<compile_context>
chip_gen: v7x
topology: tpu7x:2x2x1
jax: 0.10.0
libtpu: 0.0.40
codegen_flags: <defaults>
</compile_context>

<pallas_src>
import math

import jax
import jax.numpy as jnp
from jax import lax
from jax.experimental import pallas as pl
from jax.experimental.pallas import tpu as pltpu


# -----------------------------------------------------------------------------
# Fused forward kernel
# -----------------------------------------------------------------------------
def _lstm2_branch(x_ref, wih0_ref, whh0_ref, b0_ref, wih1_ref, whh1_ref, b1_ref):
    """Two stacked LSTM layers over a (T, B, E) VMEM block.

    Returns the final (t = T-1) hidden state of layer 2, shape (B, H).
    Weights stay resident in VMEM for the whole call and are loaded near use
    inside each (unrolled) step to keep vreg pressure bounded.
    """
    T, B, _ = x_ref.shape
    H = whh0_ref.shape[0]

    def cell(x, h, c, wih_ref, whh_ref, b_ref):
        # Fused gate matmul: (B, 4H), PyTorch gate order [i | f | g | o].
        g = (jnp.dot(x, wih_ref[...], preferred_element_type=jnp.float32)
             + jnp.dot(h, whh_ref[...], preferred_element_type=jnp.float32)
             + b_ref[...])
        i_g = jax.nn.sigmoid(g[:, 0 * H:1 * H])
        f_g = jax.nn.sigmoid(g[:, 1 * H:2 * H])
        g_g = jnp.tanh(g[:, 2 * H:3 * H])
        o_g = jax.nn.sigmoid(g[:, 3 * H:4 * H])
        c_new = f_g * c + i_g * g_g
        h_new = o_g * jnp.tanh(c_new)
        return h_new, c_new

    def step(t, carry):
        h0, c0, h1, c1 = carry
        x = x_ref[t]                                              # (B, E)
        h0, c0 = cell(x, h0, c0, wih0_ref, whh0_ref, b0_ref)      # layer 1
        h1, c1 = cell(h0, h1, c1, wih1_ref, whh1_ref, b1_ref)     # layer 2
        return (h0, c0, h1, c1)

    init = tuple(jnp.zeros((B, H), jnp.float32) for _ in range(4))
    # unroll=True: static small T, full unroll gives the LLO scheduler visibility.
    _, _, h1_final, _ = lax.fori_loop(0, T, step, init, unroll=True)
    return h1_final


def _fused_forward_kernel(xs_ref, xl_ref,
                          s_wih0, s_whh0, s_b0, s_wih1, s_whh1, s_b1,
                          l_wih0, l_whh0, l_b0, l_wih1, l_whh1, l_b1,
                          weff_ref, beff_ref,
                          out_ref):
    h_short = _lstm2_branch(xs_ref, s_wih0, s_whh0, s_b0, s_wih1, s_whh1, s_b1)
    h_long = _lstm2_branch(xl_ref, l_wih0, l_whh0, l_b0, l_wih1, l_whh1, l_b1)

    hs_dim = h_short.shape[1]
    # logits = concat(h_short, h_long) @ W_eff + b_eff, written as a split
    # matmul (avoids a lane concat):  h_s @ W_eff[:Hs] + h_l @ W_eff[Hs:] + b.
    w_eff = weff_ref[...]
    out_ref[...] = (
        jnp.dot(h_short, w_eff[:hs_dim, :], preferred_element_type=jnp.float32)
        + jnp.dot(h_long, w_eff[hs_dim:, :], preferred_element_type=jnp.float32)
        + beff_ref[...])


def fused_forward(xs_tbe, xl_tbe, short_layers, long_layers, w_eff, b_eff):
    """xs_tbe/xl_tbe: (T, B_pad, E) time-major. Returns (B_pad, N_pad) logits."""
    b_pad = xs_tbe.shape[1]
    n_pad = w_eff.shape[1]
    vmem = pl.BlockSpec(memory_space=pltpu.MemorySpace.VMEM)
    n_inputs = 2 + len(short_layers) + len(long_layers) + 2
    return pl.pallas_call(
        _fused_forward_kernel,
        out_shape=jax.ShapeDtypeStruct((b_pad, n_pad), jnp.float32),
        in_specs=[vmem] * n_inputs,
        out_specs=vmem,
    )(xs_tbe, xl_tbe, *short_layers, *long_layers, w_eff, b_eff)


# -----------------------------------------------------------------------------
# Parameter construction (deterministic, xavier-normal-style init)
# -----------------------------------------------------------------------------
def xavier_normal(key, shape):
    fan_in, fan_out = shape[-2], shape[-1]
    std = math.sqrt(2.0 / (fan_in + fan_out))
    return std * jax.random.normal(key, shape, dtype=jnp.float32)


def make_lstm_layer_params(key, e_in, hidden):
    """Fused-gate layout: W_ih (E, 4H), W_hh (H, 4H), bias (1, 4H); order i|f|g|o."""
    k1, k2, k3 = jax.random.split(key, 3)
    std = 1.0 / math.sqrt(hidden)
    wih = std * jax.random.normal(k1, (e_in, 4 * hidden), jnp.float32)
    whh = std * jax.random.normal(k2, (hidden, 4 * hidden), jnp.float32)
    b = std * jax.random.normal(k3, (1, 4 * hidden), jnp.float32)
    return wih, whh, b


def make_params(key, num_items, emb_dim, short_hidden, long_hidden):
    keys = jax.random.split(key, 8)
    h_tot = short_hidden + long_hidden

    # attention value / out projections and output Linear (stored as (in, out))
    wv = xavier_normal(keys[5], (h_tot, h_tot))
    bv = jnp.zeros((1, h_tot), jnp.float32)
    wo = xavier_normal(keys[6], (h_tot, h_tot))
    bo = jnp.zeros((1, h_tot), jnp.float32)
    wout = xavier_normal(keys[7], (h_tot, num_items))
    bout = jnp.zeros((1, num_items), jnp.float32)

    # Length-1 attention (softmax weight == 1) + eval-mode dropout + output
    # Linear is a pure affine chain -> fold once at build time:
    #   logits = ((x @ Wv + bv) @ Wo + bo) @ Wout + bout = x @ W_eff + b_eff
    w_eff = wv @ wo @ wout
    b_eff = bv @ wo @ wout + bo @ wout + bout

    return {
        "emb": xavier_normal(keys[0], (num_items + 1, emb_dim)),
        "short_l0": make_lstm_layer_params(keys[1], emb_dim, short_hidden),
        "short_l1": make_lstm_layer_params(keys[2], short_hidden, short_hidden),
        "long_l0": make_lstm_layer_params(keys[3], emb_dim, long_hidden),
        "long_l1": make_lstm_layer_params(keys[4], long_hidden, long_hidden),
        "w_eff": w_eff,
        "b_eff": b_eff,
    }


# -----------------------------------------------------------------------------
# Full forward pass (glue: embedding gather, batch/lane padding, single kernel)
# -----------------------------------------------------------------------------
@jax.jit
def forward(params, short_sequences, long_sequences):
    emb = params["emb"]
    batch = short_sequences.shape[0]
    extra_rows = (-batch) % 8                 # pad batch to the f32 sublane tile

    def embed_time_major(ids):
        if extra_rows:
            ids = jnp.pad(ids, ((0, extra_rows), (0, 0)))   # padded rows use id 0
        x = jnp.take(emb, ids, axis=0)                      # (B_pad, T, E) glue gather
        return jnp.transpose(x, (1, 0, 2))                  # (T, B_pad, E) time-major

    xs = embed_time_major(short_sequences)
    xl = embed_time_major(long_sequences)

    w_eff, b_eff = params["w_eff"], params["b_eff"]
    n_items = w_eff.shape[1]
    extra_cols = (-n_items) % 128             # lane-dense (unmasked) output stores
    if extra_cols:
        w_eff = jnp.pad(w_eff, ((0, 0), (0, extra_cols)))
        b_eff = jnp.pad(b_eff, ((0, 0), (0, extra_cols)))

    logits = fused_forward(
        xs, xl,
        params["short_l0"] + params["short_l1"],
        params["long_l0"] + params["long_l1"],
        w_eff, b_eff)
    return logits[:batch, :n_items]


# -----------------------------------------------------------------------------
# Pure-JAX reference (same folded params) for a tolerance check
# -----------------------------------------------------------------------------
def reference_forward(params, short_ids, long_ids):
    emb = params["emb"]
    hp = lax.Precision.HIGHEST

    def run_layer(x_bte, wih, whh, b):
        batch = x_bte.shape[0]
        hidden = whh.shape[0]

        def step(carry, xt):
            h, c = carry
            g = (jnp.dot(xt, wih, precision=hp)
                 + jnp.dot(h, whh, precision=hp) + b)
            i = jax.nn.sigmoid(g[:, :hidden])
            f = jax.nn.sigmoid(g[:, hidden:2 * hidden])
            gg = jnp.tanh(g[:, 2 * hidden:3 * hidden])
            o = jax.nn.sigmoid(g[:, 3 * hidden:])
            c = f * c + i * gg
            h = o * jnp.tanh(c)
            return (h, c), h

        init = (jnp.zeros((batch, hidden), jnp.float32),
                jnp.zeros((batch, hidden), jnp.float32))
        _, hs = lax.scan(step, init, jnp.transpose(x_bte, (1, 0, 2)))
        return jnp.transpose(hs, (1, 0, 2))   # (B, T, H)

    def branch(ids, l0, l1):
        x = jnp.take(emb, ids, axis=0)
        h1 = run_layer(x, *l0)
        h2 = run_layer(h1, *l1)
        return h2[:, -1]

    s_final = branch(short_ids, params["short_l0"], params["short_l1"])
    l_final = branch(long_ids, params["long_l0"], params["long_l1"])
    combined = jnp.concatenate([s_final, l_final], axis=-1)
    return jnp.dot(combined, params["w_eff"], precision=hp) + params["b_eff"]


if __name__ == "__main__":
    # small shapes consistent with the module
    NUM_ITEMS = 64
    EMB_DIM = 32
    SHORT_HIDDEN = 32
    LONG_HIDDEN = 64          # short+long = 96, divisible by 4 attention heads
    BATCH = 2
    SHORT_SEQ = 8
    LONG_SEQ = 16

    key = jax.random.PRNGKey(0)
    k_params, k_short, k_long = jax.random.split(key, 3)

    params = make_params(k_params, NUM_ITEMS, EMB_DIM, SHORT_HIDDEN, LONG_HIDDEN)

    short_ids = jax.random.randint(k_short, (BATCH, SHORT_SEQ), 1, NUM_ITEMS + 1,
                                   dtype=jnp.int32)
    long_ids = jax.random.randint(k_long, (BATCH, LONG_SEQ), 1, NUM_ITEMS + 1,
                                  dtype=jnp.int32)

    logits = forward(params, short_ids, long_ids)
    logits = jax.block_until_ready(logits)

    assert logits.shape == (BATCH, NUM_ITEMS)
    assert logits.dtype == jnp.float32
    assert bool(jnp.all(jnp.isfinite(logits)))

    ref = reference_forward(params, short_ids, long_ids)
    max_err = float(jnp.max(jnp.abs(logits - ref)))
    assert bool(jnp.allclose(logits, ref, rtol=1e-2, atol=1e-2)), max_err

    print("KERNEL_OK")
</pallas_src>

<mosaic_0001>
module attributes {stable_mosaic.version = 11 : i64} {
  func.func @_fused_forward_kernel(%arg0: memref<8x8x32xf32, #tpu.memory_space<vmem>>, %arg1: memref<16x8x32xf32, #tpu.memory_space<vmem>>, %arg2: memref<32x128xf32, #tpu.memory_space<vmem>>, %arg3: memref<32x128xf32, #tpu.memory_space<vmem>>, %arg4: memref<1x128xf32, #tpu.memory_space<vmem>>, %arg5: memref<32x128xf32, #tpu.memory_space<vmem>>, %arg6: memref<32x128xf32, #tpu.memory_space<vmem>>, %arg7: memref<1x128xf32, #tpu.memory_space<vmem>>, %arg8: memref<32x256xf32, #tpu.memory_space<vmem>>, %arg9: memref<64x256xf32, #tpu.memory_space<vmem>>, %arg10: memref<1x256xf32, #tpu.memory_space<vmem>>, %arg11: memref<64x256xf32, #tpu.memory_space<vmem>>, %arg12: memref<64x256xf32, #tpu.memory_space<vmem>>, %arg13: memref<1x256xf32, #tpu.memory_space<vmem>>, %arg14: memref<96x128xf32, #tpu.memory_space<vmem>>, %arg15: memref<1x128xf32, #tpu.memory_space<vmem>>, %arg16: memref<8x128xf32, #tpu.memory_space<vmem>>) attributes {dimension_semantics = [], scalar_prefetch = 0 : i64, scratch_operands = 0 : i64, tpu.core_type = #tpu.core_type<tc>} {
    %cst = arith.constant 0.000000e+00 : f32
    %0 = vector.broadcast %cst : f32 to vector<8x32xf32>
    %cst_0 = arith.constant 0.000000e+00 : f32
    %1 = vector.broadcast %cst_0 : f32 to vector<8x32xf32>
    %cst_1 = arith.constant 0.000000e+00 : f32
    %2 = vector.broadcast %cst_1 : f32 to vector<8x32xf32>
    %cst_2 = arith.constant 0.000000e+00 : f32
    %3 = vector.broadcast %cst_2 : f32 to vector<8x32xf32>
    %c0_i32 = arith.constant 0 : i32
    %4 = arith.index_cast %c0_i32 : i32 to index
    %c0 = arith.constant 0 : index
    %c0_3 = arith.constant 0 : index
    %5 = vector.load %arg0[%4, %c0, %c0_3] : memref<8x8x32xf32, #tpu.memory_space<vmem>>, vector<1x8x32xf32>
    %6 = vector.shape_cast %5 : vector<1x8x32xf32> to vector<8x32xf32>
    %c0_4 = arith.constant 0 : index
    %c0_5 = arith.constant 0 : index
    %7 = vector.load %arg2[%c0_4, %c0_5] : memref<32x128xf32, #tpu.memory_space<vmem>>, vector<32x128xf32>
    %cst_6 = arith.constant dense<0.000000e+00> : vector<8x128xf32>
    %8 = tpu.matmul %6, %7, %cst_6 {dimension_numbers = #tpu.dot_dimension_numbers<[1], [0], [0], [1], [0, 0, 1, 1], [], []>} : vector<8x32xf32>, vector<32x128xf32>, vector<8x128xf32> -> vector<8x128xf32>
    %c0_7 = arith.constant 0 : index
    %c0_8 = arith.constant 0 : index
    %9 = vector.load %arg3[%c0_7, %c0_8] : memref<32x128xf32, #tpu.memory_space<vmem>>, vector<32x128xf32>
    %cst_9 = arith.constant dense<0.000000e+00> : vector<8x128xf32>
    %10 = tpu.matmul %0, %9, %cst_9 {dimension_numbers = #tpu.dot_dimension_numbers<[1], [0], [0], [1], [0, 0, 1, 1], [], []>} : vector<8x32xf32>, vector<32x128xf32>, vector<8x128xf32> -> vector<8x128xf32>
    %11 = arith.addf %8, %10 : vector<8x128xf32>
    %c0_10 = arith.constant 0 : index
    %c0_11 = arith.constant 0 : index
    %12 = vector.load %arg4[%c0_10, %c0_11] : memref<1x128xf32, #tpu.memory_space<vmem>>, vector<1x128xf32>
    %13 = vector.broadcast %12 : vector<1x128xf32> to vector<8x128xf32>
    %14 = arith.addf %11, %13 : vector<8x128xf32>
    %15 = vector.extract_strided_slice %14 {offsets = [0, 0], sizes = [8, 32], strides = [1, 1]} : vector<8x128xf32> to vector<8x32xf32>
    %16 = arith.negf %15 : vector<8x32xf32>
    %17 = math.exp %16 : vector<8x32xf32>
    %cst_12 = arith.constant 1.000000e+00 : f32
    %18 = vector.broadcast %cst_12 : f32 to vector<8x32xf32>
    %19 = arith.addf %18, %17 : vector<8x32xf32>
    %20 = arith.divf %18, %19 : vector<8x32xf32>
    %21 = vector.extract_strided_slice %14 {offsets = [0, 32], sizes = [8, 32], strides = [1, 1]} : vector<8x128xf32> to vector<8x32xf32>
    %22 = arith.negf %21 : vector<8x32xf32>
    %23 = math.exp %22 : vector<8x32xf32>
    %cst_13 = arith.constant 1.000000e+00 : f32
    %24 = vector.broadcast %cst_13 : f32 to vector<8x32xf32>
    %25 = arith.addf %24, %23 : vector<8x32xf32>
    %26 = arith.divf %24, %25 : vector<8x32xf32>
    %27 = vector.extract_strided_slice %14 {offsets = [0, 64], sizes = [8, 32], strides = [1, 1]} : vector<8x128xf32> to vector<8x32xf32>
    %28 = math.tanh %27 : vector<8x32xf32>
    %29 = vector.extract_strided_slice %14 {offsets = [0, 96], sizes = [8, 32], strides = [1, 1]} : vector<8x128xf32> to vector<8x32xf32>
    %30 = arith.negf %29 : vector<8x32xf32>
    %31 = math.exp %30 : vector<8x32xf32>
    %cst_14 = arith.constant 1.000000e+00 : f32
    %32 = vector.broadcast %cst_14 : f32 to vector<8x32xf32>
    %33 = arith.addf %32, %31 : vector<8x32xf32>
    %34 = arith.divf %32, %33 : vector<8x32xf32>
    %35 = arith.mulf %26, %1 : vector<8x32xf32>
    %36 = arith.mulf %20, %28 : vector<8x32xf32>
    %37 = arith.addf %35, %36 : vector<8x32xf32>
    %38 = math.tanh %37 : vector<8x32xf32>
    %39 = arith.mulf %34, %38 : vector<8x32xf32>
    %c0_15 = arith.constant 0 : index
    %c0_16 = arith.constant 0 : index
    %40 = vector.load %arg5[%c0_15, %c0_16] : memref<32x128xf32, #tpu.memory_space<vmem>>, vector<32x128xf32>
    %cst_17 = arith.constant dense<0.000000e+00> : vector<8x128xf32>
    %41 = tpu.matmul %39, %40, %cst_17 {dimension_numbers = #tpu.dot_dimension_numbers<[1], [0], [0], [1], [0, 0, 1, 1], [], []>} : vector<8x32xf32>, vector<32x128xf32>, vector<8x128xf32> -> vector<8x128xf32>
    %c0_18 = arith.constant 0 : index
    %c0_19 = arith.constant 0 : index
    %42 = vector.load %arg6[%c0_18, %c0_19] : memref<32x128xf32, #tpu.memory_space<vmem>>, vector<32x128xf32>
    %cst_20 = arith.constant dense<0.000000e+00> : vector<8x128xf32>
    %43 = tpu.matmul %2, %42, %cst_20 {dimension_numbers = #tpu.dot_dimension_numbers<[1], [0], [0], [1], [0, 0, 1, 1], [], []>} : vector<8x32xf32>, vector<32x128xf32>, vector<8x128xf32> -> vector<8x128xf32>
    %44 = arith.addf %41, %43 : vector<8x128xf32>
    %c0_21 = arith.constant 0 : index
    %c0_22 = arith.constant 0 : index
    %45 = vector.load %arg7[%c0_21, %c0_22] : memref<1x128xf32, #tpu.memory_space<vmem>>, vector<1x128xf32>
    %46 = vector.broadcast %45 : vector<1x128xf32> to vector<8x128xf32>
    %47 = arith.addf %44, %46 : vector<8x128xf32>
    %48 = vector.extract_strided_slice %47 {offsets = [0, 0], sizes = [8, 32], strides = [1, 1]} : vector<8x128xf32> to vector<8x32xf32>
    %49 = arith.negf %48 : vector<8x32xf32>
    %50 = math.exp %49 : vector<8x32xf32>
    %cst_23 = arith.constant 1.000000e+00 : f32
    %51 = vector.broadcast %cst_23 : f32 to vector<8x32xf32>
    %52 = arith.addf %51, %50 : vector<8x32xf32>
    %53 = arith.divf %51, %52 : vector<8x32xf32>
    %54 = vector.extract_strided_slice %47 {offsets = [0, 32], sizes = [8, 32], strides = [1, 1]} : vector<8x128xf32> to vector<8x32xf32>
    %55 = arith.negf %54 : vector<8x32xf32>
    %56 = math.exp %55 : vector<8x32xf32>
    %cst_24 = arith.constant 1.000000e+00 : f32
    %57 = vector.broadcast %cst_24 : f32 to vector<8x32xf32>
    %58 = arith.addf %57, %56 : vector<8x32xf32>
    %59 = arith.divf %57, %58 : vector<8x32xf32>
    %60 = vector.extract_strided_slice %47 {offsets = [0, 64], sizes = [8, 32], strides = [1, 1]} : vector<8x128xf32> to vector<8x32xf32>
    %61 = math.tanh %60 : vector<8x32xf32>
    %62 = vector.extract_strided_slice %47 {offsets = [0, 96], sizes = [8, 32], strides = [1, 1]} : vector<8x128xf32> to vector<8x32xf32>
    %63 = arith.negf %62 : vector<8x32xf32>
    %64 = math.exp %63 : vector<8x32xf32>
    %cst_25 = arith.constant 1.000000e+00 : f32
    %65 = vector.broadcast %cst_25 : f32 to vector<8x32xf32>
    %66 = arith.addf %65, %64 : vector<8x32xf32>
    %67 = arith.divf %65, %66 : vector<8x32xf32>
    %68 = arith.mulf %59, %3 : vector<8x32xf32>
    %69 = arith.mulf %53, %61 : vector<8x32xf32>
    %70 = arith.addf %68, %69 : vector<8x32xf32>
    %71 = math.tanh %70 : vector<8x32xf32>
    %72 = arith.mulf %67, %71 : vector<8x32xf32>
    %c1_i32 = arith.constant 1 : i32
    %73 = arith.index_cast %c1_i32 : i32 to index
    %c0_26 = arith.constant 0 : index
    %c0_27 = arith.constant 0 : index
    %74 = vector.load %arg0[%73, %c0_26, %c0_27] : memref<8x8x32xf32, #tpu.memory_space<vmem>>, vector<1x8x32xf32>
    %75 = vector.shape_cast %74 : vector<1x8x32xf32> to vector<8x32xf32>
    %c0_28 = arith.constant 0 : index
    %c0_29 = arith.constant 0 : index
    %76 = vector.load %arg2[%c0_28, %c0_29] : memref<32x128xf32, #tpu.memory_space<vmem>>, vector<32x128xf32>
    %cst_30 = arith.constant dense<0.000000e+00> : vector<8x128xf32>
    %77 = tpu.matmul %75, %76, %cst_30 {dimension_numbers = #tpu.dot_dimension_numbers<[1], [0], [0], [1], [0, 0, 1, 1], [], []>} : vector<8x32xf32>, vector<32x128xf32>, vector<8x128xf32> -> vector<8x128xf32>
    %c0_31 = arith.constant 0 : index
    %c0_32 = arith.constant 0 : index
    %78 = vector.load %arg3[%c0_31, %c0_32] : memref<32x128xf32, #tpu.memory_space<vmem>>, vector<32x128xf32>
    %cst_33 = arith.constant dense<0.000000e+00> : vector<8x128xf32>
    %79 = tpu.matmul %39, %78, %cst_33 {dimension_numbers = #tpu.dot_dimension_numbers<[1], [0], [0], [1], [0, 0, 1, 1], [], []>} : vector<8x32xf32>, vector<32x128xf32>, vector<8x128xf32> -> vector<8x128xf32>
    %80 = arith.addf %77, %79 : vector<8x128xf32>
    %c0_34 = arith.constant 0 : index
    %c0_35 = arith.constant 0 : index
    %81 = vector.load %arg4[%c0_34, %c0_35] : memref<1x128xf32, #tpu.memory_space<vmem>>, vector<1x128xf32>
    %82 = vector.broadcast %81 : vector<1x128xf32> to vector<8x128xf32>
    %83 = arith.addf %80, %82 : vector<8x128xf32>
    %84 = vector.extract_strided_slice %83 {offsets = [0, 0], sizes = [8, 32], strides = [1, 1]} : vector<8x128xf32> to vector<8x32xf32>
    %85 = arith.negf %84 : vector<8x32xf32>
    %86 = math.exp %85 : vector<8x32xf32>
    %cst_36 = arith.constant 1.000000e+00 : f32
    %87 = vector.broadcast %cst_36 : f32 to vector<8x32xf32>
    %88 = arith.addf %87, %86 : vector<8x32xf32>
    %89 = arith.divf %87, %88 : vector<8x32xf32>
    %90 = vector.extract_strided_slice %83 {offsets = [0, 32], sizes = [8, 32], strides = [1, 1]} : vector<8x128xf32> to vector<8x32xf32>
    %91 = arith.negf %90 : vector<8x32xf32>
    %92 = math.exp %91 : vector<8x32xf32>
    %cst_37 = arith.constant 1.000000e+00 : f32
    %93 = vector.broadcast %cst_37 : f32 to vector<8x32xf32>
    %94 = arith.addf %93, %92 : vector<8x32xf32>
    %95 = arith.divf %93, %94 : vector<8x32xf32>
    %96 = vector.extract_strided_slice %83 {offsets = [0, 64], sizes = [8, 32], strides = [1, 1]} : vector<8x128xf32> to vector<8x32xf32>
    %97 = math.tanh %96 : vector<8x32xf32>
    %98 = vector.extract_strided_slice %83 {offsets = [0, 96], sizes = [8, 32], strides = [1, 1]} : vector<8x128xf32> to vector<8x32xf32>
    %99 = arith.negf %98 : vector<8x32xf32>
    %100 = math.exp %99 : vector<8x32xf32>
    %cst_38 = arith.constant 1.000000e+00 : f32
    %101 = vector.broadcast %cst_38 : f32 to vector<8x32xf32>
    %102 = arith.addf %101, %100 : vector<8x32xf32>
    %103 = arith.divf %101, %102 : vector<8x32xf32>
    %104 = arith.mulf %95, %37 : vector<8x32xf32>
    %105 = arith.mulf %89, %97 : vector<8x32xf32>
    %106 = arith.addf %104, %105 : vector<8x32xf32>
    %107 = math.tanh %106 : vector<8x32xf32>
    %108 = arith.mulf %103, %107 : vector<8x32xf32>
    %c0_39 = arith.constant 0 : index
    %c0_40 = arith.constant 0 : index
    %109 = vector.load %arg5[%c0_39, %c0_40] : memref<32x128xf32, #tpu.memory_space<vmem>>, vector<32x128xf32>
    %cst_41 = arith.constant dense<0.000000e+00> : vector<8x128xf32>
    %110 = tpu.matmul %108, %109, %cst_41 {dimension_numbers = #tpu.dot_dimension_numbers<[1], [0], [0], [1], [0, 0, 1, 1], [], []>} : vector<8x32xf32>, vector<32x128xf32>, vector<8x128xf32> -> vector<8x128xf32>
    %c0_42 = arith.constant 0 : index
    %c0_43 = arith.constant 0 : index
    %111 = vector.load %arg6[%c0_42, %c0_43] : memref<32x128xf32, #tpu.memory_space<vmem>>, vector<32x128xf32>
    %cst_44 = arith.constant dense<0.000000e+00> : vector<8x128xf32>
    %112 = tpu.matmul %72, %111, %cst_44 {dimension_numbers = #tpu.dot_dimension_numbers<[1], [0], [0], [1], [0, 0, 1, 1], [], []>} : vector<8x32xf32>, vector<32x128xf32>, vector<8x128xf32> -> vector<8x128xf32>
    %113 = arith.addf %110, %112 : vector<8x128xf32>
    %c0_45 = arith.constant 0 : index
    %c0_46 = arith.constant 0 : index
    %114 = vector.load %arg7[%c0_45, %c0_46] : memref<1x128xf32, #tpu.memory_space<vmem>>, vector<1x128xf32>
    %115 = vector.broadcast %114 : vector<1x128xf32> to vector<8x128xf32>
    %116 = arith.addf %113, %115 : vector<8x128xf32>
    %117 = vector.extract_strided_slice %116 {offsets = [0, 0], sizes = [8, 32], strides = [1, 1]} : vector<8x128xf32> to vector<8x32xf32>
    %118 = arith.negf %117 : vector<8x32xf32>
    %119 = math.exp %118 : vector<8x32xf32>
    %cst_47 = arith.constant 1.000000e+00 : f32
    %120 = vector.broadcast %cst_47 : f32 to vector<8x32xf32>
    %121 = arith.addf %120, %119 : vector<8x32xf32>
    %122 = arith.divf %120, %121 : vector<8x32xf32>
    %123 = vector.extract_strided_slice %116 {offsets = [0, 32], sizes = [8, 32], strides = [1, 1]} : vector<8x128xf32> to vector<8x32xf32>
    %124 = arith.negf %123 : vector<8x32xf32>
    %125 = math.exp %124 : vector<8x32xf32>
    %cst_48 = arith.constant 1.000000e+00 : f32
    %126 = vector.broadcast %cst_48 : f32 to vector<8x32xf32>
    %127 = arith.addf %126, %125 : vector<8x32xf32>
    %128 = arith.divf %126, %127 : vector<8x32xf32>
    %129 = vector.extract_strided_slice %116 {offsets = [0, 64], sizes = [8, 32], strides = [1, 1]} : vector<8x128xf32> to vector<8x32xf32>
    %130 = math.tanh %129 : vector<8x32xf32>
    %131 = vector.extract_strided_slice %116 {offsets = [0, 96], sizes = [8, 32], strides = [1, 1]} : vector<8x128xf32> to vector<8x32xf32>
    %132 = arith.negf %131 : vector<8x32xf32>
    %133 = math.exp %132 : vector<8x32xf32>
    %cst_49 = arith.constant 1.000000e+00 : f32
    %134 = vector.broadcast %cst_49 : f32 to vector<8x32xf32>
    %135 = arith.addf %134, %133 : vector<8x32xf32>
    %136 = arith.divf %134, %135 : vector<8x32xf32>
    %137 = arith.mulf %128, %70 : vector<8x32xf32>
    %138 = arith.mulf %122, %130 : vector<8x32xf32>
    %139 = arith.addf %137, %138 : vector<8x32xf32>
    %140 = math.tanh %139 : vector<8x32xf32>
    %141 = arith.mulf %136, %140 : vector<8x32xf32>
    %c2_i32 = arith.constant 2 : i32
    %142 = arith.index_cast %c2_i32 : i32 to index
    %c0_50 = arith.constant 0 : index
    %c0_51 = arith.constant 0 : index
    %143 = vector.load %arg0[%142, %c0_50, %c0_51] : memref<8x8x32xf32, #tpu.memory_space<vmem>>, vector<1x8x32xf32>
    %144 = vector.shape_cast %143 : vector<1x8x32xf32> to vector<8x32xf32>
    %c0_52 = arith.constant 0 : index
    %c0_53 = arith.constant 0 : index
    %145 = vector.load %arg2[%c0_52, %c0_53] : memref<32x128xf32, #tpu.memory_space<vmem>>, vector<32x128xf32>
    %cst_54 = arith.constant dense<0.000000e+00> : vector<8x128xf32>
    %146 = tpu.matmul %144, %145, %cst_54 {dimension_numbers = #tpu.dot_dimension_numbers<[1], [0], [0], [1], [0, 0, 1, 1], [], []>} : vector<8x32xf32>, vector<32x128xf32>, vector<8x128xf32> -> vector<8x128xf32>
    %c0_55 = arith.constant 0 : index
    %c0_56 = arith.constant 0 : index
    %147 = vector.load %arg3[%c0_55, %c0_56] : memref<32x128xf32, #tpu.memory_space<vmem>>, vector<32x128xf32>
    %cst_57 = arith.constant dense<0.000000e+00> : vector<8x128xf32>
    %148 = tpu.matmul %108, %147, %cst_57 {dimension_numbers = #tpu.dot_dimension_numbers<[1], [0], [0], [1], [0, 0, 1, 1], [], []>} : vector<8x32xf32>, vector<32x128xf32>, vector<8x128xf32> -> vector<8x128xf32>
    %149 = arith.addf %146, %148 : vector<8x128xf32>
    %c0_58 = arith.constant 0 : index
    %c0_59 = arith.constant 0 : index
    %150 = vector.load %arg4[%c0_58, %c0_59] : memref<1x128xf32, #tpu.memory_space<vmem>>, vector<1x128xf32>
    %151 = vector.broadcast %150 : vector<1x128xf32> to vector<8x128xf32>
    %152 = arith.addf %149, %151 : vector<8x128xf32>
    %153 = vector.extract_strided_slice %152 {offsets = [0, 0], sizes = [8, 32], strides = [1, 1]} : vector<8x128xf32> to vector<8x32xf32>
    %154 = arith.negf %153 : vector<8x32xf32>
    %155 = math.exp %154 : vector<8x32xf32>
    %cst_60 = arith.constant 1.000000e+00 : f32
    %156 = vector.broadcast %cst_60 : f32 to vector<8x32xf32>
    %157 = arith.addf %156, %155 : vector<8x32xf32>
    %158 = arith.divf %156, %157 : vector<8x32xf32>
    %159 = vector.extract_strided_slice %152 {offsets = [0, 32], sizes = [8, 32], strides = [1, 1]} : vector<8x128xf32> to vector<8x32xf32>
    %160 = arith.negf %159 : vector<8x32xf32>
    %161 = math.exp %160 : vector<8x32xf32>
    %cst_61 = arith.constant 1.000000e+00 : f32
    %162 = vector.broadcast %cst_61 : f32 to vector<8x32xf32>
    %163 = arith.addf %162, %161 : vector<8x32xf32>
    %164 = arith.divf %162, %163 : vector<8x32xf32>
    %165 = vector.extract_strided_slice %152 {offsets = [0, 64], sizes = [8, 32], strides = [1, 1]} : vector<8x128xf32> to vector<8x32xf32>
    %166 = math.tanh %165 : vector<8x32xf32>
    %167 = vector.extract_strided_slice %152 {offsets = [0, 96], sizes = [8, 32], strides = [1, 1]} : vector<8x128xf32> to vector<8x32xf32>
    %168 = arith.negf %167 : vector<8x32xf32>
    %169 = math.exp %168 : vector<8x32xf32>
    %cst_62 = arith.constant 1.000000e+00 : f32
    %170 = vector.broadcast %cst_62 : f32 to vector<8x32xf32>
    %171 = arith.addf %170, %169 : vector<8x32xf32>
    %172 = arith.divf %170, %171 : vector<8x32xf32>
    %173 = arith.mulf %164, %106 : vector<8x32xf32>
    %174 = arith.mulf %158, %166 : vector<8x32xf32>
    %175 = arith.addf %173, %174 : vector<8x32xf32>
    %176 = math.tanh %175 : vector<8x32xf32>
    %177 = arith.mulf %172, %176 : vector<8x32xf32>
    %c0_63 = arith.constant 0 : index
    %c0_64 = arith.constant 0 : index
    %178 = vector.load %arg5[%c0_63, %c0_64] : memref<32x128xf32, #tpu.memory_space<vmem>>, vector<32x128xf32>
    %cst_65 = arith.constant dense<0.000000e+00> : vector<8x128xf32>
    %179 = tpu.matmul %177, %178, %cst_65 {dimension_numbers = #tpu.dot_dimension_numbers<[1], [0], [0], [1], [0, 0, 1, 1], [], []>} : vector<8x32xf32>, vector<32x128xf32>, vector<8x128xf32> -> vector<8x128xf32>
    %c0_66 = arith.constant 0 : index
    %c0_67 = arith.constant 0 : index
    %180 = vector.load %arg6[%c0_66, %c0_67] : memref<32x128xf32, #tpu.memory_space<vmem>>, vector<32x128xf32>
    %cst_68 = arith.constant dense<0.000000e+00> : vector<8x128xf32>
    %181 = tpu.matmul %141, %180, %cst_68 {dimension_numbers = #tpu.dot_dimension_numbers<[1], [0], [0], [1], [0, 0, 1, 1], [], []>} : vector<8x32xf32>, vector<32x128xf32>, vector<8x128xf32> -> vector<8x128xf32>
    %182 = arith.addf %179, %181 : vector<8x128xf32>
    %c0_69 = arith.constant 0 : index
    %c0_70 = arith.constant 0 : index
    %183 = vector.load %arg7[%c0_69, %c0_70] : memref<1x128xf32, #tpu.memory_space<vmem>>, vector<1x128xf32>
    %184 = vector.broadcast %183 : vector<1x128xf32> to vector<8x128xf32>
    %185 = arith.addf %182, %184 : vector<8x128xf32>
    %186 = vector.extract_strided_slice %185 {offsets = [0, 0], sizes = [8, 32], strides = [1, 1]} : vector<8x128xf32> to vector<8x32xf32>
    %187 = arith.negf %186 : vector<8x32xf32>
    %188 = math.exp %187 : vector<8x32xf32>
    %cst_71 = arith.constant 1.000000e+00 : f32
    %189 = vector.broadcast %cst_71 : f32 to vector<8x32xf32>
    %190 = arith.addf %189, %188 : vector<8x32xf32>
    %191 = arith.divf %189, %190 : vector<8x32xf32>
    %192 = vector.extract_strided_slice %185 {offsets = [0, 32], sizes = [8, 32], strides = [1, 1]} : vector<8x128xf32> to vector<8x32xf32>
    %193 = arith.negf %192 : vector<8x32xf32>
    %194 = math.exp %193 : vector<8x32xf32>
    %cst_72 = arith.constant 1.000000e+00 : f32
    %195 = vector.broadcast %cst_72 : f32 to vector<8x32xf32>
    %196 = arith.addf %195, %194 : vector<8x32xf32>
    %197 = arith.divf %195, %196 : vector<8x32xf32>
    %198 = vector.extract_strided_slice %185 {offsets = [0, 64], sizes = [8, 32], strides = [1, 1]} : vector<8x128xf32> to vector<8x32xf32>
    %199 = math.tanh %198 : vector<8x32xf32>
    %200 = vector.extract_strided_slice %185 {offsets = [0, 96], sizes = [8, 32], strides = [1, 1]} : vector<8x128xf32> to vector<8x32xf32>
    %201 = arith.negf %200 : vector<8x32xf32>
    %202 = math.exp %201 : vector<8x32xf32>
    %cst_73 = arith.constant 1.000000e+00 : f32
    %203 = vector.broadcast %cst_73 : f32 to vector<8x32xf32>
    %204 = arith.addf %203, %202 : vector<8x32xf32>
    %205 = arith.divf %203, %204 : vector<8x32xf32>
    %206 = arith.mulf %197, %139 : vector<8x32xf32>
    %207 = arith.mulf %191, %199 : vector<8x32xf32>
    %208 = arith.addf %206, %207 : vector<8x32xf32>
    %209 = math.tanh %208 : vector<8x32xf32>
    %210 = arith.mulf %205, %209 : vector<8x32xf32>
    %c3_i32 = arith.constant 3 : i32
    %211 = arith.index_cast %c3_i32 : i32 to index
    %c0_74 = arith.constant 0 : index
    %c0_75 = arith.constant 0 : index
    %212 = vector.load %arg0[%211, %c0_74, %c0_75] : memref<8x8x32xf32, #tpu.memory_space<vmem>>, vector<1x8x32xf32>
    %213 = vector.shape_cast %212 : vector<1x8x32xf32> to vector<8x32xf32>
    %c0_76 = arith.constant 0 : index
    %c0_77 = arith.constant 0 : index
    %214 = vector.load %arg2[%c0_76, %c0_77] : memref<32x128xf32, #tpu.memory_space<vmem>>, vector<32x128xf32>
    %cst_78 = arith.constant dense<0.000000e+00> : vector<8x128xf32>
    %215 = tpu.matmul %213, %214, %cst_78 {dimension_numbers = #tpu.dot_dimension_numbers<[1], [0], [0], [1], [0, 0, 1, 1], [], []>} : vector<8x32xf32>, vector<32x128xf32>, vector<8x128xf32> -> vector<8x128xf32>
    %c0_79 = arith.constant 0 : index
    %c0_80 = arith.constant 0 : index
    %216 = vector.load %arg3[%c0_79, %c0_80] : memref<32x128xf32, #tpu.memory_space<vmem>>, vector<32x128xf32>
    %cst_81 = arith.constant dense<0.000000e+00> : vector<8x128xf32>
    %217 = tpu.matmul %177, %216, %cst_81 {dimension_numbers = #tpu.dot_dimension_numbers<[1], [0], [0], [1], [0, 0, 1, 1], [], []>} : vector<8x32xf32>, vector<32x128xf32>, vector<8x128xf32> -> vector<8x128xf32>
    %218 = arith.addf %215, %217 : vector<8x128xf32>
    %c0_82 = arith.constant 0 : index
    %c0_83 = arith.constant 0 : index
    %219 = vector.load %arg4[%c0_82, %c0_83] : memref<1x128xf32, #tpu.memory_space<vmem>>, vector<1x128xf32>
    %220 = vector.broadcast %219 : vector<1x128xf32> to vector<8x128xf32>
    %221 = arith.addf %218, %220 : vector<8x128xf32>
    %222 = vector.extract_strided_slice %221 {offsets = [0, 0], sizes = [8, 32], strides = [1, 1]} : vector<8x128xf32> to vector<8x32xf32>
    %223 = arith.negf %222 : vector<8x32xf32>
    %224 = math.exp %223 : vector<8x32xf32>
    %cst_84 = arith.constant 1.000000e+00 : f32
    %225 = vector.broadcast %cst_84 : f32 to vector<8x32xf32>
    %226 = arith.addf %225, %224 : vector<8x32xf32>
    %227 = arith.divf %225, %226 : vector<8x32xf32>
    %228 = vector.extract_strided_slice %221 {offsets = [0, 32], sizes = [8, 32], strides = [1, 1]} : vector<8x128xf32> to vector<8x32xf32>
    %229 = arith.negf %228 : vector<8x32xf32>
    %230 = math.exp %229 : vector<8x32xf32>
    %cst_85 = arith.constant 1.000000e+00 : f32
    %231 = vector.broadcast %cst_85 : f32 to vector<8x32xf32>
    %232 = arith.addf %231, %230 : vector<8x32xf32>
    %233 = arith.divf %231, %232 : vector<8x32xf32>
    %234 = vector.extract_strided_slice %221 {offsets = [0, 64], sizes = [8, 32], strides = [1, 1]} : vector<8x128xf32> to vector<8x32xf32>
    %235 = math.tanh %234 : vector<8x32xf32>
    %236 = vector.extract_strided_slice %221 {offsets = [0, 96], sizes = [8, 32], strides = [1, 1]} : vector<8x128xf32> to vector<8x32xf32>
    %237 = arith.negf %236 : vector<8x32xf32>
    %238 = math.exp %237 : vector<8x32xf32>
    %cst_86 = arith.constant 1.000000e+00 : f32
    %239 = vector.broadcast %cst_86 : f32 to vector<8x32xf32>
    %240 = arith.addf %239, %238 : vector<8x32xf32>
    %241 = arith.divf %239, %240 : vector<8x32xf32>
    %242 = arith.mulf %233, %175 : vector<8x32xf32>
    %243 = arith.mulf %227, %235 : vector<8x32xf32>
    %244 = arith.addf %242, %243 : vector<8x32xf32>
    %245 = math.tanh %244 : vector<8x32xf32>
    %246 = arith.mulf %241, %245 : vector<8x32xf32>
    %c0_87 = arith.constant 0 : index
    %c0_88 = arith.constant 0 : index
    %247 = vector.load %arg5[%c0_87, %c0_88] : memref<32x128xf32, #tpu.memory_space<vmem>>, vector<32x128xf32>
    %cst_89 = arith.constant dense<0.000000e+00> : vector<8x128xf32>
    %248 = tpu.matmul %246, %247, %cst_89 {dimension_numbers = #tpu.dot_dimension_numbers<[1], [0], [0], [1], [0, 0, 1, 1], [], []>} : vector<8x32xf32>, vector<32x128xf32>, vector<8x128xf32> -> vector<8x128xf32>
    %c0_90 = arith.constant 0 : index
    %c0_91 = arith.constant 0 : index
    %249 = vector.load %arg6[%c0_90, %c0_91] : memref<32x128xf32, #tpu.memory_space<vmem>>, vector<32x128xf32>
    %cst_92 = arith.constant dense<0.000000e+00> : vector<8x128xf32>
    %250 = tpu.matmul %210, %249, %cst_92 {dimension_numbers = #tpu.dot_dimension_numbers<[1], [0], [0], [1], [0, 0, 1, 1], [], []>} : vector<8x32xf32>, vector<32x128xf32>, vector<8x128xf32> -> vector<8x128xf32>
    %251 = arith.addf %248, %250 : vector<8x128xf32>
    %c0_93 = arith.constant 0 : index
    %c0_94 = arith.constant 0 : index
    %252 = vector.load %arg7[%c0_93, %c0_94] : memref<1x128xf32, #tpu.memory_space<vmem>>, vector<1x128xf32>
    %253 = vector.broadcast %252 : vector<1x128xf32> to vector<8x128xf32>
    %254 = arith.addf %251, %253 : vector<8x128xf32>
    %255 = vector.extract_strided_slice %254 {offsets = [0, 0], sizes = [8, 32], strides = [1, 1]} : vector<8x128xf32> to vector<8x32xf32>
    %256 = arith.negf %255 : vector<8x32xf32>
    %257 = math.exp %256 : vector<8x32xf32>
    %cst_95 = arith.constant 1.000000e+00 : f32
    %258 = vector.broadcast %cst_95 : f32 to vector<8x32xf32>
    %259 = arith.addf %258, %257 : vector<8x32xf32>
    %260 = arith.divf %258, %259 : vector<8x32xf32>
    %261 = vector.extract_strided_slice %254 {offsets = [0, 32], sizes = [8, 32], strides = [1, 1]} : vector<8x128xf32> to vector<8x32xf32>
    %262 = arith.negf %261 : vector<8x32xf32>
    %263 = math.exp %262 : vector<8x32xf32>
    %cst_96 = arith.constant 1.000000e+00 : f32
    %264 = vector.broadcast %cst_96 : f32 to vector<8x32xf32>
    %265 = arith.addf %264, %263 : vector<8x32xf32>
    %266 = arith.divf %264, %265 : vector<8x32xf32>
    %267 = vector.extract_strided_slice %254 {offsets = [0, 64], sizes = [8, 32], strides = [1, 1]} : vector<8x128xf32> to vector<8x32xf32>
    %268 = math.tanh %267 : vector<8x32xf32>
    %269 = vector.extract_strided_slice %254 {offsets = [0, 96], sizes = [8, 32], strides = [1, 1]} : vector<8x128xf32> to vector<8x32xf32>
    %270 = arith.negf %269 : vector<8x32xf32>
    %271 = math.exp %270 : vector<8x32xf32>
    %cst_97 = arith.constant 1.000000e+00 : f32
    %272 = vector.broadcast %cst_97 : f32 to vector<8x32xf32>
    %273 = arith.addf %272, %271 : vector<8x32xf32>
    %274 = arith.divf %272, %273 : vector<8x32xf32>
    %275 = arith.mulf %266, %208 : vector<8x32xf32>
    %276 = arith.mulf %260, %268 : vector<8x32xf32>
    %277 = arith.addf %275, %276 : vector<8x32xf32>
    %278 = math.tanh %277 : vector<8x32xf32>
    %279 = arith.mulf %274, %278 : vector<8x32xf32>
    %c4_i32 = arith.constant 4 : i32
    %280 = arith.index_cast %c4_i32 : i32 to index
    %c0_98 = arith.constant 0 : index
    %c0_99 = arith.constant 0 : index
    %281 = vector.load %arg0[%280, %c0_98, %c0_99] : memref<8x8x32xf32, #tpu.memory_space<vmem>>, vector<1x8x32xf32>
    %282 = vector.shape_cast %281 : vector<1x8x32xf32> to vector<8x32xf32>
    %c0_100 = arith.constant 0 : index
    %c0_101 = arith.constant 0 : index
    %283 = vector.load %arg2[%c0_100, %c0_101] : memref<32x128xf32, #tpu.memory_space<vmem>>, vector<32x128xf32>
    %cst_102 = arith.constant dense<0.000000e+00> : vector<8x128xf32>
    %284 = tpu.matmul %282, %283, %cst_102 {dimension_numbers = #tpu.dot_dimension_numbers<[1], [0], [0], [1], [0, 0, 1, 1], [], []>} : vector<8x32xf32>, vector<32x128xf32>, vector<8x128xf32> -> vector<8x128xf32>
    %c0_103 = arith.constant 0 : index
    %c0_104 = arith.constant 0 : index
    %285 = vector.load %arg3[%c0_103, %c0_104] : memref<32x128xf32, #tpu.memory_space<vmem>>, vector<32x128xf32>
    %cst_105 = arith.constant dense<0.000000e+00> : vector<8x128xf32>
    %286 = tpu.matmul %246, %285, %cst_105 {dimension_numbers = #tpu.dot_dimension_numbers<[1], [0], [0], [1], [0, 0, 1, 1], [], []>} : vector<8x32xf32>, vector<32x128xf32>, vector<8x128xf32> -> vector<8x128xf32>
    %287 = arith.addf %284, %286 : vector<8x128xf32>
    %c0_106 = arith.constant 0 : index
    %c0_107 = arith.constant 0 : index
    %288 = vector.load %arg4[%c0_106, %c0_107] : memref<1x128xf32, #tpu.memory_space<vmem>>, vector<1x128xf32>
    %289 = vector.broadcast %288 : vector<1x128xf32> to vector<8x128xf32>
    %290 = arith.addf %287, %289 : vector<8x128xf32>
    %291 = vector.extract_strided_slice %290 {offsets = [0, 0], sizes = [8, 32], strides = [1, 1]} : vector<8x128xf32> to vector<8x32xf32>
    %292 = arith.negf %291 : vector<8x32xf32>
    %293 = math.exp %292 : vector<8x32xf32>
    %cst_108 = arith.constant 1.000000e+00 : f32
    %294 = vector.broadcast %cst_108 : f32 to vector<8x32xf32>
    %295 = arith.addf %294, %293 : vector<8x32xf32>
    %296 = arith.divf %294, %295 : vector<8x32xf32>
    %297 = vector.extract_strided_slice %290 {offsets = [0, 32], sizes = [8, 32], strides = [1, 1]} : vector<8x128xf32> to vector<8x32xf32>
    %298 = arith.negf %297 : vector<8x32xf32>
    %299 = math.exp %298 : vector<8x32xf32>
    %cst_109 = arith.constant 1.000000e+00 : f32
    %300 = vector.broadcast %cst_109 : f32 to vector<8x32xf32>
    %301 = arith.addf %300, %299 : vector<8x32xf32>
    %302 = arith.divf %300, %301 : vector<8x32xf32>
    %303 = vector.extract_strided_slice %290 {offsets = [0, 64], sizes = [8, 32], strides = [1, 1]} : vector<8x128xf32> to vector<8x32xf32>
    %304 = math.tanh %303 : vector<8x32xf32>
    %305 = vector.extract_strided_slice %290 {offsets = [0, 96], sizes = [8, 32], strides = [1, 1]} : vector<8x128xf32> to vector<8x32xf32>
    %306 = arith.negf %305 : vector<8x32xf32>
    %307 = math.exp %306 : vector<8x32xf32>
    %cst_110 = arith.constant 1.000000e+00 : f32
    %308 = vector.broadcast %cst_110 : f32 to vector<8x32xf32>
    %309 = arith.addf %308, %307 : vector<8x32xf32>
    %310 = arith.divf %308, %309 : vector<8x32xf32>
    %311 = arith.mulf %302, %244 : vector<8x32xf32>
    %312 = arith.mulf %296, %304 : vector<8x32xf32>
    %313 = arith.addf %311, %312 : vector<8x32xf32>
    %314 = math.tanh %313 : vector<8x32xf32>
    %315 = arith.mulf %310, %314 : vector<8x32xf32>
    %c0_111 = arith.constant 0 : index
    %c0_112 = arith.constant 0 : index
    %316 = vector.load %arg5[%c0_111, %c0_112] : memref<32x128xf32, #tpu.memory_space<vmem>>, vector<32x128xf32>
    %cst_113 = arith.constant dense<0.000000e+00> : vector<8x128xf32>
    %317 = tpu.matmul %315, %316, %cst_113 {dimension_numbers = #tpu.dot_dimension_numbers<[1], [0], [0], [1], [0, 0, 1, 1], [], []>} : vector<8x32xf32>, vector<32x128xf32>, vector<8x128xf32> -> vector<8x128xf32>
    %c0_114 = arith.constant 0 : index
    %c0_115 = arith.constant 0 : index
    %318 = vector.load %arg6[%c0_114, %c0_115] : memref<32x128xf32, #tpu.memory_space<vmem>>, vector<32x128xf32>
    %cst_116 = arith.constant dense<0.000000e+00> : vector<8x128xf32>
    %319 = tpu.matmul %279, %318, %cst_116 {dimension_numbers = #tpu.dot_dimension_numbers<[1], [0], [0], [1], [0, 0, 1, 1], [], []>} : vector<8x32xf32>, vector<32x128xf32>, vector<8x128xf32> -> vector<8x128xf32>
    %320 = arith.addf %317, %319 : vector<8x128xf32>
    %c0_117 = arith.constant 0 : index
    %c0_118 = arith.constant 0 : index
    %321 = vector.load %arg7[%c0_117, %c0_118] : memref<1x128xf32, #tpu.memory_space<vmem>>, vector<1x128xf32>
    %322 = vector.broadcast %321 : vector<1x128xf32> to vector<8x128xf32>
    %323 = arith.addf %320, %322 : vector<8x128xf32>
    %324 = vector.extract_strided_slice %323 {offsets = [0, 0], sizes = [8, 32], strides = [1, 1]} : vector<8x128xf32> to vector<8x32xf32>
    %325 = arith.negf %324 : vector<8x32xf32>
    %326 = math.exp %325 : vector<8x32xf32>
    %cst_119 = arith.constant 1.000000e+00 : f32
    %327 = vector.broadcast %cst_119 : f32 to vector<8x32xf32>
    %328 = arith.addf %327, %326 : vector<8x32xf32>
    %329 = arith.divf %327, %328 : vector<8x32xf32>
    %330 = vector.extract_strided_slice %323 {offsets = [0, 32], sizes = [8, 32], strides = [1, 1]} : vector<8x128xf32> to vector<8x32xf32>
    %331 = arith.negf %330 : vector<8x32xf32>
    %332 = math.exp %331 : vector<8x32xf32>
    %cst_120 = arith.constant 1.000000e+00 : f32
    %333 = vector.broadcast %cst_120 : f32 to vector<8x32xf32>
    %334 = arith.addf %333, %332 : vector<8x32xf32>
    %335 = arith.divf %333, %334 : vector<8x32xf32>
    %336 = vector.extract_strided_slice %323 {offsets = [0, 64], sizes = [8, 32], strides = [1, 1]} : vector<8x128xf32> to vector<8x32xf32>
    %337 = math.tanh %336 : vector<8x32xf32>
    %338 = vector.extract_strided_slice %323 {offsets = [0, 96], sizes = [8, 32], strides = [1, 1]} : vector<8x128xf32> to vector<8x32xf32>
    %339 = arith.negf %338 : vector<8x32xf32>
    %340 = math.exp %339 : vector<8x32xf32>
    %cst_121 = arith.constant 1.000000e+00 : f32
    %341 = vector.broadcast %cst_121 : f32 to vector<8x32xf32>
    %342 = arith.addf %341, %340 : vector<8x32xf32>
    %343 = arith.divf %341, %342 : vector<8x32xf32>
    %344 = arith.mulf %335, %277 : vector<8x32xf32>
    %345 = arith.mulf %329, %337 : vector<8x32xf32>
    %346 = arith.addf %344, %345 : vector<8x32xf32>
    %347 = math.tanh %346 : vector<8x32xf32>
    %348 = arith.mulf %343, %347 : vector<8x32xf32>
    %c5_i32 = arith.constant 5 : i32
    %349 = arith.index_cast %c5_i32 : i32 to index
    %c0_122 = arith.constant 0 : index
    %c0_123 = arith.constant 0 : index
    %350 = vector.load %arg0[%349, %c0_122, %c0_123] : memref<8x8x32xf32, #tpu.memory_space<vmem>>, vector<1x8x32xf32>
    %351 = vector.shape_cast %350 : vector<1x8x32xf32> to vector<8x32xf32>
    %c0_124 = arith.constant 0 : index
    %c0_125 = arith.constant 0 : index
    %352 = vector.load %arg2[%c0_124, %c0_125] : memref<32x128xf32, #tpu.memory_space<vmem>>, vector<32x128xf32>
    %cst_126 = arith.constant dense<0.000000e+00> : vector<8x128xf32>
    %353 = tpu.matmul %351, %352, %cst_126 {dimension_numbers = #tpu.dot_dimension_numbers<[1], [0], [0], [1], [0, 0, 1, 1], [], []>} : vector<8x32xf32>, vector<32x128xf32>, vector<8x128xf32> -> vector<8x128xf32>
    %c0_127 = arith.constant 0 : index
    %c0_128 = arith.constant 0 : index
    %354 = vector.load %arg3[%c0_127, %c0_128] : memref<32x128xf32, #tpu.memory_space<vmem>>, vector<32x128xf32>
    %cst_129 = arith.constant dense<0.000000e+00> : vector<8x128xf32>
    %355 = tpu.matmul %315, %354, %cst_129 {dimension_numbers = #tpu.dot_dimension_numbers<[1], [0], [0], [1], [0, 0, 1, 1], [], []>} : vector<8x32xf32>, vector<32x128xf32>, vector<8x128xf32> -> vector<8x128xf32>
    %356 = arith.addf %353, %355 : vector<8x128xf32>
    %c0_130 = arith.constant 0 : index
    %c0_131 = arith.constant 0 : index
    %357 = vector.load %arg4[%c0_130, %c0_131] : memref<1x128xf32, #tpu.memory_space<vmem>>, vector<1x128xf32>
    %358 = vector.broadcast %357 : vector<1x128xf32> to vector<8x128xf32>
    %359 = arith.addf %356, %358 : vector<8x128xf32>
    %360 = vector.extract_strided_slice %359 {offsets = [0, 0], sizes = [8, 32], strides = [1, 1]} : vector<8x128xf32> to vector<8x32xf32>
    %361 = arith.negf %360 : vector<8x32xf32>
    %362 = math.exp %361 : vector<8x32xf32>
    %cst_132 = arith.constant 1.000000e+00 : f32
    %363 = vector.broadcast %cst_132 : f32 to vector<8x32xf32>
    %364 = arith.addf %363, %362 : vector<8x32xf32>
    %365 = arith.divf %363, %364 : vector<8x32xf32>
    %366 = vector.extract_strided_slice %359 {offsets = [0, 32], sizes = [8, 32], strides = [1, 1]} : vector<8x128xf32> to vector<8x32xf32>
    %367 = arith.negf %366 : vector<8x32xf32>
    %368 = math.exp %367 : vector<8x32xf32>
    %cst_133 = arith.constant 1.000000e+00 : f32
    %369 = vector.broadcast %cst_133 : f32 to vector<8x32xf32>
    %370 = arith.addf %369, %368 : vector<8x32xf32>
    %371 = arith.divf %369, %370 : vector<8x32xf32>
    %372 = vector.extract_strided_slice %359 {offsets = [0, 64], sizes = [8, 32], strides = [1, 1]} : vector<8x128xf32> to vector<8x32xf32>
    %373 = math.tanh %372 : vector<8x32xf32>
    %374 = vector.extract_strided_slice %359 {offsets = [0, 96], sizes = [8, 32], strides = [1, 1]} : vector<8x128xf32> to vector<8x32xf32>
    %375 = arith.negf %374 : vector<8x32xf32>
    %376 = math.exp %375 : vector<8x32xf32>
    %cst_134 = arith.constant 1.000000e+00 : f32
    %377 = vector.broadcast %cst_134 : f32 to vector<8x32xf32>
    %378 = arith.addf %377, %376 : vector<8x32xf32>
    %379 = arith.divf %377, %378 : vector<8x32xf32>
    %380 = arith.mulf %371, %313 : vector<8x32xf32>
    %381 = arith.mulf %365, %373 : vector<8x32xf32>
    %382 = arith.addf %380, %381 : vector<8x32xf32>
    %383 = math.tanh %382 : vector<8x32xf32>
    %384 = arith.mulf %379, %383 : vector<8x32xf32>
    %c0_135 = arith.constant 0 : index
    %c0_136 = arith.constant 0 : index
    %385 = vector.load %arg5[%c0_135, %c0_136] : memref<32x128xf32, #tpu.memory_space<vmem>>, vector<32x128xf32>
    %cst_137 = arith.constant dense<0.000000e+00> : vector<8x128xf32>
    %386 = tpu.matmul %384, %385, %cst_137 {dimension_numbers = #tpu.dot_dimension_numbers<[1], [0], [0], [1], [0, 0, 1, 1], [], []>} : vector<8x32xf32>, vector<32x128xf32>, vector<8x128xf32> -> vector<8x128xf32>
    %c0_138 = arith.constant 0 : index
    %c0_139 = arith.constant 0 : index
    %387 = vector.load %arg6[%c0_138, %c0_139] : memref<32x128xf32, #tpu.memory_space<vmem>>, vector<32x128xf32>
    %cst_140 = arith.constant dense<0.000000e+00> : vector<8x128xf32>
    %388 = tpu.matmul %348, %387, %cst_140 {dimension_numbers = #tpu.dot_dimension_numbers<[1], [0], [0], [1], [0, 0, 1, 1], [], []>} : vector<8x32xf32>, vector<32x128xf32>, vector<8x128xf32> -> vector<8x128xf32>
    %389 = arith.addf %386, %388 : vector<8x128xf32>
    %c0_141 = arith.constant 0 : index
    %c0_142 = arith.constant 0 : index
    %390 = vector.load %arg7[%c0_141, %c0_142] : memref<1x128xf32, #tpu.memory_space<vmem>>, vector<1x128xf32>
    %391 = vector.broadcast %390 : vector<1x128xf32> to vector<8x128xf32>
    %392 = arith.addf %389, %391 : vector<8x128xf32>
    %393 = vector.extract_strided_slice %392 {offsets = [0, 0], sizes = [8, 32], strides = [1, 1]} : vector<8x128xf32> to vector<8x32xf32>
    %394 = arith.negf %393 : vector<8x32xf32>
    %395 = math.exp %394 : vector<8x32xf32>
    %cst_143 = arith.constant 1.000000e+00 : f32
    %396 = vector.broadcast %cst_143 : f32 to vector<8x32xf32>
    %397 = arith.addf %396, %395 : vector<8x32xf32>
    %398 = arith.divf %396, %397 : vector<8x32xf32>
    %399 = vector.extract_strided_slice %392 {offsets = [0, 32], sizes = [8, 32], strides = [1, 1]} : vector<8x128xf32> to vector<8x32xf32>
    %400 = arith.negf %399 : vector<8x32xf32>
    %401 = math.exp %400 : vector<8x32xf32>
    %cst_144 = arith.constant 1.000000e+00 : f32
    %402 = vector.broadcast %cst_144 : f32 to vector<8x32xf32>
    %403 = arith.addf %402, %401 : vector<8x32xf32>
    %404 = arith.divf %402, %403 : vector<8x32xf32>
    %405 = vector.extract_strided_slice %392 {offsets = [0, 64], sizes = [8, 32], strides = [1, 1]} : vector<8x128xf32> to vector<8x32xf32>
    %406 = math.tanh %405 : vector<8x32xf32>
    %407 = vector.extract_strided_slice %392 {offsets = [0, 96], sizes = [8, 32], strides = [1, 1]} : vector<8x128xf32> to vector<8x32xf32>
    %408 = arith.negf %407 : vector<8x32xf32>
    %409 = math.exp %408 : vector<8x32xf32>
    %cst_145 = arith.constant 1.000000e+00 : f32
    %410 = vector.broadcast %cst_145 : f32 to vector<8x32xf32>
    %411 = arith.addf %410, %409 : vector<8x32xf32>
    %412 = arith.divf %410, %411 : vector<8x32xf32>
    %413 = arith.mulf %404, %346 : vector<8x32xf32>
    %414 = arith.mulf %398, %406 : vector<8x32xf32>
    %415 = arith.addf %413, %414 : vector<8x32xf32>
    %416 = math.tanh %415 : vector<8x32xf32>
    %417 = arith.mulf %412, %416 : vector<8x32xf32>
    %c6_i32 = arith.constant 6 : i32
    %418 = arith.index_cast %c6_i32 : i32 to index
    %c0_146 = arith.constant 0 : index
    %c0_147 = arith.constant 0 : index
    %419 = vector.load %arg0[%418, %c0_146, %c0_147] : memref<8x8x32xf32, #tpu.memory_space<vmem>>, vector<1x8x32xf32>
    %420 = vector.shape_cast %419 : vector<1x8x32xf32> to vector<8x32xf32>
    %c0_148 = arith.constant 0 : index
    %c0_149 = arith.constant 0 : index
    %421 = vector.load %arg2[%c0_148, %c0_149] : memref<32x128xf32, #tpu.memory_space<vmem>>, vector<32x128xf32>
    %cst_150 = arith.constant dense<0.000000e+00> : vector<8x128xf32>
    %422 = tpu.matmul %420, %421, %cst_150 {dimension_numbers = #tpu.dot_dimension_numbers<[1], [0], [0], [1], [0, 0, 1, 1], [], []>} : vector<8x32xf32>, vector<32x128xf32>, vector<8x128xf32> -> vector<8x128xf32>
    %c0_151 = arith.constant 0 : index
    %c0_152 = arith.constant 0 : index
    %423 = vector.load %arg3[%c0_151, %c0_152] : memref<32x128xf32, #tpu.memory_space<vmem>>, vector<32x128xf32>
    %cst_153 = arith.constant dense<0.000000e+00> : vector<8x128xf32>
    %424 = tpu.matmul %384, %423, %cst_153 {dimension_numbers = #tpu.dot_dimension_numbers<[1], [0], [0], [1], [0, 0, 1, 1], [], []>} : vector<8x32xf32>, vector<32x128xf32>, vector<8x128xf32> -> vector<8x128xf32>
    %425 = arith.addf %422, %424 : vector<8x128xf32>
    %c0_154 = arith.constant 0 : index
    %c0_155 = arith.constant 0 : index
    %426 = vector.load %arg4[%c0_154, %c0_155] : memref<1x128xf32, #tpu.memory_space<vmem>>, vector<1x128xf32>
    %427 = vector.broadcast %426 : vector<1x128xf32> to vector<8x128xf32>
    %428 = arith.addf %425, %427 : vector<8x128xf32>
    %429 = vector.extract_strided_slice %428 {offsets = [0, 0], sizes = [8, 32], strides = [1, 1]} : vector<8x128xf32> to vector<8x32xf32>
    %430 = arith.negf %429 : vector<8x32xf32>
    %431 = math.exp %430 : vector<8x32xf32>
    %cst_156 = arith.constant 1.000000e+00 : f32
    %432 = vector.broadcast %cst_156 : f32 to vector<8x32xf32>
    %433 = arith.addf %432, %431 : vector<8x32xf32>
    %434 = arith.divf %432, %433 : vector<8x32xf32>
    %435 = vector.extract_strided_slice %428 {offsets = [0, 32], sizes = [8, 32], strides = [1, 1]} : vector<8x128xf32> to vector<8x32xf32>
    %436 = arith.negf %435 : vector<8x32xf32>
    %437 = math.exp %436 : vector<8x32xf32>
    %cst_157 = arith.constant 1.000000e+00 : f32
    %438 = vector.broadcast %cst_157 : f32 to vector<8x32xf32>
    %439 = arith.addf %438, %437 : vector<8x32xf32>
    %440 = arith.divf %438, %439 : vector<8x32xf32>
    %441 = vector.extract_strided_slice %428 {offsets = [0, 64], sizes = [8, 32], strides = [1, 1]} : vector<8x128xf32> to vector<8x32xf32>
    %442 = math.tanh %441 : vector<8x32xf32>
    %443 = vector.extract_strided_slice %428 {offsets = [0, 96], sizes = [8, 32], strides = [1, 1]} : vector<8x128xf32> to vector<8x32xf32>
    %444 = arith.negf %443 : vector<8x32xf32>
    %445 = math.exp %444 : vector<8x32xf32>
    %cst_158 = arith.constant 1.000000e+00 : f32
    %446 = vector.broadcast %cst_158 : f32 to vector<8x32xf32>
    %447 = arith.addf %446, %445 : vector<8x32xf32>
    %448 = arith.divf %446, %447 : vector<8x32xf32>
    %449 = arith.mulf %440, %382 : vector<8x32xf32>
    %450 = arith.mulf %434, %442 : vector<8x32xf32>
    %451 = arith.addf %449, %450 : vector<8x32xf32>
    %452 = math.tanh %451 : vector<8x32xf32>
    %453 = arith.mulf %448, %452 : vector<8x32xf32>
    %c0_159 = arith.constant 0 : index
    %c0_160 = arith.constant 0 : index
    %454 = vector.load %arg5[%c0_159, %c0_160] : memref<32x128xf32, #tpu.memory_space<vmem>>, vector<32x128xf32>
    %cst_161 = arith.constant dense<0.000000e+00> : vector<8x128xf32>
    %455 = tpu.matmul %453, %454, %cst_161 {dimension_numbers = #tpu.dot_dimension_numbers<[1], [0], [0], [1], [0, 0, 1, 1], [], []>} : vector<8x32xf32>, vector<32x128xf32>, vector<8x128xf32> -> vector<8x128xf32>
    %c0_162 = arith.constant 0 : index
    %c0_163 = arith.constant 0 : index
    %456 = vector.load %arg6[%c0_162, %c0_163] : memref<32x128xf32, #tpu.memory_space<vmem>>, vector<32x128xf32>
    %cst_164 = arith.constant dense<0.000000e+00> : vector<8x128xf32>
    %457 = tpu.matmul %417, %456, %cst_164 {dimension_numbers = #tpu.dot_dimension_numbers<[1], [0], [0], [1], [0, 0, 1, 1], [], []>} : vector<8x32xf32>, vector<32x128xf32>, vector<8x128xf32> -> vector<8x128xf32>
    %458 = arith.addf %455, %457 : vector<8x128xf32>
    %c0_165 = arith.constant 0 : index
    %c0_166 = arith.constant 0 : index
    %459 = vector.load %arg7[%c0_165, %c0_166] : memref<1x128xf32, #tpu.memory_space<vmem>>, vector<1x128xf32>
    %460 = vector.broadcast %459 : vector<1x128xf32> to vector<8x128xf32>
    %461 = arith.addf %458, %460 : vector<8x128xf32>
    %462 = vector.extract_strided_slice %461 {offsets = [0, 0], sizes = [8, 32], strides = [1, 1]} : vector<8x128xf32> to vector<8x32xf32>
    %463 = arith.negf %462 : vector<8x32xf32>
    %464 = math.exp %463 : vector<8x32xf32>
    %cst_167 = arith.constant 1.000000e+00 : f32
    %465 = vector.broadcast %cst_167 : f32 to vector<8x32xf32>
    %466 = arith.addf %465, %464 : vector<8x32xf32>
    %467 = arith.divf %465, %466 : vector<8x32xf32>
    %468 = vector.extract_strided_slice %461 {offsets = [0, 32], sizes = [8, 32], strides = [1, 1]} : vector<8x128xf32> to vector<8x32xf32>
    %469 = arith.negf %468 : vector<8x32xf32>
    %470 = math.exp %469 : vector<8x32xf32>
    %cst_168 = arith.constant 1.000000e+00 : f32
    %471 = vector.broadcast %cst_168 : f32 to vector<8x32xf32>
    %472 = arith.addf %471, %470 : vector<8x32xf32>
    %473 = arith.divf %471, %472 : vector<8x32xf32>
    %474 = vector.extract_strided_slice %461 {offsets = [0, 64], sizes = [8, 32], strides = [1, 1]} : vector<8x128xf32> to vector<8x32xf32>
    %475 = math.tanh %474 : vector<8x32xf32>
    %476 = vector.extract_strided_slice %461 {offsets = [0, 96], sizes = [8, 32], strides = [1, 1]} : vector<8x128xf32> to vector<8x32xf32>
    %477 = arith.negf %476 : vector<8x32xf32>
    %478 = math.exp %477 : vector<8x32xf32>
    %cst_169 = arith.constant 1.000000e+00 : f32
    %479 = vector.broadcast %cst_169 : f32 to vector<8x32xf32>
    %480 = arith.addf %479, %478 : vector<8x32xf32>
    %481 = arith.divf %479, %480 : vector<8x32xf32>
    %482 = arith.mulf %473, %415 : vector<8x32xf32>
    %483 = arith.mulf %467, %475 : vector<8x32xf32>
    %484 = arith.addf %482, %483 : vector<8x32xf32>
    %485 = math.tanh %484 : vector<8x32xf32>
    %486 = arith.mulf %481, %485 : vector<8x32xf32>
    %c7_i32 = arith.constant 7 : i32
    %487 = arith.index_cast %c7_i32 : i32 to index
    %c0_170 = arith.constant 0 : index
    %c0_171 = arith.constant 0 : index
    %488 = vector.load %arg0[%487, %c0_170, %c0_171] : memref<8x8x32xf32, #tpu.memory_space<vmem>>, vector<1x8x32xf32>
    %489 = vector.shape_cast %488 : vector<1x8x32xf32> to vector<8x32xf32>
    %c0_172 = arith.constant 0 : index
    %c0_173 = arith.constant 0 : index
    %490 = vector.load %arg2[%c0_172, %c0_173] : memref<32x128xf32, #tpu.memory_space<vmem>>, vector<32x128xf32>
    %cst_174 = arith.constant dense<0.000000e+00> : vector<8x128xf32>
    %491 = tpu.matmul %489, %490, %cst_174 {dimension_numbers = #tpu.dot_dimension_numbers<[1], [0], [0], [1], [0, 0, 1, 1], [], []>} : vector<8x32xf32>, vector<32x128xf32>, vector<8x128xf32> -> vector<8x128xf32>
    %c0_175 = arith.constant 0 : index
    %c0_176 = arith.constant 0 : index
    %492 = vector.load %arg3[%c0_175, %c0_176] : memref<32x128xf32, #tpu.memory_space<vmem>>, vector<32x128xf32>
    %cst_177 = arith.constant dense<0.000000e+00> : vector<8x128xf32>
    %493 = tpu.matmul %453, %492, %cst_177 {dimension_numbers = #tpu.dot_dimension_numbers<[1], [0], [0], [1], [0, 0, 1, 1], [], []>} : vector<8x32xf32>, vector<32x128xf32>, vector<8x128xf32> -> vector<8x128xf32>
    %494 = arith.addf %491, %493 : vector<8x128xf32>
    %c0_178 = arith.constant 0 : index
    %c0_179 = arith.constant 0 : index
    %495 = vector.load %arg4[%c0_178, %c0_179] : memref<1x128xf32, #tpu.memory_space<vmem>>, vector<1x128xf32>
    %496 = vector.broadcast %495 : vector<1x128xf32> to vector<8x128xf32>
    %497 = arith.addf %494, %496 : vector<8x128xf32>
    %498 = vector.extract_strided_slice %497 {offsets = [0, 0], sizes = [8, 32], strides = [1, 1]} : vector<8x128xf32> to vector<8x32xf32>
    %499 = arith.negf %498 : vector<8x32xf32>
    %500 = math.exp %499 : vector<8x32xf32>
    %cst_180 = arith.constant 1.000000e+00 : f32
    %501 = vector.broadcast %cst_180 : f32 to vector<8x32xf32>
    %502 = arith.addf %501, %500 : vector<8x32xf32>
    %503 = arith.divf %501, %502 : vector<8x32xf32>
    %504 = vector.extract_strided_slice %497 {offsets = [0, 32], sizes = [8, 32], strides = [1, 1]} : vector<8x128xf32> to vector<8x32xf32>
    %505 = arith.negf %504 : vector<8x32xf32>
    %506 = math.exp %505 : vector<8x32xf32>
    %cst_181 = arith.constant 1.000000e+00 : f32
    %507 = vector.broadcast %cst_181 : f32 to vector<8x32xf32>
    %508 = arith.addf %507, %506 : vector<8x32xf32>
    %509 = arith.divf %507, %508 : vector<8x32xf32>
    %510 = vector.extract_strided_slice %497 {offsets = [0, 64], sizes = [8, 32], strides = [1, 1]} : vector<8x128xf32> to vector<8x32xf32>
    %511 = math.tanh %510 : vector<8x32xf32>
    %512 = vector.extract_strided_slice %497 {offsets = [0, 96], sizes = [8, 32], strides = [1, 1]} : vector<8x128xf32> to vector<8x32xf32>
    %513 = arith.negf %512 : vector<8x32xf32>
    %514 = math.exp %513 : vector<8x32xf32>
    %cst_182 = arith.constant 1.000000e+00 : f32
    %515 = vector.broadcast %cst_182 : f32 to vector<8x32xf32>
    %516 = arith.addf %515, %514 : vector<8x32xf32>
    %517 = arith.divf %515, %516 : vector<8x32xf32>
    %518 = arith.mulf %509, %451 : vector<8x32xf32>
    %519 = arith.mulf %503, %511 : vector<8x32xf32>
    %520 = arith.addf %518, %519 : vector<8x32xf32>
    %521 = math.tanh %520 : vector<8x32xf32>
    %522 = arith.mulf %517, %521 : vector<8x32xf32>
    %c0_183 = arith.constant 0 : index
    %c0_184 = arith.constant 0 : index
    %523 = vector.load %arg5[%c0_183, %c0_184] : memref<32x128xf32, #tpu.memory_space<vmem>>, vector<32x128xf32>
    %cst_185 = arith.constant dense<0.000000e+00> : vector<8x128xf32>
    %524 = tpu.matmul %522, %523, %cst_185 {dimension_numbers = #tpu.dot_dimension_numbers<[1], [0], [0], [1], [0, 0, 1, 1], [], []>} : vector<8x32xf32>, vector<32x128xf32>, vector<8x128xf32> -> vector<8x128xf32>
    %c0_186 = arith.constant 0 : index
    %c0_187 = arith.constant 0 : index
    %525 = vector.load %arg6[%c0_186, %c0_187] : memref<32x128xf32, #tpu.memory_space<vmem>>, vector<32x128xf32>
    %cst_188 = arith.constant dense<0.000000e+00> : vector<8x128xf32>
    %526 = tpu.matmul %486, %525, %cst_188 {dimension_numbers = #tpu.dot_dimension_numbers<[1], [0], [0], [1], [0, 0, 1, 1], [], []>} : vector<8x32xf32>, vector<32x128xf32>, vector<8x128xf32> -> vector<8x128xf32>
    %527 = arith.addf %524, %526 : vector<8x128xf32>
    %c0_189 = arith.constant 0 : index
    %c0_190 = arith.constant 0 : index
    %528 = vector.load %arg7[%c0_189, %c0_190] : memref<1x128xf32, #tpu.memory_space<vmem>>, vector<1x128xf32>
    %529 = vector.broadcast %528 : vector<1x128xf32> to vector<8x128xf32>
    %530 = arith.addf %527, %529 : vector<8x128xf32>
    %531 = vector.extract_strided_slice %530 {offsets = [0, 0], sizes = [8, 32], strides = [1, 1]} : vector<8x128xf32> to vector<8x32xf32>
    %532 = arith.negf %531 : vector<8x32xf32>
    %533 = math.exp %532 : vector<8x32xf32>
    %cst_191 = arith.constant 1.000000e+00 : f32
    %534 = vector.broadcast %cst_191 : f32 to vector<8x32xf32>
    %535 = arith.addf %534, %533 : vector<8x32xf32>
    %536 = arith.divf %534, %535 : vector<8x32xf32>
    %537 = vector.extract_strided_slice %530 {offsets = [0, 32], sizes = [8, 32], strides = [1, 1]} : vector<8x128xf32> to vector<8x32xf32>
    %538 = arith.negf %537 : vector<8x32xf32>
    %539 = math.exp %538 : vector<8x32xf32>
    %cst_192 = arith.constant 1.000000e+00 : f32
    %540 = vector.broadcast %cst_192 : f32 to vector<8x32xf32>
    %541 = arith.addf %540, %539 : vector<8x32xf32>
    %542 = arith.divf %540, %541 : vector<8x32xf32>
    %543 = vector.extract_strided_slice %530 {offsets = [0, 64], sizes = [8, 32], strides = [1, 1]} : vector<8x128xf32> to vector<8x32xf32>
    %544 = math.tanh %543 : vector<8x32xf32>
    %545 = vector.extract_strided_slice %530 {offsets = [0, 96], sizes = [8, 32], strides = [1, 1]} : vector<8x128xf32> to vector<8x32xf32>
    %546 = arith.negf %545 : vector<8x32xf32>
    %547 = math.exp %546 : vector<8x32xf32>
    %cst_193 = arith.constant 1.000000e+00 : f32
    %548 = vector.broadcast %cst_193 : f32 to vector<8x32xf32>
    %549 = arith.addf %548, %547 : vector<8x32xf32>
    %550 = arith.divf %548, %549 : vector<8x32xf32>
    %551 = arith.mulf %542, %484 : vector<8x32xf32>
    %552 = arith.mulf %536, %544 : vector<8x32xf32>
    %553 = arith.addf %551, %552 : vector<8x32xf32>
    %554 = math.tanh %553 : vector<8x32xf32>
    %555 = arith.mulf %550, %554 : vector<8x32xf32>
    %c8_i32 = arith.constant 8 : i32
    %cst_194 = arith.constant 0.000000e+00 : f32
    %556 = vector.broadcast %cst_194 : f32 to vector<8x64xf32>
    %cst_195 = arith.constant 0.000000e+00 : f32
    %557 = vector.broadcast %cst_195 : f32 to vector<8x64xf32>
    %cst_196 = arith.constant 0.000000e+00 : f32
    %558 = vector.broadcast %cst_196 : f32 to vector<8x64xf32>
    %cst_197 = arith.constant 0.000000e+00 : f32
    %559 = vector.broadcast %cst_197 : f32 to vector<8x64xf32>
    %c0_i32_198 = arith.constant 0 : i32
    %560 = arith.index_cast %c0_i32_198 : i32 to index
    %c0_199 = arith.constant 0 : index
    %c0_200 = arith.constant 0 : index
    %561 = vector.load %arg1[%560, %c0_199, %c0_200] : memref<16x8x32xf32, #tpu.memory_space<vmem>>, vector<1x8x32xf32>
    %562 = vector.shape_cast %561 : vector<1x8x32xf32> to vector<8x32xf32>
    %c0_201 = arith.constant 0 : index
    %c0_202 = arith.constant 0 : index
    %563 = vector.load %arg8[%c0_201, %c0_202] : memref<32x256xf32, #tpu.memory_space<vmem>>, vector<32x256xf32>
    %cst_203 = arith.constant dense<0.000000e+00> : vector<8x256xf32>
    %564 = tpu.matmul %562, %563, %cst_203 {dimension_numbers = #tpu.dot_dimension_numbers<[1], [0], [0], [1], [0, 0, 1, 1], [], []>} : vector<8x32xf32>, vector<32x256xf32>, vector<8x256xf32> -> vector<8x256xf32>
    %c0_204 = arith.constant 0 : index
    %c0_205 = arith.constant 0 : index
    %565 = vector.load %arg9[%c0_204, %c0_205] : memref<64x256xf32, #tpu.memory_space<vmem>>, vector<64x256xf32>
    %cst_206 = arith.constant dense<0.000000e+00> : vector<8x256xf32>
    %566 = tpu.matmul %556, %565, %cst_206 {dimension_numbers = #tpu.dot_dimension_numbers<[1], [0], [0], [1], [0, 0, 1, 1], [], []>} : vector<8x64xf32>, vector<64x256xf32>, vector<8x256xf32> -> vector<8x256xf32>
    %567 = arith.addf %564, %566 : vector<8x256xf32>
    %c0_207 = arith.constant 0 : index
    %c0_208 = arith.constant 0 : index
    %568 = vector.load %arg10[%c0_207, %c0_208] : memref<1x256xf32, #tpu.memory_space<vmem>>, vector<1x256xf32>
    %569 = vector.broadcast %568 : vector<1x256xf32> to vector<8x256xf32>
    %570 = arith.addf %567, %569 : vector<8x256xf32>
    %571 = vector.extract_strided_slice %570 {offsets = [0, 0], sizes = [8, 64], strides = [1, 1]} : vector<8x256xf32> to vector<8x64xf32>
    %572 = arith.negf %571 : vector<8x64xf32>
    %573 = math.exp %572 : vector<8x64xf32>
    %cst_209 = arith.constant 1.000000e+00 : f32
    %574 = vector.broadcast %cst_209 : f32 to vector<8x64xf32>
    %575 = arith.addf %574, %573 : vector<8x64xf32>
    %576 = arith.divf %574, %575 : vector<8x64xf32>
    %577 = vector.extract_strided_slice %570 {offsets = [0, 64], sizes = [8, 64], strides = [1, 1]} : vector<8x256xf32> to vector<8x64xf32>
    %578 = arith.negf %577 : vector<8x64xf32>
    %579 = math.exp %578 : vector<8x64xf32>
    %cst_210 = arith.constant 1.000000e+00 : f32
    %580 = vector.broadcast %cst_210 : f32 to vector<8x64xf32>
    %581 = arith.addf %580, %579 : vector<8x64xf32>
    %582 = arith.divf %580, %581 : vector<8x64xf32>
    %583 = vector.extract_strided_slice %570 {offsets = [0, 128], sizes = [8, 64], strides = [1, 1]} : vector<8x256xf32> to vector<8x64xf32>
    %584 = math.tanh %583 : vector<8x64xf32>
    %585 = vector.extract_strided_slice %570 {offsets = [0, 192], sizes = [8, 64], strides = [1, 1]} : vector<8x256xf32> to vector<8x64xf32>
    %586 = arith.negf %585 : vector<8x64xf32>
    %587 = math.exp %586 : vector<8x64xf32>
    %cst_211 = arith.constant 1.000000e+00 : f32
    %588 = vector.broadcast %cst_211 : f32 to vector<8x64xf32>
    %589 = arith.addf %588, %587 : vector<8x64xf32>
    %590 = arith.divf %588, %589 : vector<8x64xf32>
    %591 = arith.mulf %582, %557 : vector<8x64xf32>
    %592 = arith.mulf %576, %584 : vector<8x64xf32>
    %593 = arith.addf %591, %592 : vector<8x64xf32>
    %594 = math.tanh %593 : vector<8x64xf32>
    %595 = arith.mulf %590, %594 : vector<8x64xf32>
    %c0_212 = arith.constant 0 : index
    %c0_213 = arith.constant 0 : index
    %596 = vector.load %arg11[%c0_212, %c0_213] : memref<64x256xf32, #tpu.memory_space<vmem>>, vector<64x256xf32>
    %cst_214 = arith.constant dense<0.000000e+00> : vector<8x256xf32>
    %597 = tpu.matmul %595, %596, %cst_214 {dimension_numbers = #tpu.dot_dimension_numbers<[1], [0], [0], [1], [0, 0, 1, 1], [], []>} : vector<8x64xf32>, vector<64x256xf32>, vector<8x256xf32> -> vector<8x256xf32>
    %c0_215 = arith.constant 0 : index
    %c0_216 = arith.constant 0 : index
    %598 = vector.load %arg12[%c0_215, %c0_216] : memref<64x256xf32, #tpu.memory_space<vmem>>, vector<64x256xf32>
    %cst_217 = arith.constant dense<0.000000e+00> : vector<8x256xf32>
    %599 = tpu.matmul %558, %598, %cst_217 {dimension_numbers = #tpu.dot_dimension_numbers<[1], [0], [0], [1], [0, 0, 1, 1], [], []>} : vector<8x64xf32>, vector<64x256xf32>, vector<8x256xf32> -> vector<8x256xf32>
    %600 = arith.addf %597, %599 : vector<8x256xf32>
    %c0_218 = arith.constant 0 : index
    %c0_219 = arith.constant 0 : index
    %601 = vector.load %arg13[%c0_218, %c0_219] : memref<1x256xf32, #tpu.memory_space<vmem>>, vector<1x256xf32>
    %602 = vector.broadcast %601 : vector<1x256xf32> to vector<8x256xf32>
    %603 = arith.addf %600, %602 : vector<8x256xf32>
    %604 = vector.extract_strided_slice %603 {offsets = [0, 0], sizes = [8, 64], strides = [1, 1]} : vector<8x256xf32> to vector<8x64xf32>
    %605 = arith.negf %604 : vector<8x64xf32>
    %606 = math.exp %605 : vector<8x64xf32>
    %cst_220 = arith.constant 1.000000e+00 : f32
    %607 = vector.broadcast %cst_220 : f32 to vector<8x64xf32>
    %608 = arith.addf %607, %606 : vector<8x64xf32>
    %609 = arith.divf %607, %608 : vector<8x64xf32>
    %610 = vector.extract_strided_slice %603 {offsets = [0, 64], sizes = [8, 64], strides = [1, 1]} : vector<8x256xf32> to vector<8x64xf32>
    %611 = arith.negf %610 : vector<8x64xf32>
    %612 = math.exp %611 : vector<8x64xf32>
    %cst_221 = arith.constant 1.000000e+00 : f32
    %613 = vector.broadcast %cst_221 : f32 to vector<8x64xf32>
    %614 = arith.addf %613, %612 : vector<8x64xf32>
    %615 = arith.divf %613, %614 : vector<8x64xf32>
    %616 = vector.extract_strided_slice %603 {offsets = [0, 128], sizes = [8, 64], strides = [1, 1]} : vector<8x256xf32> to vector<8x64xf32>
    %617 = math.tanh %616 : vector<8x64xf32>
    %618 = vector.extract_strided_slice %603 {offsets = [0, 192], sizes = [8, 64], strides = [1, 1]} : vector<8x256xf32> to vector<8x64xf32>
    %619 = arith.negf %618 : vector<8x64xf32>
    %620 = math.exp %619 : vector<8x64xf32>
    %cst_222 = arith.constant 1.000000e+00 : f32
    %621 = vector.broadcast %cst_222 : f32 to vector<8x64xf32>
    %622 = arith.addf %621, %620 : vector<8x64xf32>
    %623 = arith.divf %621, %622 : vector<8x64xf32>
    %624 = arith.mulf %615, %559 : vector<8x64xf32>
    %625 = arith.mulf %609, %617 : vector<8x64xf32>
    %626 = arith.addf %624, %625 : vector<8x64xf32>
    %627 = math.tanh %626 : vector<8x64xf32>
    %628 = arith.mulf %623, %627 : vector<8x64xf32>
    %c1_i32_223 = arith.constant 1 : i32
    %629 = arith.index_cast %c1_i32_223 : i32 to index
    %c0_224 = arith.constant 0 : index
    %c0_225 = arith.constant 0 : index
    %630 = vector.load %arg1[%629, %c0_224, %c0_225] : memref<16x8x32xf32, #tpu.memory_space<vmem>>, vector<1x8x32xf32>
    %631 = vector.shape_cast %630 : vector<1x8x32xf32> to vector<8x32xf32>
    %c0_226 = arith.constant 0 : index
    %c0_227 = arith.constant 0 : index
    %632 = vector.load %arg8[%c0_226, %c0_227] : memref<32x256xf32, #tpu.memory_space<vmem>>, vector<32x256xf32>
    %cst_228 = arith.constant dense<0.000000e+00> : vector<8x256xf32>
    %633 = tpu.matmul %631, %632, %cst_228 {dimension_numbers = #tpu.dot_dimension_numbers<[1], [0], [0], [1], [0, 0, 1, 1], [], []>} : vector<8x32xf32>, vector<32x256xf32>, vector<8x256xf32> -> vector<8x256xf32>
    %c0_229 = arith.constant 0 : index
    %c0_230 = arith.constant 0 : index
    %634 = vector.load %arg9[%c0_229, %c0_230] : memref<64x256xf32, #tpu.memory_space<vmem>>, vector<64x256xf32>
    %cst_231 = arith.constant dense<0.000000e+00> : vector<8x256xf32>
    %635 = tpu.matmul %595, %634, %cst_231 {dimension_numbers = #tpu.dot_dimension_numbers<[1], [0], [0], [1], [0, 0, 1, 1], [], []>} : vector<8x64xf32>, vector<64x256xf32>, vector<8x256xf32> -> vector<8x256xf32>
    %636 = arith.addf %633, %635 : vector<8x256xf32>
    %c0_232 = arith.constant 0 : index
    %c0_233 = arith.constant 0 : index
    %637 = vector.load %arg10[%c0_232, %c0_233] : memref<1x256xf32, #tpu.memory_space<vmem>>, vector<1x256xf32>
    %638 = vector.broadcast %637 : vector<1x256xf32> to vector<8x256xf32>
    %639 = arith.addf %636, %638 : vector<8x256xf32>
    %640 = vector.extract_strided_slice %639 {offsets = [0, 0], sizes = [8, 64], strides = [1, 1]} : vector<8x256xf32> to vector<8x64xf32>
    %641 = arith.negf %640 : vector<8x64xf32>
    %642 = math.exp %641 : vector<8x64xf32>
    %cst_234 = arith.constant 1.000000e+00 : f32
    %643 = vector.broadcast %cst_234 : f32 to vector<8x64xf32>
    %644 = arith.addf %643, %642 : vector<8x64xf32>
    %645 = arith.divf %643, %644 : vector<8x64xf32>
    %646 = vector.extract_strided_slice %639 {offsets = [0, 64], sizes = [8, 64], strides = [1, 1]} : vector<8x256xf32> to vector<8x64xf32>
    %647 = arith.negf %646 : vector<8x64xf32>
    %648 = math.exp %647 : vector<8x64xf32>
    %cst_235 = arith.constant 1.000000e+00 : f32
    %649 = vector.broadcast %cst_235 : f32 to vector<8x64xf32>
    %650 = arith.addf %649, %648 : vector<8x64xf32>
    %651 = arith.divf %649, %650 : vector<8x64xf32>
    %652 = vector.extract_strided_slice %639 {offsets = [0, 128], sizes = [8, 64], strides = [1, 1]} : vector<8x256xf32> to vector<8x64xf32>
    %653 = math.tanh %652 : vector<8x64xf32>
    %654 = vector.extract_strided_slice %639 {offsets = [0, 192], sizes = [8, 64], strides = [1, 1]} : vector<8x256xf32> to vector<8x64xf32>
    %655 = arith.negf %654 : vector<8x64xf32>
    %656 = math.exp %655 : vector<8x64xf32>
    %cst_236 = arith.constant 1.000000e+00 : f32
    %657 = vector.broadcast %cst_236 : f32 to vector<8x64xf32>
    %658 = arith.addf %657, %656 : vector<8x64xf32>
    %659 = arith.divf %657, %658 : vector<8x64xf32>
    %660 = arith.mulf %651, %593 : vector<8x64xf32>
    %661 = arith.mulf %645, %653 : vector<8x64xf32>
    %662 = arith.addf %660, %661 : vector<8x64xf32>
    %663 = math.tanh %662 : vector<8x64xf32>
    %664 = arith.mulf %659, %663 : vector<8x64xf32>
    %c0_237 = arith.constant 0 : index
    %c0_238 = arith.constant 0 : index
    %665 = vector.load %arg11[%c0_237, %c0_238] : memref<64x256xf32, #tpu.memory_space<vmem>>, vector<64x256xf32>
    %cst_239 = arith.constant dense<0.000000e+00> : vector<8x256xf32>
    %666 = tpu.matmul %664, %665, %cst_239 {dimension_numbers = #tpu.dot_dimension_numbers<[1], [0], [0], [1], [0, 0, 1, 1], [], []>} : vector<8x64xf32>, vector<64x256xf32>, vector<8x256xf32> -> vector<8x256xf32>
    %c0_240 = arith.constant 0 : index
    %c0_241 = arith.constant 0 : index
    %667 = vector.load %arg12[%c0_240, %c0_241] : memref<64x256xf32, #tpu.memory_space<vmem>>, vector<64x256xf32>
    %cst_242 = arith.constant dense<0.000000e+00> : vector<8x256xf32>
    %668 = tpu.matmul %628, %667, %cst_242 {dimension_numbers = #tpu.dot_dimension_numbers<[1], [0], [0], [1], [0, 0, 1, 1], [], []>} : vector<8x64xf32>, vector<64x256xf32>, vector<8x256xf32> -> vector<8x256xf32>
    %669 = arith.addf %666, %668 : vector<8x256xf32>
    %c0_243 = arith.constant 0 : index
    %c0_244 = arith.constant 0 : index
    %670 = vector.load %arg13[%c0_243, %c0_244] : memref<1x256xf32, #tpu.memory_space<vmem>>, vector<1x256xf32>
    %671 = vector.broadcast %670 : vector<1x256xf32> to vector<8x256xf32>
    %672 = arith.addf %669, %671 : vector<8x256xf32>
    %673 = vector.extract_strided_slice %672 {offsets = [0, 0], sizes = [8, 64], strides = [1, 1]} : vector<8x256xf32> to vector<8x64xf32>
    %674 = arith.negf %673 : vector<8x64xf32>
    %675 = math.exp %674 : vector<8x64xf32>
    %cst_245 = arith.constant 1.000000e+00 : f32
    %676 = vector.broadcast %cst_245 : f32 to vector<8x64xf32>
    %677 = arith.addf %676, %675 : vector<8x64xf32>
    %678 = arith.divf %676, %677 : vector<8x64xf32>
    %679 = vector.extract_strided_slice %672 {offsets = [0, 64], sizes = [8, 64], strides = [1, 1]} : vector<8x256xf32> to vector<8x64xf32>
    %680 = arith.negf %679 : vector<8x64xf32>
    %681 = math.exp %680 : vector<8x64xf32>
    %cst_246 = arith.constant 1.000000e+00 : f32
    %682 = vector.broadcast %cst_246 : f32 to vector<8x64xf32>
    %683 = arith.addf %682, %681 : vector<8x64xf32>
    %684 = arith.divf %682, %683 : vector<8x64xf32>
    %685 = vector.extract_strided_slice %672 {offsets = [0, 128], sizes = [8, 64], strides = [1, 1]} : vector<8x256xf32> to vector<8x64xf32>
    %686 = math.tanh %685 : vector<8x64xf32>
    %687 = vector.extract_strided_slice %672 {offsets = [0, 192], sizes = [8, 64], strides = [1, 1]} : vector<8x256xf32> to vector<8x64xf32>
    %688 = arith.negf %687 : vector<8x64xf32>
    %689 = math.exp %688 : vector<8x64xf32>
    %cst_247 = arith.constant 1.000000e+00 : f32
    %690 = vector.broadcast %cst_247 : f32 to vector<8x64xf32>
    %691 = arith.addf %690, %689 : vector<8x64xf32>
    %692 = arith.divf %690, %691 : vector<8x64xf32>
    %693 = arith.mulf %684, %626 : vector<8x64xf32>
    %694 = arith.mulf %678, %686 : vector<8x64xf32>
    %695 = arith.addf %693, %694 : vector<8x64xf32>
    %696 = math.tanh %695 : vector<8x64xf32>
    %697 = arith.mulf %692, %696 : vector<8x64xf32>
    %c2_i32_248 = arith.constant 2 : i32
    %698 = arith.index_cast %c2_i32_248 : i32 to index
    %c0_249 = arith.constant 0 : index
    %c0_250 = arith.constant 0 : index
    %699 = vector.load %arg1[%698, %c0_249, %c0_250] : memref<16x8x32xf32, #tpu.memory_space<vmem>>, vector<1x8x32xf32>
    %700 = vector.shape_cast %699 : vector<1x8x32xf32> to vector<8x32xf32>
    %c0_251 = arith.constant 0 : index
    %c0_252 = arith.constant 0 : index
    %701 = vector.load %arg8[%c0_251, %c0_252] : memref<32x256xf32, #tpu.memory_space<vmem>>, vector<32x256xf32>
    %cst_253 = arith.constant dense<0.000000e+00> : vector<8x256xf32>
    %702 = tpu.matmul %700, %701, %cst_253 {dimension_numbers = #tpu.dot_dimension_numbers<[1], [0], [0], [1], [0, 0, 1, 1], [], []>} : vector<8x32xf32>, vector<32x256xf32>, vector<8x256xf32> -> vector<8x256xf32>
    %c0_254 = arith.constant 0 : index
    %c0_255 = arith.constant 0 : index
    %703 = vector.load %arg9[%c0_254, %c0_255] : memref<64x256xf32, #tpu.memory_space<vmem>>, vector<64x256xf32>
    %cst_256 = arith.constant dense<0.000000e+00> : vector<8x256xf32>
    %704 = tpu.matmul %664, %703, %cst_256 {dimension_numbers = #tpu.dot_dimension_numbers<[1], [0], [0], [1], [0, 0, 1, 1], [], []>} : vector<8x64xf32>, vector<64x256xf32>, vector<8x256xf32> -> vector<8x256xf32>
    %705 = arith.addf %702, %704 : vector<8x256xf32>
    %c0_257 = arith.constant 0 : index
    %c0_258 = arith.constant 0 : index
    %706 = vector.load %arg10[%c0_257, %c0_258] : memref<1x256xf32, #tpu.memory_space<vmem>>, vector<1x256xf32>
    %707 = vector.broadcast %706 : vector<1x256xf32> to vector<8x256xf32>
    %708 = arith.addf %705, %707 : vector<8x256xf32>
    %709 = vector.extract_strided_slice %708 {offsets = [0, 0], sizes = [8, 64], strides = [1, 1]} : vector<8x256xf32> to vector<8x64xf32>
    %710 = arith.negf %709 : vector<8x64xf32>
    %711 = math.exp %710 : vector<8x64xf32>
    %cst_259 = arith.constant 1.000000e+00 : f32
    %712 = vector.broadcast %cst_259 : f32 to vector<8x64xf32>
    %713 = arith.addf %712, %711 : vector<8x64xf32>
    %714 = arith.divf %712, %713 : vector<8x64xf32>
    %715 = vector.extract_strided_slice %708 {offsets = [0, 64], sizes = [8, 64], strides = [1, 1]} : vector<8x256xf32> to vector<8x64xf32>
    %716 = arith.negf %715 : vector<8x64xf32>
    %717 = math.exp %716 : vector<8x64xf32>
    %cst_260 = arith.constant 1.000000e+00 : f32
    %718 = vector.broadcast %cst_260 : f32 to vector<8x64xf32>
    %719 = arith.addf %718, %717 : vector<8x64xf32>
    %720 = arith.divf %718, %719 : vector<8x64xf32>
    %721 = vector.extract_strided_slice %708 {offsets = [0, 128], sizes = [8, 64], strides = [1, 1]} : vector<8x256xf32> to vector<8x64xf32>
    %722 = math.tanh %721 : vector<8x64xf32>
    %723 = vector.extract_strided_slice %708 {offsets = [0, 192], sizes = [8, 64], strides = [1, 1]} : vector<8x256xf32> to vector<8x64xf32>
    %724 = arith.negf %723 : vector<8x64xf32>
    %725 = math.exp %724 : vector<8x64xf32>
    %cst_261 = arith.constant 1.000000e+00 : f32
    %726 = vector.broadcast %cst_261 : f32 to vector<8x64xf32>
    %727 = arith.addf %726, %725 : vector<8x64xf32>
    %728 = arith.divf %726, %727 : vector<8x64xf32>
    %729 = arith.mulf %720, %662 : vector<8x64xf32>
    %730 = arith.mulf %714, %722 : vector<8x64xf32>
    %731 = arith.addf %729, %730 : vector<8x64xf32>
    %732 = math.tanh %731 : vector<8x64xf32>
    %733 = arith.mulf %728, %732 : vector<8x64xf32>
    %c0_262 = arith.constant 0 : index
    %c0_263 = arith.constant 0 : index
    %734 = vector.load %arg11[%c0_262, %c0_263] : memref<64x256xf32, #tpu.memory_space<vmem>>, vector<64x256xf32>
    %cst_264 = arith.constant dense<0.000000e+00> : vector<8x256xf32>
    %735 = tpu.matmul %733, %734, %cst_264 {dimension_numbers = #tpu.dot_dimension_numbers<[1], [0], [0], [1], [0, 0, 1, 1], [], []>} : vector<8x64xf32>, vector<64x256xf32>, vector<8x256xf32> -> vector<8x256xf32>
    %c0_265 = arith.constant 0 : index
    %c0_266 = arith.constant 0 : index
    %736 = vector.load %arg12[%c0_265, %c0_266] : memref<64x256xf32, #tpu.memory_space<vmem>>, vector<64x256xf32>
    %cst_267 = arith.constant dense<0.000000e+00> : vector<8x256xf32>
    %737 = tpu.matmul %697, %736, %cst_267 {dimension_numbers = #tpu.dot_dimension_numbers<[1], [0], [0], [1], [0, 0, 1, 1], [], []>} : vector<8x64xf32>, vector<64x256xf32>, vector<8x256xf32> -> vector<8x256xf32>
    %738 = arith.addf %735, %737 : vector<8x256xf32>
    %c0_268 = arith.constant 0 : index
    %c0_269 = arith.constant 0 : index
    %739 = vector.load %arg13[%c0_268, %c0_269] : memref<1x256xf32, #tpu.memory_space<vmem>>, vector<1x256xf32>
    %740 = vector.broadcast %739 : vector<1x256xf32> to vector<8x256xf32>
    %741 = arith.addf %738, %740 : vector<8x256xf32>
    %742 = vector.extract_strided_slice %741 {offsets = [0, 0], sizes = [8, 64], strides = [1, 1]} : vector<8x256xf32> to vector<8x64xf32>
    %743 = arith.negf %742 : vector<8x64xf32>
    %744 = math.exp %743 : vector<8x64xf32>
    %cst_270 = arith.constant 1.000000e+00 : f32
    %745 = vector.broadcast %cst_270 : f32 to vector<8x64xf32>
    %746 = arith.addf %745, %744 : vector<8x64xf32>
    %747 = arith.divf %745, %746 : vector<8x64xf32>
    %748 = vector.extract_strided_slice %741 {offsets = [0, 64], sizes = [8, 64], strides = [1, 1]} : vector<8x256xf32> to vector<8x64xf32>
    %749 = arith.negf %748 : vector<8x64xf32>
    %750 = math.exp %749 : vector<8x64xf32>
    %cst_271 = arith.constant 1.000000e+00 : f32
    %751 = vector.broadcast %cst_271 : f32 to vector<8x64xf32>
    %752 = arith.addf %751, %750 : vector<8x64xf32>
    %753 = arith.divf %751, %752 : vector<8x64xf32>
    %754 = vector.extract_strided_slice %741 {offsets = [0, 128], sizes = [8, 64], strides = [1, 1]} : vector<8x256xf32> to vector<8x64xf32>
    %755 = math.tanh %754 : vector<8x64xf32>
    %756 = vector.extract_strided_slice %741 {offsets = [0, 192], sizes = [8, 64], strides = [1, 1]} : vector<8x256xf32> to vector<8x64xf32>
    %757 = arith.negf %756 : vector<8x64xf32>
    %758 = math.exp %757 : vector<8x64xf32>
    %cst_272 = arith.constant 1.000000e+00 : f32
    %759 = vector.broadcast %cst_272 : f32 to vector<8x64xf32>
    %760 = arith.addf %759, %758 : vector<8x64xf32>
    %761 = arith.divf %759, %760 : vector<8x64xf32>
    %762 = arith.mulf %753, %695 : vector<8x64xf32>
    %763 = arith.mulf %747, %755 : vector<8x64xf32>
    %764 = arith.addf %762, %763 : vector<8x64xf32>
    %765 = math.tanh %764 : vector<8x64xf32>
    %766 = arith.mulf %761, %765 : vector<8x64xf32>
    %c3_i32_273 = arith.constant 3 : i32
    %767 = arith.index_cast %c3_i32_273 : i32 to index
    %c0_274 = arith.constant 0 : index
    %c0_275 = arith.constant 0 : index
    %768 = vector.load %arg1[%767, %c0_274, %c0_275] : memref<16x8x32xf32, #tpu.memory_space<vmem>>, vector<1x8x32xf32>
    %769 = vector.shape_cast %768 : vector<1x8x32xf32> to vector<8x32xf32>
    %c0_276 = arith.constant 0 : index
    %c0_277 = arith.constant 0 : index
    %770 = vector.load %arg8[%c0_276, %c0_277] : memref<32x256xf32, #tpu.memory_space<vmem>>, vector<32x256xf32>
    %cst_278 = arith.constant dense<0.000000e+00> : vector<8x256xf32>
    %771 = tpu.matmul %769, %770, %cst_278 {dimension_numbers = #tpu.dot_dimension_numbers<[1], [0], [0], [1], [0, 0, 1, 1], [], []>} : vector<8x32xf32>, vector<32x256xf32>, vector<8x256xf32> -> vector<8x256xf32>
    %c0_279 = arith.constant 0 : index
    %c0_280 = arith.constant 0 : index
    %772 = vector.load %arg9[%c0_279, %c0_280] : memref<64x256xf32, #tpu.memory_space<vmem>>, vector<64x256xf32>
    %cst_281 = arith.constant dense<0.000000e+00> : vector<8x256xf32>
    %773 = tpu.matmul %733, %772, %cst_281 {dimension_numbers = #tpu.dot_dimension_numbers<[1], [0], [0], [1], [0, 0, 1, 1], [], []>} : vector<8x64xf32>, vector<64x256xf32>, vector<8x256xf32> -> vector<8x256xf32>
    %774 = arith.addf %771, %773 : vector<8x256xf32>
    %c0_282 = arith.constant 0 : index
    %c0_283 = arith.constant 0 : index
    %775 = vector.load %arg10[%c0_282, %c0_283] : memref<1x256xf32, #tpu.memory_space<vmem>>, vector<1x256xf32>
    %776 = vector.broadcast %775 : vector<1x256xf32> to vector<8x256xf32>
    %777 = arith.addf %774, %776 : vector<8x256xf32>
    %778 = vector.extract_strided_slice %777 {offsets = [0, 0], sizes = [8, 64], strides = [1, 1]} : vector<8x256xf32> to vector<8x64xf32>
    %779 = arith.negf %778 : vector<8x64xf32>
    %780 = math.exp %779 : vector<8x64xf32>
    %cst_284 = arith.constant 1.000000e+00 : f32
    %781 = vector.broadcast %cst_284 : f32 to vector<8x64xf32>
    %782 = arith.addf %781, %780 : vector<8x64xf32>
    %783 = arith.divf %781, %782 : vector<8x64xf32>
    %784 = vector.extract_strided_slice %777 {offsets = [0, 64], sizes = [8, 64], strides = [1, 1]} : vector<8x256xf32> to vector<8x64xf32>
    %785 = arith.negf %784 : vector<8x64xf32>
    %786 = math.exp %785 : vector<8x64xf32>
    %cst_285 = arith.constant 1.000000e+00 : f32
    %787 = vector.broadcast %cst_285 : f32 to vector<8x64xf32>
    %788 = arith.addf %787, %786 : vector<8x64xf32>
    %789 = arith.divf %787, %788 : vector<8x64xf32>
    %790 = vector.extract_strided_slice %777 {offsets = [0, 128], sizes = [8, 64], strides = [1, 1]} : vector<8x256xf32> to vector<8x64xf32>
    %791 = math.tanh %790 : vector<8x64xf32>
    %792 = vector.extract_strided_slice %777 {offsets = [0, 192], sizes = [8, 64], strides = [1, 1]} : vector<8x256xf32> to vector<8x64xf32>
    %793 = arith.negf %792 : vector<8x64xf32>
    %794 = math.exp %793 : vector<8x64xf32>
    %cst_286 = arith.constant 1.000000e+00 : f32
    %795 = vector.broadcast %cst_286 : f32 to vector<8x64xf32>
    %796 = arith.addf %795, %794 : vector<8x64xf32>
    %797 = arith.divf %795, %796 : vector<8x64xf32>
    %798 = arith.mulf %789, %731 : vector<8x64xf32>
    %799 = arith.mulf %783, %791 : vector<8x64xf32>
    %800 = arith.addf %798, %799 : vector<8x64xf32>
    %801 = math.tanh %800 : vector<8x64xf32>
    %802 = arith.mulf %797, %801 : vector<8x64xf32>
    %c0_287 = arith.constant 0 : index
    %c0_288 = arith.constant 0 : index
    %803 = vector.load %arg11[%c0_287, %c0_288] : memref<64x256xf32, #tpu.memory_space<vmem>>, vector<64x256xf32>
    %cst_289 = arith.constant dense<0.000000e+00> : vector<8x256xf32>
    %804 = tpu.matmul %802, %803, %cst_289 {dimension_numbers = #tpu.dot_dimension_numbers<[1], [0], [0], [1], [0, 0, 1, 1], [], []>} : vector<8x64xf32>, vector<64x256xf32>, vector<8x256xf32> -> vector<8x256xf32>
    %c0_290 = arith.constant 0 : index
    %c0_291 = arith.constant 0 : index
    %805 = vector.load %arg12[%c0_290, %c0_291] : memref<64x256xf32, #tpu.memory_space<vmem>>, vector<64x256xf32>
    %cst_292 = arith.constant dense<0.000000e+00> : vector<8x256xf32>
    %806 = tpu.matmul %766, %805, %cst_292 {dimension_numbers = #tpu.dot_dimension_numbers<[1], [0], [0], [1], [0, 0, 1, 1], [], []>} : vector<8x64xf32>, vector<64x256xf32>, vector<8x256xf32> -> vector<8x256xf32>
    %807 = arith.addf %804, %806 : vector<8x256xf32>
    %c0_293 = arith.constant 0 : index
    %c0_294 = arith.constant 0 : index
    %808 = vector.load %arg13[%c0_293, %c0_294] : memref<1x256xf32, #tpu.memory_space<vmem>>, vector<1x256xf32>
    %809 = vector.broadcast %808 : vector<1x256xf32> to vector<8x256xf32>
    %810 = arith.addf %807, %809 : vector<8x256xf32>
    %811 = vector.extract_strided_slice %810 {offsets = [0, 0], sizes = [8, 64], strides = [1, 1]} : vector<8x256xf32> to vector<8x64xf32>
    %812 = arith.negf %811 : vector<8x64xf32>
    %813 = math.exp %812 : vector<8x64xf32>
    %cst_295 = arith.constant 1.000000e+00 : f32
    %814 = vector.broadcast %cst_295 : f32 to vector<8x64xf32>
    %815 = arith.addf %814, %813 : vector<8x64xf32>
    %816 = arith.divf %814, %815 : vector<8x64xf32>
    %817 = vector.extract_strided_slice %810 {offsets = [0, 64], sizes = [8, 64], strides = [1, 1]} : vector<8x256xf32> to vector<8x64xf32>
    %818 = arith.negf %817 : vector<8x64xf32>
    %819 = math.exp %818 : vector<8x64xf32>
    %cst_296 = arith.constant 1.000000e+00 : f32
    %820 = vector.broadcast %cst_296 : f32 to vector<8x64xf32>
    %821 = arith.addf %820, %819 : vector<8x64xf32>
    %822 = arith.divf %820, %821 : vector<8x64xf32>
    %823 = vector.extract_strided_slice %810 {offsets = [0, 128], sizes = [8, 64], strides = [1, 1]} : vector<8x256xf32> to vector<8x64xf32>
    %824 = math.tanh %823 : vector<8x64xf32>
    %825 = vector.extract_strided_slice %810 {offsets = [0, 192], sizes = [8, 64], strides = [1, 1]} : vector<8x256xf32> to vector<8x64xf32>
    %826 = arith.negf %825 : vector<8x64xf32>
    %827 = math.exp %826 : vector<8x64xf32>
    %cst_297 = arith.constant 1.000000e+00 : f32
    %828 = vector.broadcast %cst_297 : f32 to vector<8x64xf32>
    %829 = arith.addf %828, %827 : vector<8x64xf32>
    %830 = arith.divf %828, %829 : vector<8x64xf32>
    %831 = arith.mulf %822, %764 : vector<8x64xf32>
    %832 = arith.mulf %816, %824 : vector<8x64xf32>
    %833 = arith.addf %831, %832 : vector<8x64xf32>
    %834 = math.tanh %833 : vector<8x64xf32>
    %835 = arith.mulf %830, %834 : vector<8x64xf32>
    %c4_i32_298 = arith.constant 4 : i32
    %836 = arith.index_cast %c4_i32_298 : i32 to index
    %c0_299 = arith.constant 0 : index
    %c0_300 = arith.constant 0 : index
    %837 = vector.load %arg1[%836, %c0_299, %c0_300] : memref<16x8x32xf32, #tpu.memory_space<vmem>>, vector<1x8x32xf32>
    %838 = vector.shape_cast %837 : vector<1x8x32xf32> to vector<8x32xf32>
    %c0_301 = arith.constant 0 : index
    %c0_302 = arith.constant 0 : index
    %839 = vector.load %arg8[%c0_301, %c0_302] : memref<32x256xf32, #tpu.memory_space<vmem>>, vector<32x256xf32>
    %cst_303 = arith.constant dense<0.000000e+00> : vector<8x256xf32>
    %840 = tpu.matmul %838, %839, %cst_303 {dimension_numbers = #tpu.dot_dimension_numbers<[1], [0], [0], [1], [0, 0, 1, 1], [], []>} : vector<8x32xf32>, vector<32x256xf32>, vector<8x256xf32> -> vector<8x256xf32>
    %c0_304 = arith.constant 0 : index
    %c0_305 = arith.constant 0 : index
    %841 = vector.load %arg9[%c0_304, %c0_305] : memref<64x256xf32, #tpu.memory_space<vmem>>, vector<64x256xf32>
    %cst_306 = arith.constant dense<0.000000e+00> : vector<8x256xf32>
    %842 = tpu.matmul %802, %841, %cst_306 {dimension_numbers = #tpu.dot_dimension_numbers<[1], [0], [0], [1], [0, 0, 1, 1], [], []>} : vector<8x64xf32>, vector<64x256xf32>, vector<8x256xf32> -> vector<8x256xf32>
    %843 = arith.addf %840, %842 : vector<8x256xf32>
    %c0_307 = arith.constant 0 : index
    %c0_308 = arith.constant 0 : index
    %844 = vector.load %arg10[%c0_307, %c0_308] : memref<1x256xf32, #tpu.memory_space<vmem>>, vector<1x256xf32>
    %845 = vector.broadcast %844 : vector<1x256xf32> to vector<8x256xf32>
    %846 = arith.addf %843, %845 : vector<8x256xf32>
    %847 = vector.extract_strided_slice %846 {offsets = [0, 0], sizes = [8, 64], strides = [1, 1]} : vector<8x256xf32> to vector<8x64xf32>
    %848 = arith.negf %847 : vector<8x64xf32>
    %849 = math.exp %848 : vector<8x64xf32>
    %cst_309 = arith.constant 1.000000e+00 : f32
    %850 = vector.broadcast %cst_309 : f32 to vector<8x64xf32>
    %851 = arith.addf %850, %849 : vector<8x64xf32>
    %852 = arith.divf %850, %851 : vector<8x64xf32>
    %853 = vector.extract_strided_slice %846 {offsets = [0, 64], sizes = [8, 64], strides = [1, 1]} : vector<8x256xf32> to vector<8x64xf32>
    %854 = arith.negf %853 : vector<8x64xf32>
    %855 = math.exp %854 : vector<8x64xf32>
    %cst_310 = arith.constant 1.000000e+00 : f32
    %856 = vector.broadcast %cst_310 : f32 to vector<8x64xf32>
    %857 = arith.addf %856, %855 : vector<8x64xf32>
    %858 = arith.divf %856, %857 : vector<8x64xf32>
    %859 = vector.extract_strided_slice %846 {offsets = [0, 128], sizes = [8, 64], strides = [1, 1]} : vector<8x256xf32> to vector<8x64xf32>
    %860 = math.tanh %859 : vector<8x64xf32>
    %861 = vector.extract_strided_slice %846 {offsets = [0, 192], sizes = [8, 64], strides = [1, 1]} : vector<8x256xf32> to vector<8x64xf32>
    %862 = arith.negf %861 : vector<8x64xf32>
    %863 = math.exp %862 : vector<8x64xf32>
    %cst_311 = arith.constant 1.000000e+00 : f32
    %864 = vector.broadcast %cst_311 : f32 to vector<8x64xf32>
    %865 = arith.addf %864, %863 : vector<8x64xf32>
    %866 = arith.divf %864, %865 : vector<8x64xf32>
    %867 = arith.mulf %858, %800 : vector<8x64xf32>
    %868 = arith.mulf %852, %860 : vector<8x64xf32>
    %869 = arith.addf %867, %868 : vector<8x64xf32>
    %870 = math.tanh %869 : vector<8x64xf32>
    %871 = arith.mulf %866, %870 : vector<8x64xf32>
    %c0_312 = arith.constant 0 : index
    %c0_313 = arith.constant 0 : index
    %872 = vector.load %arg11[%c0_312, %c0_313] : memref<64x256xf32, #tpu.memory_space<vmem>>, vector<64x256xf32>
    %cst_314 = arith.constant dense<0.000000e+00> : vector<8x256xf32>
    %873 = tpu.matmul %871, %872, %cst_314 {dimension_numbers = #tpu.dot_dimension_numbers<[1], [0], [0], [1], [0, 0, 1, 1], [], []>} : vector<8x64xf32>, vector<64x256xf32>, vector<8x256xf32> -> vector<8x256xf32>
    %c0_315 = arith.constant 0 : index
    %c0_316 = arith.constant 0 : index
    %874 = vector.load %arg12[%c0_315, %c0_316] : memref<64x256xf32, #tpu.memory_space<vmem>>, vector<64x256xf32>
    %cst_317 = arith.constant dense<0.000000e+00> : vector<8x256xf32>
    %875 = tpu.matmul %835, %874, %cst_317 {dimension_numbers = #tpu.dot_dimension_numbers<[1], [0], [0], [1], [0, 0, 1, 1], [], []>} : vector<8x64xf32>, vector<64x256xf32>, vector<8x256xf32> -> vector<8x256xf32>
    %876 = arith.addf %873, %875 : vector<8x256xf32>
    %c0_318 = arith.constant 0 : index
    %c0_319 = arith.constant 0 : index
    %877 = vector.load %arg13[%c0_318, %c0_319] : memref<1x256xf32, #tpu.memory_space<vmem>>, vector<1x256xf32>
    %878 = vector.broadcast %877 : vector<1x256xf32> to vector<8x256xf32>
    %879 = arith.addf %876, %878 : vector<8x256xf32>
    %880 = vector.extract_strided_slice %879 {offsets = [0, 0], sizes = [8, 64], strides = [1, 1]} : vector<8x256xf32> to vector<8x64xf32>
    %881 = arith.negf %880 : vector<8x64xf32>
    %882 = math.exp %881 : vector<8x64xf32>
    %cst_320 = arith.constant 1.000000e+00 : f32
    %883 = vector.broadcast %cst_320 : f32 to vector<8x64xf32>
    %884 = arith.addf %883, %882 : vector<8x64xf32>
    %885 = arith.divf %883, %884 : vector<8x64xf32>
    %886 = vector.extract_strided_slice %879 {offsets = [0, 64], sizes = [8, 64], strides = [1, 1]} : vector<8x256xf32> to vector<8x64xf32>
    %887 = arith.negf %886 : vector<8x64xf32>
    %888 = math.exp %887 : vector<8x64xf32>
    %cst_321 = arith.constant 1.000000e+00 : f32
    %889 = vector.broadcast %cst_321 : f32 to vector<8x64xf32>
    %890 = arith.addf %889, %888 : vector<8x64xf32>
    %891 = arith.divf %889, %890 : vector<8x64xf32>
    %892 = vector.extract_strided_slice %879 {offsets = [0, 128], sizes = [8, 64], strides = [1, 1]} : vector<8x256xf32> to vector<8x64xf32>
    %893 = math.tanh %892 : vector<8x64xf32>
    %894 = vector.extract_strided_slice %879 {offsets = [0, 192], sizes = [8, 64], strides = [1, 1]} : vector<8x256xf32> to vector<8x64xf32>
    %895 = arith.negf %894 : vector<8x64xf32>
    %896 = math.exp %895 : vector<8x64xf32>
    %cst_322 = arith.constant 1.000000e+00 : f32
    %897 = vector.broadcast %cst_322 : f32 to vector<8x64xf32>
    %898 = arith.addf %897, %896 : vector<8x64xf32>
    %899 = arith.divf %897, %898 : vector<8x64xf32>
    %900 = arith.mulf %891, %833 : vector<8x64xf32>
    %901 = arith.mulf %885, %893 : vector<8x64xf32>
    %902 = arith.addf %900, %901 : vector<8x64xf32>
    %903 = math.tanh %902 : vector<8x64xf32>
    %904 = arith.mulf %899, %903 : vector<8x64xf32>
    %c5_i32_323 = arith.constant 5 : i32
    %905 = arith.index_cast %c5_i32_323 : i32 to index
    %c0_324 = arith.constant 0 : index
    %c0_325 = arith.constant 0 : index
    %906 = vector.load %arg1[%905, %c0_324, %c0_325] : memref<16x8x32xf32, #tpu.memory_space<vmem>>, vector<1x8x32xf32>
    %907 = vector.shape_cast %906 : vector<1x8x32xf32> to vector<8x32xf32>
    %c0_326 = arith.constant 0 : index
    %c0_327 = arith.constant 0 : index
    %908 = vector.load %arg8[%c0_326, %c0_327] : memref<32x256xf32, #tpu.memory_space<vmem>>, vector<32x256xf32>
    %cst_328 = arith.constant dense<0.000000e+00> : vector<8x256xf32>
    %909 = tpu.matmul %907, %908, %cst_328 {dimension_numbers = #tpu.dot_dimension_numbers<[1], [0], [0], [1], [0, 0, 1, 1], [], []>} : vector<8x32xf32>, vector<32x256xf32>, vector<8x256xf32> -> vector<8x256xf32>
    %c0_329 = arith.constant 0 : index
    %c0_330 = arith.constant 0 : index
    %910 = vector.load %arg9[%c0_329, %c0_330] : memref<64x256xf32, #tpu.memory_space<vmem>>, vector<64x256xf32>
    %cst_331 = arith.constant dense<0.000000e+00> : vector<8x256xf32>
    %911 = tpu.matmul %871, %910, %cst_331 {dimension_numbers = #tpu.dot_dimension_numbers<[1], [0], [0], [1], [0, 0, 1, 1], [], []>} : vector<8x64xf32>, vector<64x256xf32>, vector<8x256xf32> -> vector<8x256xf32>
    %912 = arith.addf %909, %911 : vector<8x256xf32>
    %c0_332 = arith.constant 0 : index
    %c0_333 = arith.constant 0 : index
    %913 = vector.load %arg10[%c0_332, %c0_333] : memref<1x256xf32, #tpu.memory_space<vmem>>, vector<1x256xf32>
    %914 = vector.broadcast %913 : vector<1x256xf32> to vector<8x256xf32>
    %915 = arith.addf %912, %914 : vector<8x256xf32>
    %916 = vector.extract_strided_slice %915 {offsets = [0, 0], sizes = [8, 64], strides = [1, 1]} : vector<8x256xf32> to vector<8x64xf32>
    %917 = arith.negf %916 : vector<8x64xf32>
    %918 = math.exp %917 : vector<8x64xf32>
    %cst_334 = arith.constant 1.000000e+00 : f32
    %919 = vector.broadcast %cst_334 : f32 to vector<8x64xf32>
    %920 = arith.addf %919, %918 : vector<8x64xf32>
    %921 = arith.divf %919, %920 : vector<8x64xf32>
    %922 = vector.extract_strided_slice %915 {offsets = [0, 64], sizes = [8, 64], strides = [1, 1]} : vector<8x256xf32> to vector<8x64xf32>
    %923 = arith.negf %922 : vector<8x64xf32>
    %924 = math.exp %923 : vector<8x64xf32>
    %cst_335 = arith.constant 1.000000e+00 : f32
    %925 = vector.broadcast %cst_335 : f32 to vector<8x64xf32>
    %926 = arith.addf %925, %924 : vector<8x64xf32>
    %927 = arith.divf %925, %926 : vector<8x64xf32>
    %928 = vector.extract_strided_slice %915 {offsets = [0, 128], sizes = [8, 64], strides = [1, 1]} : vector<8x256xf32> to vector<8x64xf32>
    %929 = math.tanh %928 : vector<8x64xf32>
    %930 = vector.extract_strided_slice %915 {offsets = [0, 192], sizes = [8, 64], strides = [1, 1]} : vector<8x256xf32> to vector<8x64xf32>
    %931 = arith.negf %930 : vector<8x64xf32>
    %932 = math.exp %931 : vector<8x64xf32>
    %cst_336 = arith.constant 1.000000e+00 : f32
    %933 = vector.broadcast %cst_336 : f32 to vector<8x64xf32>
    %934 = arith.addf %933, %932 : vector<8x64xf32>
    %935 = arith.divf %933, %934 : vector<8x64xf32>
    %936 = arith.mulf %927, %869 : vector<8x64xf32>
    %937 = arith.mulf %921, %929 : vector<8x64xf32>
    %938 = arith.addf %936, %937 : vector<8x64xf32>
    %939 = math.tanh %938 : vector<8x64xf32>
    %940 = arith.mulf %935, %939 : vector<8x64xf32>
    %c0_337 = arith.constant 0 : index
    %c0_338 = arith.constant 0 : index
    %941 = vector.load %arg11[%c0_337, %c0_338] : memref<64x256xf32, #tpu.memory_space<vmem>>, vector<64x256xf32>
    %cst_339 = arith.constant dense<0.000000e+00> : vector<8x256xf32>
    %942 = tpu.matmul %940, %941, %cst_339 {dimension_numbers = #tpu.dot_dimension_numbers<[1], [0], [0], [1], [0, 0, 1, 1], [], []>} : vector<8x64xf32>, vector<64x256xf32>, vector<8x256xf32> -> vector<8x256xf32>
    %c0_340 = arith.constant 0 : index
    %c0_341 = arith.constant 0 : index
    %943 = vector.load %arg12[%c0_340, %c0_341] : memref<64x256xf32, #tpu.memory_space<vmem>>, vector<64x256xf32>
    %cst_342 = arith.constant dense<0.000000e+00> : vector<8x256xf32>
    %944 = tpu.matmul %904, %943, %cst_342 {dimension_numbers = #tpu.dot_dimension_numbers<[1], [0], [0], [1], [0, 0, 1, 1], [], []>} : vector<8x64xf32>, vector<64x256xf32>, vector<8x256xf32> -> vector<8x256xf32>
    %945 = arith.addf %942, %944 : vector<8x256xf32>
    %c0_343 = arith.constant 0 : index
    %c0_344 = arith.constant 0 : index
    %946 = vector.load %arg13[%c0_343, %c0_344] : memref<1x256xf32, #tpu.memory_space<vmem>>, vector<1x256xf32>
    %947 = vector.broadcast %946 : vector<1x256xf32> to vector<8x256xf32>
    %948 = arith.addf %945, %947 : vector<8x256xf32>
    %949 = vector.extract_strided_slice %948 {offsets = [0, 0], sizes = [8, 64], strides = [1, 1]} : vector<8x256xf32> to vector<8x64xf32>
    %950 = arith.negf %949 : vector<8x64xf32>
    %951 = math.exp %950 : vector<8x64xf32>
    %cst_345 = arith.constant 1.000000e+00 : f32
    %952 = vector.broadcast %cst_345 : f32 to vector<8x64xf32>
    %953 = arith.addf %952, %951 : vector<8x64xf32>
    %954 = arith.divf %952, %953 : vector<8x64xf32>
    %955 = vector.extract_strided_slice %948 {offsets = [0, 64], sizes = [8, 64], strides = [1, 1]} : vector<8x256xf32> to vector<8x64xf32>
    %956 = arith.negf %955 : vector<8x64xf32>
    %957 = math.exp %956 : vector<8x64xf32>
    %cst_346 = arith.constant 1.000000e+00 : f32
    %958 = vector.broadcast %cst_346 : f32 to vector<8x64xf32>
    %959 = arith.addf %958, %957 : vector<8x64xf32>
    %960 = arith.divf %958, %959 : vector<8x64xf32>
    %961 = vector.extract_strided_slice %948 {offsets = [0, 128], sizes = [8, 64], strides = [1, 1]} : vector<8x256xf32> to vector<8x64xf32>
    %962 = math.tanh %961 : vector<8x64xf32>
    %963 = vector.extract_strided_slice %948 {offsets = [0, 192], sizes = [8, 64], strides = [1, 1]} : vector<8x256xf32> to vector<8x64xf32>
    %964 = arith.negf %963 : vector<8x64xf32>
    %965 = math.exp %964 : vector<8x64xf32>
    %cst_347 = arith.constant 1.000000e+00 : f32
    %966 = vector.broadcast %cst_347 : f32 to vector<8x64xf32>
    %967 = arith.addf %966, %965 : vector<8x64xf32>
    %968 = arith.divf %966, %967 : vector<8x64xf32>
    %969 = arith.mulf %960, %902 : vector<8x64xf32>
    %970 = arith.mulf %954, %962 : vector<8x64xf32>
    %971 = arith.addf %969, %970 : vector<8x64xf32>
    %972 = math.tanh %971 : vector<8x64xf32>
    %973 = arith.mulf %968, %972 : vector<8x64xf32>
    %c6_i32_348 = arith.constant 6 : i32
    %974 = arith.index_cast %c6_i32_348 : i32 to index
    %c0_349 = arith.constant 0 : index
    %c0_350 = arith.constant 0 : index
    %975 = vector.load %arg1[%974, %c0_349, %c0_350] : memref<16x8x32xf32, #tpu.memory_space<vmem>>, vector<1x8x32xf32>
    %976 = vector.shape_cast %975 : vector<1x8x32xf32> to vector<8x32xf32>
    %c0_351 = arith.constant 0 : index
    %c0_352 = arith.constant 0 : index
    %977 = vector.load %arg8[%c0_351, %c0_352] : memref<32x256xf32, #tpu.memory_space<vmem>>, vector<32x256xf32>
    %cst_353 = arith.constant dense<0.000000e+00> : vector<8x256xf32>
    %978 = tpu.matmul %976, %977, %cst_353 {dimension_numbers = #tpu.dot_dimension_numbers<[1], [0], [0], [1], [0, 0, 1, 1], [], []>} : vector<8x32xf32>, vector<32x256xf32>, vector<8x256xf32> -> vector<8x256xf32>
    %c0_354 = arith.constant 0 : index
    %c0_355 = arith.constant 0 : index
    %979 = vector.load %arg9[%c0_354, %c0_355] : memref<64x256xf32, #tpu.memory_space<vmem>>, vector<64x256xf32>
    %cst_356 = arith.constant dense<0.000000e+00> : vector<8x256xf32>
    %980 = tpu.matmul %940, %979, %cst_356 {dimension_numbers = #tpu.dot_dimension_numbers<[1], [0], [0], [1], [0, 0, 1, 1], [], []>} : vector<8x64xf32>, vector<64x256xf32>, vector<8x256xf32> -> vector<8x256xf32>
    %981 = arith.addf %978, %980 : vector<8x256xf32>
    %c0_357 = arith.constant 0 : index
    %c0_358 = arith.constant 0 : index
    %982 = vector.load %arg10[%c0_357, %c0_358] : memref<1x256xf32, #tpu.memory_space<vmem>>, vector<1x256xf32>
    %983 = vector.broadcast %982 : vector<1x256xf32> to vector<8x256xf32>
    %984 = arith.addf %981, %983 : vector<8x256xf32>
    %985 = vector.extract_strided_slice %984 {offsets = [0, 0], sizes = [8, 64], strides = [1, 1]} : vector<8x256xf32> to vector<8x64xf32>
    %986 = arith.negf %985 : vector<8x64xf32>
    %987 = math.exp %986 : vector<8x64xf32>
    %cst_359 = arith.constant 1.000000e+00 : f32
    %988 = vector.broadcast %cst_359 : f32 to vector<8x64xf32>
    %989 = arith.addf %988, %987 : vector<8x64xf32>
    %990 = arith.divf %988, %989 : vector<8x64xf32>
    %991 = vector.extract_strided_slice %984 {offsets = [0, 64], sizes = [8, 64], strides = [1, 1]} : vector<8x256xf32> to vector<8x64xf32>
    %992 = arith.negf %991 : vector<8x64xf32>
    %993 = math.exp %992 : vector<8x64xf32>
    %cst_360 = arith.constant 1.000000e+00 : f32
    %994 = vector.broadcast %cst_360 : f32 to vector<8x64xf32>
    %995 = arith.addf %994, %993 : vector<8x64xf32>
    %996 = arith.divf %994, %995 : vector<8x64xf32>
    %997 = vector.extract_strided_slice %984 {offsets = [0, 128], sizes = [8, 64], strides = [1, 1]} : vector<8x256xf32> to vector<8x64xf32>
    %998 = math.tanh %997 : vector<8x64xf32>
    %999 = vector.extract_strided_slice %984 {offsets = [0, 192], sizes = [8, 64], strides = [1, 1]} : vector<8x256xf32> to vector<8x64xf32>
    %1000 = arith.negf %999 : vector<8x64xf32>
    %1001 = math.exp %1000 : vector<8x64xf32>
    %cst_361 = arith.constant 1.000000e+00 : f32
    %1002 = vector.broadcast %cst_361 : f32 to vector<8x64xf32>
    %1003 = arith.addf %1002, %1001 : vector<8x64xf32>
    %1004 = arith.divf %1002, %1003 : vector<8x64xf32>
    %1005 = arith.mulf %996, %938 : vector<8x64xf32>
    %1006 = arith.mulf %990, %998 : vector<8x64xf32>
    %1007 = arith.addf %1005, %1006 : vector<8x64xf32>
    %1008 = math.tanh %1007 : vector<8x64xf32>
    %1009 = arith.mulf %1004, %1008 : vector<8x64xf32>
    %c0_362 = arith.constant 0 : index
    %c0_363 = arith.constant 0 : index
    %1010 = vector.load %arg11[%c0_362, %c0_363] : memref<64x256xf32, #tpu.memory_space<vmem>>, vector<64x256xf32>
    %cst_364 = arith.constant dense<0.000000e+00> : vector<8x256xf32>
    %1011 = tpu.matmul %1009, %1010, %cst_364 {dimension_numbers = #tpu.dot_dimension_numbers<[1], [0], [0], [1], [0, 0, 1, 1], [], []>} : vector<8x64xf32>, vector<64x256xf32>, vector<8x256xf32> -> vector<8x256xf32>
    %c0_365 = arith.constant 0 : index
    %c0_366 = arith.constant 0 : index
    %1012 = vector.load %arg12[%c0_365, %c0_366] : memref<64x256xf32, #tpu.memory_space<vmem>>, vector<64x256xf32>
    %cst_367 = arith.constant dense<0.000000e+00> : vector<8x256xf32>
    %1013 = tpu.matmul %973, %1012, %cst_367 {dimension_numbers = #tpu.dot_dimension_numbers<[1], [0], [0], [1], [0, 0, 1, 1], [], []>} : vector<8x64xf32>, vector<64x256xf32>, vector<8x256xf32> -> vector<8x256xf32>
    %1014 = arith.addf %1011, %1013 : vector<8x256xf32>
    %c0_368 = arith.constant 0 : index
    %c0_369 = arith.constant 0 : index
    %1015 = vector.load %arg13[%c0_368, %c0_369] : memref<1x256xf32, #tpu.memory_space<vmem>>, vector<1x256xf32>
    %1016 = vector.broadcast %1015 : vector<1x256xf32> to vector<8x256xf32>
    %1017 = arith.addf %1014, %1016 : vector<8x256xf32>
    %1018 = vector.extract_strided_slice %1017 {offsets = [0, 0], sizes = [8, 64], strides = [1, 1]} : vector<8x256xf32> to vector<8x64xf32>
    %1019 = arith.negf %1018 : vector<8x64xf32>
    %1020 = math.exp %1019 : vector<8x64xf32>
    %cst_370 = arith.constant 1.000000e+00 : f32
    %1021 = vector.broadcast %cst_370 : f32 to vector<8x64xf32>
    %1022 = arith.addf %1021, %1020 : vector<8x64xf32>
    %1023 = arith.divf %1021, %1022 : vector<8x64xf32>
    %1024 = vector.extract_strided_slice %1017 {offsets = [0, 64], sizes = [8, 64], strides = [1, 1]} : vector<8x256xf32> to vector<8x64xf32>
    %1025 = arith.negf %1024 : vector<8x64xf32>
    %1026 = math.exp %1025 : vector<8x64xf32>
    %cst_371 = arith.constant 1.000000e+00 : f32
    %1027 = vector.broadcast %cst_371 : f32 to vector<8x64xf32>
    %1028 = arith.addf %1027, %1026 : vector<8x64xf32>
    %1029 = arith.divf %1027, %1028 : vector<8x64xf32>
    %1030 = vector.extract_strided_slice %1017 {offsets = [0, 128], sizes = [8, 64], strides = [1, 1]} : vector<8x256xf32> to vector<8x64xf32>
    %1031 = math.tanh %1030 : vector<8x64xf32>
    %1032 = vector.extract_strided_slice %1017 {offsets = [0, 192], sizes = [8, 64], strides = [1, 1]} : vector<8x256xf32> to vector<8x64xf32>
    %1033 = arith.negf %1032 : vector<8x64xf32>
    %1034 = math.exp %1033 : vector<8x64xf32>
    %cst_372 = arith.constant 1.000000e+00 : f32
    %1035 = vector.broadcast %cst_372 : f32 to vector<8x64xf32>
    %1036 = arith.addf %1035, %1034 : vector<8x64xf32>
    %1037 = arith.divf %1035, %1036 : vector<8x64xf32>
    %1038 = arith.mulf %1029, %971 : vector<8x64xf32>
    %1039 = arith.mulf %1023, %1031 : vector<8x64xf32>
    %1040 = arith.addf %1038, %1039 : vector<8x64xf32>
    %1041 = math.tanh %1040 : vector<8x64xf32>
    %1042 = arith.mulf %1037, %1041 : vector<8x64xf32>
    %c7_i32_373 = arith.constant 7 : i32
    %1043 = arith.index_cast %c7_i32_373 : i32 to index
    %c0_374 = arith.constant 0 : index
    %c0_375 = arith.constant 0 : index
    %1044 = vector.load %arg1[%1043, %c0_374, %c0_375] : memref<16x8x32xf32, #tpu.memory_space<vmem>>, vector<1x8x32xf32>
    %1045 = vector.shape_cast %1044 : vector<1x8x32xf32> to vector<8x32xf32>
    %c0_376 = arith.constant 0 : index
    %c0_377 = arith.constant 0 : index
    %1046 = vector.load %arg8[%c0_376, %c0_377] : memref<32x256xf32, #tpu.memory_space<vmem>>, vector<32x256xf32>
    %cst_378 = arith.constant dense<0.000000e+00> : vector<8x256xf32>
    %1047 = tpu.matmul %1045, %1046, %cst_378 {dimension_numbers = #tpu.dot_dimension_numbers<[1], [0], [0], [1], [0, 0, 1, 1], [], []>} : vector<8x32xf32>, vector<32x256xf32>, vector<8x256xf32> -> vector<8x256xf32>
    %c0_379 = arith.constant 0 : index
    %c0_380 = arith.constant 0 : index
    %1048 = vector.load %arg9[%c0_379, %c0_380] : memref<64x256xf32, #tpu.memory_space<vmem>>, vector<64x256xf32>
    %cst_381 = arith.constant dense<0.000000e+00> : vector<8x256xf32>
    %1049 = tpu.matmul %1009, %1048, %cst_381 {dimension_numbers = #tpu.dot_dimension_numbers<[1], [0], [0], [1], [0, 0, 1, 1], [], []>} : vector<8x64xf32>, vector<64x256xf32>, vector<8x256xf32> -> vector<8x256xf32>
    %1050 = arith.addf %1047, %1049 : vector<8x256xf32>
    %c0_382 = arith.constant 0 : index
    %c0_383 = arith.constant 0 : index
    %1051 = vector.load %arg10[%c0_382, %c0_383] : memref<1x256xf32, #tpu.memory_space<vmem>>, vector<1x256xf32>
    %1052 = vector.broadcast %1051 : vector<1x256xf32> to vector<8x256xf32>
    %1053 = arith.addf %1050, %1052 : vector<8x256xf32>
    %1054 = vector.extract_strided_slice %1053 {offsets = [0, 0], sizes = [8, 64], strides = [1, 1]} : vector<8x256xf32> to vector<8x64xf32>
    %1055 = arith.negf %1054 : vector<8x64xf32>
    %1056 = math.exp %1055 : vector<8x64xf32>
    %cst_384 = arith.constant 1.000000e+00 : f32
    %1057 = vector.broadcast %cst_384 : f32 to vector<8x64xf32>
    %1058 = arith.addf %1057, %1056 : vector<8x64xf32>
    %1059 = arith.divf %1057, %1058 : vector<8x64xf32>
    %1060 = vector.extract_strided_slice %1053 {offsets = [0, 64], sizes = [8, 64], strides = [1, 1]} : vector<8x256xf32> to vector<8x64xf32>
    %1061 = arith.negf %1060 : vector<8x64xf32>
    %1062 = math.exp %1061 : vector<8x64xf32>
    %cst_385 = arith.constant 1.000000e+00 : f32
    %1063 = vector.broadcast %cst_385 : f32 to vector<8x64xf32>
    %1064 = arith.addf %1063, %1062 : vector<8x64xf32>
    %1065 = arith.divf %1063, %1064 : vector<8x64xf32>
    %1066 = vector.extract_strided_slice %1053 {offsets = [0, 128], sizes = [8, 64], strides = [1, 1]} : vector<8x256xf32> to vector<8x64xf32>
    %1067 = math.tanh %1066 : vector<8x64xf32>
    %1068 = vector.extract_strided_slice %1053 {offsets = [0, 192], sizes = [8, 64], strides = [1, 1]} : vector<8x256xf32> to vector<8x64xf32>
    %1069 = arith.negf %1068 : vector<8x64xf32>
    %1070 = math.exp %1069 : vector<8x64xf32>
    %cst_386 = arith.constant 1.000000e+00 : f32
    %1071 = vector.broadcast %cst_386 : f32 to vector<8x64xf32>
    %1072 = arith.addf %1071, %1070 : vector<8x64xf32>
    %1073 = arith.divf %1071, %1072 : vector<8x64xf32>
    %1074 = arith.mulf %1065, %1007 : vector<8x64xf32>
    %1075 = arith.mulf %1059, %1067 : vector<8x64xf32>
    %1076 = arith.addf %1074, %1075 : vector<8x64xf32>
    %1077 = math.tanh %1076 : vector<8x64xf32>
    %1078 = arith.mulf %1073, %1077 : vector<8x64xf32>
    %c0_387 = arith.constant 0 : index
    %c0_388 = arith.constant 0 : index
    %1079 = vector.load %arg11[%c0_387, %c0_388] : memref<64x256xf32, #tpu.memory_space<vmem>>, vector<64x256xf32>
    %cst_389 = arith.constant dense<0.000000e+00> : vector<8x256xf32>
    %1080 = tpu.matmul %1078, %1079, %cst_389 {dimension_numbers = #tpu.dot_dimension_numbers<[1], [0], [0], [1], [0, 0, 1, 1], [], []>} : vector<8x64xf32>, vector<64x256xf32>, vector<8x256xf32> -> vector<8x256xf32>
    %c0_390 = arith.constant 0 : index
    %c0_391 = arith.constant 0 : index
    %1081 = vector.load %arg12[%c0_390, %c0_391] : memref<64x256xf32, #tpu.memory_space<vmem>>, vector<64x256xf32>
    %cst_392 = arith.constant dense<0.000000e+00> : vector<8x256xf32>
    %1082 = tpu.matmul %1042, %1081, %cst_392 {dimension_numbers = #tpu.dot_dimension_numbers<[1], [0], [0], [1], [0, 0, 1, 1], [], []>} : vector<8x64xf32>, vector<64x256xf32>, vector<8x256xf32> -> vector<8x256xf32>
    %1083 = arith.addf %1080, %1082 : vector<8x256xf32>
    %c0_393 = arith.constant 0 : index
    %c0_394 = arith.constant 0 : index
    %1084 = vector.load %arg13[%c0_393, %c0_394] : memref<1x256xf32, #tpu.memory_space<vmem>>, vector<1x256xf32>
    %1085 = vector.broadcast %1084 : vector<1x256xf32> to vector<8x256xf32>
    %1086 = arith.addf %1083, %1085 : vector<8x256xf32>
    %1087 = vector.extract_strided_slice %1086 {offsets = [0, 0], sizes = [8, 64], strides = [1, 1]} : vector<8x256xf32> to vector<8x64xf32>
    %1088 = arith.negf %1087 : vector<8x64xf32>
    %1089 = math.exp %1088 : vector<8x64xf32>
    %cst_395 = arith.constant 1.000000e+00 : f32
    %1090 = vector.broadcast %cst_395 : f32 to vector<8x64xf32>
    %1091 = arith.addf %1090, %1089 : vector<8x64xf32>
    %1092 = arith.divf %1090, %1091 : vector<8x64xf32>
    %1093 = vector.extract_strided_slice %1086 {offsets = [0, 64], sizes = [8, 64], strides = [1, 1]} : vector<8x256xf32> to vector<8x64xf32>
    %1094 = arith.negf %1093 : vector<8x64xf32>
    %1095 = math.exp %1094 : vector<8x64xf32>
    %cst_396 = arith.constant 1.000000e+00 : f32
    %1096 = vector.broadcast %cst_396 : f32 to vector<8x64xf32>
    %1097 = arith.addf %1096, %1095 : vector<8x64xf32>
    %1098 = arith.divf %1096, %1097 : vector<8x64xf32>
    %1099 = vector.extract_strided_slice %1086 {offsets = [0, 128], sizes = [8, 64], strides = [1, 1]} : vector<8x256xf32> to vector<8x64xf32>
    %1100 = math.tanh %1099 : vector<8x64xf32>
    %1101 = vector.extract_strided_slice %1086 {offsets = [0, 192], sizes = [8, 64], strides = [1, 1]} : vector<8x256xf32> to vector<8x64xf32>
    %1102 = arith.negf %1101 : vector<8x64xf32>
    %1103 = math.exp %1102 : vector<8x64xf32>
    %cst_397 = arith.constant 1.000000e+00 : f32
    %1104 = vector.broadcast %cst_397 : f32 to vector<8x64xf32>
    %1105 = arith.addf %1104, %1103 : vector<8x64xf32>
    %1106 = arith.divf %1104, %1105 : vector<8x64xf32>
    %1107 = arith.mulf %1098, %1040 : vector<8x64xf32>
    %1108 = arith.mulf %1092, %1100 : vector<8x64xf32>
    %1109 = arith.addf %1107, %1108 : vector<8x64xf32>
    %1110 = math.tanh %1109 : vector<8x64xf32>
    %1111 = arith.mulf %1106, %1110 : vector<8x64xf32>
    %c8_i32_398 = arith.constant 8 : i32
    %1112 = arith.index_cast %c8_i32_398 : i32 to index
    %c0_399 = arith.constant 0 : index
    %c0_400 = arith.constant 0 : index
    %1113 = vector.load %arg1[%1112, %c0_399, %c0_400] : memref<16x8x32xf32, #tpu.memory_space<vmem>>, vector<1x8x32xf32>
    %1114 = vector.shape_cast %1113 : vector<1x8x32xf32> to vector<8x32xf32>
    %c0_401 = arith.constant 0 : index
    %c0_402 = arith.constant 0 : index
    %1115 = vector.load %arg8[%c0_401, %c0_402] : memref<32x256xf32, #tpu.memory_space<vmem>>, vector<32x256xf32>
    %cst_403 = arith.constant dense<0.000000e+00> : vector<8x256xf32>
    %1116 = tpu.matmul %1114, %1115, %cst_403 {dimension_numbers = #tpu.dot_dimension_numbers<[1], [0], [0], [1], [0, 0, 1, 1], [], []>} : vector<8x32xf32>, vector<32x256xf32>, vector<8x256xf32> -> vector<8x256xf32>
    %c0_404 = arith.constant 0 : index
    %c0_405 = arith.constant 0 : index
    %1117 = vector.load %arg9[%c0_404, %c0_405] : memref<64x256xf32, #tpu.memory_space<vmem>>, vector<64x256xf32>
    %cst_406 = arith.constant dense<0.000000e+00> : vector<8x256xf32>
    %1118 = tpu.matmul %1078, %1117, %cst_406 {dimension_numbers = #tpu.dot_dimension_numbers<[1], [0], [0], [1], [0, 0, 1, 1], [], []>} : vector<8x64xf32>, vector<64x256xf32>, vector<8x256xf32> -> vector<8x256xf32>
    %1119 = arith.addf %1116, %1118 : vector<8x256xf32>
    %c0_407 = arith.constant 0 : index
    %c0_408 = arith.constant 0 : index
    %1120 = vector.load %arg10[%c0_407, %c0_408] : memref<1x256xf32, #tpu.memory_space<vmem>>, vector<1x256xf32>
    %1121 = vector.broadcast %1120 : vector<1x256xf32> to vector<8x256xf32>
    %1122 = arith.addf %1119, %1121 : vector<8x256xf32>
    %1123 = vector.extract_strided_slice %1122 {offsets = [0, 0], sizes = [8, 64], strides = [1, 1]} : vector<8x256xf32> to vector<8x64xf32>
    %1124 = arith.negf %1123 : vector<8x64xf32>
    %1125 = math.exp %1124 : vector<8x64xf32>
    %cst_409 = arith.constant 1.000000e+00 : f32
    %1126 = vector.broadcast %cst_409 : f32 to vector<8x64xf32>
    %1127 = arith.addf %1126, %1125 : vector<8x64xf32>
    %1128 = arith.divf %1126, %1127 : vector<8x64xf32>
    %1129 = vector.extract_strided_slice %1122 {offsets = [0, 64], sizes = [8, 64], strides = [1, 1]} : vector<8x256xf32> to vector<8x64xf32>
    %1130 = arith.negf %1129 : vector<8x64xf32>
    %1131 = math.exp %1130 : vector<8x64xf32>
    %cst_410 = arith.constant 1.000000e+00 : f32
    %1132 = vector.broadcast %cst_410 : f32 to vector<8x64xf32>
    %1133 = arith.addf %1132, %1131 : vector<8x64xf32>
    %1134 = arith.divf %1132, %1133 : vector<8x64xf32>
    %1135 = vector.extract_strided_slice %1122 {offsets = [0, 128], sizes = [8, 64], strides = [1, 1]} : vector<8x256xf32> to vector<8x64xf32>
    %1136 = math.tanh %1135 : vector<8x64xf32>
    %1137 = vector.extract_strided_slice %1122 {offsets = [0, 192], sizes = [8, 64], strides = [1, 1]} : vector<8x256xf32> to vector<8x64xf32>
    %1138 = arith.negf %1137 : vector<8x64xf32>
    %1139 = math.exp %1138 : vector<8x64xf32>
    %cst_411 = arith.constant 1.000000e+00 : f32
    %1140 = vector.broadcast %cst_411 : f32 to vector<8x64xf32>
    %1141 = arith.addf %1140, %1139 : vector<8x64xf32>
    %1142 = arith.divf %1140, %1141 : vector<8x64xf32>
    %1143 = arith.mulf %1134, %1076 : vector<8x64xf32>
    %1144 = arith.mulf %1128, %1136 : vector<8x64xf32>
    %1145 = arith.addf %1143, %1144 : vector<8x64xf32>
    %1146 = math.tanh %1145 : vector<8x64xf32>
    %1147 = arith.mulf %1142, %1146 : vector<8x64xf32>
    %c0_412 = arith.constant 0 : index
    %c0_413 = arith.constant 0 : index
    %1148 = vector.load %arg11[%c0_412, %c0_413] : memref<64x256xf32, #tpu.memory_space<vmem>>, vector<64x256xf32>
    %cst_414 = arith.constant dense<0.000000e+00> : vector<8x256xf32>
    %1149 = tpu.matmul %1147, %1148, %cst_414 {dimension_numbers = #tpu.dot_dimension_numbers<[1], [0], [0], [1], [0, 0, 1, 1], [], []>} : vector<8x64xf32>, vector<64x256xf32>, vector<8x256xf32> -> vector<8x256xf32>
    %c0_415 = arith.constant 0 : index
    %c0_416 = arith.constant 0 : index
    %1150 = vector.load %arg12[%c0_415, %c0_416] : memref<64x256xf32, #tpu.memory_space<vmem>>, vector<64x256xf32>
    %cst_417 = arith.constant dense<0.000000e+00> : vector<8x256xf32>
    %1151 = tpu.matmul %1111, %1150, %cst_417 {dimension_numbers = #tpu.dot_dimension_numbers<[1], [0], [0], [1], [0, 0, 1, 1], [], []>} : vector<8x64xf32>, vector<64x256xf32>, vector<8x256xf32> -> vector<8x256xf32>
    %1152 = arith.addf %1149, %1151 : vector<8x256xf32>
    %c0_418 = arith.constant 0 : index
    %c0_419 = arith.constant 0 : index
    %1153 = vector.load %arg13[%c0_418, %c0_419] : memref<1x256xf32, #tpu.memory_space<vmem>>, vector<1x256xf32>
    %1154 = vector.broadcast %1153 : vector<1x256xf32> to vector<8x256xf32>
    %1155 = arith.addf %1152, %1154 : vector<8x256xf32>
    %1156 = vector.extract_strided_slice %1155 {offsets = [0, 0], sizes = [8, 64], strides = [1, 1]} : vector<8x256xf32> to vector<8x64xf32>
    %1157 = arith.negf %1156 : vector<8x64xf32>
    %1158 = math.exp %1157 : vector<8x64xf32>
    %cst_420 = arith.constant 1.000000e+00 : f32
    %1159 = vector.broadcast %cst_420 : f32 to vector<8x64xf32>
    %1160 = arith.addf %1159, %1158 : vector<8x64xf32>
    %1161 = arith.divf %1159, %1160 : vector<8x64xf32>
    %1162 = vector.extract_strided_slice %1155 {offsets = [0, 64], sizes = [8, 64], strides = [1, 1]} : vector<8x256xf32> to vector<8x64xf32>
    %1163 = arith.negf %1162 : vector<8x64xf32>
    %1164 = math.exp %1163 : vector<8x64xf32>
    %cst_421 = arith.constant 1.000000e+00 : f32
    %1165 = vector.broadcast %cst_421 : f32 to vector<8x64xf32>
    %1166 = arith.addf %1165, %1164 : vector<8x64xf32>
    %1167 = arith.divf %1165, %1166 : vector<8x64xf32>
    %1168 = vector.extract_strided_slice %1155 {offsets = [0, 128], sizes = [8, 64], strides = [1, 1]} : vector<8x256xf32> to vector<8x64xf32>
    %1169 = math.tanh %1168 : vector<8x64xf32>
    %1170 = vector.extract_strided_slice %1155 {offsets = [0, 192], sizes = [8, 64], strides = [1, 1]} : vector<8x256xf32> to vector<8x64xf32>
    %1171 = arith.negf %1170 : vector<8x64xf32>
    %1172 = math.exp %1171 : vector<8x64xf32>
    %cst_422 = arith.constant 1.000000e+00 : f32
    %1173 = vector.broadcast %cst_422 : f32 to vector<8x64xf32>
    %1174 = arith.addf %1173, %1172 : vector<8x64xf32>
    %1175 = arith.divf %1173, %1174 : vector<8x64xf32>
    %1176 = arith.mulf %1167, %1109 : vector<8x64xf32>
    %1177 = arith.mulf %1161, %1169 : vector<8x64xf32>
    %1178 = arith.addf %1176, %1177 : vector<8x64xf32>
    %1179 = math.tanh %1178 : vector<8x64xf32>
    %1180 = arith.mulf %1175, %1179 : vector<8x64xf32>
    %c9_i32 = arith.constant 9 : i32
    %1181 = arith.index_cast %c9_i32 : i32 to index
    %c0_423 = arith.constant 0 : index
    %c0_424 = arith.constant 0 : index
    %1182 = vector.load %arg1[%1181, %c0_423, %c0_424] : memref<16x8x32xf32, #tpu.memory_space<vmem>>, vector<1x8x32xf32>
    %1183 = vector.shape_cast %1182 : vector<1x8x32xf32> to vector<8x32xf32>
    %c0_425 = arith.constant 0 : index
    %c0_426 = arith.constant 0 : index
    %1184 = vector.load %arg8[%c0_425, %c0_426] : memref<32x256xf32, #tpu.memory_space<vmem>>, vector<32x256xf32>
    %cst_427 = arith.constant dense<0.000000e+00> : vector<8x256xf32>
    %1185 = tpu.matmul %1183, %1184, %cst_427 {dimension_numbers = #tpu.dot_dimension_numbers<[1], [0], [0], [1], [0, 0, 1, 1], [], []>} : vector<8x32xf32>, vector<32x256xf32>, vector<8x256xf32> -> vector<8x256xf32>
    %c0_428 = arith.constant 0 : index
    %c0_429 = arith.constant 0 : index
    %1186 = vector.load %arg9[%c0_428, %c0_429] : memref<64x256xf32, #tpu.memory_space<vmem>>, vector<64x256xf32>
    %cst_430 = arith.constant dense<0.000000e+00> : vector<8x256xf32>
    %1187 = tpu.matmul %1147, %1186, %cst_430 {dimension_numbers = #tpu.dot_dimension_numbers<[1], [0], [0], [1], [0, 0, 1, 1], [], []>} : vector<8x64xf32>, vector<64x256xf32>, vector<8x256xf32> -> vector<8x256xf32>
    %1188 = arith.addf %1185, %1187 : vector<8x256xf32>
    %c0_431 = arith.constant 0 : index
    %c0_432 = arith.constant 0 : index
    %1189 = vector.load %arg10[%c0_431, %c0_432] : memref<1x256xf32, #tpu.memory_space<vmem>>, vector<1x256xf32>
    %1190 = vector.broadcast %1189 : vector<1x256xf32> to vector<8x256xf32>
    %1191 = arith.addf %1188, %1190 : vector<8x256xf32>
    %1192 = vector.extract_strided_slice %1191 {offsets = [0, 0], sizes = [8, 64], strides = [1, 1]} : vector<8x256xf32> to vector<8x64xf32>
    %1193 = arith.negf %1192 : vector<8x64xf32>
    %1194 = math.exp %1193 : vector<8x64xf32>
    %cst_433 = arith.constant 1.000000e+00 : f32
    %1195 = vector.broadcast %cst_433 : f32 to vector<8x64xf32>
    %1196 = arith.addf %1195, %1194 : vector<8x64xf32>
    %1197 = arith.divf %1195, %1196 : vector<8x64xf32>
    %1198 = vector.extract_strided_slice %1191 {offsets = [0, 64], sizes = [8, 64], strides = [1, 1]} : vector<8x256xf32> to vector<8x64xf32>
    %1199 = arith.negf %1198 : vector<8x64xf32>
    %1200 = math.exp %1199 : vector<8x64xf32>
    %cst_434 = arith.constant 1.000000e+00 : f32
    %1201 = vector.broadcast %cst_434 : f32 to vector<8x64xf32>
    %1202 = arith.addf %1201, %1200 : vector<8x64xf32>
    %1203 = arith.divf %1201, %1202 : vector<8x64xf32>
    %1204 = vector.extract_strided_slice %1191 {offsets = [0, 128], sizes = [8, 64], strides = [1, 1]} : vector<8x256xf32> to vector<8x64xf32>
    %1205 = math.tanh %1204 : vector<8x64xf32>
    %1206 = vector.extract_strided_slice %1191 {offsets = [0, 192], sizes = [8, 64], strides = [1, 1]} : vector<8x256xf32> to vector<8x64xf32>
    %1207 = arith.negf %1206 : vector<8x64xf32>
    %1208 = math.exp %1207 : vector<8x64xf32>
    %cst_435 = arith.constant 1.000000e+00 : f32
    %1209 = vector.broadcast %cst_435 : f32 to vector<8x64xf32>
    %1210 = arith.addf %1209, %1208 : vector<8x64xf32>
    %1211 = arith.divf %1209, %1210 : vector<8x64xf32>
    %1212 = arith.mulf %1203, %1145 : vector<8x64xf32>
    %1213 = arith.mulf %1197, %1205 : vector<8x64xf32>
    %1214 = arith.addf %1212, %1213 : vector<8x64xf32>
    %1215 = math.tanh %1214 : vector<8x64xf32>
    %1216 = arith.mulf %1211, %1215 : vector<8x64xf32>
    %c0_436 = arith.constant 0 : index
    %c0_437 = arith.constant 0 : index
    %1217 = vector.load %arg11[%c0_436, %c0_437] : memref<64x256xf32, #tpu.memory_space<vmem>>, vector<64x256xf32>
    %cst_438 = arith.constant dense<0.000000e+00> : vector<8x256xf32>
    %1218 = tpu.matmul %1216, %1217, %cst_438 {dimension_numbers = #tpu.dot_dimension_numbers<[1], [0], [0], [1], [0, 0, 1, 1], [], []>} : vector<8x64xf32>, vector<64x256xf32>, vector<8x256xf32> -> vector<8x256xf32>
    %c0_439 = arith.constant 0 : index
    %c0_440 = arith.constant 0 : index
    %1219 = vector.load %arg12[%c0_439, %c0_440] : memref<64x256xf32, #tpu.memory_space<vmem>>, vector<64x256xf32>
    %cst_441 = arith.constant dense<0.000000e+00> : vector<8x256xf32>
    %1220 = tpu.matmul %1180, %1219, %cst_441 {dimension_numbers = #tpu.dot_dimension_numbers<[1], [0], [0], [1], [0, 0, 1, 1], [], []>} : vector<8x64xf32>, vector<64x256xf32>, vector<8x256xf32> -> vector<8x256xf32>
    %1221 = arith.addf %1218, %1220 : vector<8x256xf32>
    %c0_442 = arith.constant 0 : index
    %c0_443 = arith.constant 0 : index
    %1222 = vector.load %arg13[%c0_442, %c0_443] : memref<1x256xf32, #tpu.memory_space<vmem>>, vector<1x256xf32>
    %1223 = vector.broadcast %1222 : vector<1x256xf32> to vector<8x256xf32>
    %1224 = arith.addf %1221, %1223 : vector<8x256xf32>
    %1225 = vector.extract_strided_slice %1224 {offsets = [0, 0], sizes = [8, 64], strides = [1, 1]} : vector<8x256xf32> to vector<8x64xf32>
    %1226 = arith.negf %1225 : vector<8x64xf32>
    %1227 = math.exp %1226 : vector<8x64xf32>
    %cst_444 = arith.constant 1.000000e+00 : f32
    %1228 = vector.broadcast %cst_444 : f32 to vector<8x64xf32>
    %1229 = arith.addf %1228, %1227 : vector<8x64xf32>
    %1230 = arith.divf %1228, %1229 : vector<8x64xf32>
    %1231 = vector.extract_strided_slice %1224 {offsets = [0, 64], sizes = [8, 64], strides = [1, 1]} : vector<8x256xf32> to vector<8x64xf32>
    %1232 = arith.negf %1231 : vector<8x64xf32>
    %1233 = math.exp %1232 : vector<8x64xf32>
    %cst_445 = arith.constant 1.000000e+00 : f32
    %1234 = vector.broadcast %cst_445 : f32 to vector<8x64xf32>
    %1235 = arith.addf %1234, %1233 : vector<8x64xf32>
    %1236 = arith.divf %1234, %1235 : vector<8x64xf32>
    %1237 = vector.extract_strided_slice %1224 {offsets = [0, 128], sizes = [8, 64], strides = [1, 1]} : vector<8x256xf32> to vector<8x64xf32>
    %1238 = math.tanh %1237 : vector<8x64xf32>
    %1239 = vector.extract_strided_slice %1224 {offsets = [0, 192], sizes = [8, 64], strides = [1, 1]} : vector<8x256xf32> to vector<8x64xf32>
    %1240 = arith.negf %1239 : vector<8x64xf32>
    %1241 = math.exp %1240 : vector<8x64xf32>
    %cst_446 = arith.constant 1.000000e+00 : f32
    %1242 = vector.broadcast %cst_446 : f32 to vector<8x64xf32>
    %1243 = arith.addf %1242, %1241 : vector<8x64xf32>
    %1244 = arith.divf %1242, %1243 : vector<8x64xf32>
    %1245 = arith.mulf %1236, %1178 : vector<8x64xf32>
    %1246 = arith.mulf %1230, %1238 : vector<8x64xf32>
    %1247 = arith.addf %1245, %1246 : vector<8x64xf32>
    %1248 = math.tanh %1247 : vector<8x64xf32>
    %1249 = arith.mulf %1244, %1248 : vector<8x64xf32>
    %c10_i32 = arith.constant 10 : i32
    %1250 = arith.index_cast %c10_i32 : i32 to index
    %c0_447 = arith.constant 0 : index
    %c0_448 = arith.constant 0 : index
    %1251 = vector.load %arg1[%1250, %c0_447, %c0_448] : memref<16x8x32xf32, #tpu.memory_space<vmem>>, vector<1x8x32xf32>
    %1252 = vector.shape_cast %1251 : vector<1x8x32xf32> to vector<8x32xf32>
    %c0_449 = arith.constant 0 : index
    %c0_450 = arith.constant 0 : index
    %1253 = vector.load %arg8[%c0_449, %c0_450] : memref<32x256xf32, #tpu.memory_space<vmem>>, vector<32x256xf32>
    %cst_451 = arith.constant dense<0.000000e+00> : vector<8x256xf32>
    %1254 = tpu.matmul %1252, %1253, %cst_451 {dimension_numbers = #tpu.dot_dimension_numbers<[1], [0], [0], [1], [0, 0, 1, 1], [], []>} : vector<8x32xf32>, vector<32x256xf32>, vector<8x256xf32> -> vector<8x256xf32>
    %c0_452 = arith.constant 0 : index
    %c0_453 = arith.constant 0 : index
    %1255 = vector.load %arg9[%c0_452, %c0_453] : memref<64x256xf32, #tpu.memory_space<vmem>>, vector<64x256xf32>
    %cst_454 = arith.constant dense<0.000000e+00> : vector<8x256xf32>
    %1256 = tpu.matmul %1216, %1255, %cst_454 {dimension_numbers = #tpu.dot_dimension_numbers<[1], [0], [0], [1], [0, 0, 1, 1], [], []>} : vector<8x64xf32>, vector<64x256xf32>, vector<8x256xf32> -> vector<8x256xf32>
    %1257 = arith.addf %1254, %1256 : vector<8x256xf32>
    %c0_455 = arith.constant 0 : index
    %c0_456 = arith.constant 0 : index
    %1258 = vector.load %arg10[%c0_455, %c0_456] : memref<1x256xf32, #tpu.memory_space<vmem>>, vector<1x256xf32>
    %1259 = vector.broadcast %1258 : vector<1x256xf32> to vector<8x256xf32>
    %1260 = arith.addf %1257, %1259 : vector<8x256xf32>
    %1261 = vector.extract_strided_slice %1260 {offsets = [0, 0], sizes = [8, 64], strides = [1, 1]} : vector<8x256xf32> to vector<8x64xf32>
    %1262 = arith.negf %1261 : vector<8x64xf32>
    %1263 = math.exp %1262 : vector<8x64xf32>
    %cst_457 = arith.constant 1.000000e+00 : f32
    %1264 = vector.broadcast %cst_457 : f32 to vector<8x64xf32>
    %1265 = arith.addf %1264, %1263 : vector<8x64xf32>
    %1266 = arith.divf %1264, %1265 : vector<8x64xf32>
    %1267 = vector.extract_strided_slice %1260 {offsets = [0, 64], sizes = [8, 64], strides = [1, 1]} : vector<8x256xf32> to vector<8x64xf32>
    %1268 = arith.negf %1267 : vector<8x64xf32>
    %1269 = math.exp %1268 : vector<8x64xf32>
    %cst_458 = arith.constant 1.000000e+00 : f32
    %1270 = vector.broadcast %cst_458 : f32 to vector<8x64xf32>
    %1271 = arith.addf %1270, %1269 : vector<8x64xf32>
    %1272 = arith.divf %1270, %1271 : vector<8x64xf32>
    %1273 = vector.extract_strided_slice %1260 {offsets = [0, 128], sizes = [8, 64], strides = [1, 1]} : vector<8x256xf32> to vector<8x64xf32>
    %1274 = math.tanh %1273 : vector<8x64xf32>
    %1275 = vector.extract_strided_slice %1260 {offsets = [0, 192], sizes = [8, 64], strides = [1, 1]} : vector<8x256xf32> to vector<8x64xf32>
    %1276 = arith.negf %1275 : vector<8x64xf32>
    %1277 = math.exp %1276 : vector<8x64xf32>
    %cst_459 = arith.constant 1.000000e+00 : f32
    %1278 = vector.broadcast %cst_459 : f32 to vector<8x64xf32>
    %1279 = arith.addf %1278, %1277 : vector<8x64xf32>
    %1280 = arith.divf %1278, %1279 : vector<8x64xf32>
    %1281 = arith.mulf %1272, %1214 : vector<8x64xf32>
    %1282 = arith.mulf %1266, %1274 : vector<8x64xf32>
    %1283 = arith.addf %1281, %1282 : vector<8x64xf32>
    %1284 = math.tanh %1283 : vector<8x64xf32>
    %1285 = arith.mulf %1280, %1284 : vector<8x64xf32>
    %c0_460 = arith.constant 0 : index
    %c0_461 = arith.constant 0 : index
    %1286 = vector.load %arg11[%c0_460, %c0_461] : memref<64x256xf32, #tpu.memory_space<vmem>>, vector<64x256xf32>
    %cst_462 = arith.constant dense<0.000000e+00> : vector<8x256xf32>
    %1287 = tpu.matmul %1285, %1286, %cst_462 {dimension_numbers = #tpu.dot_dimension_numbers<[1], [0], [0], [1], [0, 0, 1, 1], [], []>} : vector<8x64xf32>, vector<64x256xf32>, vector<8x256xf32> -> vector<8x256xf32>
    %c0_463 = arith.constant 0 : index
    %c0_464 = arith.constant 0 : index
    %1288 = vector.load %arg12[%c0_463, %c0_464] : memref<64x256xf32, #tpu.memory_space<vmem>>, vector<64x256xf32>
    %cst_465 = arith.constant dense<0.000000e+00> : vector<8x256xf32>
    %1289 = tpu.matmul %1249, %1288, %cst_465 {dimension_numbers = #tpu.dot_dimension_numbers<[1], [0], [0], [1], [0, 0, 1, 1], [], []>} : vector<8x64xf32>, vector<64x256xf32>, vector<8x256xf32> -> vector<8x256xf32>
    %1290 = arith.addf %1287, %1289 : vector<8x256xf32>
    %c0_466 = arith.constant 0 : index
    %c0_467 = arith.constant 0 : index
    %1291 = vector.load %arg13[%c0_466, %c0_467] : memref<1x256xf32, #tpu.memory_space<vmem>>, vector<1x256xf32>
    %1292 = vector.broadcast %1291 : vector<1x256xf32> to vector<8x256xf32>
    %1293 = arith.addf %1290, %1292 : vector<8x256xf32>
    %1294 = vector.extract_strided_slice %1293 {offsets = [0, 0], sizes = [8, 64], strides = [1, 1]} : vector<8x256xf32> to vector<8x64xf32>
    %1295 = arith.negf %1294 : vector<8x64xf32>
    %1296 = math.exp %1295 : vector<8x64xf32>
    %cst_468 = arith.constant 1.000000e+00 : f32
    %1297 = vector.broadcast %cst_468 : f32 to vector<8x64xf32>
    %1298 = arith.addf %1297, %1296 : vector<8x64xf32>
    %1299 = arith.divf %1297, %1298 : vector<8x64xf32>
    %1300 = vector.extract_strided_slice %1293 {offsets = [0, 64], sizes = [8, 64], strides = [1, 1]} : vector<8x256xf32> to vector<8x64xf32>
    %1301 = arith.negf %1300 : vector<8x64xf32>
    %1302 = math.exp %1301 : vector<8x64xf32>
    %cst_469 = arith.constant 1.000000e+00 : f32
    %1303 = vector.broadcast %cst_469 : f32 to vector<8x64xf32>
    %1304 = arith.addf %1303, %1302 : vector<8x64xf32>
    %1305 = arith.divf %1303, %1304 : vector<8x64xf32>
    %1306 = vector.extract_strided_slice %1293 {offsets = [0, 128], sizes = [8, 64], strides = [1, 1]} : vector<8x256xf32> to vector<8x64xf32>
    %1307 = math.tanh %1306 : vector<8x64xf32>
    %1308 = vector.extract_strided_slice %1293 {offsets = [0, 192], sizes = [8, 64], strides = [1, 1]} : vector<8x256xf32> to vector<8x64xf32>
    %1309 = arith.negf %1308 : vector<8x64xf32>
    %1310 = math.exp %1309 : vector<8x64xf32>
    %cst_470 = arith.constant 1.000000e+00 : f32
    %1311 = vector.broadcast %cst_470 : f32 to vector<8x64xf32>
    %1312 = arith.addf %1311, %1310 : vector<8x64xf32>
    %1313 = arith.divf %1311, %1312 : vector<8x64xf32>
    %1314 = arith.mulf %1305, %1247 : vector<8x64xf32>
    %1315 = arith.mulf %1299, %1307 : vector<8x64xf32>
    %1316 = arith.addf %1314, %1315 : vector<8x64xf32>
    %1317 = math.tanh %1316 : vector<8x64xf32>
    %1318 = arith.mulf %1313, %1317 : vector<8x64xf32>
    %c11_i32 = arith.constant 11 : i32
    %1319 = arith.index_cast %c11_i32 : i32 to index
    %c0_471 = arith.constant 0 : index
    %c0_472 = arith.constant 0 : index
    %1320 = vector.load %arg1[%1319, %c0_471, %c0_472] : memref<16x8x32xf32, #tpu.memory_space<vmem>>, vector<1x8x32xf32>
    %1321 = vector.shape_cast %1320 : vector<1x8x32xf32> to vector<8x32xf32>
    %c0_473 = arith.constant 0 : index
    %c0_474 = arith.constant 0 : index
    %1322 = vector.load %arg8[%c0_473, %c0_474] : memref<32x256xf32, #tpu.memory_space<vmem>>, vector<32x256xf32>
    %cst_475 = arith.constant dense<0.000000e+00> : vector<8x256xf32>
    %1323 = tpu.matmul %1321, %1322, %cst_475 {dimension_numbers = #tpu.dot_dimension_numbers<[1], [0], [0], [1], [0, 0, 1, 1], [], []>} : vector<8x32xf32>, vector<32x256xf32>, vector<8x256xf32> -> vector<8x256xf32>
    %c0_476 = arith.constant 0 : index
    %c0_477 = arith.constant 0 : index
    %1324 = vector.load %arg9[%c0_476, %c0_477] : memref<64x256xf32, #tpu.memory_space<vmem>>, vector<64x256xf32>
    %cst_478 = arith.constant dense<0.000000e+00> : vector<8x256xf32>
    %1325 = tpu.matmul %1285, %1324, %cst_478 {dimension_numbers = #tpu.dot_dimension_numbers<[1], [0], [0], [1], [0, 0, 1, 1], [], []>} : vector<8x64xf32>, vector<64x256xf32>, vector<8x256xf32> -> vector<8x256xf32>
    %1326 = arith.addf %1323, %1325 : vector<8x256xf32>
    %c0_479 = arith.constant 0 : index
    %c0_480 = arith.constant 0 : index
    %1327 = vector.load %arg10[%c0_479, %c0_480] : memref<1x256xf32, #tpu.memory_space<vmem>>, vector<1x256xf32>
    %1328 = vector.broadcast %1327 : vector<1x256xf32> to vector<8x256xf32>
    %1329 = arith.addf %1326, %1328 : vector<8x256xf32>
    %1330 = vector.extract_strided_slice %1329 {offsets = [0, 0], sizes = [8, 64], strides = [1, 1]} : vector<8x256xf32> to vector<8x64xf32>
    %1331 = arith.negf %1330 : vector<8x64xf32>
    %1332 = math.exp %1331 : vector<8x64xf32>
    %cst_481 = arith.constant 1.000000e+00 : f32
    %1333 = vector.broadcast %cst_481 : f32 to vector<8x64xf32>
    %1334 = arith.addf %1333, %1332 : vector<8x64xf32>
    %1335 = arith.divf %1333, %1334 : vector<8x64xf32>
    %1336 = vector.extract_strided_slice %1329 {offsets = [0, 64], sizes = [8, 64], strides = [1, 1]} : vector<8x256xf32> to vector<8x64xf32>
    %1337 = arith.negf %1336 : vector<8x64xf32>
    %1338 = math.exp %1337 : vector<8x64xf32>
    %cst_482 = arith.constant 1.000000e+00 : f32
    %1339 = vector.broadcast %cst_482 : f32 to vector<8x64xf32>
    %1340 = arith.addf %1339, %1338 : vector<8x64xf32>
    %1341 = arith.divf %1339, %1340 : vector<8x64xf32>
    %1342 = vector.extract_strided_slice %1329 {offsets = [0, 128], sizes = [8, 64], strides = [1, 1]} : vector<8x256xf32> to vector<8x64xf32>
    %1343 = math.tanh %1342 : vector<8x64xf32>
    %1344 = vector.extract_strided_slice %1329 {offsets = [0, 192], sizes = [8, 64], strides = [1, 1]} : vector<8x256xf32> to vector<8x64xf32>
    %1345 = arith.negf %1344 : vector<8x64xf32>
    %1346 = math.exp %1345 : vector<8x64xf32>
    %cst_483 = arith.constant 1.000000e+00 : f32
    %1347 = vector.broadcast %cst_483 : f32 to vector<8x64xf32>
    %1348 = arith.addf %1347, %1346 : vector<8x64xf32>
    %1349 = arith.divf %1347, %1348 : vector<8x64xf32>
    %1350 = arith.mulf %1341, %1283 : vector<8x64xf32>
    %1351 = arith.mulf %1335, %1343 : vector<8x64xf32>
    %1352 = arith.addf %1350, %1351 : vector<8x64xf32>
    %1353 = math.tanh %1352 : vector<8x64xf32>
    %1354 = arith.mulf %1349, %1353 : vector<8x64xf32>
    %c0_484 = arith.constant 0 : index
    %c0_485 = arith.constant 0 : index
    %1355 = vector.load %arg11[%c0_484, %c0_485] : memref<64x256xf32, #tpu.memory_space<vmem>>, vector<64x256xf32>
    %cst_486 = arith.constant dense<0.000000e+00> : vector<8x256xf32>
    %1356 = tpu.matmul %1354, %1355, %cst_486 {dimension_numbers = #tpu.dot_dimension_numbers<[1], [0], [0], [1], [0, 0, 1, 1], [], []>} : vector<8x64xf32>, vector<64x256xf32>, vector<8x256xf32> -> vector<8x256xf32>
    %c0_487 = arith.constant 0 : index
    %c0_488 = arith.constant 0 : index
    %1357 = vector.load %arg12[%c0_487, %c0_488] : memref<64x256xf32, #tpu.memory_space<vmem>>, vector<64x256xf32>
    %cst_489 = arith.constant dense<0.000000e+00> : vector<8x256xf32>
    %1358 = tpu.matmul %1318, %1357, %cst_489 {dimension_numbers = #tpu.dot_dimension_numbers<[1], [0], [0], [1], [0, 0, 1, 1], [], []>} : vector<8x64xf32>, vector<64x256xf32>, vector<8x256xf32> -> vector<8x256xf32>
    %1359 = arith.addf %1356, %1358 : vector<8x256xf32>
    %c0_490 = arith.constant 0 : index
    %c0_491 = arith.constant 0 : index
    %1360 = vector.load %arg13[%c0_490, %c0_491] : memref<1x256xf32, #tpu.memory_space<vmem>>, vector<1x256xf32>
    %1361 = vector.broadcast %1360 : vector<1x256xf32> to vector<8x256xf32>
    %1362 = arith.addf %1359, %1361 : vector<8x256xf32>
    %1363 = vector.extract_strided_slice %1362 {offsets = [0, 0], sizes = [8, 64], strides = [1, 1]} : vector<8x256xf32> to vector<8x64xf32>
    %1364 = arith.negf %1363 : vector<8x64xf32>
    %1365 = math.exp %1364 : vector<8x64xf32>
    %cst_492 = arith.constant 1.000000e+00 : f32
    %1366 = vector.broadcast %cst_492 : f32 to vector<8x64xf32>
    %1367 = arith.addf %1366, %1365 : vector<8x64xf32>
    %1368 = arith.divf %1366, %1367 : vector<8x64xf32>
    %1369 = vector.extract_strided_slice %1362 {offsets = [0, 64], sizes = [8, 64], strides = [1, 1]} : vector<8x256xf32> to vector<8x64xf32>
    %1370 = arith.negf %1369 : vector<8x64xf32>
    %1371 = math.exp %1370 : vector<8x64xf32>
    %cst_493 = arith.constant 1.000000e+00 : f32
    %1372 = vector.broadcast %cst_493 : f32 to vector<8x64xf32>
    %1373 = arith.addf %1372, %1371 : vector<8x64xf32>
    %1374 = arith.divf %1372, %1373 : vector<8x64xf32>
    %1375 = vector.extract_strided_slice %1362 {offsets = [0, 128], sizes = [8, 64], strides = [1, 1]} : vector<8x256xf32> to vector<8x64xf32>
    %1376 = math.tanh %1375 : vector<8x64xf32>
    %1377 = vector.extract_strided_slice %1362 {offsets = [0, 192], sizes = [8, 64], strides = [1, 1]} : vector<8x256xf32> to vector<8x64xf32>
    %1378 = arith.negf %1377 : vector<8x64xf32>
    %1379 = math.exp %1378 : vector<8x64xf32>
    %cst_494 = arith.constant 1.000000e+00 : f32
    %1380 = vector.broadcast %cst_494 : f32 to vector<8x64xf32>
    %1381 = arith.addf %1380, %1379 : vector<8x64xf32>
    %1382 = arith.divf %1380, %1381 : vector<8x64xf32>
    %1383 = arith.mulf %1374, %1316 : vector<8x64xf32>
    %1384 = arith.mulf %1368, %1376 : vector<8x64xf32>
    %1385 = arith.addf %1383, %1384 : vector<8x64xf32>
    %1386 = math.tanh %1385 : vector<8x64xf32>
    %1387 = arith.mulf %1382, %1386 : vector<8x64xf32>
    %c12_i32 = arith.constant 12 : i32
    %1388 = arith.index_cast %c12_i32 : i32 to index
    %c0_495 = arith.constant 0 : index
    %c0_496 = arith.constant 0 : index
    %1389 = vector.load %arg1[%1388, %c0_495, %c0_496] : memref<16x8x32xf32, #tpu.memory_space<vmem>>, vector<1x8x32xf32>
    %1390 = vector.shape_cast %1389 : vector<1x8x32xf32> to vector<8x32xf32>
    %c0_497 = arith.constant 0 : index
    %c0_498 = arith.constant 0 : index
    %1391 = vector.load %arg8[%c0_497, %c0_498] : memref<32x256xf32, #tpu.memory_space<vmem>>, vector<32x256xf32>
    %cst_499 = arith.constant dense<0.000000e+00> : vector<8x256xf32>
    %1392 = tpu.matmul %1390, %1391, %cst_499 {dimension_numbers = #tpu.dot_dimension_numbers<[1], [0], [0], [1], [0, 0, 1, 1], [], []>} : vector<8x32xf32>, vector<32x256xf32>, vector<8x256xf32> -> vector<8x256xf32>
    %c0_500 = arith.constant 0 : index
    %c0_501 = arith.constant 0 : index
    %1393 = vector.load %arg9[%c0_500, %c0_501] : memref<64x256xf32, #tpu.memory_space<vmem>>, vector<64x256xf32>
    %cst_502 = arith.constant dense<0.000000e+00> : vector<8x256xf32>
    %1394 = tpu.matmul %1354, %1393, %cst_502 {dimension_numbers = #tpu.dot_dimension_numbers<[1], [0], [0], [1], [0, 0, 1, 1], [], []>} : vector<8x64xf32>, vector<64x256xf32>, vector<8x256xf32> -> vector<8x256xf32>
    %1395 = arith.addf %1392, %1394 : vector<8x256xf32>
    %c0_503 = arith.constant 0 : index
    %c0_504 = arith.constant 0 : index
    %1396 = vector.load %arg10[%c0_503, %c0_504] : memref<1x256xf32, #tpu.memory_space<vmem>>, vector<1x256xf32>
    %1397 = vector.broadcast %1396 : vector<1x256xf32> to vector<8x256xf32>
    %1398 = arith.addf %1395, %1397 : vector<8x256xf32>
    %1399 = vector.extract_strided_slice %1398 {offsets = [0, 0], sizes = [8, 64], strides = [1, 1]} : vector<8x256xf32> to vector<8x64xf32>
    %1400 = arith.negf %1399 : vector<8x64xf32>
    %1401 = math.exp %1400 : vector<8x64xf32>
    %cst_505 = arith.constant 1.000000e+00 : f32
    %1402 = vector.broadcast %cst_505 : f32 to vector<8x64xf32>
    %1403 = arith.addf %1402, %1401 : vector<8x64xf32>
    %1404 = arith.divf %1402, %1403 : vector<8x64xf32>
    %1405 = vector.extract_strided_slice %1398 {offsets = [0, 64], sizes = [8, 64], strides = [1, 1]} : vector<8x256xf32> to vector<8x64xf32>
    %1406 = arith.negf %1405 : vector<8x64xf32>
    %1407 = math.exp %1406 : vector<8x64xf32>
    %cst_506 = arith.constant 1.000000e+00 : f32
    %1408 = vector.broadcast %cst_506 : f32 to vector<8x64xf32>
    %1409 = arith.addf %1408, %1407 : vector<8x64xf32>
    %1410 = arith.divf %1408, %1409 : vector<8x64xf32>
    %1411 = vector.extract_strided_slice %1398 {offsets = [0, 128], sizes = [8, 64], strides = [1, 1]} : vector<8x256xf32> to vector<8x64xf32>
    %1412 = math.tanh %1411 : vector<8x64xf32>
    %1413 = vector.extract_strided_slice %1398 {offsets = [0, 192], sizes = [8, 64], strides = [1, 1]} : vector<8x256xf32> to vector<8x64xf32>
    %1414 = arith.negf %1413 : vector<8x64xf32>
    %1415 = math.exp %1414 : vector<8x64xf32>
    %cst_507 = arith.constant 1.000000e+00 : f32
    %1416 = vector.broadcast %cst_507 : f32 to vector<8x64xf32>
    %1417 = arith.addf %1416, %1415 : vector<8x64xf32>
    %1418 = arith.divf %1416, %1417 : vector<8x64xf32>
    %1419 = arith.mulf %1410, %1352 : vector<8x64xf32>
    %1420 = arith.mulf %1404, %1412 : vector<8x64xf32>
    %1421 = arith.addf %1419, %1420 : vector<8x64xf32>
    %1422 = math.tanh %1421 : vector<8x64xf32>
    %1423 = arith.mulf %1418, %1422 : vector<8x64xf32>
    %c0_508 = arith.constant 0 : index
    %c0_509 = arith.constant 0 : index
    %1424 = vector.load %arg11[%c0_508, %c0_509] : memref<64x256xf32, #tpu.memory_space<vmem>>, vector<64x256xf32>
    %cst_510 = arith.constant dense<0.000000e+00> : vector<8x256xf32>
    %1425 = tpu.matmul %1423, %1424, %cst_510 {dimension_numbers = #tpu.dot_dimension_numbers<[1], [0], [0], [1], [0, 0, 1, 1], [], []>} : vector<8x64xf32>, vector<64x256xf32>, vector<8x256xf32> -> vector<8x256xf32>
    %c0_511 = arith.constant 0 : index
    %c0_512 = arith.constant 0 : index
    %1426 = vector.load %arg12[%c0_511, %c0_512] : memref<64x256xf32, #tpu.memory_space<vmem>>, vector<64x256xf32>
    %cst_513 = arith.constant dense<0.000000e+00> : vector<8x256xf32>
    %1427 = tpu.matmul %1387, %1426, %cst_513 {dimension_numbers = #tpu.dot_dimension_numbers<[1], [0], [0], [1], [0, 0, 1, 1], [], []>} : vector<8x64xf32>, vector<64x256xf32>, vector<8x256xf32> -> vector<8x256xf32>
    %1428 = arith.addf %1425, %1427 : vector<8x256xf32>
    %c0_514 = arith.constant 0 : index
    %c0_515 = arith.constant 0 : index
    %1429 = vector.load %arg13[%c0_514, %c0_515] : memref<1x256xf32, #tpu.memory_space<vmem>>, vector<1x256xf32>
    %1430 = vector.broadcast %1429 : vector<1x256xf32> to vector<8x256xf32>
    %1431 = arith.addf %1428, %1430 : vector<8x256xf32>
    %1432 = vector.extract_strided_slice %1431 {offsets = [0, 0], sizes = [8, 64], strides = [1, 1]} : vector<8x256xf32> to vector<8x64xf32>
    %1433 = arith.negf %1432 : vector<8x64xf32>
    %1434 = math.exp %1433 : vector<8x64xf32>
    %cst_516 = arith.constant 1.000000e+00 : f32
    %1435 = vector.broadcast %cst_516 : f32 to vector<8x64xf32>
    %1436 = arith.addf %1435, %1434 : vector<8x64xf32>
    %1437 = arith.divf %1435, %1436 : vector<8x64xf32>
    %1438 = vector.extract_strided_slice %1431 {offsets = [0, 64], sizes = [8, 64], strides = [1, 1]} : vector<8x256xf32> to vector<8x64xf32>
    %1439 = arith.negf %1438 : vector<8x64xf32>
    %1440 = math.exp %1439 : vector<8x64xf32>
    %cst_517 = arith.constant 1.000000e+00 : f32
    %1441 = vector.broadcast %cst_517 : f32 to vector<8x64xf32>
    %1442 = arith.addf %1441, %1440 : vector<8x64xf32>
    %1443 = arith.divf %1441, %1442 : vector<8x64xf32>
    %1444 = vector.extract_strided_slice %1431 {offsets = [0, 128], sizes = [8, 64], strides = [1, 1]} : vector<8x256xf32> to vector<8x64xf32>
    %1445 = math.tanh %1444 : vector<8x64xf32>
    %1446 = vector.extract_strided_slice %1431 {offsets = [0, 192], sizes = [8, 64], strides = [1, 1]} : vector<8x256xf32> to vector<8x64xf32>
    %1447 = arith.negf %1446 : vector<8x64xf32>
    %1448 = math.exp %1447 : vector<8x64xf32>
    %cst_518 = arith.constant 1.000000e+00 : f32
    %1449 = vector.broadcast %cst_518 : f32 to vector<8x64xf32>
    %1450 = arith.addf %1449, %1448 : vector<8x64xf32>
    %1451 = arith.divf %1449, %1450 : vector<8x64xf32>
    %1452 = arith.mulf %1443, %1385 : vector<8x64xf32>
    %1453 = arith.mulf %1437, %1445 : vector<8x64xf32>
    %1454 = arith.addf %1452, %1453 : vector<8x64xf32>
    %1455 = math.tanh %1454 : vector<8x64xf32>
    %1456 = arith.mulf %1451, %1455 : vector<8x64xf32>
    %c13_i32 = arith.constant 13 : i32
    %1457 = arith.index_cast %c13_i32 : i32 to index
    %c0_519 = arith.constant 0 : index
    %c0_520 = arith.constant 0 : index
    %1458 = vector.load %arg1[%1457, %c0_519, %c0_520] : memref<16x8x32xf32, #tpu.memory_space<vmem>>, vector<1x8x32xf32>
    %1459 = vector.shape_cast %1458 : vector<1x8x32xf32> to vector<8x32xf32>
    %c0_521 = arith.constant 0 : index
    %c0_522 = arith.constant 0 : index
    %1460 = vector.load %arg8[%c0_521, %c0_522] : memref<32x256xf32, #tpu.memory_space<vmem>>, vector<32x256xf32>
    %cst_523 = arith.constant dense<0.000000e+00> : vector<8x256xf32>
    %1461 = tpu.matmul %1459, %1460, %cst_523 {dimension_numbers = #tpu.dot_dimension_numbers<[1], [0], [0], [1], [0, 0, 1, 1], [], []>} : vector<8x32xf32>, vector<32x256xf32>, vector<8x256xf32> -> vector<8x256xf32>
    %c0_524 = arith.constant 0 : index
    %c0_525 = arith.constant 0 : index
    %1462 = vector.load %arg9[%c0_524, %c0_525] : memref<64x256xf32, #tpu.memory_space<vmem>>, vector<64x256xf32>
    %cst_526 = arith.constant dense<0.000000e+00> : vector<8x256xf32>
    %1463 = tpu.matmul %1423, %1462, %cst_526 {dimension_numbers = #tpu.dot_dimension_numbers<[1], [0], [0], [1], [0, 0, 1, 1], [], []>} : vector<8x64xf32>, vector<64x256xf32>, vector<8x256xf32> -> vector<8x256xf32>
    %1464 = arith.addf %1461, %1463 : vector<8x256xf32>
    %c0_527 = arith.constant 0 : index
    %c0_528 = arith.constant 0 : index
    %1465 = vector.load %arg10[%c0_527, %c0_528] : memref<1x256xf32, #tpu.memory_space<vmem>>, vector<1x256xf32>
    %1466 = vector.broadcast %1465 : vector<1x256xf32> to vector<8x256xf32>
    %1467 = arith.addf %1464, %1466 : vector<8x256xf32>
    %1468 = vector.extract_strided_slice %1467 {offsets = [0, 0], sizes = [8, 64], strides = [1, 1]} : vector<8x256xf32> to vector<8x64xf32>
    %1469 = arith.negf %1468 : vector<8x64xf32>
    %1470 = math.exp %1469 : vector<8x64xf32>
    %cst_529 = arith.constant 1.000000e+00 : f32
    %1471 = vector.broadcast %cst_529 : f32 to vector<8x64xf32>
    %1472 = arith.addf %1471, %1470 : vector<8x64xf32>
    %1473 = arith.divf %1471, %1472 : vector<8x64xf32>
    %1474 = vector.extract_strided_slice %1467 {offsets = [0, 64], sizes = [8, 64], strides = [1, 1]} : vector<8x256xf32> to vector<8x64xf32>
    %1475 = arith.negf %1474 : vector<8x64xf32>
    %1476 = math.exp %1475 : vector<8x64xf32>
    %cst_530 = arith.constant 1.000000e+00 : f32
    %1477 = vector.broadcast %cst_530 : f32 to vector<8x64xf32>
    %1478 = arith.addf %1477, %1476 : vector<8x64xf32>
    %1479 = arith.divf %1477, %1478 : vector<8x64xf32>
    %1480 = vector.extract_strided_slice %1467 {offsets = [0, 128], sizes = [8, 64], strides = [1, 1]} : vector<8x256xf32> to vector<8x64xf32>
    %1481 = math.tanh %1480 : vector<8x64xf32>
    %1482 = vector.extract_strided_slice %1467 {offsets = [0, 192], sizes = [8, 64], strides = [1, 1]} : vector<8x256xf32> to vector<8x64xf32>
    %1483 = arith.negf %1482 : vector<8x64xf32>
    %1484 = math.exp %1483 : vector<8x64xf32>
    %cst_531 = arith.constant 1.000000e+00 : f32
    %1485 = vector.broadcast %cst_531 : f32 to vector<8x64xf32>
    %1486 = arith.addf %1485, %1484 : vector<8x64xf32>
    %1487 = arith.divf %1485, %1486 : vector<8x64xf32>
    %1488 = arith.mulf %1479, %1421 : vector<8x64xf32>
    %1489 = arith.mulf %1473, %1481 : vector<8x64xf32>
    %1490 = arith.addf %1488, %1489 : vector<8x64xf32>
    %1491 = math.tanh %1490 : vector<8x64xf32>
    %1492 = arith.mulf %1487, %1491 : vector<8x64xf32>
    %c0_532 = arith.constant 0 : index
    %c0_533 = arith.constant 0 : index
    %1493 = vector.load %arg11[%c0_532, %c0_533] : memref<64x256xf32, #tpu.memory_space<vmem>>, vector<64x256xf32>
    %cst_534 = arith.constant dense<0.000000e+00> : vector<8x256xf32>
    %1494 = tpu.matmul %1492, %1493, %cst_534 {dimension_numbers = #tpu.dot_dimension_numbers<[1], [0], [0], [1], [0, 0, 1, 1], [], []>} : vector<8x64xf32>, vector<64x256xf32>, vector<8x256xf32> -> vector<8x256xf32>
    %c0_535 = arith.constant 0 : index
    %c0_536 = arith.constant 0 : index
    %1495 = vector.load %arg12[%c0_535, %c0_536] : memref<64x256xf32, #tpu.memory_space<vmem>>, vector<64x256xf32>
    %cst_537 = arith.constant dense<0.000000e+00> : vector<8x256xf32>
    %1496 = tpu.matmul %1456, %1495, %cst_537 {dimension_numbers = #tpu.dot_dimension_numbers<[1], [0], [0], [1], [0, 0, 1, 1], [], []>} : vector<8x64xf32>, vector<64x256xf32>, vector<8x256xf32> -> vector<8x256xf32>
    %1497 = arith.addf %1494, %1496 : vector<8x256xf32>
    %c0_538 = arith.constant 0 : index
    %c0_539 = arith.constant 0 : index
    %1498 = vector.load %arg13[%c0_538, %c0_539] : memref<1x256xf32, #tpu.memory_space<vmem>>, vector<1x256xf32>
    %1499 = vector.broadcast %1498 : vector<1x256xf32> to vector<8x256xf32>
    %1500 = arith.addf %1497, %1499 : vector<8x256xf32>
    %1501 = vector.extract_strided_slice %1500 {offsets = [0, 0], sizes = [8, 64], strides = [1, 1]} : vector<8x256xf32> to vector<8x64xf32>
    %1502 = arith.negf %1501 : vector<8x64xf32>
    %1503 = math.exp %1502 : vector<8x64xf32>
    %cst_540 = arith.constant 1.000000e+00 : f32
    %1504 = vector.broadcast %cst_540 : f32 to vector<8x64xf32>
    %1505 = arith.addf %1504, %1503 : vector<8x64xf32>
    %1506 = arith.divf %1504, %1505 : vector<8x64xf32>
    %1507 = vector.extract_strided_slice %1500 {offsets = [0, 64], sizes = [8, 64], strides = [1, 1]} : vector<8x256xf32> to vector<8x64xf32>
    %1508 = arith.negf %1507 : vector<8x64xf32>
    %1509 = math.exp %1508 : vector<8x64xf32>
    %cst_541 = arith.constant 1.000000e+00 : f32
    %1510 = vector.broadcast %cst_541 : f32 to vector<8x64xf32>
    %1511 = arith.addf %1510, %1509 : vector<8x64xf32>
    %1512 = arith.divf %1510, %1511 : vector<8x64xf32>
    %1513 = vector.extract_strided_slice %1500 {offsets = [0, 128], sizes = [8, 64], strides = [1, 1]} : vector<8x256xf32> to vector<8x64xf32>
    %1514 = math.tanh %1513 : vector<8x64xf32>
    %1515 = vector.extract_strided_slice %1500 {offsets = [0, 192], sizes = [8, 64], strides = [1, 1]} : vector<8x256xf32> to vector<8x64xf32>
    %1516 = arith.negf %1515 : vector<8x64xf32>
    %1517 = math.exp %1516 : vector<8x64xf32>
    %cst_542 = arith.constant 1.000000e+00 : f32
    %1518 = vector.broadcast %cst_542 : f32 to vector<8x64xf32>
    %1519 = arith.addf %1518, %1517 : vector<8x64xf32>
    %1520 = arith.divf %1518, %1519 : vector<8x64xf32>
    %1521 = arith.mulf %1512, %1454 : vector<8x64xf32>
    %1522 = arith.mulf %1506, %1514 : vector<8x64xf32>
    %1523 = arith.addf %1521, %1522 : vector<8x64xf32>
    %1524 = math.tanh %1523 : vector<8x64xf32>
    %1525 = arith.mulf %1520, %1524 : vector<8x64xf32>
    %c14_i32 = arith.constant 14 : i32
    %1526 = arith.index_cast %c14_i32 : i32 to index
    %c0_543 = arith.constant 0 : index
    %c0_544 = arith.constant 0 : index
    %1527 = vector.load %arg1[%1526, %c0_543, %c0_544] : memref<16x8x32xf32, #tpu.memory_space<vmem>>, vector<1x8x32xf32>
    %1528 = vector.shape_cast %1527 : vector<1x8x32xf32> to vector<8x32xf32>
    %c0_545 = arith.constant 0 : index
    %c0_546 = arith.constant 0 : index
    %1529 = vector.load %arg8[%c0_545, %c0_546] : memref<32x256xf32, #tpu.memory_space<vmem>>, vector<32x256xf32>
    %cst_547 = arith.constant dense<0.000000e+00> : vector<8x256xf32>
    %1530 = tpu.matmul %1528, %1529, %cst_547 {dimension_numbers = #tpu.dot_dimension_numbers<[1], [0], [0], [1], [0, 0, 1, 1], [], []>} : vector<8x32xf32>, vector<32x256xf32>, vector<8x256xf32> -> vector<8x256xf32>
    %c0_548 = arith.constant 0 : index
    %c0_549 = arith.constant 0 : index
    %1531 = vector.load %arg9[%c0_548, %c0_549] : memref<64x256xf32, #tpu.memory_space<vmem>>, vector<64x256xf32>
    %cst_550 = arith.constant dense<0.000000e+00> : vector<8x256xf32>
    %1532 = tpu.matmul %1492, %1531, %cst_550 {dimension_numbers = #tpu.dot_dimension_numbers<[1], [0], [0], [1], [0, 0, 1, 1], [], []>} : vector<8x64xf32>, vector<64x256xf32>, vector<8x256xf32> -> vector<8x256xf32>
    %1533 = arith.addf %1530, %1532 : vector<8x256xf32>
    %c0_551 = arith.constant 0 : index
    %c0_552 = arith.constant 0 : index
    %1534 = vector.load %arg10[%c0_551, %c0_552] : memref<1x256xf32, #tpu.memory_space<vmem>>, vector<1x256xf32>
    %1535 = vector.broadcast %1534 : vector<1x256xf32> to vector<8x256xf32>
    %1536 = arith.addf %1533, %1535 : vector<8x256xf32>
    %1537 = vector.extract_strided_slice %1536 {offsets = [0, 0], sizes = [8, 64], strides = [1, 1]} : vector<8x256xf32> to vector<8x64xf32>
    %1538 = arith.negf %1537 : vector<8x64xf32>
    %1539 = math.exp %1538 : vector<8x64xf32>
    %cst_553 = arith.constant 1.000000e+00 : f32
    %1540 = vector.broadcast %cst_553 : f32 to vector<8x64xf32>
    %1541 = arith.addf %1540, %1539 : vector<8x64xf32>
    %1542 = arith.divf %1540, %1541 : vector<8x64xf32>
    %1543 = vector.extract_strided_slice %1536 {offsets = [0, 64], sizes = [8, 64], strides = [1, 1]} : vector<8x256xf32> to vector<8x64xf32>
    %1544 = arith.negf %1543 : vector<8x64xf32>
    %1545 = math.exp %1544 : vector<8x64xf32>
    %cst_554 = arith.constant 1.000000e+00 : f32
    %1546 = vector.broadcast %cst_554 : f32 to vector<8x64xf32>
    %1547 = arith.addf %1546, %1545 : vector<8x64xf32>
    %1548 = arith.divf %1546, %1547 : vector<8x64xf32>
    %1549 = vector.extract_strided_slice %1536 {offsets = [0, 128], sizes = [8, 64], strides = [1, 1]} : vector<8x256xf32> to vector<8x64xf32>
    %1550 = math.tanh %1549 : vector<8x64xf32>
    %1551 = vector.extract_strided_slice %1536 {offsets = [0, 192], sizes = [8, 64], strides = [1, 1]} : vector<8x256xf32> to vector<8x64xf32>
    %1552 = arith.negf %1551 : vector<8x64xf32>
    %1553 = math.exp %1552 : vector<8x64xf32>
    %cst_555 = arith.constant 1.000000e+00 : f32
    %1554 = vector.broadcast %cst_555 : f32 to vector<8x64xf32>
    %1555 = arith.addf %1554, %1553 : vector<8x64xf32>
    %1556 = arith.divf %1554, %1555 : vector<8x64xf32>
    %1557 = arith.mulf %1548, %1490 : vector<8x64xf32>
    %1558 = arith.mulf %1542, %1550 : vector<8x64xf32>
    %1559 = arith.addf %1557, %1558 : vector<8x64xf32>
    %1560 = math.tanh %1559 : vector<8x64xf32>
    %1561 = arith.mulf %1556, %1560 : vector<8x64xf32>
    %c0_556 = arith.constant 0 : index
    %c0_557 = arith.constant 0 : index
    %1562 = vector.load %arg11[%c0_556, %c0_557] : memref<64x256xf32, #tpu.memory_space<vmem>>, vector<64x256xf32>
    %cst_558 = arith.constant dense<0.000000e+00> : vector<8x256xf32>
    %1563 = tpu.matmul %1561, %1562, %cst_558 {dimension_numbers = #tpu.dot_dimension_numbers<[1], [0], [0], [1], [0, 0, 1, 1], [], []>} : vector<8x64xf32>, vector<64x256xf32>, vector<8x256xf32> -> vector<8x256xf32>
    %c0_559 = arith.constant 0 : index
    %c0_560 = arith.constant 0 : index
    %1564 = vector.load %arg12[%c0_559, %c0_560] : memref<64x256xf32, #tpu.memory_space<vmem>>, vector<64x256xf32>
    %cst_561 = arith.constant dense<0.000000e+00> : vector<8x256xf32>
    %1565 = tpu.matmul %1525, %1564, %cst_561 {dimension_numbers = #tpu.dot_dimension_numbers<[1], [0], [0], [1], [0, 0, 1, 1], [], []>} : vector<8x64xf32>, vector<64x256xf32>, vector<8x256xf32> -> vector<8x256xf32>
    %1566 = arith.addf %1563, %1565 : vector<8x256xf32>
    %c0_562 = arith.constant 0 : index
    %c0_563 = arith.constant 0 : index
    %1567 = vector.load %arg13[%c0_562, %c0_563] : memref<1x256xf32, #tpu.memory_space<vmem>>, vector<1x256xf32>
    %1568 = vector.broadcast %1567 : vector<1x256xf32> to vector<8x256xf32>
    %1569 = arith.addf %1566, %1568 : vector<8x256xf32>
    %1570 = vector.extract_strided_slice %1569 {offsets = [0, 0], sizes = [8, 64], strides = [1, 1]} : vector<8x256xf32> to vector<8x64xf32>
    %1571 = arith.negf %1570 : vector<8x64xf32>
    %1572 = math.exp %1571 : vector<8x64xf32>
    %cst_564 = arith.constant 1.000000e+00 : f32
    %1573 = vector.broadcast %cst_564 : f32 to vector<8x64xf32>
    %1574 = arith.addf %1573, %1572 : vector<8x64xf32>
    %1575 = arith.divf %1573, %1574 : vector<8x64xf32>
    %1576 = vector.extract_strided_slice %1569 {offsets = [0, 64], sizes = [8, 64], strides = [1, 1]} : vector<8x256xf32> to vector<8x64xf32>
    %1577 = arith.negf %1576 : vector<8x64xf32>
    %1578 = math.exp %1577 : vector<8x64xf32>
    %cst_565 = arith.constant 1.000000e+00 : f32
    %1579 = vector.broadcast %cst_565 : f32 to vector<8x64xf32>
    %1580 = arith.addf %1579, %1578 : vector<8x64xf32>
    %1581 = arith.divf %1579, %1580 : vector<8x64xf32>
    %1582 = vector.extract_strided_slice %1569 {offsets = [0, 128], sizes = [8, 64], strides = [1, 1]} : vector<8x256xf32> to vector<8x64xf32>
    %1583 = math.tanh %1582 : vector<8x64xf32>
    %1584 = vector.extract_strided_slice %1569 {offsets = [0, 192], sizes = [8, 64], strides = [1, 1]} : vector<8x256xf32> to vector<8x64xf32>
    %1585 = arith.negf %1584 : vector<8x64xf32>
    %1586 = math.exp %1585 : vector<8x64xf32>
    %cst_566 = arith.constant 1.000000e+00 : f32
    %1587 = vector.broadcast %cst_566 : f32 to vector<8x64xf32>
    %1588 = arith.addf %1587, %1586 : vector<8x64xf32>
    %1589 = arith.divf %1587, %1588 : vector<8x64xf32>
    %1590 = arith.mulf %1581, %1523 : vector<8x64xf32>
    %1591 = arith.mulf %1575, %1583 : vector<8x64xf32>
    %1592 = arith.addf %1590, %1591 : vector<8x64xf32>
    %1593 = math.tanh %1592 : vector<8x64xf32>
    %1594 = arith.mulf %1589, %1593 : vector<8x64xf32>
    %c15_i32 = arith.constant 15 : i32
    %1595 = arith.index_cast %c15_i32 : i32 to index
    %c0_567 = arith.constant 0 : index
    %c0_568 = arith.constant 0 : index
    %1596 = vector.load %arg1[%1595, %c0_567, %c0_568] : memref<16x8x32xf32, #tpu.memory_space<vmem>>, vector<1x8x32xf32>
    %1597 = vector.shape_cast %1596 : vector<1x8x32xf32> to vector<8x32xf32>
    %c0_569 = arith.constant 0 : index
    %c0_570 = arith.constant 0 : index
    %1598 = vector.load %arg8[%c0_569, %c0_570] : memref<32x256xf32, #tpu.memory_space<vmem>>, vector<32x256xf32>
    %cst_571 = arith.constant dense<0.000000e+00> : vector<8x256xf32>
    %1599 = tpu.matmul %1597, %1598, %cst_571 {dimension_numbers = #tpu.dot_dimension_numbers<[1], [0], [0], [1], [0, 0, 1, 1], [], []>} : vector<8x32xf32>, vector<32x256xf32>, vector<8x256xf32> -> vector<8x256xf32>
    %c0_572 = arith.constant 0 : index
    %c0_573 = arith.constant 0 : index
    %1600 = vector.load %arg9[%c0_572, %c0_573] : memref<64x256xf32, #tpu.memory_space<vmem>>, vector<64x256xf32>
    %cst_574 = arith.constant dense<0.000000e+00> : vector<8x256xf32>
    %1601 = tpu.matmul %1561, %1600, %cst_574 {dimension_numbers = #tpu.dot_dimension_numbers<[1], [0], [0], [1], [0, 0, 1, 1], [], []>} : vector<8x64xf32>, vector<64x256xf32>, vector<8x256xf32> -> vector<8x256xf32>
    %1602 = arith.addf %1599, %1601 : vector<8x256xf32>
    %c0_575 = arith.constant 0 : index
    %c0_576 = arith.constant 0 : index
    %1603 = vector.load %arg10[%c0_575, %c0_576] : memref<1x256xf32, #tpu.memory_space<vmem>>, vector<1x256xf32>
    %1604 = vector.broadcast %1603 : vector<1x256xf32> to vector<8x256xf32>
    %1605 = arith.addf %1602, %1604 : vector<8x256xf32>
    %1606 = vector.extract_strided_slice %1605 {offsets = [0, 0], sizes = [8, 64], strides = [1, 1]} : vector<8x256xf32> to vector<8x64xf32>
    %1607 = arith.negf %1606 : vector<8x64xf32>
    %1608 = math.exp %1607 : vector<8x64xf32>
    %cst_577 = arith.constant 1.000000e+00 : f32
    %1609 = vector.broadcast %cst_577 : f32 to vector<8x64xf32>
    %1610 = arith.addf %1609, %1608 : vector<8x64xf32>
    %1611 = arith.divf %1609, %1610 : vector<8x64xf32>
    %1612 = vector.extract_strided_slice %1605 {offsets = [0, 64], sizes = [8, 64], strides = [1, 1]} : vector<8x256xf32> to vector<8x64xf32>
    %1613 = arith.negf %1612 : vector<8x64xf32>
    %1614 = math.exp %1613 : vector<8x64xf32>
    %cst_578 = arith.constant 1.000000e+00 : f32
    %1615 = vector.broadcast %cst_578 : f32 to vector<8x64xf32>
    %1616 = arith.addf %1615, %1614 : vector<8x64xf32>
    %1617 = arith.divf %1615, %1616 : vector<8x64xf32>
    %1618 = vector.extract_strided_slice %1605 {offsets = [0, 128], sizes = [8, 64], strides = [1, 1]} : vector<8x256xf32> to vector<8x64xf32>
    %1619 = math.tanh %1618 : vector<8x64xf32>
    %1620 = vector.extract_strided_slice %1605 {offsets = [0, 192], sizes = [8, 64], strides = [1, 1]} : vector<8x256xf32> to vector<8x64xf32>
    %1621 = arith.negf %1620 : vector<8x64xf32>
    %1622 = math.exp %1621 : vector<8x64xf32>
    %cst_579 = arith.constant 1.000000e+00 : f32
    %1623 = vector.broadcast %cst_579 : f32 to vector<8x64xf32>
    %1624 = arith.addf %1623, %1622 : vector<8x64xf32>
    %1625 = arith.divf %1623, %1624 : vector<8x64xf32>
    %1626 = arith.mulf %1617, %1559 : vector<8x64xf32>
    %1627 = arith.mulf %1611, %1619 : vector<8x64xf32>
    %1628 = arith.addf %1626, %1627 : vector<8x64xf32>
    %1629 = math.tanh %1628 : vector<8x64xf32>
    %1630 = arith.mulf %1625, %1629 : vector<8x64xf32>
    %c0_580 = arith.constant 0 : index
    %c0_581 = arith.constant 0 : index
    %1631 = vector.load %arg11[%c0_580, %c0_581] : memref<64x256xf32, #tpu.memory_space<vmem>>, vector<64x256xf32>
    %cst_582 = arith.constant dense<0.000000e+00> : vector<8x256xf32>
    %1632 = tpu.matmul %1630, %1631, %cst_582 {dimension_numbers = #tpu.dot_dimension_numbers<[1], [0], [0], [1], [0, 0, 1, 1], [], []>} : vector<8x64xf32>, vector<64x256xf32>, vector<8x256xf32> -> vector<8x256xf32>
    %c0_583 = arith.constant 0 : index
    %c0_584 = arith.constant 0 : index
    %1633 = vector.load %arg12[%c0_583, %c0_584] : memref<64x256xf32, #tpu.memory_space<vmem>>, vector<64x256xf32>
    %cst_585 = arith.constant dense<0.000000e+00> : vector<8x256xf32>
    %1634 = tpu.matmul %1594, %1633, %cst_585 {dimension_numbers = #tpu.dot_dimension_numbers<[1], [0], [0], [1], [0, 0, 1, 1], [], []>} : vector<8x64xf32>, vector<64x256xf32>, vector<8x256xf32> -> vector<8x256xf32>
    %1635 = arith.addf %1632, %1634 : vector<8x256xf32>
    %c0_586 = arith.constant 0 : index
    %c0_587 = arith.constant 0 : index
    %1636 = vector.load %arg13[%c0_586, %c0_587] : memref<1x256xf32, #tpu.memory_space<vmem>>, vector<1x256xf32>
    %1637 = vector.broadcast %1636 : vector<1x256xf32> to vector<8x256xf32>
    %1638 = arith.addf %1635, %1637 : vector<8x256xf32>
    %1639 = vector.extract_strided_slice %1638 {offsets = [0, 0], sizes = [8, 64], strides = [1, 1]} : vector<8x256xf32> to vector<8x64xf32>
    %1640 = arith.negf %1639 : vector<8x64xf32>
    %1641 = math.exp %1640 : vector<8x64xf32>
    %cst_588 = arith.constant 1.000000e+00 : f32
    %1642 = vector.broadcast %cst_588 : f32 to vector<8x64xf32>
    %1643 = arith.addf %1642, %1641 : vector<8x64xf32>
    %1644 = arith.divf %1642, %1643 : vector<8x64xf32>
    %1645 = vector.extract_strided_slice %1638 {offsets = [0, 64], sizes = [8, 64], strides = [1, 1]} : vector<8x256xf32> to vector<8x64xf32>
    %1646 = arith.negf %1645 : vector<8x64xf32>
    %1647 = math.exp %1646 : vector<8x64xf32>
    %cst_589 = arith.constant 1.000000e+00 : f32
    %1648 = vector.broadcast %cst_589 : f32 to vector<8x64xf32>
    %1649 = arith.addf %1648, %1647 : vector<8x64xf32>
    %1650 = arith.divf %1648, %1649 : vector<8x64xf32>
    %1651 = vector.extract_strided_slice %1638 {offsets = [0, 128], sizes = [8, 64], strides = [1, 1]} : vector<8x256xf32> to vector<8x64xf32>
    %1652 = math.tanh %1651 : vector<8x64xf32>
    %1653 = vector.extract_strided_slice %1638 {offsets = [0, 192], sizes = [8, 64], strides = [1, 1]} : vector<8x256xf32> to vector<8x64xf32>
    %1654 = arith.negf %1653 : vector<8x64xf32>
    %1655 = math.exp %1654 : vector<8x64xf32>
    %cst_590 = arith.constant 1.000000e+00 : f32
    %1656 = vector.broadcast %cst_590 : f32 to vector<8x64xf32>
    %1657 = arith.addf %1656, %1655 : vector<8x64xf32>
    %1658 = arith.divf %1656, %1657 : vector<8x64xf32>
    %1659 = arith.mulf %1650, %1592 : vector<8x64xf32>
    %1660 = arith.mulf %1644, %1652 : vector<8x64xf32>
    %1661 = arith.addf %1659, %1660 : vector<8x64xf32>
    %1662 = math.tanh %1661 : vector<8x64xf32>
    %1663 = arith.mulf %1658, %1662 : vector<8x64xf32>
    %c16_i32 = arith.constant 16 : i32
    %c0_591 = arith.constant 0 : index
    %c0_592 = arith.constant 0 : index
    %1664 = vector.load %arg14[%c0_591, %c0_592] : memref<96x128xf32, #tpu.memory_space<vmem>>, vector<96x128xf32>
    %1665 = vector.extract_strided_slice %1664 {offsets = [0, 0], sizes = [32, 128], strides = [1, 1]} : vector<96x128xf32> to vector<32x128xf32>
    %cst_593 = arith.constant dense<0.000000e+00> : vector<8x128xf32>
    %1666 = tpu.matmul %555, %1665, %cst_593 {dimension_numbers = #tpu.dot_dimension_numbers<[1], [0], [0], [1], [0, 0, 1, 1], [], []>} : vector<8x32xf32>, vector<32x128xf32>, vector<8x128xf32> -> vector<8x128xf32>
    %1667 = vector.extract_strided_slice %1664 {offsets = [32, 0], sizes = [64, 128], strides = [1, 1]} : vector<96x128xf32> to vector<64x128xf32>
    %cst_594 = arith.constant dense<0.000000e+00> : vector<8x128xf32>
    %1668 = tpu.matmul %1663, %1667, %cst_594 {dimension_numbers = #tpu.dot_dimension_numbers<[1], [0], [0], [1], [0, 0, 1, 1], [], []>} : vector<8x64xf32>, vector<64x128xf32>, vector<8x128xf32> -> vector<8x128xf32>
    %1669 = arith.addf %1666, %1668 : vector<8x128xf32>
    %c0_595 = arith.constant 0 : index
    %c0_596 = arith.constant 0 : index
    %1670 = vector.load %arg15[%c0_595, %c0_596] : memref<1x128xf32, #tpu.memory_space<vmem>>, vector<1x128xf32>
    %1671 = vector.broadcast %1670 : vector<1x128xf32> to vector<8x128xf32>
    %1672 = arith.addf %1669, %1671 : vector<8x128xf32>
    %c0_597 = arith.constant 0 : index
    %c0_598 = arith.constant 0 : index
    %1673 = vector.load %arg16[%c0_597, %c0_598] : memref<8x128xf32, #tpu.memory_space<vmem>>, vector<8x128xf32>
    tpu.vector_store %arg16[%c0_597, %c0_598], %1672 {strides = array<i32>} : memref<8x128xf32, #tpu.memory_space<vmem>>, vector<8x128xf32>,
    return
  }
}

</mosaic_0001>

<llo_original>
// kernel: forward.1
$region0: #{forward.1}
  #allocation0 [shape = 'u32[]', space=smem, size = 0x4, offset = 0x4, fixed_abs, tag = 'smem constant byte address 0x4 - core index']
  #allocation1 [shape = 'u32[144,128]{1,0:T(1,128)}', space=vmem, size = 0x12000, scoped, tag = 'internal scratch']
  %s0 = inlined_call_operand.vmem [shape: f32[8,8,32], index: 0, kind: input, shape index: {}]
  %s1 = inlined_call_operand.vmem [shape: f32[16,8,32], index: 1, kind: input, shape index: {}]
  %s2 = inlined_call_operand.vmem [shape: f32[32,128], index: 2, kind: input, shape index: {}]
  %s3 = inlined_call_operand.vmem [shape: f32[32,128], index: 3, kind: input, shape index: {}]
  %s4 = inlined_call_operand.vmem [shape: f32[1,128], index: 4, kind: input, shape index: {}]
  %s5 = inlined_call_operand.vmem [shape: f32[32,128], index: 5, kind: input, shape index: {}]
  %s6 = inlined_call_operand.vmem [shape: f32[32,128], index: 6, kind: input, shape index: {}]
  %s7 = inlined_call_operand.vmem [shape: f32[1,128], index: 7, kind: input, shape index: {}]
  %s8 = inlined_call_operand.vmem [shape: f32[32,256], index: 8, kind: input, shape index: {}]
  %s9 = inlined_call_operand.vmem [shape: f32[64,256], index: 9, kind: input, shape index: {}]
  %s10 = inlined_call_operand.vmem [shape: f32[1,256], index: 10, kind: input, shape index: {}]
  %s11 = inlined_call_operand.vmem [shape: f32[64,256], index: 11, kind: input, shape index: {}]
  %s12 = inlined_call_operand.vmem [shape: f32[64,256], index: 12, kind: input, shape index: {}]
  %s13 = inlined_call_operand.vmem [shape: f32[1,256], index: 13, kind: input, shape index: {}]
  %s14 = inlined_call_operand.vmem [shape: f32[96,128], index: 14, kind: input, shape index: {}]
  %s15 = inlined_call_operand.vmem [shape: f32[1,128], index: 15, kind: input, shape index: {}]
  %s16 = inlined_call_operand.vmem [shape: f32[8,128], index: 16, kind: output, shape index: {}]
  %s17 = sld [smem:[#allocation0]]
  $region74: #{forward.1} parent=0
    _
  %s19 = ssub.s32 1, %s17
  %s20 = scalar_select 0, %s19, %s17
  // Predicated region
  $region2: #{forward.1} parent=0 // pred_check
    _
  $region3: #{forward.1} parent=0 // pred_check_branch
    %22 = sbr.rel (0) target = $region5
  $region4: #{forward.1} parent=0 // pred_region
    _
  $region5: #{forward.1} parent=0 // pred_fallthru
    _
  // Predicated region
  $region6: #{forward.1} parent=0 // pred_check
    _
  $region7: #{forward.1} parent=0 // pred_check_branch
    %24 = sbr.rel (0) target = $region9
  $region8: #{forward.1} parent=0 // pred_region
    _
  $region9: #{forward.1} parent=0 // pred_fallthru
    _
  // Predicated region
  $region10: #{forward.1} parent=0 // pred_check
    _
  $region11: #{forward.1} parent=0 // pred_check_branch
    %26 = sbr.rel (0) target = $region13
  $region12: #{forward.1} parent=0 // pred_region
    _
  $region13: #{forward.1} parent=0 // pred_fallthru
    _
  // Predicated region
  $region14: #{forward.1} parent=0 // pred_check
    _
  $region15: #{forward.1} parent=0 // pred_check_branch
    %28 = sbr.rel (0) target = $region17
  $region16: #{forward.1} parent=0 // pred_region
    _
  $region17: #{forward.1} parent=0 // pred_fallthru
    _
  // Predicated region
  $region18: #{forward.1} parent=0 // pred_check
    _
  $region19: #{forward.1} parent=0 // pred_check_branch
    %30 = sbr.rel (0) target = $region21
  $region20: #{forward.1} parent=0 // pred_region
    _
  $region21: #{forward.1} parent=0 // pred_fallthru
    _
  // Predicated region
  $region22: #{forward.1} parent=0 // pred_check
    _
  $region23: #{forward.1} parent=0 // pred_check_branch
    %32 = sbr.rel (0) target = $region25
  $region24: #{forward.1} parent=0 // pred_region
    _
  $region25: #{forward.1} parent=0 // pred_fallthru
    _
  // Predicated region
  $region26: #{forward.1} parent=0 // pred_check
    _
  $region27: #{forward.1} parent=0 // pred_check_branch
    %34 = sbr.rel (0) target = $region29
  $region28: #{forward.1} parent=0 // pred_region
    _
  $region29: #{forward.1} parent=0 // pred_fallthru
    _
  // Predicated region
  $region30: #{forward.1} parent=0 // pred_check
    _
  $region31: #{forward.1} parent=0 // pred_check_branch
    %36 = sbr.rel (0) target = $region33
  $region32: #{forward.1} parent=0 // pred_region
    _
  $region33: #{forward.1} parent=0 // pred_fallthru
    _
  // Predicated region
  $region34: #{forward.1} parent=0 // pred_check
    _
  $region35: #{forward.1} parent=0 // pred_check_branch
    %38 = sbr.rel (0) target = $region37
  $region36: #{forward.1} parent=0 // pred_region
    _
  $region37: #{forward.1} parent=0 // pred_fallthru
    _
  // Predicated region
  $region38: #{forward.1} parent=0 // pred_check
    _
  $region39: #{forward.1} parent=0 // pred_check_branch
    %40 = sbr.rel (0) target = $region41
  $region40: #{forward.1} parent=0 // pred_region
    _
  $region41: #{forward.1} parent=0 // pred_fallthru
    _
  // Predicated region
  $region42: #{forward.1} parent=0 // pred_check
    _
  $region43: #{forward.1} parent=0 // pred_check_branch
    %42 = sbr.rel (0) target = $region45
  $region44: #{forward.1} parent=0 // pred_region
    _
  $region45: #{forward.1} parent=0 // pred_fallthru
    _
  // Predicated region
  $region46: #{forward.1} parent=0 // pred_check
    _
  $region47: #{forward.1} parent=0 // pred_check_branch
    %44 = sbr.rel (0) target = $region49
  $region48: #{forward.1} parent=0 // pred_region
    _
  $region49: #{forward.1} parent=0 // pred_fallthru
    _
  // Predicated region
  $region50: #{forward.1} parent=0 // pred_check
    _
  $region51: #{forward.1} parent=0 // pred_check_branch
    %46 = sbr.rel (0) target = $region53
  $region52: #{forward.1} parent=0 // pred_region
    _
  $region53: #{forward.1} parent=0 // pred_fallthru
    _
  // Predicated region
  $region54: #{forward.1} parent=0 // pred_check
    _
  $region55: #{forward.1} parent=0 // pred_check_branch
    %48 = sbr.rel (0) target = $region57
  $region56: #{forward.1} parent=0 // pred_region
    _
  $region57: #{forward.1} parent=0 // pred_fallthru
    _
  // Predicated region
  $region58: #{forward.1} parent=0 // pred_check
    _
  $region59: #{forward.1} parent=0 // pred_check_branch
    %50 = sbr.rel (0) target = $region61
  $region60: #{forward.1} parent=0 // pred_region
    _
  $region61: #{forward.1} parent=0 // pred_fallthru
    _
  // Predicated region
  $region62: #{forward.1} parent=0 // pred_check
    _
  $region63: #{forward.1} parent=0 // pred_check_branch
    %52 = sbr.rel (0) target = $region65
  $region64: #{forward.1} parent=0 // pred_region
    _
  $region65: #{forward.1} parent=0 // pred_fallthru
    _
  %v53 = vld [vmem:[%s0] sm:$0xff]
  %v54 = vld [vmem:[%s2] sm:$0xff]
  %v55 = vld [vmem:[%s2 + $0x8] sm:$0xff]
  %v56 = vld [vmem:[%s2 + $0x10] sm:$0xff]
  %v57 = vld [vmem:[%s2 + $0x18] sm:$0xff]
  %v58 = vld [vmem:[%s3] sm:$0xff]
  %v59 = vld [vmem:[%s3 + $0x8] sm:$0xff]
  %v60 = vld [vmem:[%s3 + $0x10] sm:$0xff]
  %v61 = vld [vmem:[%s3 + $0x18] sm:$0xff]
  %vm62 = vcmask 261120
  %v64 = vsel %vm62, 0.0, 0
  %66 = vmatprep.subr.mxu0 0.0
  %67 = vmatpush1.msra.mxu0 %v58
  %68 = vmatprep.subr.mxu0 0.0
  %69 = vmatpush1.msra.mxu0 %v59
  %70 = vmatprep.subr.mxu0 0.0
  %71 = vmatpush1.msra.mxu0 %v60
  %72 = vmatprep.subr.mxu0 0.0
  %73 = vmatpush1.msra.mxu0 %v61
  %74 = vmatprep.subr.mxu0 0.0
  %75 = vmatpush1.msra.mxu0 0.0
  %76 = vmatprep.subr.mxu0 0.0
  %77 = vmatpush1.msra.mxu0 0.0
  %78 = vmatprep.subr.mxu0 0.0
  %79 = vmatpush1.msra.mxu0 0.0
  %80 = vmatprep.subr.mxu0 0.0
  %81 = vmatpush1.msra.mxu0 0.0
  %82 = vmatprep.subr.mxu0 0.0
  %83 = vmatpush1.msra.mxu0 0.0
  %84 = vmatprep.subr.mxu0 0.0
  %85 = vmatpush1.msra.mxu0 0.0
  %86 = vmatprep.subr.mxu0 0.0
  %87 = vmatpush1.msra.mxu0 0.0
  %88 = vmatprep.subr.mxu0 0.0
  %89 = vmatpush1.msra.mxu0 0.0
  %90 = vmatprep.subr.mxu0 0.0
  %91 = vmatpush1.msra.mxu0 0.0
  %92 = vmatprep.subr.mxu0 0.0
  %93 = vmatpush1.msra.mxu0 0.0
  %94 = vmatprep.subr.mxu0 0.0
  %95 = vmatpush1.msra.mxu0 0.0
  %96 = vmatprep.subr.mxu0 0.0
  %97 = vmatpush1.msra.mxu0 0.0
  %98 = vmatprep.subr.mxu0 0.0
  %99 = vmatpush1.msra.mxu0 0.0
  %100 = vmatprep.subr.mxu0 0.0
  %101 = vmatpush1.msra.mxu0 0.0
  %102 = vmatprep.subr.mxu0 0.0
  %103 = vmatpush1.msra.mxu0 0.0
  %104 = vmatprep.subr.mxu0 0.0
  %105 = vmatpush1.msra.mxu0 0.0
  %106 = vmatprep.subr.mxu0 0.0
  %107 = vmatpush1.msra.mxu0 0.0
  %108 = vmatprep.subr.mxu0 0.0
  %109 = vmatpush1.msra.mxu0 0.0
  %110 = vmatprep.subr.mxu0 0.0
  %111 = vmatpush1.msra.mxu0 0.0
  %112 = vmatprep.subr.mxu0 0.0
  %113 = vmatpush1.msra.mxu0 0.0
  %114 = vmatprep.subr.mxu0 0.0
  %115 = vmatpush1.msra.mxu0 0.0
  %116 = vmatprep.subr.mxu0 0.0
  %117 = vmatpush1.msra.mxu0 0.0
  %118 = vmatprep.subr.mxu0 0.0
  %119 = vmatpush1.msra.mxu0 0.0
  %120 = vmatprep.subr.mxu0 0.0
  %121 = vmatpush1.msra.mxu0 0.0
  %122 = vmatprep.subr.mxu0 0.0
  %123 = vmatpush1.msra.mxu0 0.0
  %124 = vmatprep.subr.mxu0 0.0
  %125 = vmatpush1.msra.mxu0 0.0
  %126 = vmatprep.subr.mxu0 0.0
  %127 = vmatpush1.msra.mxu0 0.0
  %128 = vmatprep.subr.mxu0 0.0
  %129 = vmatpush1.msra.mxu0 0.0
  %130 = vmatprep.mubr.f32.mxu0 0.0
  %131 = vmatmul.mubr.f32.gmra.mrb[0].mxu0 %v64
  %v132 = vpop.f32.mrb[0].mxu0
  %v133 = vadd.f32 0.0, %v132
  %v134 = vpop.f32.mrb[0].mxu0
  %135 = vdwg.mxu0
  %v137 = vsel %vm62, %v53, 0
  %139 = vmatprep.subr.mxu0 0.0
  %140 = vmatpush1.msra.mxu0 %v54
  %141 = vmatprep.subr.mxu0 0.0
  %142 = vmatpush1.msra.mxu0 %v55
  %143 = vmatprep.subr.mxu0 0.0
  %144 = vmatpush1.msra.mxu0 %v56
  %145 = vmatprep.subr.mxu0 0.0
  %146 = vmatpush1.msra.mxu0 %v57
  %147 = vmatprep.subr.mxu0 0.0
  %148 = vmatpush1.msra.mxu0 0.0
  %149 = vmatprep.subr.mxu0 0.0
  %150 = vmatpush1.msra.mxu0 0.0
  %151 = vmatprep.subr.mxu0 0.0
  %152 = vmatpush1.msra.mxu0 0.0
  %153 = vmatprep.subr.mxu0 0.0
  %154 = vmatpush1.msra.mxu0 0.0
  %155 = vmatprep.subr.mxu0 0.0
  %156 = vmatpush1.msra.mxu0 0.0
  %157 = vmatprep.subr.mxu0 0.0
  %158 = vmatpush1.msra.mxu0 0.0
  %159 = vmatprep.subr.mxu0 0.0
  %160 = vmatpush1.msra.mxu0 0.0
  %161 = vmatprep.subr.mxu0 0.0
  %162 = vmatpush1.msra.mxu0 0.0
  %163 = vmatprep.subr.mxu0 0.0
  %164 = vmatpush1.msra.mxu0 0.0
  %165 = vmatprep.subr.mxu0 0.0
  %166 = vmatpush1.msra.mxu0 0.0
  %167 = vmatprep.subr.mxu0 0.0
  %168 = vmatpush1.msra.mxu0 0.0
  %169 = vmatprep.subr.mxu0 0.0
  %170 = vmatpush1.msra.mxu0 0.0
  %171 = vmatprep.subr.mxu0 0.0
  %172 = vmatpush1.msra.mxu0 0.0
  %173 = vmatprep.subr.mxu0 0.0
  %174 = vmatpush1.msra.mxu0 0.0
  %175 = vmatprep.subr.mxu0 0.0
  %176 = vmatpush1.msra.mxu0 0.0
  %177 = vmatprep.subr.mxu0 0.0
  %178 = vmatpush1.msra.mxu0 0.0
  %179 = vmatprep.subr.mxu0 0.0
  %180 = vmatpush1.msra.mxu0 0.0
  %181 = vmatprep.subr.mxu0 0.0
  %182 = vmatpush1.msra.mxu0 0.0
  %183 = vmatprep.subr.mxu0 0.0
  %184 = vmatpush1.msra.mxu0 0.0
  %185 = vmatprep.subr.mxu0 0.0
  %186 = vmatpush1.msra.mxu0 0.0
  %187 = vmatprep.subr.mxu0 0.0
  %188 = vmatpush1.msra.mxu0 0.0
  %189 = vmatprep.subr.mxu0 0.0
  %190 = vmatpush1.msra.mxu0 0.0
  %191 = vmatprep.subr.mxu0 0.0
  %192 = vmatpush1.msra.mxu0 0.0
  %193 = vmatprep.subr.mxu0 0.0
  %194 = vmatpush1.msra.mxu0 0.0
  %195 = vmatprep.subr.mxu0 0.0
  %196 = vmatpush1.msra.mxu0 0.0
  %197 = vmatprep.subr.mxu0 0.0
  %198 = vmatpush1.msra.mxu0 0.0
  %199 = vmatprep.subr.mxu0 0.0
  %200 = vmatpush1.msra.mxu0 0.0
  %201 = vmatprep.subr.mxu0 0.0
  %202 = vmatpush1.msra.mxu0 0.0
  %203 = vmatprep.mubr.f32.mxu0 0.0
  %204 = vmatmul.mubr.f32.gmra.mrb[0].mxu0 %v137
  %v205 = vpop.f32.mrb[0].mxu0
  %v206 = vadd.f32 %v133, %v205
  %v207 = vpop.f32.mrb[0].mxu0
  %208 = vdwg.mxu0
  %v209 = vld [vmem:[%s4] sm:$0x1]
  %v211 = vlaneseq
  %v212 = vshrl.u32 %v211, 7
  %v213 = vsub.s32 0, %v212
  %v214 = vrot.slane %v209, %v213
  %v216 = vadd.f32 %v206, %v214
  %v217 = vxor.u32 %v216, 2147483648
  %v218 = vmul.f32 %v217, 1.442695
  %v219 = vpow.pop %v218
  %v220 = vadd.f32 %v219, 1.0
  %v221 = vrcp.pop %v220
  %v222 = vmul.f32 1.0, %v221
  %v223 = vtanh.pop %v216
  %v224 = vmul.f32 %v222, 0.0
  %226 = vrot.lane.b32.xlu0 %v223, 64
  %v227 = vpop.permute.xlu0 %226
  %v229 = vmul.f32 %v222, %v227
  %231 = vrot.lane.b32.xlu0 %v229, 32
  %v232 = vpop.permute.xlu0 %231
  %v234 = vadd.f32 %v224, %v232
  %v235 = vtanh.pop %v234
  %237 = vrot.lane.b32.xlu0 %v235, 64
  %v238 = vpop.permute.xlu0 %237
  %v240 = vmul.f32 %v222, %v238
  %v241 = vld [vmem:[%s5] sm:$0xff]
  %v242 = vld [vmem:[%s5 + $0x8] sm:$0xff]
  %v243 = vld [vmem:[%s5 + $0x10] sm:$0xff]
  %v244 = vld [vmem:[%s5 + $0x18] sm:$0xff]
  %v245 = vld [vmem:[%s6] sm:$0xff]
  %v246 = vld [vmem:[%s6 + $0x8] sm:$0xff]
  %v247 = vld [vmem:[%s6 + $0x10] sm:$0xff]
  %v248 = vld [vmem:[%s6 + $0x18] sm:$0xff]
  %249 = vmatprep.subr.mxu0 0.0
  %250 = vmatpush1.msra.mxu0 %v245
  %251 = vmatprep.subr.mxu0 0.0
  %252 = vmatpush1.msra.mxu0 %v246
  %253 = vmatprep.subr.mxu0 0.0
  %254 = vmatpush1.msra.mxu0 %v247
  %255 = vmatprep.subr.mxu0 0.0
  %256 = vmatpush1.msra.mxu0 %v248
  %257 = vmatprep.subr.mxu0 0.0
  %258 = vmatpush1.msra.mxu0 0.0
  %259 = vmatprep.subr.mxu0 0.0
  %260 = vmatpush1.msra.mxu0 0.0
  %261 = vmatprep.subr.mxu0 0.0
  %262 = vmatpush1.msra.mxu0 0.0
  %263 = vmatprep.subr.mxu0 0.0
  %264 = vmatpush1.msra.mxu0 0.0
  %265 = vmatprep.subr.mxu0 0.0
  %266 = vmatpush1.msra.mxu0 0.0
  %267 = vmatprep.subr.mxu0 0.0
  %268 = vmatpush1.msra.mxu0 0.0
  %269 = vmatprep.subr.mxu0 0.0
  %270 = vmatpush1.msra.mxu0 0.0
  %271 = vmatprep.subr.mxu0 0.0
  %272 = vmatpush1.msra.mxu0 0.0
  %273 = vmatprep.subr.mxu0 0.0
  %274 = vmatpush1.msra.mxu0 0.0
  %275 = vmatprep.subr.mxu0 0.0
  %276 = vmatpush1.msra.mxu0 0.0
  %277 = vmatprep.subr.mxu0 0.0
  %278 = vmatpush1.msra.mxu0 0.0
  %279 = vmatprep.subr.mxu0 0.0
  %280 = vmatpush1.msra.mxu0 0.0
  %281 = vmatprep.subr.mxu0 0.0
  %282 = vmatpush1.msra.mxu0 0.0
  %283 = vmatprep.subr.mxu0 0.0
  %284 = vmatpush1.msra.mxu0 0.0
  %285 = vmatprep.subr.mxu0 0.0
  %286 = vmatpush1.msra.mxu0 0.0
  %287 = vmatprep.subr.mxu0 0.0
  %288 = vmatpush1.msra.mxu0 0.0
  %289 = vmatprep.subr.mxu0 0.0
  %290 = vmatpush1.msra.mxu0 0.0
  %291 = vmatprep.subr.mxu0 0.0
  %292 = vmatpush1.msra.mxu0 0.0
  %293 = vmatprep.subr.mxu0 0.0
  %294 = vmatpush1.msra.mxu0 0.0
  %295 = vmatprep.subr.mxu0 0.0
  %296 = vmatpush1.msra.mxu0 0.0
  %297 = vmatprep.subr.mxu0 0.0
  %298 = vmatpush1.msra.mxu0 0.0
  %299 = vmatprep.subr.mxu0 0.0
  %300 = vmatpush1.msra.mxu0 0.0
  %301 = vmatprep.subr.mxu0 0.0
  %302 = vmatpush1.msra.mxu0 0.0
  %303 = vmatprep.subr.mxu0 0.0
  %304 = vmatpush1.msra.mxu0 0.0
  %305 = vmatprep.subr.mxu0 0.0
  %306 = vmatpush1.msra.mxu0 0.0
  %307 = vmatprep.subr.mxu0 0.0
  %308 = vmatpush1.msra.mxu0 0.0
  %309 = vmatprep.subr.mxu0 0.0
  %310 = vmatpush1.msra.mxu0 0.0
  %311 = vmatprep.subr.mxu0 0.0
  %312 = vmatpush1.msra.mxu0 0.0
  %313 = vmatprep.mubr.f32.mxu0 0.0
  %314 = vmatmul.mubr.f32.gmra.mrb[0].mxu0 %v64
  %v315 = vpop.f32.mrb[0].mxu0
  %v316 = vadd.f32 0.0, %v315
  %v317 = vpop.f32.mrb[0].mxu0
  %318 = vdwg.mxu0
  %320 = vrot.lane.b32.xlu0 %v240, 32
  %v321 = vpop.permute.xlu0 %320
  %v322 = vsel %vm62, %v321, 0
  %324 = vmatprep.subr.mxu0 0.0
  %325 = vmatpush1.msra.mxu0 %v241
  %326 = vmatprep.subr.mxu0 0.0
  %327 = vmatpush1.msra.mxu0 %v242
  %328 = vmatprep.subr.mxu0 0.0
  %329 = vmatpush1.msra.mxu0 %v243
  %330 = vmatprep.subr.mxu0 0.0
  %331 = vmatpush1.msra.mxu0 %v244
  %332 = vmatprep.subr.mxu0 0.0
  %333 = vmatpush1.msra.mxu0 0.0
  %334 = vmatprep.subr.mxu0 0.0
  %335 = vmatpush1.msra.mxu0 0.0
  %336 = vmatprep.subr.mxu0 0.0
  %337 = vmatpush1.msra.mxu0 0.0
  %338 = vmatprep.subr.mxu0 0.0
  %339 = vmatpush1.msra.mxu0 0.0
  %340 = vmatprep.subr.mxu0 0.0
  %341 = vmatpush1.msra.mxu0 0.0
  %342 = vmatprep.subr.mxu0 0.0
  %343 = vmatpush1.msra.mxu0 0.0
  %344 = vmatprep.subr.mxu0 0.0
  %345 = vmatpush1.msra.mxu0 0.0
  %346 = vmatprep.subr.mxu0 0.0
  %347 = vmatpush1.msra.mxu0 0.0
  %348 = vmatprep.subr.mxu0 0.0
  %349 = vmatpush1.msra.mxu0 0.0
  %350 = vmatprep.subr.mxu0 0.0
  %351 = vmatpush1.msra.mxu0 0.0
  %352 = vmatprep.subr.mxu0 0.0
  %353 = vmatpush1.msra.mxu0 0.0
  %354 = vmatprep.subr.mxu0 0.0
  %355 = vmatpush1.msra.mxu0 0.0
  %356 = vmatprep.subr.mxu0 0.0
  %357 = vmatpush1.msra.mxu0 0.0
  %358 = vmatprep.subr.mxu0 0.0
  %359 = vmatpush1.msra.mxu0 0.0
  %360 = vmatprep.subr.mxu0 0.0
  %361 = vmatpush1.msra.mxu0 0.0
  %362 = vmatprep.subr.mxu0 0.0
  %363 = vmatpush1.msra.mxu0 0.0
  %364 = vmatprep.subr.mxu0 0.0
  %365 = vmatpush1.msra.mxu0 0.0
  %366 = vmatprep.subr.mxu0 0.0
  %367 = vmatpush1.msra.mxu0 0.0
  %368 = vmatprep.subr.mxu0 0.0
  %369 = vmatpush1.msra.mxu0 0.0
  %370 = vmatprep.subr.mxu0 0.0
  %371 = vmatpush1.msra.mxu0 0.0
  %372 = vmatprep.subr.mxu0 0.0
  %373 = vmatpush1.msra.mxu0 0.0
  %374 = vmatprep.subr.mxu0 0.0
  %375 = vmatpush1.msra.mxu0 0.0
  %376 = vmatprep.subr.mxu0 0.0
  %377 = vmatpush1.msra.mxu0 0.0
  %378 = vmatprep.subr.mxu0 0.0
  %379 = vmatpush1.msra.mxu0 0.0
  %380 = vmatprep.subr.mxu0 0.0
  %381 = vmatpush1.msra.mxu0 0.0
  %382 = vmatprep.subr.mxu0 0.0
  %383 = vmatpush1.msra.mxu0 0.0
  %384 = vmatprep.subr.mxu0 0.0
  %385 = vmatpush1.msra.mxu0 0.0
  %386 = vmatprep.subr.mxu0 0.0
  %387 = vmatpush1.msra.mxu0 0.0
  %388 = vmatprep.mubr.f32.mxu0 0.0
  %389 = vmatmul.mubr.f32.gmra.mrb[0].mxu0 %v322
  %v390 = vpop.f32.mrb[0].mxu0
  %v391 = vadd.f32 %v316, %v390
  %v392 = vpop.f32.mrb[0].mxu0
  %393 = vdwg.mxu0
  %v394 = vld [vmem:[%s7] sm:$0x1]
  %v396 = vlaneseq
  %v397 = vshrl.u32 %v396, 7
  %v398 = vsub.s32 0, %v397
  %v399 = vrot.slane %v394, %v398
  %v401 = vadd.f32 %v391, %v399
  %v402 = vxor.u32 %v401, 2147483648
  %v403 = vmul.f32 %v402, 1.442695
  %v404 = vpow.pop %v403
  %v405 = vadd.f32 %v404, 1.0
  %v406 = vrcp.pop %v405
  %v407 = vmul.f32 1.0, %v406
  %v408 = vtanh.pop %v401
  %v409 = vmul.f32 %v407, 0.0
  %411 = vrot.lane.b32.xlu0 %v408, 64
  %v412 = vpop.permute.xlu0 %411
  %v414 = vmul.f32 %v407, %v412
  %416 = vrot.lane.b32.xlu0 %v414, 32
  %v417 = vpop.permute.xlu0 %416
  %v419 = vadd.f32 %v409, %v417
  %v420 = vtanh.pop %v419
  %422 = vrot.lane.b32.xlu0 %v420, 64
  %v423 = vpop.permute.xlu0 %422
  %v425 = vmul.f32 %v407, %v423
  %s426 = scalar_lea.vmem %s0, 8
  %v427 = vld [vmem:[%s426] sm:$0xff]
  %428 = vmatprep.subr.mxu0 0.0
  %429 = vmatpush1.msra.mxu0 %v58
  %430 = vmatprep.subr.mxu0 0.0
  %431 = vmatpush1.msra.mxu0 %v59
  %432 = vmatprep.subr.mxu0 0.0
  %433 = vmatpush1.msra.mxu0 %v60
  %434 = vmatprep.subr.mxu0 0.0
  %435 = vmatpush1.msra.mxu0 %v61
  %436 = vmatprep.subr.mxu0 0.0
  %437 = vmatpush1.msra.mxu0 0.0
  %438 = vmatprep.subr.mxu0 0.0
  %439 = vmatpush1.msra.mxu0 0.0
  %440 = vmatprep.subr.mxu0 0.0
  %441 = vmatpush1.msra.mxu0 0.0
  %442 = vmatprep.subr.mxu0 0.0
  %443 = vmatpush1.msra.mxu0 0.0
  %444 = vmatprep.subr.mxu0 0.0
  %445 = vmatpush1.msra.mxu0 0.0
  %446 = vmatprep.subr.mxu0 0.0
  %447 = vmatpush1.msra.mxu0 0.0
  %448 = vmatprep.subr.mxu0 0.0
  %449 = vmatpush1.msra.mxu0 0.0
  %450 = vmatprep.subr.mxu0 0.0
  %451 = vmatpush1.msra.mxu0 0.0
  %452 = vmatprep.subr.mxu0 0.0
  %453 = vmatpush1.msra.mxu0 0.0
  %454 = vmatprep.subr.mxu0 0.0
  %455 = vmatpush1.msra.mxu0 0.0
  %456 = vmatprep.subr.mxu0 0.0
  %457 = vmatpush1.msra.mxu0 0.0
  %458 = vmatprep.subr.mxu0 0.0
  %459 = vmatpush1.msra.mxu0 0.0
  %460 = vmatprep.subr.mxu0 0.0
  %461 = vmatpush1.msra.mxu0 0.0
  %462 = vmatprep.subr.mxu0 0.0
  %463 = vmatpush1.msra.mxu0 0.0
  %464 = vmatprep.subr.mxu0 0.0
  %465 = vmatpush1.msra.mxu0 0.0
  %466 = vmatprep.subr.mxu0 0.0
  %467 = vmatpush1.msra.mxu0 0.0
  %468 = vmatprep.subr.mxu0 0.0
  %469 = vmatpush1.msra.mxu0 0.0
  %470 = vmatprep.subr.mxu0 0.0
  %471 = vmatpush1.msra.mxu0 0.0
  %472 = vmatprep.subr.mxu0 0.0
  %473 = vmatpush1.msra.mxu0 0.0
  %474 = vmatprep.subr.mxu0 0.0
  %475 = vmatpush1.msra.mxu0 0.0
  %476 = vmatprep.subr.mxu0 0.0
  %477 = vmatpush1.msra.mxu0 0.0
  %478 = vmatprep.subr.mxu0 0.0
  %479 = vmatpush1.msra.mxu0 0.0
  %480 = vmatprep.subr.mxu0 0.0
  %481 = vmatpush1.msra.mxu0 0.0
  %482 = vmatprep.subr.mxu0 0.0
  %483 = vmatpush1.msra.mxu0 0.0
  %484 = vmatprep.subr.mxu0 0.0
  %485 = vmatpush1.msra.mxu0 0.0
  %486 = vmatprep.subr.mxu0 0.0
  %487 = vmatpush1.msra.mxu0 0.0
  %488 = vmatprep.subr.mxu0 0.0
  %489 = vmatpush1.msra.mxu0 0.0
  %490 = vmatprep.subr.mxu0 0.0
  %491 = vmatpush1.msra.mxu0 0.0
  %492 = vmatprep.mubr.f32.mxu0 0.0
  %493 = vmatmul.mubr.f32.gmra.mrb[0].mxu0 %v322
  %v494 = vpop.f32.mrb[0].mxu0
  %v495 = vadd.f32 0.0, %v494
  %v496 = vpop.f32.mrb[0].mxu0
  %497 = vdwg.mxu0
  %v499 = vsel %vm62, %v427, 0
  %501 = vmatprep.subr.mxu0 0.0
  %502 = vmatpush1.msra.mxu0 %v54
  %503 = vmatprep.subr.mxu0 0.0
  %504 = vmatpush1.msra.mxu0 %v55
  %505 = vmatprep.subr.mxu0 0.0
  %506 = vmatpush1.msra.mxu0 %v56
  %507 = vmatprep.subr.mxu0 0.0
  %508 = vmatpush1.msra.mxu0 %v57
  %509 = vmatprep.subr.mxu0 0.0
  %510 = vmatpush1.msra.mxu0 0.0
  %511 = vmatprep.subr.mxu0 0.0
  %512 = vmatpush1.msra.mxu0 0.0
  %513 = vmatprep.subr.mxu0 0.0
  %514 = vmatpush1.msra.mxu0 0.0
  %515 = vmatprep.subr.mxu0 0.0
  %516 = vmatpush1.msra.mxu0 0.0
  %517 = vmatprep.subr.mxu0 0.0
  %518 = vmatpush1.msra.mxu0 0.0
  %519 = vmatprep.subr.mxu0 0.0
  %520 = vmatpush1.msra.mxu0 0.0
  %521 = vmatprep.subr.mxu0 0.0
  %522 = vmatpush1.msra.mxu0 0.0
  %523 = vmatprep.subr.mxu0 0.0
  %524 = vmatpush1.msra.mxu0 0.0
  %525 = vmatprep.subr.mxu0 0.0
  %526 = vmatpush1.msra.mxu0 0.0
  %527 = vmatprep.subr.mxu0 0.0
  %528 = vmatpush1.msra.mxu0 0.0
  %529 = vmatprep.subr.mxu0 0.0
  %530 = vmatpush1.msra.mxu0 0.0
  %531 = vmatprep.subr.mxu0 0.0
  %532 = vmatpush1.msra.mxu0 0.0
  %533 = vmatprep.subr.mxu0 0.0
  %534 = vmatpush1.msra.mxu0 0.0
  %535 = vmatprep.subr.mxu0 0.0
  %536 = vmatpush1.msra.mxu0 0.0
  %537 = vmatprep.subr.mxu0 0.0
  %538 = vmatpush1.msra.mxu0 0.0
  %539 = vmatprep.subr.mxu0 0.0
  %540 = vmatpush1.msra.mxu0 0.0
  %541 = vmatprep.subr.mxu0 0.0
  %542 = vmatpush1.msra.mxu0 0.0
  %543 = vmatprep.subr.mxu0 0.0
  %544 = vmatpush1.msra.mxu0 0.0
  %545 = vmatprep.subr.mxu0 0.0
  %546 = vmatpush1.msra.mxu0 0.0
  %547 = vmatprep.subr.mxu0 0.0
  %548 = vmatpush1.msra.mxu0 0.0
  %549 = vmatprep.subr.mxu0 0.0
  %550 = vmatpush1.msra.mxu0 0.0
  %551 = vmatprep.subr.mxu0 0.0
  %552 = vmatpush1.msra.mxu0 0.0
  %553 = vmatprep.subr.mxu0 0.0
  %554 = vmatpush1.msra.mxu0 0.0
  %555 = vmatprep.subr.mxu0 0.0
  %556 = vmatpush1.msra.mxu0 0.0
  %557 = vmatprep.subr.mxu0 0.0
  %558 = vmatpush1.msra.mxu0 0.0
  %559 = vmatprep.subr.mxu0 0.0
  %560 = vmatpush1.msra.mxu0 0.0
  %561 = vmatprep.subr.mxu0 0.0
  %562 = vmatpush1.msra.mxu0 0.0
  %563 = vmatprep.subr.mxu0 0.0
  %564 = vmatpush1.msra.mxu0 0.0
  %565 = vmatprep.mubr.f32.mxu0 0.0
  %566 = vmatmul.mubr.f32.gmra.mrb[0].mxu0 %v499
  %v567 = vpop.f32.mrb[0].mxu0
  %v568 = vadd.f32 %v495, %v567
  %v569 = vpop.f32.mrb[0].mxu0
  %570 = vdwg.mxu0
  %v571 = vadd.f32 %v568, %v214
  %v572 = vxor.u32 %v571, 2147483648
  %v573 = vmul.f32 %v572, 1.442695
  %v574 = vpow.pop %v573
  %v575 = vadd.f32 %v574, 1.0
  %v576 = vrcp.pop %v575
  %v577 = vmul.f32 1.0, %v576
  %v578 = vtanh.pop %v571
  %v579 = vmul.f32 %v577, %v234
  %581 = vrot.lane.b32.xlu0 %v578, 64
  %v582 = vpop.permute.xlu0 %581
  %v584 = vmul.f32 %v577, %v582
  %586 = vrot.lane.b32.xlu0 %v584, 32
  %v587 = vpop.permute.xlu0 %586
  %v589 = vadd.f32 %v579, %v587
  %v590 = vtanh.pop %v589
  %592 = vrot.lane.b32.xlu0 %v590, 64
  %v593 = vpop.permute.xlu0 %592
  %v595 = vmul.f32 %v577, %v593
  %597 = vrot.lane.b32.xlu0 %v425, 32
  %v598 = vpop.permute.xlu0 %597
  %v599 = vsel %vm62, %v598, 0
  %601 = vmatprep.subr.mxu0 0.0
  %602 = vmatpush1.msra.mxu0 %v245
  %603 = vmatprep.subr.mxu0 0.0
  %604 = vmatpush1.msra.mxu0 %v246
  %605 = vmatprep.subr.mxu0 0.0
  %606 = vmatpush1.msra.mxu0 %v247
  %607 = vmatprep.subr.mxu0 0.0
  %608 = vmatpush1.msra.mxu0 %v248
  %609 = vmatprep.subr.mxu0 0.0
  %610 = vmatpush1.msra.mxu0 0.0
  %611 = vmatprep.subr.mxu0 0.0
  %612 = vmatpush1.msra.mxu0 0.0
  %613 = vmatprep.subr.mxu0 0.0
  %614 = vmatpush1.msra.mxu0 0.0
  %615 = vmatprep.subr.mxu0 0.0
  %616 = vmatpush1.msra.mxu0 0.0
  %617 = vmatprep.subr.mxu0 0.0
  %618 = vmatpush1.msra.mxu0 0.0
  %619 = vmatprep.subr.mxu0 0.0
  %620 = vmatpush1.msra.mxu0 0.0
  %621 = vmatprep.subr.mxu0 0.0
  %622 = vmatpush1.msra.mxu0 0.0
  %623 = vmatprep.subr.mxu0 0.0
  %624 = vmatpush1.msra.mxu0 0.0
  %625 = vmatprep.subr.mxu0 0.0
  %626 = vmatpush1.msra.mxu0 0.0
  %627 = vmatprep.subr.mxu0 0.0
  %628 = vmatpush1.msra.mxu0 0.0
  %629 = vmatprep.subr.mxu0 0.0
  %630 = vmatpush1.msra.mxu0 0.0
  %631 = vmatprep.subr.mxu0 0.0
  %632 = vmatpush1.msra.mxu0 0.0
  %633 = vmatprep.subr.mxu0 0.0
  %634 = vmatpush1.msra.mxu0 0.0
  %635 = vmatprep.subr.mxu0 0.0
  %636 = vmatpush1.msra.mxu0 0.0
  %637 = vmatprep.subr.mxu0 0.0
  %638 = vmatpush1.msra.mxu0 0.0
  %639 = vmatprep.subr.mxu0 0.0
  %640 = vmatpush1.msra.mxu0 0.0
  %641 = vmatprep.subr.mxu0 0.0
  %642 = vmatpush1.msra.mxu0 0.0
  %643 = vmatprep.subr.mxu0 0.0
  %644 = vmatpush1.msra.mxu0 0.0
  %645 = vmatprep.subr.mxu0 0.0
  %646 = vmatpush1.msra.mxu0 0.0
  %647 = vmatprep.subr.mxu0 0.0
  %648 = vmatpush1.msra.mxu0 0.0
  %649 = vmatprep.subr.mxu0 0.0
  %650 = vmatpush1.msra.mxu0 0.0
  %651 = vmatprep.subr.mxu0 0.0
  %652 = vmatpush1.msra.mxu0 0.0
  %653 = vmatprep.subr.mxu0 0.0
  %654 = vmatpush1.msra.mxu0 0.0
  %655 = vmatprep.subr.mxu0 0.0
  %656 = vmatpush1.msra.mxu0 0.0
  %657 = vmatprep.subr.mxu0 0.0
  %658 = vmatpush1.msra.mxu0 0.0
  %659 = vmatprep.subr.mxu0 0.0
  %660 = vmatpush1.msra.mxu0 0.0
  %661 = vmatprep.subr.mxu0 0.0
  %662 = vmatpush1.msra.mxu0 0.0
  %663 = vmatprep.subr.mxu0 0.0
  %664 = vmatpush1.msra.mxu0 0.0
  %665 = vmatprep.mubr.f32.mxu0 0.0
  %666 = vmatmul.mubr.f32.gmra.mrb[0].mxu0 %v599
  %v667 = vpop.f32.mrb[0].mxu0
  %v668 = vadd.f32 0.0, %v667
  %v669 = vpop.f32.mrb[0].mxu0
  %670 = vdwg.mxu0
  %672 = vrot.lane.b32.xlu0 %v595, 32
  %v673 = vpop.permute.xlu0 %672
  %v674 = vsel %vm62, %v673, 0
  %676 = vmatprep.subr.mxu0 0.0
  %677 = vmatpush1.msra.mxu0 %v241
  %678 = vmatprep.subr.mxu0 0.0
  %679 = vmatpush1.msra.mxu0 %v242
  %680 = vmatprep.subr.mxu0 0.0
  %681 = vmatpush1.msra.mxu0 %v243
  %682 = vmatprep.subr.mxu0 0.0
  %683 = vmatpush1.msra.mxu0 %v244
  %684 = vmatprep.subr.mxu0 0.0
  %685 = vmatpush1.msra.mxu0 0.0
  %686 = vmatprep.subr.mxu0 0.0
  %687 = vmatpush1.msra.mxu0 0.0
  %688 = vmatprep.subr.mxu0 0.0
  %689 = vmatpush1.msra.mxu0 0.0
  %690 = vmatprep.subr.mxu0 0.0
  %691 = vmatpush1.msra.mxu0 0.0
  %692 = vmatprep.subr.mxu0 0.0
  %693 = vmatpush1.msra.mxu0 0.0
  %694 = vmatprep.subr.mxu0 0.0
  %695 = vmatpush1.msra.mxu0 0.0
  %696 = vmatprep.subr.mxu0 0.0
  %697 = vmatpush1.msra.mxu0 0.0
  %698 = vmatprep.subr.mxu0 0.0
  %699 = vmatpush1.msra.mxu0 0.0
  %700 = vmatprep.subr.mxu0 0.0
  %701 = vmatpush1.msra.mxu0 0.0
  %702 = vmatprep.subr.mxu0 0.0
  %703 = vmatpush1.msra.mxu0 0.0
  %704 = vmatprep.subr.mxu0 0.0
  %705 = vmatpush1.msra.mxu0 0.0
  %706 = vmatprep.subr.mxu0 0.0
  %707 = vmatpush1.msra.mxu0 0.0
  %708 = vmatprep.subr.mxu0 0.0
  %709 = vmatpush1.msra.mxu0 0.0
  %710 = vmatprep.subr.mxu0 0.0
  %711 = vmatpush1.msra.mxu0 0.0
  %712 = vmatprep.subr.mxu0 0.0
  %713 = vmatpush1.msra.mxu0 0.0
  %714 = vmatprep.subr.mxu0 0.0
  %715 = vmatpush1.msra.mxu0 0.0
  %716 = vmatprep.subr.mxu0 0.0
  %717 = vmatpush1.msra.mxu0 0.0
  %718 = vmatprep.subr.mxu0 0.0
  %719 = vmatpush1.msra.mxu0 0.0
  %720 = vmatprep.subr.mxu0 0.0
  %721 = vmatpush1.msra.mxu0 0.0
  %722 = vmatprep.subr.mxu0 0.0
  %723 = vmatpush1.msra.mxu0 0.0
  %724 = vmatprep.subr.mxu0 0.0
  %725 = vmatpush1.msra.mxu0 0.0
  %726 = vmatprep.subr.mxu0 0.0
  %727 = vmatpush1.msra.mxu0 0.0
  %728 = vmatprep.subr.mxu0 0.0
  %729 = vmatpush1.msra.mxu0 0.0
  %730 = vmatprep.subr.mxu0 0.0
  %731 = vmatpush1.msra.mxu0 0.0
  %732 = vmatprep.subr.mxu0 0.0
  %733 = vmatpush1.msra.mxu0 0.0
  %734 = vmatprep.subr.mxu0 0.0
  %735 = vmatpush1.msra.mxu0 0.0
  %736 = vmatprep.subr.mxu0 0.0
  %737 = vmatpush1.msra.mxu0 0.0
  %738 = vmatprep.subr.mxu0 0.0
  %739 = vmatpush1.msra.mxu0 0.0
  %740 = vmatprep.mubr.f32.mxu0 0.0
  %741 = vmatmul.mubr.f32.gmra.mrb[0].mxu0 %v674
  %v742 = vpop.f32.mrb[0].mxu0
  %v743 = vadd.f32 %v668, %v742
  %v744 = vpop.f32.mrb[0].mxu0
  %745 = vdwg.mxu0
  %v746 = vadd.f32 %v743, %v399
  %v747 = vxor.u32 %v746, 2147483648
  %v748 = vmul.f32 %v747, 1.442695
  %v749 = vpow.pop %v748
  %v750 = vadd.f32 %v749, 1.0
  %v751 = vrcp.pop %v750
  %v752 = vmul.f32 1.0, %v751
  %v753 = vtanh.pop %v746
  %v754 = vmul.f32 %v752, %v419
  %756 = vrot.lane.b32.xlu0 %v753, 64
  %v757 = vpop.permute.xlu0 %756
  %v759 = vmul.f32 %v752, %v757
  %761 = vrot.lane.b32.xlu0 %v759, 32
  %v762 = vpop.permute.xlu0 %761
  %v764 = vadd.f32 %v754, %v762
  %v765 = vtanh.pop %v764
  %767 = vrot.lane.b32.xlu0 %v765, 64
  %v768 = vpop.permute.xlu0 %767
  %v770 = vmul.f32 %v752, %v768
  %s771 = scalar_lea.vmem %s0, 16
  %v772 = vld [vmem:[%s771] sm:$0xff]
  %773 = vmatprep.subr.mxu0 0.0
  %774 = vmatpush1.msra.mxu0 %v58
  %775 = vmatprep.subr.mxu0 0.0
  %776 = vmatpush1.msra.mxu0 %v59
  %777 = vmatprep.subr.mxu0 0.0
  %778 = vmatpush1.msra.mxu0 %v60
  %779 = vmatprep.subr.mxu0 0.0
  %780 = vmatpush1.msra.mxu0 %v61
  %781 = vmatprep.subr.mxu0 0.0
  %782 = vmatpush1.msra.mxu0 0.0
  %783 = vmatprep.subr.mxu0 0.0
  %784 = vmatpush1.msra.mxu0 0.0
  %785 = vmatprep.subr.mxu0 0.0
  %786 = vmatpush1.msra.mxu0 0.0
  %787 = vmatprep.subr.mxu0 0.0
  %788 = vmatpush1.msra.mxu0 0.0
  %789 = vmatprep.subr.mxu0 0.0
  %790 = vmatpush1.msra.mxu0 0.0
  %791 = vmatprep.subr.mxu0 0.0
  %792 = vmatpush1.msra.mxu0 0.0
  %793 = vmatprep.subr.mxu0 0.0
  %794 = vmatpush1.msra.mxu0 0.0
  %795 = vmatprep.subr.mxu0 0.0
  %796 = vmatpush1.msra.mxu0 0.0
  %797 = vmatprep.subr.mxu0 0.0
  %798 = vmatpush1.msra.mxu0 0.0
  %799 = vmatprep.subr.mxu0 0.0
  %800 = vmatpush1.msra.mxu0 0.0
  %801 = vmatprep.subr.mxu0 0.0
  %802 = vmatpush1.msra.mxu0 0.0
  %803 = vmatprep.subr.mxu0 0.0
  %804 = vmatpush1.msra.mxu0 0.0
  %805 = vmatprep.subr.mxu0 0.0
  %806 = vmatpush1.msra.mxu0 0.0
  %807 = vmatprep.subr.mxu0 0.0
  %808 = vmatpush1.msra.mxu0 0.0
  %809 = vmatprep.subr.mxu0 0.0
  %810 = vmatpush1.msra.mxu0 0.0
  %811 = vmatprep.subr.mxu0 0.0
  %812 = vmatpush1.msra.mxu0 0.0
  %813 = vmatprep.subr.mxu0 0.0
  %814 = vmatpush1.msra.mxu0 0.0
  %815 = vmatprep.subr.mxu0 0.0
  %816 = vmatpush1.msra.mxu0 0.0
  %817 = vmatprep.subr.mxu0 0.0
  %818 = vmatpush1.msra.mxu0 0.0
  %819 = vmatprep.subr.mxu0 0.0
  %820 = vmatpush1.msra.mxu0 0.0
  %821 = vmatprep.subr.mxu0 0.0
  %822 = vmatpush1.msra.mxu0 0.0
  %823 = vmatprep.subr.mxu0 0.0
  %824 = vmatpush1.msra.mxu0 0.0
  %825 = vmatprep.subr.mxu0 0.0
  %826 = vmatpush1.msra.mxu0 0.0
  %827 = vmatprep.subr.mxu0 0.0
  %828 = vmatpush1.msra.mxu0 0.0
  %829 = vmatprep.subr.mxu0 0.0
  %830 = vmatpush1.msra.mxu0 0.0
  %831 = vmatprep.subr.mxu0 0.0
  %832 = vmatpush1.msra.mxu0 0.0
  %833 = vmatprep.subr.mxu0 0.0
  %834 = vmatpush1.msra.mxu0 0.0
  %835 = vmatprep.subr.mxu0 0.0
  %836 = vmatpush1.msra.mxu0 0.0
  %837 = vmatprep.mubr.f32.mxu0 0.0
  %838 = vmatmul.mubr.f32.gmra.mrb[0].mxu0 %v674
  %v839 = vpop.f32.mrb[0].mxu0
  %v840 = vadd.f32 0.0, %v839
  %v841 = vpop.f32.mrb[0].mxu0
  %842 = vdwg.mxu0
  %v844 = vsel %vm62, %v772, 0
  %846 = vmatprep.subr.mxu0 0.0
  %847 = vmatpush1.msra.mxu0 %v54
  %848 = vmatprep.subr.mxu0 0.0
  %849 = vmatpush1.msra.mxu0 %v55
  %850 = vmatprep.subr.mxu0 0.0
  %851 = vmatpush1.msra.mxu0 %v56
  %852 = vmatprep.subr.mxu0 0.0
  %853 = vmatpush1.msra.mxu0 %v57
  %854 = vmatprep.subr.mxu0 0.0
  %855 = vmatpush1.msra.mxu0 0.0
  %856 = vmatprep.subr.mxu0 0.0
  %857 = vmatpush1.msra.mxu0 0.0
  %858 = vmatprep.subr.mxu0 0.0
  %859 = vmatpush1.msra.mxu0 0.0
  %860 = vmatprep.subr.mxu0 0.0
  %861 = vmatpush1.msra.mxu0 0.0
  %862 = vmatprep.subr.mxu0 0.0
  %863 = vmatpush1.msra.mxu0 0.0
  %864 = vmatprep.subr.mxu0 0.0
  %865 = vmatpush1.msra.mxu0 0.0
  %866 = vmatprep.subr.mxu0 0.0
  %867 = vmatpush1.msra.mxu0 0.0
  %868 = vmatprep.subr.mxu0 0.0
  %869 = vmatpush1.msra.mxu0 0.0
  %870 = vmatprep.subr.mxu0 0.0
  %871 = vmatpush1.msra.mxu0 0.0
  %872 = vmatprep.subr.mxu0 0.0
  %873 = vmatpush1.msra.mxu0 0.0
  %874 = vmatprep.subr.mxu0 0.0
  %875 = vmatpush1.msra.mxu0 0.0
  %876 = vmatprep.subr.mxu0 0.0
  %877 = vmatpush1.msra.mxu0 0.0
  %878 = vmatprep.subr.mxu0 0.0
  %879 = vmatpush1.msra.mxu0 0.0
  %880 = vmatprep.subr.mxu0 0.0
  %881 = vmatpush1.msra.mxu0 0.0
  %882 = vmatprep.subr.mxu0 0.0
  %883 = vmatpush1.msra.mxu0 0.0
  %884 = vmatprep.subr.mxu0 0.0
  %885 = vmatpush1.msra.mxu0 0.0
  %886 = vmatprep.subr.mxu0 0.0
  %887 = vmatpush1.msra.mxu0 0.0
  %888 = vmatprep.subr.mxu0 0.0
  %889 = vmatpush1.msra.mxu0 0.0
  %890 = vmatprep.subr.mxu0 0.0
  %891 = vmatpush1.msra.mxu0 0.0
  %892 = vmatprep.subr.mxu0 0.0
  %893 = vmatpush1.msra.mxu0 0.0
  %894 = vmatprep.subr.mxu0 0.0
  %895 = vmatpush1.msra.mxu0 0.0
  %896 = vmatprep.subr.mxu0 0.0
  %897 = vmatpush1.msra.mxu0 0.0
  %898 = vmatprep.subr.mxu0 0.0
  %899 = vmatpush1.msra.mxu0 0.0
  %900 = vmatprep.subr.mxu0 0.0
  %901 = vmatpush1.msra.mxu0 0.0
  %902 = vmatprep.subr.mxu0 0.0
  %903 = vmatpush1.msra.mxu0 0.0
  %904 = vmatprep.subr.mxu0 0.0
  %905 = vmatpush1.msra.mxu0 0.0
  %906 = vmatprep.subr.mxu0 0.0
  %907 = vmatpush1.msra.mxu0 0.0
  %908 = vmatprep.subr.mxu0 0.0
  %909 = vmatpush1.msra.mxu0 0.0
  %910 = vmatprep.mubr.f32.mxu0 0.0
  %911 = vmatmul.mubr.f32.gmra.mrb[0].mxu0 %v844
  %v912 = vpop.f32.mrb[0].mxu0
  %v913 = vadd.f32 %v840, %v912
  %v914 = vpop.f32.mrb[0].mxu0
  %915 = vdwg.mxu0
  %v916 = vadd.f32 %v913, %v214
  %v917 = vxor.u32 %v916, 2147483648
  %v918 = vmul.f32 %v917, 1.442695
  %v919 = vpow.pop %v918
  %v920 = vadd.f32 %v919, 1.0
  %v921 = vrcp.pop %v920
  %v922 = vmul.f32 1.0, %v921
  %v923 = vtanh.pop %v916
  %v924 = vmul.f32 %v922, %v589
  %926 = vrot.lane.b32.xlu0 %v923, 64
  %v927 = vpop.permute.xlu0 %926
  %v929 = vmul.f32 %v922, %v927
  %931 = vrot.lane.b32.xlu0 %v929, 32
  %v932 = vpop.permute.xlu0 %931
  %v934 = vadd.f32 %v924, %v932
  %v935 = vtanh.pop %v934
  %937 = vrot.lane.b32.xlu0 %v935, 64
  %v938 = vpop.permute.xlu0 %937
  %v940 = vmul.f32 %v922, %v938
  %942 = vrot.lane.b32.xlu0 %v770, 32
  %v943 = vpop.permute.xlu0 %942
  %v944 = vsel %vm62, %v943, 0
  %946 = vmatprep.subr.mxu0 0.0
  %947 = vmatpush1.msra.mxu0 %v245
  %948 = vmatprep.subr.mxu0 0.0
  %949 = vmatpush1.msra.mxu0 %v246
  %950 = vmatprep.subr.mxu0 0.0
  %951 = vmatpush1.msra.mxu0 %v247
  %952 = vmatprep.subr.mxu0 0.0
  %953 = vmatpush1.msra.mxu0 %v248
  %954 = vmatprep.subr.mxu0 0.0
  %955 = vmatpush1.msra.mxu0 0.0
  %956 = vmatprep.subr.mxu0 0.0
  %957 = vmatpush1.msra.mxu0 0.0
  %958 = vmatprep.subr.mxu0 0.0
  %959 = vmatpush1.msra.mxu0 0.0
  %960 = vmatprep.subr.mxu0 0.0
  %961 = vmatpush1.msra.mxu0 0.0
  %962 = vmatprep.subr.mxu0 0.0
  %963 = vmatpush1.msra.mxu0 0.0
  %964 = vmatprep.subr.mxu0 0.0
  %965 = vmatpush1.msra.mxu0 0.0
  %966 = vmatprep.subr.mxu0 0.0
  %967 = vmatpush1.msra.mxu0 0.0
  %968 = vmatprep.subr.mxu0 0.0
  %969 = vmatpush1.msra.mxu0 0.0
  %970 = vmatprep.subr.mxu0 0.0
  %971 = vmatpush1.msra.mxu0 0.0
  %972 = vmatprep.subr.mxu0 0.0
  %973 = vmatpush1.msra.mxu0 0.0
  %974 = vmatprep.subr.mxu0 0.0
  %975 = vmatpush1.msra.mxu0 0.0
  %976 = vmatprep.subr.mxu0 0.0
  %977 = vmatpush1.msra.mxu0 0.0
  %978 = vmatprep.subr.mxu0 0.0
  %979 = vmatpush1.msra.mxu0 0.0
  %980 = vmatprep.subr.mxu0 0.0
  %981 = vmatpush1.msra.mxu0 0.0
  %982 = vmatprep.subr.mxu0 0.0
  %983 = vmatpush1.msra.mxu0 0.0
  %984 = vmatprep.subr.mxu0 0.0
  %985 = vmatpush1.msra.mxu0 0.0
  %986 = vmatprep.subr.mxu0 0.0
  %987 = vmatpush1.msra.mxu0 0.0
  %988 = vmatprep.subr.mxu0 0.0
  %989 = vmatpush1.msra.mxu0 0.0
  %990 = vmatprep.subr.mxu0 0.0
  %991 = vmatpush1.msra.mxu0 0.0
  %992 = vmatprep.subr.mxu0 0.0
  %993 = vmatpush1.msra.mxu0 0.0
  %994 = vmatprep.subr.mxu0 0.0
  %995 = vmatpush1.msra.mxu0 0.0
  %996 = vmatprep.subr.mxu0 0.0
  %997 = vmatpush1.msra.mxu0 0.0
  %998 = vmatprep.subr.mxu0 0.0
  %999 = vmatpush1.msra.mxu0 0.0
  %1000 = vmatprep.subr.mxu0 0.0
  %1001 = vmatpush1.msra.mxu0 0.0
  %1002 = vmatprep.subr.mxu0 0.0
  %1003 = vmatpush1.msra.mxu0 0.0
  %1004 = vmatprep.subr.mxu0 0.0
  %1005 = vmatpush1.msra.mxu0 0.0
  %1006 = vmatprep.subr.mxu0 0.0
  %1007 = vmatpush1.msra.mxu0 0.0
  %1008 = vmatprep.subr.mxu0 0.0
  %1009 = vmatpush1.msra.mxu0 0.0
  %1010 = vmatprep.mubr.f32.mxu0 0.0
  %1011 = vmatmul.mubr.f32.gmra.mrb[0].mxu0 %v944
  %v1012 = vpop.f32.mrb[0].mxu0
  %v1013 = vadd.f32 0.0, %v1012
  %v1014 = vpop.f32.mrb[0].mxu0
  %1015 = vdwg.mxu0
  %1017 = vrot.lane.b32.xlu0 %v940, 32
  %v1018 = vpop.permute.xlu0 %1017
  %v1019 = vsel %vm62, %v1018, 0
  %1021 = vmatprep.subr.mxu0 0.0
  %1022 = vmatpush1.msra.mxu0 %v241
  %1023 = vmatprep.subr.mxu0 0.0
  %1024 = vmatpush1.msra.mxu0 %v242
  %1025 = vmatprep.subr.mxu0 0.0
  %1026 = vmatpush1.msra.mxu0 %v243
  %1027 = vmatprep.subr.mxu0 0.0
  %1028 = vmatpush1.msra.mxu0 %v244
  %1029 = vmatprep.subr.mxu0 0.0
  %1030 = vmatpush1.msra.mxu0 0.0
  %1031 = vmatprep.subr.mxu0 0.0
  %1032 = vmatpush1.msra.mxu0 0.0
  %1033 = vmatprep.subr.mxu0 0.0
  %1034 = vmatpush1.msra.mxu0 0.0
  %1035 = vmatprep.subr.mxu0 0.0
  %1036 = vmatpush1.msra.mxu0 0.0
  %1037 = vmatprep.subr.mxu0 0.0
  %1038 = vmatpush1.msra.mxu0 0.0
  %1039 = vmatprep.subr.mxu0 0.0
  %1040 = vmatpush1.msra.mxu0 0.0
  %1041 = vmatprep.subr.mxu0 0.0
  %1042 = vmatpush1.msra.mxu0 0.0
  %1043 = vmatprep.subr.mxu0 0.0
  %1044 = vmatpush1.msra.mxu0 0.0
  %1045 = vmatprep.subr.mxu0 0.0
  %1046 = vmatpush1.msra.mxu0 0.0
  %1047 = vmatprep.subr.mxu0 0.0
  %1048 = vmatpush1.msra.mxu0 0.0
  %1049 = vmatprep.subr.mxu0 0.0
  %1050 = vmatpush1.msra.mxu0 0.0
  %1051 = vmatprep.subr.mxu0 0.0
  %1052 = vmatpush1.msra.mxu0 0.0
  %1053 = vmatprep.subr.mxu0 0.0
  %1054 = vmatpush1.msra.mxu0 0.0
  %1055 = vmatprep.subr.mxu0 0.0
  %1056 = vmatpush1.msra.mxu0 0.0
  %1057 = vmatprep.subr.mxu0 0.0
  %1058 = vmatpush1.msra.mxu0 0.0
  %1059 = vmatprep.subr.mxu0 0.0
  %1060 = vmatpush1.msra.mxu0 0.0
  %1061 = vmatprep.subr.mxu0 0.0
  %1062 = vmatpush1.msra.mxu0 0.0
  %1063 = vmatprep.subr.mxu0 0.0
  %1064 = vmatpush1.msra.mxu0 0.0
  %1065 = vmatprep.subr.mxu0 0.0
  %1066 = vmatpush1.msra.mxu0 0.0
  %1067 = vmatprep.subr.mxu0 0.0
  %1068 = vmatpush1.msra.mxu0 0.0
  %1069 = vmatprep.subr.mxu0 0.0
  %1070 = vmatpush1.msra.mxu0 0.0
  %1071 = vmatprep.subr.mxu0 0.0
  %1072 = vmatpush1.msra.mxu0 0.0
  %1073 = vmatprep.subr.mxu0 0.0
  %1074 = vmatpush1.msra.mxu0 0.0
  %1075 = vmatprep.subr.mxu0 0.0
  %1076 = vmatpush1.msra.mxu0 0.0
  %1077 = vmatprep.subr.mxu0 0.0
  %1078 = vmatpush1.msra.mxu0 0.0
  %1079 = vmatprep.subr.mxu0 0.0
  %1080 = vmatpush1.msra.mxu0 0.0
  %1081 = vmatprep.subr.mxu0 0.0
  %1082 = vmatpush1.msra.mxu0 0.0
  %1083 = vmatprep.subr.mxu0 0.0
  %1084 = vmatpush1.msra.mxu0 0.0
  %1085 = vmatprep.mubr.f32.mxu0 0.0
  %1086 = vmatmul.mubr.f32.gmra.mrb[0].mxu0 %v1019
  %v1087 = vpop.f32.mrb[0].mxu0
  %v1088 = vadd.f32 %v1013, %v1087
  %v1089 = vpop.f32.mrb[0].mxu0
  %1090 = vdwg.mxu0
  %v1091 = vadd.f32 %v1088, %v399
  %v1092 = vxor.u32 %v1091, 2147483648
  %v1093 = vmul.f32 %v1092, 1.442695
  %v1094 = vpow.pop %v1093
  %v1095 = vadd.f32 %v1094, 1.0
  %v1096 = vrcp.pop %v1095
  %v1097 = vmul.f32 1.0, %v1096
  %v1098 = vtanh.pop %v1091
  %v1099 = vmul.f32 %v1097, %v764
  %1101 = vrot.lane.b32.xlu0 %v1098, 64
  %v1102 = vpop.permute.xlu0 %1101
  %v1104 = vmul.f32 %v1097, %v1102
  %1106 = vrot.lane.b32.xlu0 %v1104, 32
  %v1107 = vpop.permute.xlu0 %1106
  %v1109 = vadd.f32 %v1099, %v1107
  %v1110 = vtanh.pop %v1109
  %1112 = vrot.lane.b32.xlu0 %v1110, 64
  %v1113 = vpop.permute.xlu0 %1112
  %v1115 = vmul.f32 %v1097, %v1113
  %s1116 = scalar_lea.vmem %s0, 24
  %v1117 = vld [vmem:[%s1116] sm:$0xff]
  %1118 = vmatprep.subr.mxu0 0.0
  %1119 = vmatpush1.msra.mxu0 %v58
  %1120 = vmatprep.subr.mxu0 0.0
  %1121 = vmatpush1.msra.mxu0 %v59
  %1122 = vmatprep.subr.mxu0 0.0
  %1123 = vmatpush1.msra.mxu0 %v60
  %1124 = vmatprep.subr.mxu0 0.0
  %1125 = vmatpush1.msra.mxu0 %v61
  %1126 = vmatprep.subr.mxu0 0.0
  %1127 = vmatpush1.msra.mxu0 0.0
  %1128 = vmatprep.subr.mxu0 0.0
  %1129 = vmatpush1.msra.mxu0 0.0
  %1130 = vmatprep.subr.mxu0 0.0
  %1131 = vmatpush1.msra.mxu0 0.0
  %1132 = vmatprep.subr.mxu0 0.0
  %1133 = vmatpush1.msra.mxu0 0.0
  %1134 = vmatprep.subr.mxu0 0.0
  %1135 = vmatpush1.msra.mxu0 0.0
  %1136 = vmatprep.subr.mxu0 0.0
  %1137 = vmatpush1.msra.mxu0 0.0
  %1138 = vmatprep.subr.mxu0 0.0
  %1139 = vmatpush1.msra.mxu0 0.0
  %1140 = vmatprep.subr.mxu0 0.0
  %1141 = vmatpush1.msra.mxu0 0.0
  %1142 = vmatprep.subr.mxu0 0.0
  %1143 = vmatpush1.msra.mxu0 0.0
  %1144 = vmatprep.subr.mxu0 0.0
  %1145 = vmatpush1.msra.mxu0 0.0
  %1146 = vmatprep.subr.mxu0 0.0
  %1147 = vmatpush1.msra.mxu0 0.0
  %1148 = vmatprep.subr.mxu0 0.0
  %1149 = vmatpush1.msra.mxu0 0.0
  %1150 = vmatprep.subr.mxu0 0.0
  %1151 = vmatpush1.msra.mxu0 0.0
  %1152 = vmatprep.subr.mxu0 0.0
  %1153 = vmatpush1.msra.mxu0 0.0
  %1154 = vmatprep.subr.mxu0 0.0
  %1155 = vmatpush1.msra.mxu0 0.0
  %1156 = vmatprep.subr.mxu0 0.0
  %1157 = vmatpush1.msra.mxu0 0.0
  %1158 = vmatprep.subr.mxu0 0.0
  %1159 = vmatpush1.msra.mxu0 0.0
  %1160 = vmatprep.subr.mxu0 0.0
  %1161 = vmatpush1.msra.mxu0 0.0
  %1162 = vmatprep.subr.mxu0 0.0
  %1163 = vmatpush1.msra.mxu0 0.0
  %1164 = vmatprep.subr.mxu0 0.0
  %1165 = vmatpush1.msra.mxu0 0.0
  %1166 = vmatprep.subr.mxu0 0.0
  %1167 = vmatpush1.msra.mxu0 0.0
  %1168 = vmatprep.subr.mxu0 0.0
  %1169 = vmatpush1.msra.mxu0 0.0
  %1170 = vmatprep.subr.mxu0 0.0
  %1171 = vmatpush1.msra.mxu0 0.0
  %1172 = vmatprep.subr.mxu0 0.0
  %1173 = vmatpush1.msra.mxu0 0.0
  %1174 = vmatprep.subr.mxu0 0.0
  %1175 = vmatpush1.msra.mxu0 0.0
  %1176 = vmatprep.subr.mxu0 0.0
  %1177 = vmatpush1.msra.mxu0 0.0
  %1178 = vmatprep.subr.mxu0 0.0
  %1179 = vmatpush1.msra.mxu0 0.0
  %1180 = vmatprep.subr.mxu0 0.0
  %1181 = vmatpush1.msra.mxu0 0.0
  %1182 = vmatprep.mubr.f32.mxu0 0.0
  %1183 = vmatmul.mubr.f32.gmra.mrb[0].mxu0 %v1019
  %v1184 = vpop.f32.mrb[0].mxu0
  %v1185 = vadd.f32 0.0, %v1184
  %v1186 = vpop.f32.mrb[0].mxu0
  %1187 = vdwg.mxu0
  %v1189 = vsel %vm62, %v1117, 0
  %1191 = vmatprep.subr.mxu0 0.0
  %1192 = vmatpush1.msra.mxu0 %v54
  %1193 = vmatprep.subr.mxu0 0.0
  %1194 = vmatpush1.msra.mxu0 %v55
  %1195 = vmatprep.subr.mxu0 0.0
  %1196 = vmatpush1.msra.mxu0 %v56
  %1197 = vmatprep.subr.mxu0 0.0
  %1198 = vmatpush1.msra.mxu0 %v57
  %1199 = vmatprep.subr.mxu0 0.0
  %1200 = vmatpush1.msra.mxu0 0.0
  %1201 = vmatprep.subr.mxu0 0.0
  %1202 = vmatpush1.msra.mxu0 0.0
  %1203 = vmatprep.subr.mxu0 0.0
  %1204 = vmatpush1.msra.mxu0 0.0
  %1205 = vmatprep.subr.mxu0 0.0
  %1206 = vmatpush1.msra.mxu0 0.0
  %1207 = vmatprep.subr.mxu0 0.0
  %1208 = vmatpush1.msra.mxu0 0.0
  %1209 = vmatprep.subr.mxu0 0.0
  %1210 = vmatpush1.msra.mxu0 0.0
  %1211 = vmatprep.subr.mxu0 0.0
  %1212 = vmatpush1.msra.mxu0 0.0
  %1213 = vmatprep.subr.mxu0 0.0
  %1214 = vmatpush1.msra.mxu0 0.0
  %1215 = vmatprep.subr.mxu0 0.0
  %1216 = vmatpush1.msra.mxu0 0.0
  %1217 = vmatprep.subr.mxu0 0.0
  %1218 = vmatpush1.msra.mxu0 0.0
  %1219 = vmatprep.subr.mxu0 0.0
  %1220 = vmatpush1.msra.mxu0 0.0
  %1221 = vmatprep.subr.mxu0 0.0
  %1222 = vmatpush1.msra.mxu0 0.0
  %1223 = vmatprep.subr.mxu0 0.0
  %1224 = vmatpush1.msra.mxu0 0.0
  %1225 = vmatprep.subr.mxu0 0.0
  %1226 = vmatpush1.msra.mxu0 0.0
  %1227 = vmatprep.subr.mxu0 0.0
  %1228 = vmatpush1.msra.mxu0 0.0
  %1229 = vmatprep.subr.mxu0 0.0
  %1230 = vmatpush1.msra.mxu0 0.0
  %1231 = vmatprep.subr.mxu0 0.0
  %1232 = vmatpush1.msra.mxu0 0.0
  %1233 = vmatprep.subr.mxu0 0.0
  %1234 = vmatpush1.msra.mxu0 0.0
  %1235 = vmatprep.subr.mxu0 0.0
  %1236 = vmatpush1.msra.mxu0 0.0
  %1237 = vmatprep.subr.mxu0 0.0
  %1238 = vmatpush1.msra.mxu0 0.0
  %1239 = vmatprep.subr.mxu0 0.0
  %1240 = vmatpush1.msra.mxu0 0.0
  %1241 = vmatprep.subr.mxu0 0.0
  %1242 = vmatpush1.msra.mxu0 0.0
  %1243 = vmatprep.subr.mxu0 0.0
  %1244 = vmatpush1.msra.mxu0 0.0
  %1245 = vmatprep.subr.mxu0 0.0
  %1246 = vmatpush1.msra.mxu0 0.0
  %1247 = vmatprep.subr.mxu0 0.0
  %1248 = vmatpush1.msra.mxu0 0.0
  %1249 = vmatprep.subr.mxu0 0.0
  %1250 = vmatpush1.msra.mxu0 0.0
  %1251 = vmatprep.subr.mxu0 0.0
  %1252 = vmatpush1.msra.mxu0 0.0
  %1253 = vmatprep.subr.mxu0 0.0
  %1254 = vmatpush1.msra.mxu0 0.0
  %1255 = vmatprep.mubr.f32.mxu0 0.0
  %1256 = vmatmul.mubr.f32.gmra.mrb[0].mxu0 %v1189
  %v1257 = vpop.f32.mrb[0].mxu0
  %v1258 = vadd.f32 %v1185, %v1257
  %v1259 = vpop.f32.mrb[0].mxu0
  %1260 = vdwg.mxu0
  %v1261 = vadd.f32 %v1258, %v214
  %v1262 = vxor.u32 %v1261, 2147483648
  %v1263 = vmul.f32 %v1262, 1.442695
  %v1264 = vpow.pop %v1263
  %v1265 = vadd.f32 %v1264, 1.0
  %v1266 = vrcp.pop %v1265
  %v1267 = vmul.f32 1.0, %v1266
  %v1268 = vtanh.pop %v1261
  %v1269 = vmul.f32 %v1267, %v934
  %1271 = vrot.lane.b32.xlu0 %v1268, 64
  %v1272 = vpop.permute.xlu0 %1271
  %v1274 = vmul.f32 %v1267, %v1272
  %1276 = vrot.lane.b32.xlu0 %v1274, 32
  %v1277 = vpop.permute.xlu0 %1276
  %v1279 = vadd.f32 %v1269, %v1277
  %v1280 = vtanh.pop %v1279
  %1282 = vrot.lane.b32.xlu0 %v1280, 64
  %v1283 = vpop.permute.xlu0 %1282
  %v1285 = vmul.f32 %v1267, %v1283
  %1287 = vrot.lane.b32.xlu0 %v1115, 32
  %v1288 = vpop.permute.xlu0 %1287
  %v1289 = vsel %vm62, %v1288, 0
  %1291 = vmatprep.subr.mxu0 0.0
  %1292 = vmatpush1.msra.mxu0 %v245
  %1293 = vmatprep.subr.mxu0 0.0
  %1294 = vmatpush1.msra.mxu0 %v246
  %1295 = vmatprep.subr.mxu0 0.0
  %1296 = vmatpush1.msra.mxu0 %v247
  %1297 = vmatprep.subr.mxu0 0.0
  %1298 = vmatpush1.msra.mxu0 %v248
  %1299 = vmatprep.subr.mxu0 0.0
  %1300 = vmatpush1.msra.mxu0 0.0
  %1301 = vmatprep.subr.mxu0 0.0
  %1302 = vmatpush1.msra.mxu0 0.0
  %1303 = vmatprep.subr.mxu0 0.0
  %1304 = vmatpush1.msra.mxu0 0.0
  %1305 = vmatprep.subr.mxu0 0.0
  %1306 = vmatpush1.msra.mxu0 0.0
  %1307 = vmatprep.subr.mxu0 0.0
  %1308 = vmatpush1.msra.mxu0 0.0
  %1309 = vmatprep.subr.mxu0 0.0
  %1310 = vmatpush1.msra.mxu0 0.0
  %1311 = vmatprep.subr.mxu0 0.0
  %1312 = vmatpush1.msra.mxu0 0.0
  %1313 = vmatprep.subr.mxu0 0.0
  %1314 = vmatpush1.msra.mxu0 0.0
  %1315 = vmatprep.subr.mxu0 0.0
  %1316 = vmatpush1.msra.mxu0 0.0
  %1317 = vmatprep.subr.mxu0 0.0
  %1318 = vmatpush1.msra.mxu0 0.0
  %1319 = vmatprep.subr.mxu0 0.0
  %1320 = vmatpush1.msra.mxu0 0.0
  %1321 = vmatprep.subr.mxu0 0.0
  %1322 = vmatpush1.msra.mxu0 0.0
  %1323 = vmatprep.subr.mxu0 0.0
  %1324 = vmatpush1.msra.mxu0 0.0
  %1325 = vmatprep.subr.mxu0 0.0
  %1326 = vmatpush1.msra.mxu0 0.0
  %1327 = vmatprep.subr.mxu0 0.0
  %1328 = vmatpush1.msra.mxu0 0.0
  %1329 = vmatprep.subr.mxu0 0.0
  %1330 = vmatpush1.msra.mxu0 0.0
  %1331 = vmatprep.subr.mxu0 0.0
  %1332 = vmatpush1.msra.mxu0 0.0
  %1333 = vmatprep.subr.mxu0 0.0
  %1334 = vmatpush1.msra.mxu0 0.0
  %1335 = vmatprep.subr.mxu0 0.0
  %1336 = vmatpush1.msra.mxu0 0.0
  %1337 = vmatprep.subr.mxu0 0.0
  %1338 = vmatpush1.msra.mxu0 0.0
  %1339 = vmatprep.subr.mxu0 0.0
  %1340 = vmatpush1.msra.mxu0 0.0
  %1341 = vmatprep.subr.mxu0 0.0
  %1342 = vmatpush1.msra.mxu0 0.0
  %1343 = vmatprep.subr.mxu0 0.0
  %1344 = vmatpush1.msra.mxu0 0.0
  %1345 = vmatprep.subr.mxu0 0.0
  %1346 = vmatpush1.msra.mxu0 0.0
  %1347 = vmatprep.subr.mxu0 0.0
  %1348 = vmatpush1.msra.mxu0 0.0
  %1349 = vmatprep.subr.mxu0 0.0
  %1350 = vmatpush1.msra.mxu0 0.0
  %1351 = vmatprep.subr.mxu0 0.0
  %1352 = vmatpush1.msra.mxu0 0.0
  %1353 = vmatprep.subr.mxu0 0.0
  %1354 = vmatpush1.msra.mxu0 0.0
  %1355 = vmatprep.mubr.f32.mxu0 0.0
  %1356 = vmatmul.mubr.f32.gmra.mrb[0].mxu0 %v1289
  %v1357 = vpop.f32.mrb[0].mxu0
  %v1358 = vadd.f32 0.0, %v1357
  %v1359 = vpop.f32.mrb[0].mxu0
  %1360 = vdwg.mxu0
  %1362 = vrot.lane.b32.xlu0 %v1285, 32
  %v1363 = vpop.permute.xlu0 %1362
  %v1364 = vsel %vm62, %v1363, 0
  %1366 = vmatprep.subr.mxu0 0.0
  %1367 = vmatpush1.msra.mxu0 %v241
  %1368 = vmatprep.subr.mxu0 0.0
  %1369 = vmatpush1.msra.mxu0 %v242
  %1370 = vmatprep.subr.mxu0 0.0
  %1371 = vmatpush1.msra.mxu0 %v243
  %1372 = vmatprep.subr.mxu0 0.0
  %1373 = vmatpush1.msra.mxu0 %v244
  %1374 = vmatprep.subr.mxu0 0.0
  %1375 = vmatpush1.msra.mxu0 0.0
  %1376 = vmatprep.subr.mxu0 0.0
  %1377 = vmatpush1.msra.mxu0 0.0
  %1378 = vmatprep.subr.mxu0 0.0
  %1379 = vmatpush1.msra.mxu0 0.0
  %1380 = vmatprep.subr.mxu0 0.0
  %1381 = vmatpush1.msra.mxu0 0.0
  %1382 = vmatprep.subr.mxu0 0.0
  %1383 = vmatpush1.msra.mxu0 0.0
  %1384 = vmatprep.subr.mxu0 0.0
  %1385 = vmatpush1.msra.mxu0 0.0
  %1386 = vmatprep.subr.mxu0 0.0
  %1387 = vmatpush1.msra.mxu0 0.0
  %1388 = vmatprep.subr.mxu0 0.0
  %1389 = vmatpush1.msra.mxu0 0.0
  %1390 = vmatprep.subr.mxu0 0.0
  %1391 = vmatpush1.msra.mxu0 0.0
  %1392 = vmatprep.subr.mxu0 0.0
  %1393 = vmatpush1.msra.mxu0 0.0
  %1394 = vmatprep.subr.mxu0 0.0
  %1395 = vmatpush1.msra.mxu0 0.0
  %1396 = vmatprep.subr.mxu0 0.0
  %1397 = vmatpush1.msra.mxu0 0.0
  %1398 = vmatprep.subr.mxu0 0.0
  %1399 = vmatpush1.msra.mxu0 0.0
  %1400 = vmatprep.subr.mxu0 0.0
  %1401 = vmatpush1.msra.mxu0 0.0
  %1402 = vmatprep.subr.mxu0 0.0
  %1403 = vmatpush1.msra.mxu0 0.0
  %1404 = vmatprep.subr.mxu0 0.0
  %1405 = vmatpush1.msra.mxu0 0.0
  %1406 = vmatprep.subr.mxu0 0.0
  %1407 = vmatpush1.msra.mxu0 0.0
  %1408 = vmatprep.subr.mxu0 0.0
  %1409 = vmatpush1.msra.mxu0 0.0
  %1410 = vmatprep.subr.mxu0 0.0
  %1411 = vmatpush1.msra.mxu0 0.0
  %1412 = vmatprep.subr.mxu0 0.0
  %1413 = vmatpush1.msra.mxu0 0.0
  %1414 = vmatprep.subr.mxu0 0.0
  %1415 = vmatpush1.msra.mxu0 0.0
  %1416 = vmatprep.subr.mxu0 0.0
  %1417 = vmatpush1.msra.mxu0 0.0
  %1418 = vmatprep.subr.mxu0 0.0
  %1419 = vmatpush1.msra.mxu0 0.0
  %1420 = vmatprep.subr.mxu0 0.0
  %1421 = vmatpush1.msra.mxu0 0.0
  %1422 = vmatprep.subr.mxu0 0.0
  %1423 = vmatpush1.msra.mxu0 0.0
  %1424 = vmatprep.subr.mxu0 0.0
  %1425 = vmatpush1.msra.mxu0 0.0
  %1426 = vmatprep.subr.mxu0 0.0
  %1427 = vmatpush1.msra.mxu0 0.0
  %1428 = vmatprep.subr.mxu0 0.0
  %1429 = vmatpush1.msra.mxu0 0.0
  %1430 = vmatprep.mubr.f32.mxu0 0.0
  %1431 = vmatmul.mubr.f32.gmra.mrb[0].mxu0 %v1364
  %v1432 = vpop.f32.mrb[0].mxu0
  %v1433 = vadd.f32 %v1358, %v1432
  %v1434 = vpop.f32.mrb[0].mxu0
  %1435 = vdwg.mxu0
  %v1436 = vadd.f32 %v1433, %v399
  %v1437 = vxor.u32 %v1436, 2147483648
  %v1438 = vmul.f32 %v1437, 1.442695
  %v1439 = vpow.pop %v1438
  %v1440 = vadd.f32 %v1439, 1.0
  %v1441 = vrcp.pop %v1440
  %v1442 = vmul.f32 1.0, %v1441
  %v1443 = vtanh.pop %v1436
  %v1444 = vmul.f32 %v1442, %v1109
  %1446 = vrot.lane.b32.xlu0 %v1443, 64
  %v1447 = vpop.permute.xlu0 %1446
  %v1449 = vmul.f32 %v1442, %v1447
  %1451 = vrot.lane.b32.xlu0 %v1449, 32
  %v1452 = vpop.permute.xlu0 %1451
  %v1454 = vadd.f32 %v1444, %v1452
  %v1455 = vtanh.pop %v1454
  %1457 = vrot.lane.b32.xlu0 %v1455, 64
  %v1458 = vpop.permute.xlu0 %1457
  %v1460 = vmul.f32 %v1442, %v1458
  %s1461 = scalar_lea.vmem %s0, 32
  %v1462 = vld [vmem:[%s1461] sm:$0xff]
  %1463 = vmatprep.subr.mxu0 0.0
  %1464 = vmatpush1.msra.mxu0 %v58
  %1465 = vmatprep.subr.mxu0 0.0
  %1466 = vmatpush1.msra.mxu0 %v59
  %1467 = vmatprep.subr.mxu0 0.0
  %1468 = vmatpush1.msra.mxu0 %v60
  %1469 = vmatprep.subr.mxu0 0.0
  %1470 = vmatpush1.msra.mxu0 %v61
  %1471 = vmatprep.subr.mxu0 0.0
  %1472 = vmatpush1.msra.mxu0 0.0
  %1473 = vmatprep.subr.mxu0 0.0
  %1474 = vmatpush1.msra.mxu0 0.0
  %1475 = vmatprep.subr.mxu0 0.0
  %1476 = vmatpush1.msra.mxu0 0.0
  %1477 = vmatprep.subr.mxu0 0.0
  %1478 = vmatpush1.msra.mxu0 0.0
  %1479 = vmatprep.subr.mxu0 0.0
  %1480 = vmatpush1.msra.mxu0 0.0
  %1481 = vmatprep.subr.mxu0 0.0
  %1482 = vmatpush1.msra.mxu0 0.0
  %1483 = vmatprep.subr.mxu0 0.0
  %1484 = vmatpush1.msra.mxu0 0.0
  %1485 = vmatprep.subr.mxu0 0.0
  %1486 = vmatpush1.msra.mxu0 0.0
  %1487 = vmatprep.subr.mxu0 0.0
  %1488 = vmatpush1.msra.mxu0 0.0
  %1489 = vmatprep.subr.mxu0 0.0
  %1490 = vmatpush1.msra.mxu0 0.0
  %1491 = vmatprep.subr.mxu0 0.0
  %1492 = vmatpush1.msra.mxu0 0.0
  %1493 = vmatprep.subr.mxu0 0.0
  %1494 = vmatpush1.msra.mxu0 0.0
  %1495 = vmatprep.subr.mxu0 0.0
  %1496 = vmatpush1.msra.mxu0 0.0
  %1497 = vmatprep.subr.mxu0 0.0
  %1498 = vmatpush1.msra.mxu0 0.0
  %1499 = vmatprep.subr.mxu0 0.0
  %1500 = vmatpush1.msra.mxu0 0.0
  %1501 = vmatprep.subr.mxu0 0.0
  %1502 = vmatpush1.msra.mxu0 0.0
  %1503 = vmatprep.subr.mxu0 0.0
  %1504 = vmatpush1.msra.mxu0 0.0
  %1505 = vmatprep.subr.mxu0 0.0
  %1506 = vmatpush1.msra.mxu0 0.0
  %1507 = vmatprep.subr.mxu0 0.0
  %1508 = vmatpush1.msra.mxu0 0.0
  %1509 = vmatprep.subr.mxu0 0.0
  %1510 = vmatpush1.msra.mxu0 0.0
  %1511 = vmatprep.subr.mxu0 0.0
  %1512 = vmatpush1.msra.mxu0 0.0
  %1513 = vmatprep.subr.mxu0 0.0
  %1514 = vmatpush1.msra.mxu0 0.0
  %1515 = vmatprep.subr.mxu0 0.0
  %1516 = vmatpush1.msra.mxu0 0.0
  %1517 = vmatprep.subr.mxu0 0.0
  %1518 = vmatpush1.msra.mxu0 0.0
  %1519 = vmatprep.subr.mxu0 0.0
  %1520 = vmatpush1.msra.mxu0 0.0
  %1521 = vmatprep.subr.mxu0 0.0
  %1522 = vmatpush1.msra.mxu0 0.0
  %1523 = vmatprep.subr.mxu0 0.0
  %1524 = vmatpush1.msra.mxu0 0.0
  %1525 = vmatprep.subr.mxu0 0.0
  %1526 = vmatpush1.msra.mxu0 0.0
  %1527 = vmatprep.mubr.f32.mxu0 0.0
  %1528 = vmatmul.mubr.f32.gmra.mrb[0].mxu0 %v1364
  %v1529 = vpop.f32.mrb[0].mxu0
  %v1530 = vadd.f32 0.0, %v1529
  %v1531 = vpop.f32.mrb[0].mxu0
  %1532 = vdwg.mxu0
  %v1534 = vsel %vm62, %v1462, 0
  %1536 = vmatprep.subr.mxu0 0.0
  %1537 = vmatpush1.msra.mxu0 %v54
  %1538 = vmatprep.subr.mxu0 0.0
  %1539 = vmatpush1.msra.mxu0 %v55
  %1540 = vmatprep.subr.mxu0 0.0
  %1541 = vmatpush1.msra.mxu0 %v56
  %1542 = vmatprep.subr.mxu0 0.0
  %1543 = vmatpush1.msra.mxu0 %v57
  %1544 = vmatprep.subr.mxu0 0.0
  %1545 = vmatpush1.msra.mxu0 0.0
  %1546 = vmatprep.subr.mxu0 0.0
  %1547 = vmatpush1.msra.mxu0 0.0
  %1548 = vmatprep.subr.mxu0 0.0
  %1549 = vmatpush1.msra.mxu0 0.0
  %1550 = vmatprep.subr.mxu0 0.0
  %1551 = vmatpush1.msra.mxu0 0.0
  %1552 = vmatprep.subr.mxu0 0.0
  %1553 = vmatpush1.msra.mxu0 0.0
  %1554 = vmatprep.subr.mxu0 0.0
  %1555 = vmatpush1.msra.mxu0 0.0
  %1556 = vmatprep.subr.mxu0 0.0
  %1557 = vmatpush1.msra.mxu0 0.0
  %1558 = vmatprep.subr.mxu0 0.0
  %1559 = vmatpush1.msra.mxu0 0.0
  %1560 = vmatprep.subr.mxu0 0.0
  %1561 = vmatpush1.msra.mxu0 0.0
  %1562 = vmatprep.subr.mxu0 0.0
  %1563 = vmatpush1.msra.mxu0 0.0
  %1564 = vmatprep.subr.mxu0 0.0
  %1565 = vmatpush1.msra.mxu0 0.0
  %1566 = vmatprep.subr.mxu0 0.0
  %1567 = vmatpush1.msra.mxu0 0.0
  %1568 = vmatprep.subr.mxu0 0.0
  %1569 = vmatpush1.msra.mxu0 0.0
  %1570 = vmatprep.subr.mxu0 0.0
  %1571 = vmatpush1.msra.mxu0 0.0
  %1572 = vmatprep.subr.mxu0 0.0
  %1573 = vmatpush1.msra.mxu0 0.0
  %1574 = vmatprep.subr.mxu0 0.0
  %1575 = vmatpush1.msra.mxu0 0.0
  %1576 = vmatprep.subr.mxu0 0.0
  %1577 = vmatpush1.msra.mxu0 0.0
  %1578 = vmatprep.subr.mxu0 0.0
  %1579 = vmatpush1.msra.mxu0 0.0
  %1580 = vmatprep.subr.mxu0 0.0
  %1581 = vmatpush1.msra.mxu0 0.0
  %1582 = vmatprep.subr.mxu0 0.0
  %1583 = vmatpush1.msra.mxu0 0.0
  %1584 = vmatprep.subr.mxu0 0.0
  %1585 = vmatpush1.msra.mxu0 0.0
  %1586 = vmatprep.subr.mxu0 0.0
  %1587 = vmatpush1.msra.mxu0 0.0
  %1588 = vmatprep.subr.mxu0 0.0
  %1589 = vmatpush1.msra.mxu0 0.0
  %1590 = vmatprep.subr.mxu0 0.0
  %1591 = vmatpush1.msra.mxu0 0.0
  %1592 = vmatprep.subr.mxu0 0.0
  %1593 = vmatpush1.msra.mxu0 0.0
  %1594 = vmatprep.subr.mxu0 0.0
  %1595 = vmatpush1.msra.mxu0 0.0
  %1596 = vmatprep.subr.mxu0 0.0
  %1597 = vmatpush1.msra.mxu0 0.0
  %1598 = vmatprep.subr.mxu0 0.0
  %1599 = vmatpush1.msra.mxu0 0.0
  %1600 = vmatprep.mubr.f32.mxu0 0.0
  %1601 = vmatmul.mubr.f32.gmra.mrb[0].mxu0 %v1534
  %v1602 = vpop.f32.mrb[0].mxu0
  %v1603 = vadd.f32 %v1530, %v1602
  %v1604 = vpop.f32.mrb[0].mxu0
  %1605 = vdwg.mxu0
  %v1606 = vadd.f32 %v1603, %v214
  %v1607 = vxor.u32 %v1606, 2147483648
  %v1608 = vmul.f32 %v1607, 1.442695
  %v1609 = vpow.pop %v1608
  %v1610 = vadd.f32 %v1609, 1.0
  %v1611 = vrcp.pop %v1610
  %v1612 = vmul.f32 1.0, %v1611
  %v1613 = vtanh.pop %v1606
  %v1614 = vmul.f32 %v1612, %v1279
  %1616 = vrot.lane.b32.xlu0 %v1613, 64
  %v1617 = vpop.permute.xlu0 %1616
  %v1619 = vmul.f32 %v1612, %v1617
  %1621 = vrot.lane.b32.xlu0 %v1619, 32
  %v1622 = vpop.permute.xlu0 %1621
  %v1624 = vadd.f32 %v1614, %v1622
  %v1625 = vtanh.pop %v1624
  %1627 = vrot.lane.b32.xlu0 %v1625, 64
  %v1628 = vpop.permute.xlu0 %1627
  %v1630 = vmul.f32 %v1612, %v1628
  %1632 = vrot.lane.b32.xlu0 %v1460, 32
  %v1633 = vpop.permute.xlu0 %1632
  %v1634 = vsel %vm62, %v1633, 0
  %1636 = vmatprep.subr.mxu0 0.0
  %1637 = vmatpush1.msra.mxu0 %v245
  %1638 = vmatprep.subr.mxu0 0.0
  %1639 = vmatpush1.msra.mxu0 %v246
  %1640 = vmatprep.subr.mxu0 0.0
  %1641 = vmatpush1.msra.mxu0 %v247
  %1642 = vmatprep.subr.mxu0 0.0
  %1643 = vmatpush1.msra.mxu0 %v248
  %1644 = vmatprep.subr.mxu0 0.0
  %1645 = vmatpush1.msra.mxu0 0.0
  %1646 = vmatprep.subr.mxu0 0.0
  %1647 = vmatpush1.msra.mxu0 0.0
  %1648 = vmatprep.subr.mxu0 0.0
  %1649 = vmatpush1.msra.mxu0 0.0
  %1650 = vmatprep.subr.mxu0 0.0
  %1651 = vmatpush1.msra.mxu0 0.0
  %1652 = vmatprep.subr.mxu0 0.0
  %1653 = vmatpush1.msra.mxu0 0.0
  %1654 = vmatprep.subr.mxu0 0.0
  %1655 = vmatpush1.msra.mxu0 0.0
  %1656 = vmatprep.subr.mxu0 0.0
  %1657 = vmatpush1.msra.mxu0 0.0
  %1658 = vmatprep.subr.mxu0 0.0
  %1659 = vmatpush1.msra.mxu0 0.0
  %1660 = vmatprep.subr.mxu0 0.0
  %1661 = vmatpush1.msra.mxu0 0.0
  %1662 = vmatprep.subr.mxu0 0.0
  %1663 = vmatpush1.msra.mxu0 0.0
  %1664 = vmatprep.subr.mxu0 0.0
  %1665 = vmatpush1.msra.mxu0 0.0
  %1666 = vmatprep.subr.mxu0 0.0
  %1667 = vmatpush1.msra.mxu0 0.0
  %1668 = vmatprep.subr.mxu0 0.0
  %1669 = vmatpush1.msra.mxu0 0.0
  %1670 = vmatprep.subr.mxu0 0.0
  %1671 = vmatpush1.msra.mxu0 0.0
  %1672 = vmatprep.subr.mxu0 0.0
  %1673 = vmatpush1.msra.mxu0 0.0
  %1674 = vmatprep.subr.mxu0 0.0
  %1675 = vmatpush1.msra.mxu0 0.0
  %1676 = vmatprep.subr.mxu0 0.0
  %1677 = vmatpush1.msra.mxu0 0.0
  %1678 = vmatprep.subr.mxu0 0.0
  %1679 = vmatpush1.msra.mxu0 0.0
  %1680 = vmatprep.subr.mxu0 0.0
  %1681 = vmatpush1.msra.mxu0 0.0
  %1682 = vmatprep.subr.mxu0 0.0
  %1683 = vmatpush1.msra.mxu0 0.0
  %1684 = vmatprep.subr.mxu0 0.0
  %1685 = vmatpush1.msra.mxu0 0.0
  %1686 = vmatprep.subr.mxu0 0.0
  %1687 = vmatpush1.msra.mxu0 0.0
  %1688 = vmatprep.subr.mxu0 0.0
  %1689 = vmatpush1.msra.mxu0 0.0
  %1690 = vmatprep.subr.mxu0 0.0
  %1691 = vmatpush1.msra.mxu0 0.0
  %1692 = vmatprep.subr.mxu0 0.0
  %1693 = vmatpush1.msra.mxu0 0.0
  %1694 = vmatprep.subr.mxu0 0.0
  %1695 = vmatpush1.msra.mxu0 0.0
  %1696 = vmatprep.subr.mxu0 0.0
  %1697 = vmatpush1.msra.mxu0 0.0
  %1698 = vmatprep.subr.mxu0 0.0
  %1699 = vmatpush1.msra.mxu0 0.0
  %1700 = vmatprep.mubr.f32.mxu0 0.0
  %1701 = vmatmul.mubr.f32.gmra.mrb[0].mxu0 %v1634
  %v1702 = vpop.f32.mrb[0].mxu0
  %v1703 = vadd.f32 0.0, %v1702
  %v1704 = vpop.f32.mrb[0].mxu0
  %1705 = vdwg.mxu0
  %1707 = vrot.lane.b32.xlu0 %v1630, 32
  %v1708 = vpop.permute.xlu0 %1707
  %v1709 = vsel %vm62, %v1708, 0
  %1711 = vmatprep.subr.mxu0 0.0
  %1712 = vmatpush1.msra.mxu0 %v241
  %1713 = vmatprep.subr.mxu0 0.0
  %1714 = vmatpush1.msra.mxu0 %v242
  %1715 = vmatprep.subr.mxu0 0.0
  %1716 = vmatpush1.msra.mxu0 %v243
  %1717 = vmatprep.subr.mxu0 0.0
  %1718 = vmatpush1.msra.mxu0 %v244
  %1719 = vmatprep.subr.mxu0 0.0
  %1720 = vmatpush1.msra.mxu0 0.0
  %1721 = vmatprep.subr.mxu0 0.0
  %1722 = vmatpush1.msra.mxu0 0.0
  %1723 = vmatprep.subr.mxu0 0.0
  %1724 = vmatpush1.msra.mxu0 0.0
  %1725 = vmatprep.subr.mxu0 0.0
  %1726 = vmatpush1.msra.mxu0 0.0
  %1727 = vmatprep.subr.mxu0 0.0
  %1728 = vmatpush1.msra.mxu0 0.0
  %1729 = vmatprep.subr.mxu0 0.0
  %1730 = vmatpush1.msra.mxu0 0.0
  %1731 = vmatprep.subr.mxu0 0.0
  %1732 = vmatpush1.msra.mxu0 0.0
  %1733 = vmatprep.subr.mxu0 0.0
  %1734 = vmatpush1.msra.mxu0 0.0
  %1735 = vmatprep.subr.mxu0 0.0
  %1736 = vmatpush1.msra.mxu0 0.0
  %1737 = vmatprep.subr.mxu0 0.0
  %1738 = vmatpush1.msra.mxu0 0.0
  %1739 = vmatprep.subr.mxu0 0.0
  %1740 = vmatpush1.msra.mxu0 0.0
  %1741 = vmatprep.subr.mxu0 0.0
  %1742 = vmatpush1.msra.mxu0 0.0
  %1743 = vmatprep.subr.mxu0 0.0
  %1744 = vmatpush1.msra.mxu0 0.0
  %1745 = vmatprep.subr.mxu0 0.0
  %1746 = vmatpush1.msra.mxu0 0.0
  %1747 = vmatprep.subr.mxu0 0.0
  %1748 = vmatpush1.msra.mxu0 0.0
  %1749 = vmatprep.subr.mxu0 0.0
  %1750 = vmatpush1.msra.mxu0 0.0
  %1751 = vmatprep.subr.mxu0 0.0
  %1752 = vmatpush1.msra.mxu0 0.0
  %1753 = vmatprep.subr.mxu0 0.0
  %1754 = vmatpush1.msra.mxu0 0.0
  %1755 = vmatprep.subr.mxu0 0.0
  %1756 = vmatpush1.msra.mxu0 0.0
  %1757 = vmatprep.subr.mxu0 0.0
  %1758 = vmatpush1.msra.mxu0 0.0
  %1759 = vmatprep.subr.mxu0 0.0
  %1760 = vmatpush1.msra.mxu0 0.0
  %1761 = vmatprep.subr.mxu0 0.0
  %1762 = vmatpush1.msra.mxu0 0.0
  %1763 = vmatprep.subr.mxu0 0.0
  %1764 = vmatpush1.msra.mxu0 0.0
  %1765 = vmatprep.subr.mxu0 0.0
  %1766 = vmatpush1.msra.mxu0 0.0
  %1767 = vmatprep.subr.mxu0 0.0
  %1768 = vmatpush1.msra.mxu0 0.0
  %1769 = vmatprep.subr.mxu0 0.0
  %1770 = vmatpush1.msra.mxu0 0.0
  %1771 = vmatprep.subr.mxu0 0.0
  %1772 = vmatpush1.msra.mxu0 0.0
  %1773 = vmatprep.subr.mxu0 0.0
  %1774 = vmatpush1.msra.mxu0 0.0
  %1775 = vmatprep.mubr.f32.mxu0 0.0
  %1776 = vmatmul.mubr.f32.gmra.mrb[0].mxu0 %v1709
  %v1777 = vpop.f32.mrb[0].mxu0
  %v1778 = vadd.f32 %v1703, %v1777
  %v1779 = vpop.f32.mrb[0].mxu0
  %1780 = vdwg.mxu0
  %v1781 = vadd.f32 %v1778, %v399
  %v1782 = vxor.u32 %v1781, 2147483648
  %v1783 = vmul.f32 %v1782, 1.442695
  %v1784 = vpow.pop %v1783
  %v1785 = vadd.f32 %v1784, 1.0
  %v1786 = vrcp.pop %v1785
  %v1787 = vmul.f32 1.0, %v1786
  %v1788 = vtanh.pop %v1781
  %v1789 = vmul.f32 %v1787, %v1454
  %1791 = vrot.lane.b32.xlu0 %v1788, 64
  %v1792 = vpop.permute.xlu0 %1791
  %v1794 = vmul.f32 %v1787, %v1792
  %1796 = vrot.lane.b32.xlu0 %v1794, 32
  %v1797 = vpop.permute.xlu0 %1796
  %v1799 = vadd.f32 %v1789, %v1797
  %v1800 = vtanh.pop %v1799
  %1802 = vrot.lane.b32.xlu0 %v1800, 64
  %v1803 = vpop.permute.xlu0 %1802
  %v1805 = vmul.f32 %v1787, %v1803
  %s1806 = scalar_lea.vmem %s0, 40
  %v1807 = vld [vmem:[%s1806] sm:$0xff]
  %1808 = vmatprep.subr.mxu0 0.0
  %1809 = vmatpush1.msra.mxu0 %v58
  %1810 = vmatprep.subr.mxu0 0.0
  %1811 = vmatpush1.msra.mxu0 %v59
  %1812 = vmatprep.subr.mxu0 0.0
  %1813 = vmatpush1.msra.mxu0 %v60
  %1814 = vmatprep.subr.mxu0 0.0
  %1815 = vmatpush1.msra.mxu0 %v61
  %1816 = vmatprep.subr.mxu0 0.0
  %1817 = vmatpush1.msra.mxu0 0.0
  %1818 = vmatprep.subr.mxu0 0.0
  %1819 = vmatpush1.msra.mxu0 0.0
  %1820 = vmatprep.subr.mxu0 0.0
  %1821 = vmatpush1.msra.mxu0 0.0
  %1822 = vmatprep.subr.mxu0 0.0
  %1823 = vmatpush1.msra.mxu0 0.0
  %1824 = vmatprep.subr.mxu0 0.0
  %1825 = vmatpush1.msra.mxu0 0.0
  %1826 = vmatprep.subr.mxu0 0.0
  %1827 = vmatpush1.msra.mxu0 0.0
  %1828 = vmatprep.subr.mxu0 0.0
  %1829 = vmatpush1.msra.mxu0 0.0
  %1830 = vmatprep.subr.mxu0 0.0
  %1831 = vmatpush1.msra.mxu0 0.0
  %1832 = vmatprep.subr.mxu0 0.0
  %1833 = vmatpush1.msra.mxu0 0.0
  %1834 = vmatprep.subr.mxu0 0.0
  %1835 = vmatpush1.msra.mxu0 0.0
  %1836 = vmatprep.subr.mxu0 0.0
  %1837 = vmatpush1.msra.mxu0 0.0
  %1838 = vmatprep.subr.mxu0 0.0
  %1839 = vmatpush1.msra.mxu0 0.0
  %1840 = vmatprep.subr.mxu0 0.0
  %1841 = vmatpush1.msra.mxu0 0.0
  %1842 = vmatprep.subr.mxu0 0.0
  %1843 = vmatpush1.msra.mxu0 0.0
  %1844 = vmatprep.subr.mxu0 0.0
  %1845 = vmatpush1.msra.mxu0 0.0
  %1846 = vmatprep.subr.mxu0 0.0
  %1847 = vmatpush1.msra.mxu0 0.0
  %1848 = vmatprep.subr.mxu0 0.0
  %1849 = vmatpush1.msra.mxu0 0.0
  %1850 = vmatprep.subr.mxu0 0.0
  %1851 = vmatpush1.msra.mxu0 0.0
  %1852 = vmatprep.subr.mxu0 0.0
  %1853 = vmatpush1.msra.mxu0 0.0
  %1854 = vmatprep.subr.mxu0 0.0
  %1855 = vmatpush1.msra.mxu0 0.0
  %1856 = vmatprep.subr.mxu0 0.0
  %1857 = vmatpush1.msra.mxu0 0.0
  %1858 = vmatprep.subr.mxu0 0.0
  %1859 = vmatpush1.msra.mxu0 0.0
  %1860 = vmatprep.subr.mxu0 0.0
  %1861 = vmatpush1.msra.mxu0 0.0
  %1862 = vmatprep.subr.mxu0 0.0
  %1863 = vmatpush1.msra.mxu0 0.0
  %1864 = vmatprep.subr.mxu0 0.0
  %1865 = vmatpush1.msra.mxu0 0.0
  %1866 = vmatprep.subr.mxu0 0.0
  %1867 = vmatpush1.msra.mxu0 0.0
  %1868 = vmatprep.subr.mxu0 0.0
  %1869 = vmatpush1.msra.mxu0 0.0
  %1870 = vmatprep.subr.mxu0 0.0
  %1871 = vmatpush1.msra.mxu0 0.0
  %1872 = vmatprep.mubr.f32.mxu0 0.0
  %1873 = vmatmul.mubr.f32.gmra.mrb[0].mxu0 %v1709
  %v1874 = vpop.f32.mrb[0].mxu0
  %v1875 = vadd.f32 0.0, %v1874
  %v1876 = vpop.f32.mrb[0].mxu0
  %1877 = vdwg.mxu0
  %v1879 = vsel %vm62, %v1807, 0
  %1881 = vmatprep.subr.mxu0 0.0
  %1882 = vmatpush1.msra.mxu0 %v54
  %1883 = vmatprep.subr.mxu0 0.0
  %1884 = vmatpush1.msra.mxu0 %v55
  %1885 = vmatprep.subr.mxu0 0.0
  %1886 = vmatpush1.msra.mxu0 %v56
  %1887 = vmatprep.subr.mxu0 0.0
  %1888 = vmatpush1.msra.mxu0 %v57
  %1889 = vmatprep.subr.mxu0 0.0
  %1890 = vmatpush1.msra.mxu0 0.0
  %1891 = vmatprep.subr.mxu0 0.0
  %1892 = vmatpush1.msra.mxu0 0.0
  %1893 = vmatprep.subr.mxu0 0.0
  %1894 = vmatpush1.msra.mxu0 0.0
  %1895 = vmatprep.subr.mxu0 0.0
  %1896 = vmatpush1.msra.mxu0 0.0
  %1897 = vmatprep.subr.mxu0 0.0
  %1898 = vmatpush1.msra.mxu0 0.0
  %1899 = vmatprep.subr.mxu0 0.0
  %1900 = vmatpush1.msra.mxu0 0.0
  %1901 = vmatprep.subr.mxu0 0.0
  %1902 = vmatpush1.msra.mxu0 0.0
  %1903 = vmatprep.subr.mxu0 0.0
  %1904 = vmatpush1.msra.mxu0 0.0
  %1905 = vmatprep.subr.mxu0 0.0
  %1906 = vmatpush1.msra.mxu0 0.0
  %1907 = vmatprep.subr.mxu0 0.0
  %1908 = vmatpush1.msra.mxu0 0.0
  %1909 = vmatprep.subr.mxu0 0.0
  %1910 = vmatpush1.msra.mxu0 0.0
  %1911 = vmatprep.subr.mxu0 0.0
  %1912 = vmatpush1.msra.mxu0 0.0
  %1913 = vmatprep.subr.mxu0 0.0
  %1914 = vmatpush1.msra.mxu0 0.0
  %1915 = vmatprep.subr.mxu0 0.0
  %1916 = vmatpush1.msra.mxu0 0.0
  %1917 = vmatprep.subr.mxu0 0.0
  %1918 = vmatpush1.msra.mxu0 0.0
  %1919 = vmatprep.subr.mxu0 0.0
  %1920 = vmatpush1.msra.mxu0 0.0
  %1921 = vmatprep.subr.mxu0 0.0
  %1922 = vmatpush1.msra.mxu0 0.0
  %1923 = vmatprep.subr.mxu0 0.0
  %1924 = vmatpush1.msra.mxu0 0.0
  %1925 = vmatprep.subr.mxu0 0.0
  %1926 = vmatpush1.msra.mxu0 0.0
  %1927 = vmatprep.subr.mxu0 0.0
  %1928 = vmatpush1.msra.mxu0 0.0
  %1929 = vmatprep.subr.mxu0 0.0
  %1930 = vmatpush1.msra.mxu0 0.0
  %1931 = vmatprep.subr.mxu0 0.0
  %1932 = vmatpush1.msra.mxu0 0.0
  %1933 = vmatprep.subr.mxu0 0.0
  %1934 = vmatpush1.msra.mxu0 0.0
  %1935 = vmatprep.subr.mxu0 0.0
  %1936 = vmatpush1.msra.mxu0 0.0
  %1937 = vmatprep.subr.mxu0 0.0
  %1938 = vmatpush1.msra.mxu0 0.0
  %1939 = vmatprep.subr.mxu0 0.0
  %1940 = vmatpush1.msra.mxu0 0.0
  %1941 = vmatprep.subr.mxu0 0.0
  %1942 = vmatpush1.msra.mxu0 0.0
  %1943 = vmatprep.subr.mxu0 0.0
  %1944 = vmatpush1.msra.mxu0 0.0
  %1945 = vmatprep.mubr.f32.mxu0 0.0
  %1946 = vmatmul.mubr.f32.gmra.mrb[0].mxu0 %v1879
  %v1947 = vpop.f32.mrb[0].mxu0
  %v1948 = vadd.f32 %v1875, %v1947
  %v1949 = vpop.f32.mrb[0].mxu0
  %1950 = vdwg.mxu0
  %v1951 = vadd.f32 %v1948, %v214
  %v1952 = vxor.u32 %v1951, 2147483648
  %v1953 = vmul.f32 %v1952, 1.442695
  %v1954 = vpow.pop %v1953
  %v1955 = vadd.f32 %v1954, 1.0
  %v1956 = vrcp.pop %v1955
  %v1957 = vmul.f32 1.0, %v1956
  %v1958 = vtanh.pop %v1951
  %v1959 = vmul.f32 %v1957, %v1624
  %1961 = vrot.lane.b32.xlu0 %v1958, 64
  %v1962 = vpop.permute.xlu0 %1961
  %v1964 = vmul.f32 %v1957, %v1962
  %1966 = vrot.lane.b32.xlu0 %v1964, 32
  %v1967 = vpop.permute.xlu0 %1966
  %v1969 = vadd.f32 %v1959, %v1967
  %v1970 = vtanh.pop %v1969
  %1972 = vrot.lane.b32.xlu0 %v1970, 64
  %v1973 = vpop.permute.xlu0 %1972
  %v1975 = vmul.f32 %v1957, %v1973
  %1977 = vrot.lane.b32.xlu0 %v1805, 32
  %v1978 = vpop.permute.xlu0 %1977
  %v1979 = vsel %vm62, %v1978, 0
  %1981 = vmatprep.subr.mxu0 0.0
  %1982 = vmatpush1.msra.mxu0 %v245
  %1983 = vmatprep.subr.mxu0 0.0
  %1984 = vmatpush1.msra.mxu0 %v246
  %1985 = vmatprep.subr.mxu0 0.0
  %1986 = vmatpush1.msra.mxu0 %v247
  %1987 = vmatprep.subr.mxu0 0.0
  %1988 = vmatpush1.msra.mxu0 %v248
  %1989 = vmatprep.subr.mxu0 0.0
  %1990 = vmatpush1.msra.mxu0 0.0
  %1991 = vmatprep.subr.mxu0 0.0
  %1992 = vmatpush1.msra.mxu0 0.0
  %1993 = vmatprep.subr.mxu0 0.0
  %1994 = vmatpush1.msra.mxu0 0.0
  %1995 = vmatprep.subr.mxu0 0.0
  %1996 = vmatpush1.msra.mxu0 0.0
  %1997 = vmatprep.subr.mxu0 0.0
  %1998 = vmatpush1.msra.mxu0 0.0
  %1999 = vmatprep.subr.mxu0 0.0
  %2000 = vmatpush1.msra.mxu0 0.0
  %2001 = vmatprep.subr.mxu0 0.0
  %2002 = vmatpush1.msra.mxu0 0.0
  %2003 = vmatprep.subr.mxu0 0.0
  %2004 = vmatpush1.msra.mxu0 0.0
  %2005 = vmatprep.subr.mxu0 0.0
  %2006 = vmatpush1.msra.mxu0 0.0
  %2007 = vmatprep.subr.mxu0 0.0
  %2008 = vmatpush1.msra.mxu0 0.0
  %2009 = vmatprep.subr.mxu0 0.0
  %2010 = vmatpush1.msra.mxu0 0.0
  %2011 = vmatprep.subr.mxu0 0.0
  %2012 = vmatpush1.msra.mxu0 0.0
  %2013 = vmatprep.subr.mxu0 0.0
  %2014 = vmatpush1.msra.mxu0 0.0
  %2015 = vmatprep.subr.mxu0 0.0
  %2016 = vmatpush1.msra.mxu0 0.0
  %2017 = vmatprep.subr.mxu0 0.0
  %2018 = vmatpush1.msra.mxu0 0.0
  %2019 = vmatprep.subr.mxu0 0.0
  %2020 = vmatpush1.msra.mxu0 0.0
  %2021 = vmatprep.subr.mxu0 0.0
  %2022 = vmatpush1.msra.mxu0 0.0
  %2023 = vmatprep.subr.mxu0 0.0
  %2024 = vmatpush1.msra.mxu0 0.0
  %2025 = vmatprep.subr.mxu0 0.0
  %2026 = vmatpush1.msra.mxu0 0.0
  %2027 = vmatprep.subr.mxu0 0.0
  %2028 = vmatpush1.msra.mxu0 0.0
  %2029 = vmatprep.subr.mxu0 0.0
  %2030 = vmatpush1.msra.mxu0 0.0
  %2031 = vmatprep.subr.mxu0 0.0
  %2032 = vmatpush1.msra.mxu0 0.0
  %2033 = vmatprep.subr.mxu0 0.0
  %2034 = vmatpush1.msra.mxu0 0.0
  %2035 = vmatprep.subr.mxu0 0.0
  %2036 = vmatpush1.msra.mxu0 0.0
  %2037 = vmatprep.subr.mxu0 0.0
  %2038 = vmatpush1.msra.mxu0 0.0
  %2039 = vmatprep.subr.mxu0 0.0
  %2040 = vmatpush1.msra.mxu0 0.0
  %2041 = vmatprep.subr.mxu0 0.0
  %2042 = vmatpush1.msra.mxu0 0.0
  %2043 = vmatprep.subr.mxu0 0.0
  %2044 = vmatpush1.msra.mxu0 0.0
  %2045 = vmatprep.mubr.f32.mxu0 0.0
  %2046 = vmatmul.mubr.f32.gmra.mrb[0].mxu0 %v1979
  %v2047 = vpop.f32.mrb[0].mxu0
  %v2048 = vadd.f32 0.0, %v2047
  %v2049 = vpop.f32.mrb[0].mxu0
  %2050 = vdwg.mxu0
  %2052 = vrot.lane.b32.xlu0 %v1975, 32
  %v2053 = vpop.permute.xlu0 %2052
  %v2054 = vsel %vm62, %v2053, 0
  %2056 = vmatprep.subr.mxu0 0.0
  %2057 = vmatpush1.msra.mxu0 %v241
  %2058 = vmatprep.subr.mxu0 0.0
  %2059 = vmatpush1.msra.mxu0 %v242
  %2060 = vmatprep.subr.mxu0 0.0
  %2061 = vmatpush1.msra.mxu0 %v243
  %2062 = vmatprep.subr.mxu0 0.0
  %2063 = vmatpush1.msra.mxu0 %v244
  %2064 = vmatprep.subr.mxu0 0.0
  %2065 = vmatpush1.msra.mxu0 0.0
  %2066 = vmatprep.subr.mxu0 0.0
  %2067 = vmatpush1.msra.mxu0 0.0
  %2068 = vmatprep.subr.mxu0 0.0
  %2069 = vmatpush1.msra.mxu0 0.0
  %2070 = vmatprep.subr.mxu0 0.0
  %2071 = vmatpush1.msra.mxu0 0.0
  %2072 = vmatprep.subr.mxu0 0.0
  %2073 = vmatpush1.msra.mxu0 0.0
  %2074 = vmatprep.subr.mxu0 0.0
  %2075 = vmatpush1.msra.mxu0 0.0
  %2076 = vmatprep.subr.mxu0 0.0
  %2077 = vmatpush1.msra.mxu0 0.0
  %2078 = vmatprep.subr.mxu0 0.0
  %2079 = vmatpush1.msra.mxu0 0.0
  %2080 = vmatprep.subr.mxu0 0.0
  %2081 = vmatpush1.msra.mxu0 0.0
  %2082 = vmatprep.subr.mxu0 0.0
  %2083 = vmatpush1.msra.mxu0 0.0
  %2084 = vmatprep.subr.mxu0 0.0
  %2085 = vmatpush1.msra.mxu0 0.0
  %2086 = vmatprep.subr.mxu0 0.0
  %2087 = vmatpush1.msra.mxu0 0.0
  %2088 = vmatprep.subr.mxu0 0.0
  %2089 = vmatpush1.msra.mxu0 0.0
  %2090 = vmatprep.subr.mxu0 0.0
  %2091 = vmatpush1.msra.mxu0 0.0
  %2092 = vmatprep.subr.mxu0 0.0
  %2093 = vmatpush1.msra.mxu0 0.0
  %2094 = vmatprep.subr.mxu0 0.0
  %2095 = vmatpush1.msra.mxu0 0.0
  %2096 = vmatprep.subr.mxu0 0.0
  %2097 = vmatpush1.msra.mxu0 0.0
  %2098 = vmatprep.subr.mxu0 0.0
  %2099 = vmatpush1.msra.mxu0 0.0
  %2100 = vmatprep.subr.mxu0 0.0
  %2101 = vmatpush1.msra.mxu0 0.0
  %2102 = vmatprep.subr.mxu0 0.0
  %2103 = vmatpush1.msra.mxu0 0.0
  %2104 = vmatprep.subr.mxu0 0.0
  %2105 = vmatpush1.msra.mxu0 0.0
  %2106 = vmatprep.subr.mxu0 0.0
  %2107 = vmatpush1.msra.mxu0 0.0
  %2108 = vmatprep.subr.mxu0 0.0
  %2109 = vmatpush1.msra.mxu0 0.0
  %2110 = vmatprep.subr.mxu0 0.0
  %2111 = vmatpush1.msra.mxu0 0.0
  %2112 = vmatprep.subr.mxu0 0.0
  %2113 = vmatpush1.msra.mxu0 0.0
  %2114 = vmatprep.subr.mxu0 0.0
  %2115 = vmatpush1.msra.mxu0 0.0
  %2116 = vmatprep.subr.mxu0 0.0
  %2117 = vmatpush1.msra.mxu0 0.0
  %2118 = vmatprep.subr.mxu0 0.0
  %2119 = vmatpush1.msra.mxu0 0.0
  %2120 = vmatprep.mubr.f32.mxu0 0.0
  %2121 = vmatmul.mubr.f32.gmra.mrb[0].mxu0 %v2054
  %v2122 = vpop.f32.mrb[0].mxu0
  %v2123 = vadd.f32 %v2048, %v2122
  %v2124 = vpop.f32.mrb[0].mxu0
  %2125 = vdwg.mxu0
  %v2126 = vadd.f32 %v2123, %v399
  %v2127 = vxor.u32 %v2126, 2147483648
  %v2128 = vmul.f32 %v2127, 1.442695
  %v2129 = vpow.pop %v2128
  %v2130 = vadd.f32 %v2129, 1.0
  %v2131 = vrcp.pop %v2130
  %v2132 = vmul.f32 1.0, %v2131
  %v2133 = vtanh.pop %v2126
  %v2134 = vmul.f32 %v2132, %v1799
  %2136 = vrot.lane.b32.xlu0 %v2133, 64
  %v2137 = vpop.permute.xlu0 %2136
  %v2139 = vmul.f32 %v2132, %v2137
  %2141 = vrot.lane.b32.xlu0 %v2139, 32
  %v2142 = vpop.permute.xlu0 %2141
  %v2144 = vadd.f32 %v2134, %v2142
  %v2145 = vtanh.pop %v2144
  %2147 = vrot.lane.b32.xlu0 %v2145, 64
  %v2148 = vpop.permute.xlu0 %2147
  %v2150 = vmul.f32 %v2132, %v2148
  %s2151 = scalar_lea.vmem %s0, 48
  %v2152 = vld [vmem:[%s2151] sm:$0xff]
  %2153 = vmatprep.subr.mxu0 0.0
  %2154 = vmatpush1.msra.mxu0 %v58
  %2155 = vmatprep.subr.mxu0 0.0
  %2156 = vmatpush1.msra.mxu0 %v59
  %2157 = vmatprep.subr.mxu0 0.0
  %2158 = vmatpush1.msra.mxu0 %v60
  %2159 = vmatprep.subr.mxu0 0.0
  %2160 = vmatpush1.msra.mxu0 %v61
  %2161 = vmatprep.subr.mxu0 0.0
  %2162 = vmatpush1.msra.mxu0 0.0
  %2163 = vmatprep.subr.mxu0 0.0
  %2164 = vmatpush1.msra.mxu0 0.0
  %2165 = vmatprep.subr.mxu0 0.0
  %2166 = vmatpush1.msra.mxu0 0.0
  %2167 = vmatprep.subr.mxu0 0.0
  %2168 = vmatpush1.msra.mxu0 0.0
  %2169 = vmatprep.subr.mxu0 0.0
  %2170 = vmatpush1.msra.mxu0 0.0
  %2171 = vmatprep.subr.mxu0 0.0
  %2172 = vmatpush1.msra.mxu0 0.0
  %2173 = vmatprep.subr.mxu0 0.0
  %2174 = vmatpush1.msra.mxu0 0.0
  %2175 = vmatprep.subr.mxu0 0.0
  %2176 = vmatpush1.msra.mxu0 0.0
  %2177 = vmatprep.subr.mxu0 0.0
  %2178 = vmatpush1.msra.mxu0 0.0
  %2179 = vmatprep.subr.mxu0 0.0
  %2180 = vmatpush1.msra.mxu0 0.0
  %2181 = vmatprep.subr.mxu0 0.0
  %2182 = vmatpush1.msra.mxu0 0.0
  %2183 = vmatprep.subr.mxu0 0.0
  %2184 = vmatpush1.msra.mxu0 0.0
  %2185 = vmatprep.subr.mxu0 0.0
  %2186 = vmatpush1.msra.mxu0 0.0
  %2187 = vmatprep.subr.mxu0 0.0
  %2188 = vmatpush1.msra.mxu0 0.0
  %2189 = vmatprep.subr.mxu0 0.0
  %2190 = vmatpush1.msra.mxu0 0.0
  %2191 = vmatprep.subr.mxu0 0.0
  %2192 = vmatpush1.msra.mxu0 0.0
  %2193 = vmatprep.subr.mxu0 0.0
  %2194 = vmatpush1.msra.mxu0 0.0
  %2195 = vmatprep.subr.mxu0 0.0
  %2196 = vmatpush1.msra.mxu0 0.0
  %2197 = vmatprep.subr.mxu0 0.0
  %2198 = vmatpush1.msra.mxu0 0.0
  %2199 = vmatprep.subr.mxu0 0.0
  %2200 = vmatpush1.msra.mxu0 0.0
  %2201 = vmatprep.subr.mxu0 0.0
  %2202 = vmatpush1.msra.mxu0 0.0
  %2203 = vmatprep.subr.mxu0 0.0
  %2204 = vmatpush1.msra.mxu0 0.0
  %2205 = vmatprep.subr.mxu0 0.0
  %2206 = vmatpush1.msra.mxu0 0.0
  %2207 = vmatprep.subr.mxu0 0.0
  %2208 = vmatpush1.msra.mxu0 0.0
  %2209 = vmatprep.subr.mxu0 0.0
  %2210 = vmatpush1.msra.mxu0 0.0
  %2211 = vmatprep.subr.mxu0 0.0
  %2212 = vmatpush1.msra.mxu0 0.0
  %2213 = vmatprep.subr.mxu0 0.0
  %2214 = vmatpush1.msra.mxu0 0.0
  %2215 = vmatprep.subr.mxu0 0.0
  %2216 = vmatpush1.msra.mxu0 0.0
  %2217 = vmatprep.mubr.f32.mxu0 0.0
  %2218 = vmatmul.mubr.f32.gmra.mrb[0].mxu0 %v2054
  %v2219 = vpop.f32.mrb[0].mxu0
  %v2220 = vadd.f32 0.0, %v2219
  %v2221 = vpop.f32.mrb[0].mxu0
  %2222 = vdwg.mxu0
  %v2224 = vsel %vm62, %v2152, 0
  %2226 = vmatprep.subr.mxu0 0.0
  %2227 = vmatpush1.msra.mxu0 %v54
  %2228 = vmatprep.subr.mxu0 0.0
  %2229 = vmatpush1.msra.mxu0 %v55
  %2230 = vmatprep.subr.mxu0 0.0
  %2231 = vmatpush1.msra.mxu0 %v56
  %2232 = vmatprep.subr.mxu0 0.0
  %2233 = vmatpush1.msra.mxu0 %v57
  %2234 = vmatprep.subr.mxu0 0.0
  %2235 = vmatpush1.msra.mxu0 0.0
  %2236 = vmatprep.subr.mxu0 0.0
  %2237 = vmatpush1.msra.mxu0 0.0
  %2238 = vmatprep.subr.mxu0 0.0
  %2239 = vmatpush1.msra.mxu0 0.0
  %2240 = vmatprep.subr.mxu0 0.0
  %2241 = vmatpush1.msra.mxu0 0.0
  %2242 = vmatprep.subr.mxu0 0.0
  %2243 = vmatpush1.msra.mxu0 0.0
  %2244 = vmatprep.subr.mxu0 0.0
  %2245 = vmatpush1.msra.mxu0 0.0
  %2246 = vmatprep.subr.mxu0 0.0
  %2247 = vmatpush1.msra.mxu0 0.0
  %2248 = vmatprep.subr.mxu0 0.0
  %2249 = vmatpush1.msra.mxu0 0.0
  %2250 = vmatprep.subr.mxu0 0.0
  %2251 = vmatpush1.msra.mxu0 0.0
  %2252 = vmatprep.subr.mxu0 0.0
  %2253 = vmatpush1.msra.mxu0 0.0
  %2254 = vmatprep.subr.mxu0 0.0
  %2255 = vmatpush1.msra.mxu0 0.0
  %2256 = vmatprep.subr.mxu0 0.0
  %2257 = vmatpush1.msra.mxu0 0.0
  %2258 = vmatprep.subr.mxu0 0.0
  %2259 = vmatpush1.msra.mxu0 0.0
  %2260 = vmatprep.subr.mxu0 0.0
  %2261 = vmatpush1.msra.mxu0 0.0
  %2262 = vmatprep.subr.mxu0 0.0
  %2263 = vmatpush1.msra.mxu0 0.0
  %2264 = vmatprep.subr.mxu0 0.0
  %2265 = vmatpush1.msra.mxu0 0.0
  %2266 = vmatprep.subr.mxu0 0.0
  %2267 = vmatpush1.msra.mxu0 0.0
  %2268 = vmatprep.subr.mxu0 0.0
  %2269 = vmatpush1.msra.mxu0 0.0
  %2270 = vmatprep.subr.mxu0 0.0
  %2271 = vmatpush1.msra.mxu0 0.0
  %2272 = vmatprep.subr.mxu0 0.0
  %2273 = vmatpush1.msra.mxu0 0.0
  %2274 = vmatprep.subr.mxu0 0.0
  %2275 = vmatpush1.msra.mxu0 0.0
  %2276 = vmatprep.subr.mxu0 0.0
  %2277 = vmatpush1.msra.mxu0 0.0
  %2278 = vmatprep.subr.mxu0 0.0
  %2279 = vmatpush1.msra.mxu0 0.0
  %2280 = vmatprep.subr.mxu0 0.0
  %2281 = vmatpush1.msra.mxu0 0.0
  %2282 = vmatprep.subr.mxu0 0.0
  %2283 = vmatpush1.msra.mxu0 0.0
  %2284 = vmatprep.subr.mxu0 0.0
  %2285 = vmatpush1.msra.mxu0 0.0
  %2286 = vmatprep.subr.mxu0 0.0
  %2287 = vmatpush1.msra.mxu0 0.0
  %2288 = vmatprep.subr.mxu0 0.0
  %2289 = vmatpush1.msra.mxu0 0.0
  %2290 = vmatprep.mubr.f32.mxu0 0.0
  %2291 = vmatmul.mubr.f32.gmra.mrb[0].mxu0 %v2224
  %v2292 = vpop.f32.mrb[0].mxu0
  %v2293 = vadd.f32 %v2220, %v2292
  %v2294 = vpop.f32.mrb[0].mxu0
  %2295 = vdwg.mxu0
  %v2296 = vadd.f32 %v2293, %v214
  %v2297 = vxor.u32 %v2296, 2147483648
  %v2298 = vmul.f32 %v2297, 1.442695
  %v2299 = vpow.pop %v2298
  %v2300 = vadd.f32 %v2299, 1.0
  %v2301 = vrcp.pop %v2300
  %v2302 = vmul.f32 1.0, %v2301
  %v2303 = vtanh.pop %v2296
  %v2304 = vmul.f32 %v2302, %v1969
  %2306 = vrot.lane.b32.xlu0 %v2303, 64
  %v2307 = vpop.permute.xlu0 %2306
  %v2309 = vmul.f32 %v2302, %v2307
  %2311 = vrot.lane.b32.xlu0 %v2309, 32
  %v2312 = vpop.permute.xlu0 %2311
  %v2314 = vadd.f32 %v2304, %v2312
  %v2315 = vtanh.pop %v2314
  %2317 = vrot.lane.b32.xlu0 %v2315, 64
  %v2318 = vpop.permute.xlu0 %2317
  %v2320 = vmul.f32 %v2302, %v2318
  %2322 = vrot.lane.b32.xlu0 %v2150, 32
  %v2323 = vpop.permute.xlu0 %2322
  %v2324 = vsel %vm62, %v2323, 0
  %2326 = vmatprep.subr.mxu0 0.0
  %2327 = vmatpush1.msra.mxu0 %v245
  %2328 = vmatprep.subr.mxu0 0.0
  %2329 = vmatpush1.msra.mxu0 %v246
  %2330 = vmatprep.subr.mxu0 0.0
  %2331 = vmatpush1.msra.mxu0 %v247
  %2332 = vmatprep.subr.mxu0 0.0
  %2333 = vmatpush1.msra.mxu0 %v248
  %2334 = vmatprep.subr.mxu0 0.0
  %2335 = vmatpush1.msra.mxu0 0.0
  %2336 = vmatprep.subr.mxu0 0.0
  %2337 = vmatpush1.msra.mxu0 0.0
  %2338 = vmatprep.subr.mxu0 0.0
  %2339 = vmatpush1.msra.mxu0 0.0
  %2340 = vmatprep.subr.mxu0 0.0
  %2341 = vmatpush1.msra.mxu0 0.0
  %2342 = vmatprep.subr.mxu0 0.0
  %2343 = vmatpush1.msra.mxu0 0.0
  %2344 = vmatprep.subr.mxu0 0.0
  %2345 = vmatpush1.msra.mxu0 0.0
  %2346 = vmatprep.subr.mxu0 0.0
  %2347 = vmatpush1.msra.mxu0 0.0
  %2348 = vmatprep.subr.mxu0 0.0
  %2349 = vmatpush1.msra.mxu0 0.0
  %2350 = vmatprep.subr.mxu0 0.0
  %2351 = vmatpush1.msra.mxu0 0.0
  %2352 = vmatprep.subr.mxu0 0.0
  %2353 = vmatpush1.msra.mxu0 0.0
  %2354 = vmatprep.subr.mxu0 0.0
  %2355 = vmatpush1.msra.mxu0 0.0
  %2356 = vmatprep.subr.mxu0 0.0
  %2357 = vmatpush1.msra.mxu0 0.0
  %2358 = vmatprep.subr.mxu0 0.0
  %2359 = vmatpush1.msra.mxu0 0.0
  %2360 = vmatprep.subr.mxu0 0.0
  %2361 = vmatpush1.msra.mxu0 0.0
  %2362 = vmatprep.subr.mxu0 0.0
  %2363 = vmatpush1.msra.mxu0 0.0
  %2364 = vmatprep.subr.mxu0 0.0
  %2365 = vmatpush1.msra.mxu0 0.0
  %2366 = vmatprep.subr.mxu0 0.0
  %2367 = vmatpush1.msra.mxu0 0.0
  %2368 = vmatprep.subr.mxu0 0.0
  %2369 = vmatpush1.msra.mxu0 0.0
  %2370 = vmatprep.subr.mxu0 0.0
  %2371 = vmatpush1.msra.mxu0 0.0
  %2372 = vmatprep.subr.mxu0 0.0
  %2373 = vmatpush1.msra.mxu0 0.0
  %2374 = vmatprep.subr.mxu0 0.0
  %2375 = vmatpush1.msra.mxu0 0.0
  %2376 = vmatprep.subr.mxu0 0.0
  %2377 = vmatpush1.msra.mxu0 0.0
  %2378 = vmatprep.subr.mxu0 0.0
  %2379 = vmatpush1.msra.mxu0 0.0
  %2380 = vmatprep.subr.mxu0 0.0
  %2381 = vmatpush1.msra.mxu0 0.0
  %2382 = vmatprep.subr.mxu0 0.0
  %2383 = vmatpush1.msra.mxu0 0.0
  %2384 = vmatprep.subr.mxu0 0.0
  %2385 = vmatpush1.msra.mxu0 0.0
  %2386 = vmatprep.subr.mxu0 0.0
  %2387 = vmatpush1.msra.mxu0 0.0
  %2388 = vmatprep.subr.mxu0 0.0
  %2389 = vmatpush1.msra.mxu0 0.0
  %2390 = vmatprep.mubr.f32.mxu0 0.0
  %2391 = vmatmul.mubr.f32.gmra.mrb[0].mxu0 %v2324
  %v2392 = vpop.f32.mrb[0].mxu0
  %v2393 = vadd.f32 0.0, %v2392
  %v2394 = vpop.f32.mrb[0].mxu0
  %2395 = vdwg.mxu0
  %2397 = vrot.lane.b32.xlu0 %v2320, 32
  %v2398 = vpop.permute.xlu0 %2397
  %v2399 = vsel %vm62, %v2398, 0
  %2401 = vmatprep.subr.mxu0 0.0
  %2402 = vmatpush1.msra.mxu0 %v241
  %2403 = vmatprep.subr.mxu0 0.0
  %2404 = vmatpush1.msra.mxu0 %v242
  %2405 = vmatprep.subr.mxu0 0.0
  %2406 = vmatpush1.msra.mxu0 %v243
  %2407 = vmatprep.subr.mxu0 0.0
  %2408 = vmatpush1.msra.mxu0 %v244
  %2409 = vmatprep.subr.mxu0 0.0
  %2410 = vmatpush1.msra.mxu0 0.0
  %2411 = vmatprep.subr.mxu0 0.0
  %2412 = vmatpush1.msra.mxu0 0.0
  %2413 = vmatprep.subr.mxu0 0.0
  %2414 = vmatpush1.msra.mxu0 0.0
  %2415 = vmatprep.subr.mxu0 0.0
  %2416 = vmatpush1.msra.mxu0 0.0
  %2417 = vmatprep.subr.mxu0 0.0
  %2418 = vmatpush1.msra.mxu0 0.0
  %2419 = vmatprep.subr.mxu0 0.0
  %2420 = vmatpush1.msra.mxu0 0.0
  %2421 = vmatprep.subr.mxu0 0.0
  %2422 = vmatpush1.msra.mxu0 0.0
  %2423 = vmatprep.subr.mxu0 0.0
  %2424 = vmatpush1.msra.mxu0 0.0
  %2425 = vmatprep.subr.mxu0 0.0
  %2426 = vmatpush1.msra.mxu0 0.0
  %2427 = vmatprep.subr.mxu0 0.0
  %2428 = vmatpush1.msra.mxu0 0.0
  %2429 = vmatprep.subr.mxu0 0.0
  %2430 = vmatpush1.msra.mxu0 0.0
  %2431 = vmatprep.subr.mxu0 0.0
  %2432 = vmatpush1.msra.mxu0 0.0
  %2433 = vmatprep.subr.mxu0 0.0
  %2434 = vmatpush1.msra.mxu0 0.0
  %2435 = vmatprep.subr.mxu0 0.0
  %2436 = vmatpush1.msra.mxu0 0.0
  %2437 = vmatprep.subr.mxu0 0.0
  %2438 = vmatpush1.msra.mxu0 0.0
  %2439 = vmatprep.subr.mxu0 0.0
  %2440 = vmatpush1.msra.mxu0 0.0
  %2441 = vmatprep.subr.mxu0 0.0
  %2442 = vmatpush1.msra.mxu0 0.0
  %2443 = vmatprep.subr.mxu0 0.0
  %2444 = vmatpush1.msra.mxu0 0.0
  %2445 = vmatprep.subr.mxu0 0.0
  %2446 = vmatpush1.msra.mxu0 0.0
  %2447 = vmatprep.subr.mxu0 0.0
  %2448 = vmatpush1.msra.mxu0 0.0
  %2449 = vmatprep.subr.mxu0 0.0
  %2450 = vmatpush1.msra.mxu0 0.0
  %2451 = vmatprep.subr.mxu0 0.0
  %2452 = vmatpush1.msra.mxu0 0.0
  %2453 = vmatprep.subr.mxu0 0.0
  %2454 = vmatpush1.msra.mxu0 0.0
  %2455 = vmatprep.subr.mxu0 0.0
  %2456 = vmatpush1.msra.mxu0 0.0
  %2457 = vmatprep.subr.mxu0 0.0
  %2458 = vmatpush1.msra.mxu0 0.0
  %2459 = vmatprep.subr.mxu0 0.0
  %2460 = vmatpush1.msra.mxu0 0.0
  %2461 = vmatprep.subr.mxu0 0.0
  %2462 = vmatpush1.msra.mxu0 0.0
  %2463 = vmatprep.subr.mxu0 0.0
  %2464 = vmatpush1.msra.mxu0 0.0
  %2465 = vmatprep.mubr.f32.mxu0 0.0
  %2466 = vmatmul.mubr.f32.gmra.mrb[0].mxu0 %v2399
  %v2467 = vpop.f32.mrb[0].mxu0
  %v2468 = vadd.f32 %v2393, %v2467
  %v2469 = vpop.f32.mrb[0].mxu0
  %2470 = vdwg.mxu0
  %v2471 = vadd.f32 %v2468, %v399
  %v2472 = vxor.u32 %v2471, 2147483648
  %v2473 = vmul.f32 %v2472, 1.442695
  %v2474 = vpow.pop %v2473
  %v2475 = vadd.f32 %v2474, 1.0
  %v2476 = vrcp.pop %v2475
  %v2477 = vmul.f32 1.0, %v2476
  %v2478 = vtanh.pop %v2471
  %v2479 = vmul.f32 %v2477, %v2144
  %2481 = vrot.lane.b32.xlu0 %v2478, 64
  %v2482 = vpop.permute.xlu0 %2481
  %v2484 = vmul.f32 %v2477, %v2482
  %2486 = vrot.lane.b32.xlu0 %v2484, 32
  %v2487 = vpop.permute.xlu0 %2486
  %v2489 = vadd.f32 %v2479, %v2487
  %v2490 = vtanh.pop %v2489
  %2492 = vrot.lane.b32.xlu0 %v2490, 64
  %v2493 = vpop.permute.xlu0 %2492
  %v2495 = vmul.f32 %v2477, %v2493
  %s2496 = scalar_lea.vmem %s0, 56
  %v2497 = vld [vmem:[%s2496] sm:$0xff]
  %2498 = vmatprep.subr.mxu0 0.0
  %2499 = vmatpush1.msra.mxu0 %v58
  %2500 = vmatprep.subr.mxu0 0.0
  %2501 = vmatpush1.msra.mxu0 %v59
  %2502 = vmatprep.subr.mxu0 0.0
  %2503 = vmatpush1.msra.mxu0 %v60
  %2504 = vmatprep.subr.mxu0 0.0
  %2505 = vmatpush1.msra.mxu0 %v61
  %2506 = vmatprep.subr.mxu0 0.0
  %2507 = vmatpush1.msra.mxu0 0.0
  %2508 = vmatprep.subr.mxu0 0.0
  %2509 = vmatpush1.msra.mxu0 0.0
  %2510 = vmatprep.subr.mxu0 0.0
  %2511 = vmatpush1.msra.mxu0 0.0
  %2512 = vmatprep.subr.mxu0 0.0
  %2513 = vmatpush1.msra.mxu0 0.0
  %2514 = vmatprep.subr.mxu0 0.0
  %2515 = vmatpush1.msra.mxu0 0.0
  %2516 = vmatprep.subr.mxu0 0.0
  %2517 = vmatpush1.msra.mxu0 0.0
  %2518 = vmatprep.subr.mxu0 0.0
  %2519 = vmatpush1.msra.mxu0 0.0
  %2520 = vmatprep.subr.mxu0 0.0
  %2521 = vmatpush1.msra.mxu0 0.0
  %2522 = vmatprep.subr.mxu0 0.0
  %2523 = vmatpush1.msra.mxu0 0.0
  %2524 = vmatprep.subr.mxu0 0.0
  %2525 = vmatpush1.msra.mxu0 0.0
  %2526 = vmatprep.subr.mxu0 0.0
  %2527 = vmatpush1.msra.mxu0 0.0
  %2528 = vmatprep.subr.mxu0 0.0
  %2529 = vmatpush1.msra.mxu0 0.0
  %2530 = vmatprep.subr.mxu0 0.0
  %2531 = vmatpush1.msra.mxu0 0.0
  %2532 = vmatprep.subr.mxu0 0.0
  %2533 = vmatpush1.msra.mxu0 0.0
  %2534 = vmatprep.subr.mxu0 0.0
  %2535 = vmatpush1.msra.mxu0 0.0
  %2536 = vmatprep.subr.mxu0 0.0
  %2537 = vmatpush1.msra.mxu0 0.0
  %2538 = vmatprep.subr.mxu0 0.0
  %2539 = vmatpush1.msra.mxu0 0.0
  %2540 = vmatprep.subr.mxu0 0.0
  %2541 = vmatpush1.msra.mxu0 0.0
  %2542 = vmatprep.subr.mxu0 0.0
  %2543 = vmatpush1.msra.mxu0 0.0
  %2544 = vmatprep.subr.mxu0 0.0
  %2545 = vmatpush1.msra.mxu0 0.0
  %2546 = vmatprep.subr.mxu0 0.0
  %2547 = vmatpush1.msra.mxu0 0.0
  %2548 = vmatprep.subr.mxu0 0.0
  %2549 = vmatpush1.msra.mxu0 0.0
  %2550 = vmatprep.subr.mxu0 0.0
  %2551 = vmatpush1.msra.mxu0 0.0
  %2552 = vmatprep.subr.mxu0 0.0
  %2553 = vmatpush1.msra.mxu0 0.0
  %2554 = vmatprep.subr.mxu0 0.0
  %2555 = vmatpush1.msra.mxu0 0.0
  %2556 = vmatprep.subr.mxu0 0.0
  %2557 = vmatpush1.msra.mxu0 0.0
  %2558 = vmatprep.subr.mxu0 0.0
  %2559 = vmatpush1.msra.mxu0 0.0
  %2560 = vmatprep.subr.mxu0 0.0
  %2561 = vmatpush1.msra.mxu0 0.0
  %2562 = vmatprep.mubr.f32.mxu0 0.0
  %2563 = vmatmul.mubr.f32.gmra.mrb[0].mxu0 %v2399
  %v2564 = vpop.f32.mrb[0].mxu0
  %v2565 = vadd.f32 0.0, %v2564
  %v2566 = vpop.f32.mrb[0].mxu0
  %2567 = vdwg.mxu0
  %v2569 = vsel %vm62, %v2497, 0
  %2571 = vmatprep.subr.mxu0 0.0
  %2572 = vmatpush1.msra.mxu0 %v54
  %2573 = vmatprep.subr.mxu0 0.0
  %2574 = vmatpush1.msra.mxu0 %v55
  %2575 = vmatprep.subr.mxu0 0.0
  %2576 = vmatpush1.msra.mxu0 %v56
  %2577 = vmatprep.subr.mxu0 0.0
  %2578 = vmatpush1.msra.mxu0 %v57
  %2579 = vmatprep.subr.mxu0 0.0
  %2580 = vmatpush1.msra.mxu0 0.0
  %2581 = vmatprep.subr.mxu0 0.0
  %2582 = vmatpush1.msra.mxu0 0.0
  %2583 = vmatprep.subr.mxu0 0.0
  %2584 = vmatpush1.msra.mxu0 0.0
  %2585 = vmatprep.subr.mxu0 0.0
  %2586 = vmatpush1.msra.mxu0 0.0
  %2587 = vmatprep.subr.mxu0 0.0
  %2588 = vmatpush1.msra.mxu0 0.0
  %2589 = vmatprep.subr.mxu0 0.0
  %2590 = vmatpush1.msra.mxu0 0.0
  %2591 = vmatprep.subr.mxu0 0.0
  %2592 = vmatpush1.msra.mxu0 0.0
  %2593 = vmatprep.subr.mxu0 0.0
  %2594 = vmatpush1.msra.mxu0 0.0
  %2595 = vmatprep.subr.mxu0 0.0
  %2596 = vmatpush1.msra.mxu0 0.0
  %2597 = vmatprep.subr.mxu0 0.0
  %2598 = vmatpush1.msra.mxu0 0.0
  %2599 = vmatprep.subr.mxu0 0.0
  %2600 = vmatpush1.msra.mxu0 0.0
  %2601 = vmatprep.subr.mxu0 0.0
  %2602 = vmatpush1.msra.mxu0 0.0
  %2603 = vmatprep.subr.mxu0 0.0
  %2604 = vmatpush1.msra.mxu0 0.0
  %2605 = vmatprep.subr.mxu0 0.0
  %2606 = vmatpush1.msra.mxu0 0.0
  %2607 = vmatprep.subr.mxu0 0.0
  %2608 = vmatpush1.msra.mxu0 0.0
  %2609 = vmatprep.subr.mxu0 0.0
  %2610 = vmatpush1.msra.mxu0 0.0
  %2611 = vmatprep.subr.mxu0 0.0
  %2612 = vmatpush1.msra.mxu0 0.0
  %2613 = vmatprep.subr.mxu0 0.0
  %2614 = vmatpush1.msra.mxu0 0.0
  %2615 = vmatprep.subr.mxu0 0.0
  %2616 = vmatpush1.msra.mxu0 0.0
  %2617 = vmatprep.subr.mxu0 0.0
  %2618 = vmatpush1.msra.mxu0 0.0
  %2619 = vmatprep.subr.mxu0 0.0
  %2620 = vmatpush1.msra.mxu0 0.0
  %2621 = vmatprep.subr.mxu0 0.0
  %2622 = vmatpush1.msra.mxu0 0.0
  %2623 = vmatprep.subr.mxu0 0.0
  %2624 = vmatpush1.msra.mxu0 0.0
  %2625 = vmatprep.subr.mxu0 0.0
  %2626 = vmatpush1.msra.mxu0 0.0
  %2627 = vmatprep.subr.mxu0 0.0
  %2628 = vmatpush1.msra.mxu0 0.0
  %2629 = vmatprep.subr.mxu0 0.0
  %2630 = vmatpush1.msra.mxu0 0.0
  %2631 = vmatprep.subr.mxu0 0.0
  %2632 = vmatpush1.msra.mxu0 0.0
  %2633 = vmatprep.subr.mxu0 0.0
  %2634 = vmatpush1.msra.mxu0 0.0
  %2635 = vmatprep.mubr.f32.mxu0 0.0
  %2636 = vmatmul.mubr.f32.gmra.mrb[0].mxu0 %v2569
  %v2637 = vpop.f32.mrb[0].mxu0
  %v2638 = vadd.f32 %v2565, %v2637
  %v2639 = vpop.f32.mrb[0].mxu0
  %2640 = vdwg.mxu0
  %v2641 = vadd.f32 %v2638, %v214
  %v2642 = vxor.u32 %v2641, 2147483648
  %v2643 = vmul.f32 %v2642, 1.442695
  %v2644 = vpow.pop %v2643
  %v2645 = vadd.f32 %v2644, 1.0
  %v2646 = vrcp.pop %v2645
  %v2647 = vmul.f32 1.0, %v2646
  %v2648 = vtanh.pop %v2641
  %v2649 = vmul.f32 %v2647, %v2314
  %2651 = vrot.lane.b32.xlu0 %v2648, 64
  %v2652 = vpop.permute.xlu0 %2651
  %v2654 = vmul.f32 %v2647, %v2652
  %2656 = vrot.lane.b32.xlu0 %v2654, 32
  %v2657 = vpop.permute.xlu0 %2656
  %v2659 = vadd.f32 %v2649, %v2657
  %v2660 = vtanh.pop %v2659
  %2662 = vrot.lane.b32.xlu0 %v2660, 64
  %v2663 = vpop.permute.xlu0 %2662
  %v2665 = vmul.f32 %v2647, %v2663
  %2667 = vrot.lane.b32.xlu0 %v2495, 32
  %v2668 = vpop.permute.xlu0 %2667
  %v2669 = vsel %vm62, %v2668, 0
  %2671 = vmatprep.subr.mxu0 0.0
  %2672 = vmatpush1.msra.mxu0 %v245
  %2673 = vmatprep.subr.mxu0 0.0
  %2674 = vmatpush1.msra.mxu0 %v246
  %2675 = vmatprep.subr.mxu0 0.0
  %2676 = vmatpush1.msra.mxu0 %v247
  %2677 = vmatprep.subr.mxu0 0.0
  %2678 = vmatpush1.msra.mxu0 %v248
  %2679 = vmatprep.subr.mxu0 0.0
  %2680 = vmatpush1.msra.mxu0 0.0
  %2681 = vmatprep.subr.mxu0 0.0
  %2682 = vmatpush1.msra.mxu0 0.0
  %2683 = vmatprep.subr.mxu0 0.0
  %2684 = vmatpush1.msra.mxu0 0.0
  %2685 = vmatprep.subr.mxu0 0.0
  %2686 = vmatpush1.msra.mxu0 0.0
  %2687 = vmatprep.subr.mxu0 0.0
  %2688 = vmatpush1.msra.mxu0 0.0
  %2689 = vmatprep.subr.mxu0 0.0
  %2690 = vmatpush1.msra.mxu0 0.0
  %2691 = vmatprep.subr.mxu0 0.0
  %2692 = vmatpush1.msra.mxu0 0.0
  %2693 = vmatprep.subr.mxu0 0.0
  %2694 = vmatpush1.msra.mxu0 0.0
  %2695 = vmatprep.subr.mxu0 0.0
  %2696 = vmatpush1.msra.mxu0 0.0
  %2697 = vmatprep.subr.mxu0 0.0
  %2698 = vmatpush1.msra.mxu0 0.0
  %2699 = vmatprep.subr.mxu0 0.0
  %2700 = vmatpush1.msra.mxu0 0.0
  %2701 = vmatprep.subr.mxu0 0.0
  %2702 = vmatpush1.msra.mxu0 0.0
  %2703 = vmatprep.subr.mxu0 0.0
  %2704 = vmatpush1.msra.mxu0 0.0
  %2705 = vmatprep.subr.mxu0 0.0
  %2706 = vmatpush1.msra.mxu0 0.0
  %2707 = vmatprep.subr.mxu0 0.0
  %2708 = vmatpush1.msra.mxu0 0.0
  %2709 = vmatprep.subr.mxu0 0.0
  %2710 = vmatpush1.msra.mxu0 0.0
  %2711 = vmatprep.subr.mxu0 0.0
  %2712 = vmatpush1.msra.mxu0 0.0
  %2713 = vmatprep.subr.mxu0 0.0
  %2714 = vmatpush1.msra.mxu0 0.0
  %2715 = vmatprep.subr.mxu0 0.0
  %2716 = vmatpush1.msra.mxu0 0.0
  %2717 = vmatprep.subr.mxu0 0.0
  %2718 = vmatpush1.msra.mxu0 0.0
  %2719 = vmatprep.subr.mxu0 0.0
  %2720 = vmatpush1.msra.mxu0 0.0
  %2721 = vmatprep.subr.mxu0 0.0
  %2722 = vmatpush1.msra.mxu0 0.0
  %2723 = vmatprep.subr.mxu0 0.0
  %2724 = vmatpush1.msra.mxu0 0.0
  %2725 = vmatprep.subr.mxu0 0.0
  %2726 = vmatpush1.msra.mxu0 0.0
  %2727 = vmatprep.subr.mxu0 0.0
  %2728 = vmatpush1.msra.mxu0 0.0
  %2729 = vmatprep.subr.mxu0 0.0
  %2730 = vmatpush1.msra.mxu0 0.0
  %2731 = vmatprep.subr.mxu0 0.0
  %2732 = vmatpush1.msra.mxu0 0.0
  %2733 = vmatprep.subr.mxu0 0.0
  %2734 = vmatpush1.msra.mxu0 0.0
  %2735 = vmatprep.mubr.f32.mxu0 0.0
  %2736 = vmatmul.mubr.f32.gmra.mrb[0].mxu0 %v2669
  %v2737 = vpop.f32.mrb[0].mxu0
  %v2738 = vadd.f32 0.0, %v2737
  %v2739 = vpop.f32.mrb[0].mxu0
  %2740 = vdwg.mxu0
  %2742 = vrot.lane.b32.xlu0 %v2665, 32
  %v2743 = vpop.permute.xlu0 %2742
  %v2744 = vsel %vm62, %v2743, 0
  %2746 = vmatprep.subr.mxu0 0.0
  %2747 = vmatpush1.msra.mxu0 %v241
  %2748 = vmatprep.subr.mxu0 0.0
  %2749 = vmatpush1.msra.mxu0 %v242
  %2750 = vmatprep.subr.mxu0 0.0
  %2751 = vmatpush1.msra.mxu0 %v243
  %2752 = vmatprep.subr.mxu0 0.0
  %2753 = vmatpush1.msra.mxu0 %v244
  %2754 = vmatprep.subr.mxu0 0.0
  %2755 = vmatpush1.msra.mxu0 0.0
  %2756 = vmatprep.subr.mxu0 0.0
  %2757 = vmatpush1.msra.mxu0 0.0
  %2758 = vmatprep.subr.mxu0 0.0
  %2759 = vmatpush1.msra.mxu0 0.0
  %2760 = vmatprep.subr.mxu0 0.0
  %2761 = vmatpush1.msra.mxu0 0.0
  %2762 = vmatprep.subr.mxu0 0.0
  %2763 = vmatpush1.msra.mxu0 0.0
  %2764 = vmatprep.subr.mxu0 0.0
  %2765 = vmatpush1.msra.mxu0 0.0
  %2766 = vmatprep.subr.mxu0 0.0
  %2767 = vmatpush1.msra.mxu0 0.0
  %2768 = vmatprep.subr.mxu0 0.0
  %2769 = vmatpush1.msra.mxu0 0.0
  %2770 = vmatprep.subr.mxu0 0.0
  %2771 = vmatpush1.msra.mxu0 0.0
  %2772 = vmatprep.subr.mxu0 0.0
  %2773 = vmatpush1.msra.mxu0 0.0
  %2774 = vmatprep.subr.mxu0 0.0
  %2775 = vmatpush1.msra.mxu0 0.0
  %2776 = vmatprep.subr.mxu0 0.0
  %2777 = vmatpush1.msra.mxu0 0.0
  %2778 = vmatprep.subr.mxu0 0.0
  %2779 = vmatpush1.msra.mxu0 0.0
  %2780 = vmatprep.subr.mxu0 0.0
  %2781 = vmatpush1.msra.mxu0 0.0
  %2782 = vmatprep.subr.mxu0 0.0
  %2783 = vmatpush1.msra.mxu0 0.0
  %2784 = vmatprep.subr.mxu0 0.0
  %2785 = vmatpush1.msra.mxu0 0.0
  %2786 = vmatprep.subr.mxu0 0.0
  %2787 = vmatpush1.msra.mxu0 0.0
  %2788 = vmatprep.subr.mxu0 0.0
  %2789 = vmatpush1.msra.mxu0 0.0
  %2790 = vmatprep.subr.mxu0 0.0
  %2791 = vmatpush1.msra.mxu0 0.0
  %2792 = vmatprep.subr.mxu0 0.0
  %2793 = vmatpush1.msra.mxu0 0.0
  %2794 = vmatprep.subr.mxu0 0.0
  %2795 = vmatpush1.msra.mxu0 0.0
  %2796 = vmatprep.subr.mxu0 0.0
  %2797 = vmatpush1.msra.mxu0 0.0
  %2798 = vmatprep.subr.mxu0 0.0
  %2799 = vmatpush1.msra.mxu0 0.0
  %2800 = vmatprep.subr.mxu0 0.0
  %2801 = vmatpush1.msra.mxu0 0.0
  %2802 = vmatprep.subr.mxu0 0.0
  %2803 = vmatpush1.msra.mxu0 0.0
  %2804 = vmatprep.subr.mxu0 0.0
  %2805 = vmatpush1.msra.mxu0 0.0
  %2806 = vmatprep.subr.mxu0 0.0
  %2807 = vmatpush1.msra.mxu0 0.0
  %2808 = vmatprep.subr.mxu0 0.0
  %2809 = vmatpush1.msra.mxu0 0.0
  %2810 = vmatprep.mubr.f32.mxu0 0.0
  %2811 = vmatmul.mubr.f32.gmra.mrb[0].mxu0 %v2744
  %v2812 = vpop.f32.mrb[0].mxu0
  %v2813 = vadd.f32 %v2738, %v2812
  %v2814 = vpop.f32.mrb[0].mxu0
  %2815 = vdwg.mxu0
  %v2816 = vadd.f32 %v2813, %v399
  %v2817 = vxor.u32 %v2816, 2147483648
  %v2818 = vmul.f32 %v2817, 1.442695
  %v2819 = vpow.pop %v2818
  %v2820 = vadd.f32 %v2819, 1.0
  %v2821 = vrcp.pop %v2820
  %v2822 = vmul.f32 1.0, %v2821
  %v2823 = vtanh.pop %v2816
  %v2824 = vmul.f32 %v2822, %v2489
  %2826 = vrot.lane.b32.xlu0 %v2823, 64
  %v2827 = vpop.permute.xlu0 %2826
  %v2829 = vmul.f32 %v2822, %v2827
  %2831 = vrot.lane.b32.xlu0 %v2829, 32
  %v2832 = vpop.permute.xlu0 %2831
  %v2834 = vadd.f32 %v2824, %v2832
  %v2835 = vtanh.pop %v2834
  %2837 = vrot.lane.b32.xlu0 %v2835, 64
  %v2838 = vpop.permute.xlu0 %2837
  %v2840 = vmul.f32 %v2822, %v2838
  %v2841 = vld [vmem:[%s1] sm:$0xff]
  %v2842 = vld [vmem:[%s8] sm:$0xff]
  %v2843 = vld [vmem:[%s8 + $0x8] sm:$0xff]
  %v2844 = vld [vmem:[%s8 + $0x10] sm:$0xff]
  %v2845 = vld [vmem:[%s8 + $0x18] sm:$0xff]
  %v2846 = vld [vmem:[%s8 + $0x20] sm:$0xff]
  %v2847 = vld [vmem:[%s8 + $0x28] sm:$0xff]
  %v2848 = vld [vmem:[%s8 + $0x30] sm:$0xff]
  %v2849 = vld [vmem:[%s8 + $0x38] sm:$0xff]
  %v2850 = vld [vmem:[%s9] sm:$0xff]
  %v2851 = vld [vmem:[%s9 + $0x8] sm:$0xff]
  %v2852 = vld [vmem:[%s9 + $0x10] sm:$0xff]
  %v2853 = vld [vmem:[%s9 + $0x18] sm:$0xff]
  %v2854 = vld [vmem:[%s9 + $0x20] sm:$0xff]
  %v2855 = vld [vmem:[%s9 + $0x28] sm:$0xff]
  %v2856 = vld [vmem:[%s9 + $0x30] sm:$0xff]
  %v2857 = vld [vmem:[%s9 + $0x38] sm:$0xff]
  %v2858 = vld [vmem:[%s9 + $0x40] sm:$0xff]
  %v2859 = vld [vmem:[%s9 + $0x48] sm:$0xff]
  %v2860 = vld [vmem:[%s9 + $0x50] sm:$0xff]
  %v2861 = vld [vmem:[%s9 + $0x58] sm:$0xff]
  %v2862 = vld [vmem:[%s9 + $0x60] sm:$0xff]
  %v2863 = vld [vmem:[%s9 + $0x68] sm:$0xff]
  %v2864 = vld [vmem:[%s9 + $0x70] sm:$0xff]
  %v2865 = vld [vmem:[%s9 + $0x78] sm:$0xff]
  %vm2866 = vcmask 523264
  %v2867 = vsel %vm2866, 0.0, 0
  %2869 = vmatprep.subr.mxu0 %v2851
  %2870 = vmatpush1.msra.mxu0 %v2850
  %2871 = vmatprep.subr.mxu0 %v2853
  %2872 = vmatpush1.msra.mxu0 %v2852
  %2873 = vmatprep.subr.mxu0 %v2855
  %2874 = vmatpush1.msra.mxu0 %v2854
  %2875 = vmatprep.subr.mxu0 %v2857
  %2876 = vmatpush1.msra.mxu0 %v2856
  %2877 = vmatprep.subr.mxu0 %v2859
  %2878 = vmatpush1.msra.mxu0 %v2858
  %2879 = vmatprep.subr.mxu0 %v2861
  %2880 = vmatpush1.msra.mxu0 %v2860
  %2881 = vmatprep.subr.mxu0 %v2863
  %2882 = vmatpush1.msra.mxu0 %v2862
  %2883 = vmatprep.subr.mxu0 %v2865
  %2884 = vmatpush1.msra.mxu0 %v2864
  %2885 = vmatprep.subr.mxu0 0.0
  %2886 = vmatpush1.msra.mxu0 0.0
  %2887 = vmatprep.subr.mxu0 0.0
  %2888 = vmatpush1.msra.mxu0 0.0
  %2889 = vmatprep.subr.mxu0 0.0
  %2890 = vmatpush1.msra.mxu0 0.0
  %2891 = vmatprep.subr.mxu0 0.0
  %2892 = vmatpush1.msra.mxu0 0.0
  %2893 = vmatprep.subr.mxu0 0.0
  %2894 = vmatpush1.msra.mxu0 0.0
  %2895 = vmatprep.subr.mxu0 0.0
  %2896 = vmatpush1.msra.mxu0 0.0
  %2897 = vmatprep.subr.mxu0 0.0
  %2898 = vmatpush1.msra.mxu0 0.0
  %2899 = vmatprep.subr.mxu0 0.0
  %2900 = vmatpush1.msra.mxu0 0.0
  %2901 = vmatprep.subr.mxu0 0.0
  %2902 = vmatpush1.msra.mxu0 0.0
  %2903 = vmatprep.subr.mxu0 0.0
  %2904 = vmatpush1.msra.mxu0 0.0
  %2905 = vmatprep.subr.mxu0 0.0
  %2906 = vmatpush1.msra.mxu0 0.0
  %2907 = vmatprep.subr.mxu0 0.0
  %2908 = vmatpush1.msra.mxu0 0.0
  %2909 = vmatprep.subr.mxu0 0.0
  %2910 = vmatpush1.msra.mxu0 0.0
  %2911 = vmatprep.subr.mxu0 0.0
  %2912 = vmatpush1.msra.mxu0 0.0
  %2913 = vmatprep.subr.mxu0 0.0
  %2914 = vmatpush1.msra.mxu0 0.0
  %2915 = vmatprep.subr.mxu0 0.0
  %2916 = vmatpush1.msra.mxu0 0.0
  %2917 = vmatprep.subr.mxu0 0.0
  %2918 = vmatpush1.msra.mxu0 0.0
  %2919 = vmatprep.subr.mxu0 0.0
  %2920 = vmatpush1.msra.mxu0 0.0
  %2921 = vmatprep.subr.mxu0 0.0
  %2922 = vmatpush1.msra.mxu0 0.0
  %2923 = vmatprep.subr.mxu0 0.0
  %2924 = vmatpush1.msra.mxu0 0.0
  %2925 = vmatprep.subr.mxu0 0.0
  %2926 = vmatpush1.msra.mxu0 0.0
  %2927 = vmatprep.subr.mxu0 0.0
  %2928 = vmatpush1.msra.mxu0 0.0
  %2929 = vmatprep.subr.mxu0 0.0
  %2930 = vmatpush1.msra.mxu0 0.0
  %2931 = vmatprep.subr.mxu0 0.0
  %2932 = vmatpush1.msra.mxu0 0.0
  %2933 = vmatprep.mubr.f32.mxu0 0.0
  %2934 = vmatmul.mubr.f32.gmra.mrb[0].mxu0 %v2867
  %v2935 = vpop.f32.mrb[0].mxu0
  %v2936 = vadd.f32 0.0, %v2935
  %v2937 = vpop.f32.mrb[0].mxu0
  %v2938 = vadd.f32 0.0, %v2937
  %2939 = vdwg.mxu0
  %v2941 = vsel %vm62, %v2841, 0
  %2943 = vmatprep.subr.mxu0 %v2843
  %2944 = vmatpush1.msra.mxu0 %v2842
  %2945 = vmatprep.subr.mxu0 %v2845
  %2946 = vmatpush1.msra.mxu0 %v2844
  %2947 = vmatprep.subr.mxu0 %v2847
  %2948 = vmatpush1.msra.mxu0 %v2846
  %2949 = vmatprep.subr.mxu0 %v2849
  %2950 = vmatpush1.msra.mxu0 %v2848
  %2951 = vmatprep.subr.mxu0 0.0
  %2952 = vmatpush1.msra.mxu0 0.0
  %2953 = vmatprep.subr.mxu0 0.0
  %2954 = vmatpush1.msra.mxu0 0.0
  %2955 = vmatprep.subr.mxu0 0.0
  %2956 = vmatpush1.msra.mxu0 0.0
  %2957 = vmatprep.subr.mxu0 0.0
  %2958 = vmatpush1.msra.mxu0 0.0
  %2959 = vmatprep.subr.mxu0 0.0
  %2960 = vmatpush1.msra.mxu0 0.0
  %2961 = vmatprep.subr.mxu0 0.0
  %2962 = vmatpush1.msra.mxu0 0.0
  %2963 = vmatprep.subr.mxu0 0.0
  %2964 = vmatpush1.msra.mxu0 0.0
  %2965 = vmatprep.subr.mxu0 0.0
  %2966 = vmatpush1.msra.mxu0 0.0
  %2967 = vmatprep.subr.mxu0 0.0
  %2968 = vmatpush1.msra.mxu0 0.0
  %2969 = vmatprep.subr.mxu0 0.0
  %2970 = vmatpush1.msra.mxu0 0.0
  %2971 = vmatprep.subr.mxu0 0.0
  %2972 = vmatpush1.msra.mxu0 0.0
  %2973 = vmatprep.subr.mxu0 0.0
  %2974 = vmatpush1.msra.mxu0 0.0
  %2975 = vmatprep.subr.mxu0 0.0
  %2976 = vmatpush1.msra.mxu0 0.0
  %2977 = vmatprep.subr.mxu0 0.0
  %2978 = vmatpush1.msra.mxu0 0.0
  %2979 = vmatprep.subr.mxu0 0.0
  %2980 = vmatpush1.msra.mxu0 0.0
  %2981 = vmatprep.subr.mxu0 0.0
  %2982 = vmatpush1.msra.mxu0 0.0
  %2983 = vmatprep.subr.mxu0 0.0
  %2984 = vmatpush1.msra.mxu0 0.0
  %2985 = vmatprep.subr.mxu0 0.0
  %2986 = vmatpush1.msra.mxu0 0.0
  %2987 = vmatprep.subr.mxu0 0.0
  %2988 = vmatpush1.msra.mxu0 0.0
  %2989 = vmatprep.subr.mxu0 0.0
  %2990 = vmatpush1.msra.mxu0 0.0
  %2991 = vmatprep.subr.mxu0 0.0
  %2992 = vmatpush1.msra.mxu0 0.0
  %2993 = vmatprep.subr.mxu0 0.0
  %2994 = vmatpush1.msra.mxu0 0.0
  %2995 = vmatprep.subr.mxu0 0.0
  %2996 = vmatpush1.msra.mxu0 0.0
  %2997 = vmatprep.subr.mxu0 0.0
  %2998 = vmatpush1.msra.mxu0 0.0
  %2999 = vmatprep.subr.mxu0 0.0
  %3000 = vmatpush1.msra.mxu0 0.0
  %3001 = vmatprep.subr.mxu0 0.0
  %3002 = vmatpush1.msra.mxu0 0.0
  %3003 = vmatprep.subr.mxu0 0.0
  %3004 = vmatpush1.msra.mxu0 0.0
  %3005 = vmatprep.subr.mxu0 0.0
  %3006 = vmatpush1.msra.mxu0 0.0
  %3007 = vmatprep.mubr.f32.mxu0 0.0
  %3008 = vmatmul.mubr.f32.gmra.mrb[0].mxu0 %v2941
  %v3009 = vpop.f32.mrb[0].mxu0
  %v3010 = vadd.f32 %v2936, %v3009
  %v3011 = vpop.f32.mrb[0].mxu0
  %v3012 = vadd.f32 %v2938, %v3011
  %3013 = vdwg.mxu0
  %v3014 = vld [vmem:[%s10] sm:$0x3]
  %v3016 = vlaneseq
  %v3017 = vshrl.u32 %v3016, 7
  %v3018 = vsub.s32 0, %v3017
  %v3019 = vrot.slane %v3014, %v3018
  %v3020 = vlaneseq
  %v3021 = vshrl.u32 %v3020, 7
  %v3022 = vsub.s32 1, %v3021
  %v3023 = vrot.slane %v3014, %v3022
  %v3026 = vadd.f32 %v3010, %v3019
  %v3027 = vadd.f32 %v3012, %v3023
  %v3028 = vxor.u32 %v3026, 2147483648
  %v3029 = vmul.f32 %v3028, 1.442695
  %v3030 = vpow.pop %v3029
  %v3031 = vadd.f32 %v3030, 1.0
  %v3032 = vrcp.pop %v3031
  %v3033 = vmul.f32 1.0, %v3032
  %v3034 = vtanh.pop %v3027
  %v3035 = vxor.u32 %v3027, 2147483648
  %v3036 = vmul.f32 %v3035, 1.442695
  %v3037 = vpow.pop %v3036
  %v3038 = vadd.f32 %v3037, 1.0
  %v3039 = vrcp.pop %v3038
  %v3040 = vmul.f32 1.0, %v3039
  %v3041 = vmul.f32 %v3033, 0.0
  %v3042 = vmul.f32 %v3033, %v3034
  %3044 = vrot.lane.b32.xlu0 %v3042, 64
  %v3045 = vpop.permute.xlu0 %3044
  %v3047 = vadd.f32 %v3041, %v3045
  %v3048 = vtanh.pop %v3047
  %v3049 = vmul.f32 %v3040, %v3048
  %v3050 = vld [vmem:[%s11] sm:$0xff]
  %v3051 = vld [vmem:[%s11 + $0x8] sm:$0xff]
  %v3052 = vld [vmem:[%s11 + $0x10] sm:$0xff]
  %v3053 = vld [vmem:[%s11 + $0x18] sm:$0xff]
  %v3054 = vld [vmem:[%s11 + $0x20] sm:$0xff]
  %v3055 = vld [vmem:[%s11 + $0x28] sm:$0xff]
  %v3056 = vld [vmem:[%s11 + $0x30] sm:$0xff]
  %v3057 = vld [vmem:[%s11 + $0x38] sm:$0xff]
  %v3058 = vld [vmem:[%s11 + $0x40] sm:$0xff]
  %v3059 = vld [vmem:[%s11 + $0x48] sm:$0xff]
  %v3060 = vld [vmem:[%s11 + $0x50] sm:$0xff]
  %v3061 = vld [vmem:[%s11 + $0x58] sm:$0xff]
  %v3062 = vld [vmem:[%s11 + $0x60] sm:$0xff]
  %v3063 = vld [vmem:[%s11 + $0x68] sm:$0xff]
  %v3064 = vld [vmem:[%s11 + $0x70] sm:$0xff]
  %v3065 = vld [vmem:[%s11 + $0x78] sm:$0xff]
  %v3066 = vld [vmem:[%s12] sm:$0xff]
  %v3067 = vld [vmem:[%s12 + $0x8] sm:$0xff]
  %v3068 = vld [vmem:[%s12 + $0x10] sm:$0xff]
  %v3069 = vld [vmem:[%s12 + $0x18] sm:$0xff]
  %v3070 = vld [vmem:[%s12 + $0x20] sm:$0xff]
  %v3071 = vld [vmem:[%s12 + $0x28] sm:$0xff]
  %v3072 = vld [vmem:[%s12 + $0x30] sm:$0xff]
  %v3073 = vld [vmem:[%s12 + $0x38] sm:$0xff]
  %v3074 = vld [vmem:[%s12 + $0x40] sm:$0xff]
  %v3075 = vld [vmem:[%s12 + $0x48] sm:$0xff]
  %v3076 = vld [vmem:[%s12 + $0x50] sm:$0xff]
  %v3077 = vld [vmem:[%s12 + $0x58] sm:$0xff]
  %v3078 = vld [vmem:[%s12 + $0x60] sm:$0xff]
  %v3079 = vld [vmem:[%s12 + $0x68] sm:$0xff]
  %v3080 = vld [vmem:[%s12 + $0x70] sm:$0xff]
  %v3081 = vld [vmem:[%s12 + $0x78] sm:$0xff]
  %3082 = vmatprep.subr.mxu0 %v3067
  %3083 = vmatpush1.msra.mxu0 %v3066
  %3084 = vmatprep.subr.mxu0 %v3069
  %3085 = vmatpush1.msra.mxu0 %v3068
  %3086 = vmatprep.subr.mxu0 %v3071
  %3087 = vmatpush1.msra.mxu0 %v3070
  %3088 = vmatprep.subr.mxu0 %v3073
  %3089 = vmatpush1.msra.mxu0 %v3072
  %3090 = vmatprep.subr.mxu0 %v3075
  %3091 = vmatpush1.msra.mxu0 %v3074
  %3092 = vmatprep.subr.mxu0 %v3077
  %3093 = vmatpush1.msra.mxu0 %v3076
  %3094 = vmatprep.subr.mxu0 %v3079
  %3095 = vmatpush1.msra.mxu0 %v3078
  %3096 = vmatprep.subr.mxu0 %v3081
  %3097 = vmatpush1.msra.mxu0 %v3080
  %3098 = vmatprep.subr.mxu0 0.0
  %3099 = vmatpush1.msra.mxu0 0.0
  %3100 = vmatprep.subr.mxu0 0.0
  %3101 = vmatpush1.msra.mxu0 0.0
  %3102 = vmatprep.subr.mxu0 0.0
  %3103 = vmatpush1.msra.mxu0 0.0
  %3104 = vmatprep.subr.mxu0 0.0
  %3105 = vmatpush1.msra.mxu0 0.0
  %3106 = vmatprep.subr.mxu0 0.0
  %3107 = vmatpush1.msra.mxu0 0.0
  %3108 = vmatprep.subr.mxu0 0.0
  %3109 = vmatpush1.msra.mxu0 0.0
  %3110 = vmatprep.subr.mxu0 0.0
  %3111 = vmatpush1.msra.mxu0 0.0
  %3112 = vmatprep.subr.mxu0 0.0
  %3113 = vmatpush1.msra.mxu0 0.0
  %3114 = vmatprep.subr.mxu0 0.0
  %3115 = vmatpush1.msra.mxu0 0.0
  %3116 = vmatprep.subr.mxu0 0.0
  %3117 = vmatpush1.msra.mxu0 0.0
  %3118 = vmatprep.subr.mxu0 0.0
  %3119 = vmatpush1.msra.mxu0 0.0
  %3120 = vmatprep.subr.mxu0 0.0
  %3121 = vmatpush1.msra.mxu0 0.0
  %3122 = vmatprep.subr.mxu0 0.0
  %3123 = vmatpush1.msra.mxu0 0.0
  %3124 = vmatprep.subr.mxu0 0.0
  %3125 = vmatpush1.msra.mxu0 0.0
  %3126 = vmatprep.subr.mxu0 0.0
  %3127 = vmatpush1.msra.mxu0 0.0
  %3128 = vmatprep.subr.mxu0 0.0
  %3129 = vmatpush1.msra.mxu0 0.0
  %3130 = vmatprep.subr.mxu0 0.0
  %3131 = vmatpush1.msra.mxu0 0.0
  %3132 = vmatprep.subr.mxu0 0.0
  %3133 = vmatpush1.msra.mxu0 0.0
  %3134 = vmatprep.subr.mxu0 0.0
  %3135 = vmatpush1.msra.mxu0 0.0
  %3136 = vmatprep.subr.mxu0 0.0
  %3137 = vmatpush1.msra.mxu0 0.0
  %3138 = vmatprep.subr.mxu0 0.0
  %3139 = vmatpush1.msra.mxu0 0.0
  %3140 = vmatprep.subr.mxu0 0.0
  %3141 = vmatpush1.msra.mxu0 0.0
  %3142 = vmatprep.subr.mxu0 0.0
  %3143 = vmatpush1.msra.mxu0 0.0
  %3144 = vmatprep.subr.mxu0 0.0
  %3145 = vmatpush1.msra.mxu0 0.0
  %3146 = vmatprep.mubr.f32.mxu0 0.0
  %3147 = vmatmul.mubr.f32.gmra.mrb[0].mxu0 %v2867
  %v3148 = vpop.f32.mrb[0].mxu0
  %v3149 = vadd.f32 0.0, %v3148
  %v3150 = vpop.f32.mrb[0].mxu0
  %v3151 = vadd.f32 0.0, %v3150
  %3152 = vdwg.mxu0
  %3154 = vrot.lane.b32.xlu0 %v3049, 64
  %v3155 = vpop.permute.xlu0 %3154
  %v3156 = vsel %vm2866, %v3155, 0
  %3158 = vmatprep.subr.mxu0 %v3051
  %3159 = vmatpush1.msra.mxu0 %v3050
  %3160 = vmatprep.subr.mxu0 %v3053
  %3161 = vmatpush1.msra.mxu0 %v3052
  %3162 = vmatprep.subr.mxu0 %v3055
  %3163 = vmatpush1.msra.mxu0 %v3054
  %3164 = vmatprep.subr.mxu0 %v3057
  %3165 = vmatpush1.msra.mxu0 %v3056
  %3166 = vmatprep.subr.mxu0 %v3059
  %3167 = vmatpush1.msra.mxu0 %v3058
  %3168 = vmatprep.subr.mxu0 %v3061
  %3169 = vmatpush1.msra.mxu0 %v3060
  %3170 = vmatprep.subr.mxu0 %v3063
  %3171 = vmatpush1.msra.mxu0 %v3062
  %3172 = vmatprep.subr.mxu0 %v3065
  %3173 = vmatpush1.msra.mxu0 %v3064
  %3174 = vmatprep.subr.mxu0 0.0
  %3175 = vmatpush1.msra.mxu0 0.0
  %3176 = vmatprep.subr.mxu0 0.0
  %3177 = vmatpush1.msra.mxu0 0.0
  %3178 = vmatprep.subr.mxu0 0.0
  %3179 = vmatpush1.msra.mxu0 0.0
  %3180 = vmatprep.subr.mxu0 0.0
  %3181 = vmatpush1.msra.mxu0 0.0
  %3182 = vmatprep.subr.mxu0 0.0
  %3183 = vmatpush1.msra.mxu0 0.0
  %3184 = vmatprep.subr.mxu0 0.0
  %3185 = vmatpush1.msra.mxu0 0.0
  %3186 = vmatprep.subr.mxu0 0.0
  %3187 = vmatpush1.msra.mxu0 0.0
  %3188 = vmatprep.subr.mxu0 0.0
  %3189 = vmatpush1.msra.mxu0 0.0
  %3190 = vmatprep.subr.mxu0 0.0
  %3191 = vmatpush1.msra.mxu0 0.0
  %3192 = vmatprep.subr.mxu0 0.0
  %3193 = vmatpush1.msra.mxu0 0.0
  %3194 = vmatprep.subr.mxu0 0.0
  %3195 = vmatpush1.msra.mxu0 0.0
  %3196 = vmatprep.subr.mxu0 0.0
  %3197 = vmatpush1.msra.mxu0 0.0
  %3198 = vmatprep.subr.mxu0 0.0
  %3199 = vmatpush1.msra.mxu0 0.0
  %3200 = vmatprep.subr.mxu0 0.0
  %3201 = vmatpush1.msra.mxu0 0.0
  %3202 = vmatprep.subr.mxu0 0.0
  %3203 = vmatpush1.msra.mxu0 0.0
  %3204 = vmatprep.subr.mxu0 0.0
  %3205 = vmatpush1.msra.mxu0 0.0
  %3206 = vmatprep.subr.mxu0 0.0
  %3207 = vmatpush1.msra.mxu0 0.0
  %3208 = vmatprep.subr.mxu0 0.0
  %3209 = vmatpush1.msra.mxu0 0.0
  %3210 = vmatprep.subr.mxu0 0.0
  %3211 = vmatpush1.msra.mxu0 0.0
  %3212 = vmatprep.subr.mxu0 0.0
  %3213 = vmatpush1.msra.mxu0 0.0
  %3214 = vmatprep.subr.mxu0 0.0
  %3215 = vmatpush1.msra.mxu0 0.0
  %3216 = vmatprep.subr.mxu0 0.0
  %3217 = vmatpush1.msra.mxu0 0.0
  %3218 = vmatprep.subr.mxu0 0.0
  %3219 = vmatpush1.msra.mxu0 0.0
  %3220 = vmatprep.subr.mxu0 0.0
  %3221 = vmatpush1.msra.mxu0 0.0
  %3222 = vmatprep.mubr.f32.mxu0 0.0
  %3223 = vmatmul.mubr.f32.gmra.mrb[0].mxu0 %v3156
  %v3224 = vpop.f32.mrb[0].mxu0
  %v3225 = vadd.f32 %v3149, %v3224
  %v3226 = vpop.f32.mrb[0].mxu0
  %v3227 = vadd.f32 %v3151, %v3226
  %3228 = vdwg.mxu0
  %v3229 = vld [vmem:[%s13] sm:$0x3]
  %v3231 = vlaneseq
  %v3232 = vshrl.u32 %v3231, 7
  %v3233 = vsub.s32 0, %v3232
  %v3234 = vrot.slane %v3229, %v3233
  %v3235 = vlaneseq
  %v3236 = vshrl.u32 %v3235, 7
  %v3237 = vsub.s32 1, %v3236
  %v3238 = vrot.slane %v3229, %v3237
  %v3241 = vadd.f32 %v3225, %v3234
  %v3242 = vadd.f32 %v3227, %v3238
  %v3243 = vxor.u32 %v3241, 2147483648
  %v3244 = vmul.f32 %v3243, 1.442695
  %v3245 = vpow.pop %v3244
  %v3246 = vadd.f32 %v3245, 1.0
  %v3247 = vrcp.pop %v3246
  %v3248 = vmul.f32 1.0, %v3247
  %v3249 = vtanh.pop %v3242
  %v3250 = vxor.u32 %v3242, 2147483648
  %v3251 = vmul.f32 %v3250, 1.442695
  %v3252 = vpow.pop %v3251
  %v3253 = vadd.f32 %v3252, 1.0
  %v3254 = vrcp.pop %v3253
  %v3255 = vmul.f32 1.0, %v3254
  %v3256 = vmul.f32 %v3248, 0.0
  %v3257 = vmul.f32 %v3248, %v3249
  %3259 = vrot.lane.b32.xlu0 %v3257, 64
  %v3260 = vpop.permute.xlu0 %3259
  %v3262 = vadd.f32 %v3256, %v3260
  %v3263 = vtanh.pop %v3262
  %v3264 = vmul.f32 %v3255, %v3263
  %s3265 = scalar_lea.vmem %s1, 8
  %v3266 = vld [vmem:[%s3265] sm:$0xff]
  %3267 = vmatprep.subr.mxu0 %v2851
  %3268 = vmatpush1.msra.mxu0 %v2850
  %3269 = vmatprep.subr.mxu0 %v2853
  %3270 = vmatpush1.msra.mxu0 %v2852
  %3271 = vmatprep.subr.mxu0 %v2855
  %3272 = vmatpush1.msra.mxu0 %v2854
  %3273 = vmatprep.subr.mxu0 %v2857
  %3274 = vmatpush1.msra.mxu0 %v2856
  %3275 = vmatprep.subr.mxu0 %v2859
  %3276 = vmatpush1.msra.mxu0 %v2858
  %3277 = vmatprep.subr.mxu0 %v2861
  %3278 = vmatpush1.msra.mxu0 %v2860
  %3279 = vmatprep.subr.mxu0 %v2863
  %3280 = vmatpush1.msra.mxu0 %v2862
  %3281 = vmatprep.subr.mxu0 %v2865
  %3282 = vmatpush1.msra.mxu0 %v2864
  %3283 = vmatprep.subr.mxu0 0.0
  %3284 = vmatpush1.msra.mxu0 0.0
  %3285 = vmatprep.subr.mxu0 0.0
  %3286 = vmatpush1.msra.mxu0 0.0
  %3287 = vmatprep.subr.mxu0 0.0
  %3288 = vmatpush1.msra.mxu0 0.0
  %3289 = vmatprep.subr.mxu0 0.0
  %3290 = vmatpush1.msra.mxu0 0.0
  %3291 = vmatprep.subr.mxu0 0.0
  %3292 = vmatpush1.msra.mxu0 0.0
  %3293 = vmatprep.subr.mxu0 0.0
  %3294 = vmatpush1.msra.mxu0 0.0
  %3295 = vmatprep.subr.mxu0 0.0
  %3296 = vmatpush1.msra.mxu0 0.0
  %3297 = vmatprep.subr.mxu0 0.0
  %3298 = vmatpush1.msra.mxu0 0.0
  %3299 = vmatprep.subr.mxu0 0.0
  %3300 = vmatpush1.msra.mxu0 0.0
  %3301 = vmatprep.subr.mxu0 0.0
  %3302 = vmatpush1.msra.mxu0 0.0
  %3303 = vmatprep.subr.mxu0 0.0
  %3304 = vmatpush1.msra.mxu0 0.0
  %3305 = vmatprep.subr.mxu0 0.0
  %3306 = vmatpush1.msra.mxu0 0.0
  %3307 = vmatprep.subr.mxu0 0.0
  %3308 = vmatpush1.msra.mxu0 0.0
  %3309 = vmatprep.subr.mxu0 0.0
  %3310 = vmatpush1.msra.mxu0 0.0
  %3311 = vmatprep.subr.mxu0 0.0
  %3312 = vmatpush1.msra.mxu0 0.0
  %3313 = vmatprep.subr.mxu0 0.0
  %3314 = vmatpush1.msra.mxu0 0.0
  %3315 = vmatprep.subr.mxu0 0.0
  %3316 = vmatpush1.msra.mxu0 0.0
  %3317 = vmatprep.subr.mxu0 0.0
  %3318 = vmatpush1.msra.mxu0 0.0
  %3319 = vmatprep.subr.mxu0 0.0
  %3320 = vmatpush1.msra.mxu0 0.0
  %3321 = vmatprep.subr.mxu0 0.0
  %3322 = vmatpush1.msra.mxu0 0.0
  %3323 = vmatprep.subr.mxu0 0.0
  %3324 = vmatpush1.msra.mxu0 0.0
  %3325 = vmatprep.subr.mxu0 0.0
  %3326 = vmatpush1.msra.mxu0 0.0
  %3327 = vmatprep.subr.mxu0 0.0
  %3328 = vmatpush1.msra.mxu0 0.0
  %3329 = vmatprep.subr.mxu0 0.0
  %3330 = vmatpush1.msra.mxu0 0.0
  %3331 = vmatprep.mubr.f32.mxu0 0.0
  %3332 = vmatmul.mubr.f32.gmra.mrb[0].mxu0 %v3156
  %v3333 = vpop.f32.mrb[0].mxu0
  %v3334 = vadd.f32 0.0, %v3333
  %v3335 = vpop.f32.mrb[0].mxu0
  %v3336 = vadd.f32 0.0, %v3335
  %3337 = vdwg.mxu0
  %v3339 = vsel %vm62, %v3266, 0
  %3341 = vmatprep.subr.mxu0 %v2843
  %3342 = vmatpush1.msra.mxu0 %v2842
  %3343 = vmatprep.subr.mxu0 %v2845
  %3344 = vmatpush1.msra.mxu0 %v2844
  %3345 = vmatprep.subr.mxu0 %v2847
  %3346 = vmatpush1.msra.mxu0 %v2846
  %3347 = vmatprep.subr.mxu0 %v2849
  %3348 = vmatpush1.msra.mxu0 %v2848
  %3349 = vmatprep.subr.mxu0 0.0
  %3350 = vmatpush1.msra.mxu0 0.0
  %3351 = vmatprep.subr.mxu0 0.0
  %3352 = vmatpush1.msra.mxu0 0.0
  %3353 = vmatprep.subr.mxu0 0.0
  %3354 = vmatpush1.msra.mxu0 0.0
  %3355 = vmatprep.subr.mxu0 0.0
  %3356 = vmatpush1.msra.mxu0 0.0
  %3357 = vmatprep.subr.mxu0 0.0
  %3358 = vmatpush1.msra.mxu0 0.0
  %3359 = vmatprep.subr.mxu0 0.0
  %3360 = vmatpush1.msra.mxu0 0.0
  %3361 = vmatprep.subr.mxu0 0.0
  %3362 = vmatpush1.msra.mxu0 0.0
  %3363 = vmatprep.subr.mxu0 0.0
  %3364 = vmatpush1.msra.mxu0 0.0
  %3365 = vmatprep.subr.mxu0 0.0
  %3366 = vmatpush1.msra.mxu0 0.0
  %3367 = vmatprep.subr.mxu0 0.0
  %3368 = vmatpush1.msra.mxu0 0.0
  %3369 = vmatprep.subr.mxu0 0.0
  %3370 = vmatpush1.msra.mxu0 0.0
  %3371 = vmatprep.subr.mxu0 0.0
  %3372 = vmatpush1.msra.mxu0 0.0
  %3373 = vmatprep.subr.mxu0 0.0
  %3374 = vmatpush1.msra.mxu0 0.0
  %3375 = vmatprep.subr.mxu0 0.0
  %3376 = vmatpush1.msra.mxu0 0.0
  %3377 = vmatprep.subr.mxu0 0.0
  %3378 = vmatpush1.msra.mxu0 0.0
  %3379 = vmatprep.subr.mxu0 0.0
  %3380 = vmatpush1.msra.mxu0 0.0
  %3381 = vmatprep.subr.mxu0 0.0
  %3382 = vmatpush1.msra.mxu0 0.0
  %3383 = vmatprep.subr.mxu0 0.0
  %3384 = vmatpush1.msra.mxu0 0.0
  %3385 = vmatprep.subr.mxu0 0.0
  %3386 = vmatpush1.msra.mxu0 0.0
  %3387 = vmatprep.subr.mxu0 0.0
  %3388 = vmatpush1.msra.mxu0 0.0
  %3389 = vmatprep.subr.mxu0 0.0
  %3390 = vmatpush1.msra.mxu0 0.0
  %3391 = vmatprep.subr.mxu0 0.0
  %3392 = vmatpush1.msra.mxu0 0.0
  %3393 = vmatprep.subr.mxu0 0.0
  %3394 = vmatpush1.msra.mxu0 0.0
  %3395 = vmatprep.subr.mxu0 0.0
  %3396 = vmatpush1.msra.mxu0 0.0
  %3397 = vmatprep.subr.mxu0 0.0
  %3398 = vmatpush1.msra.mxu0 0.0
  %3399 = vmatprep.subr.mxu0 0.0
  %3400 = vmatpush1.msra.mxu0 0.0
  %3401 = vmatprep.subr.mxu0 0.0
  %3402 = vmatpush1.msra.mxu0 0.0
  %3403 = vmatprep.subr.mxu0 0.0
  %3404 = vmatpush1.msra.mxu0 0.0
  %3405 = vmatprep.mubr.f32.mxu0 0.0
  %3406 = vmatmul.mubr.f32.gmra.mrb[0].mxu0 %v3339
  %v3407 = vpop.f32.mrb[0].mxu0
  %v3408 = vadd.f32 %v3334, %v3407
  %v3409 = vpop.f32.mrb[0].mxu0
  %v3410 = vadd.f32 %v3336, %v3409
  %3411 = vdwg.mxu0
  %v3412 = vadd.f32 %v3408, %v3019
  %v3413 = vadd.f32 %v3410, %v3023
  %v3414 = vxor.u32 %v3412, 2147483648
  %v3415 = vmul.f32 %v3414, 1.442695
  %v3416 = vpow.pop %v3415
  %v3417 = vadd.f32 %v3416, 1.0
  %v3418 = vrcp.pop %v3417
  %v3419 = vmul.f32 1.0, %v3418
  %v3420 = vtanh.pop %v3413
  %v3421 = vxor.u32 %v3413, 2147483648
  %v3422 = vmul.f32 %v3421, 1.442695
  %v3423 = vpow.pop %v3422
  %v3424 = vadd.f32 %v3423, 1.0
  %v3425 = vrcp.pop %v3424
  %v3426 = vmul.f32 1.0, %v3425
  %v3427 = vmul.f32 %v3419, %v3047
  %v3428 = vmul.f32 %v3419, %v3420
  %3430 = vrot.lane.b32.xlu0 %v3428, 64
  %v3431 = vpop.permute.xlu0 %3430
  %v3433 = vadd.f32 %v3427, %v3431
  %v3434 = vtanh.pop %v3433
  %v3435 = vmul.f32 %v3426, %v3434
  %3437 = vrot.lane.b32.xlu0 %v3264, 64
  %v3438 = vpop.permute.xlu0 %3437
  %v3439 = vsel %vm2866, %v3438, 0
  %3441 = vmatprep.subr.mxu0 %v3067
  %3442 = vmatpush1.msra.mxu0 %v3066
  %3443 = vmatprep.subr.mxu0 %v3069
  %3444 = vmatpush1.msra.mxu0 %v3068
  %3445 = vmatprep.subr.mxu0 %v3071
  %3446 = vmatpush1.msra.mxu0 %v3070
  %3447 = vmatprep.subr.mxu0 %v3073
  %3448 = vmatpush1.msra.mxu0 %v3072
  %3449 = vmatprep.subr.mxu0 %v3075
  %3450 = vmatpush1.msra.mxu0 %v3074
  %3451 = vmatprep.subr.mxu0 %v3077
  %3452 = vmatpush1.msra.mxu0 %v3076
  %3453 = vmatprep.subr.mxu0 %v3079
  %3454 = vmatpush1.msra.mxu0 %v3078
  %3455 = vmatprep.subr.mxu0 %v3081
  %3456 = vmatpush1.msra.mxu0 %v3080
  %3457 = vmatprep.subr.mxu0 0.0
  %3458 = vmatpush1.msra.mxu0 0.0
  %3459 = vmatprep.subr.mxu0 0.0
  %3460 = vmatpush1.msra.mxu0 0.0
  %3461 = vmatprep.subr.mxu0 0.0
  %3462 = vmatpush1.msra.mxu0 0.0
  %3463 = vmatprep.subr.mxu0 0.0
  %3464 = vmatpush1.msra.mxu0 0.0
  %3465 = vmatprep.subr.mxu0 0.0
  %3466 = vmatpush1.msra.mxu0 0.0
  %3467 = vmatprep.subr.mxu0 0.0
  %3468 = vmatpush1.msra.mxu0 0.0
  %3469 = vmatprep.subr.mxu0 0.0
  %3470 = vmatpush1.msra.mxu0 0.0
  %3471 = vmatprep.subr.mxu0 0.0
  %3472 = vmatpush1.msra.mxu0 0.0
  %3473 = vmatprep.subr.mxu0 0.0
  %3474 = vmatpush1.msra.mxu0 0.0
  %3475 = vmatprep.subr.mxu0 0.0
  %3476 = vmatpush1.msra.mxu0 0.0
  %3477 = vmatprep.subr.mxu0 0.0
  %3478 = vmatpush1.msra.mxu0 0.0
  %3479 = vmatprep.subr.mxu0 0.0
  %3480 = vmatpush1.msra.mxu0 0.0
  %3481 = vmatprep.subr.mxu0 0.0
  %3482 = vmatpush1.msra.mxu0 0.0
  %3483 = vmatprep.subr.mxu0 0.0
  %3484 = vmatpush1.msra.mxu0 0.0
  %3485 = vmatprep.subr.mxu0 0.0
  %3486 = vmatpush1.msra.mxu0 0.0
  %3487 = vmatprep.subr.mxu0 0.0
  %3488 = vmatpush1.msra.mxu0 0.0
  %3489 = vmatprep.subr.mxu0 0.0
  %3490 = vmatpush1.msra.mxu0 0.0
  %3491 = vmatprep.subr.mxu0 0.0
  %3492 = vmatpush1.msra.mxu0 0.0
  %3493 = vmatprep.subr.mxu0 0.0
  %3494 = vmatpush1.msra.mxu0 0.0
  %3495 = vmatprep.subr.mxu0 0.0
  %3496 = vmatpush1.msra.mxu0 0.0
  %3497 = vmatprep.subr.mxu0 0.0
  %3498 = vmatpush1.msra.mxu0 0.0
  %3499 = vmatprep.subr.mxu0 0.0
  %3500 = vmatpush1.msra.mxu0 0.0
  %3501 = vmatprep.subr.mxu0 0.0
  %3502 = vmatpush1.msra.mxu0 0.0
  %3503 = vmatprep.subr.mxu0 0.0
  %3504 = vmatpush1.msra.mxu0 0.0
  %3505 = vmatprep.mubr.f32.mxu0 0.0
  %3506 = vmatmul.mubr.f32.gmra.mrb[0].mxu0 %v3439
  %v3507 = vpop.f32.mrb[0].mxu0
  %v3508 = vadd.f32 0.0, %v3507
  %v3509 = vpop.f32.mrb[0].mxu0
  %v3510 = vadd.f32 0.0, %v3509
  %3511 = vdwg.mxu0
  %3513 = vrot.lane.b32.xlu0 %v3435, 64
  %v3514 = vpop.permute.xlu0 %3513
  %v3515 = vsel %vm2866, %v3514, 0
  %3517 = vmatprep.subr.mxu0 %v3051
  %3518 = vmatpush1.msra.mxu0 %v3050
  %3519 = vmatprep.subr.mxu0 %v3053
  %3520 = vmatpush1.msra.mxu0 %v3052
  %3521 = vmatprep.subr.mxu0 %v3055
  %3522 = vmatpush1.msra.mxu0 %v3054
  %3523 = vmatprep.subr.mxu0 %v3057
  %3524 = vmatpush1.msra.mxu0 %v3056
  %3525 = vmatprep.subr.mxu0 %v3059
  %3526 = vmatpush1.msra.mxu0 %v3058
  %3527 = vmatprep.subr.mxu0 %v3061
  %3528 = vmatpush1.msra.mxu0 %v3060
  %3529 = vmatprep.subr.mxu0 %v3063
  %3530 = vmatpush1.msra.mxu0 %v3062
  %3531 = vmatprep.subr.mxu0 %v3065
  %3532 = vmatpush1.msra.mxu0 %v3064
  %3533 = vmatprep.subr.mxu0 0.0
  %3534 = vmatpush1.msra.mxu0 0.0
  %3535 = vmatprep.subr.mxu0 0.0
  %3536 = vmatpush1.msra.mxu0 0.0
  %3537 = vmatprep.subr.mxu0 0.0
  %3538 = vmatpush1.msra.mxu0 0.0
  %3539 = vmatprep.subr.mxu0 0.0
  %3540 = vmatpush1.msra.mxu0 0.0
  %3541 = vmatprep.subr.mxu0 0.0
  %3542 = vmatpush1.msra.mxu0 0.0
  %3543 = vmatprep.subr.mxu0 0.0
  %3544 = vmatpush1.msra.mxu0 0.0
  %3545 = vmatprep.subr.mxu0 0.0
  %3546 = vmatpush1.msra.mxu0 0.0
  %3547 = vmatprep.subr.mxu0 0.0
  %3548 = vmatpush1.msra.mxu0 0.0
  %3549 = vmatprep.subr.mxu0 0.0
  %3550 = vmatpush1.msra.mxu0 0.0
  %3551 = vmatprep.subr.mxu0 0.0
  %3552 = vmatpush1.msra.mxu0 0.0
  %3553 = vmatprep.subr.mxu0 0.0
  %3554 = vmatpush1.msra.mxu0 0.0
  %3555 = vmatprep.subr.mxu0 0.0
  %3556 = vmatpush1.msra.mxu0 0.0
  %3557 = vmatprep.subr.mxu0 0.0
  %3558 = vmatpush1.msra.mxu0 0.0
  %3559 = vmatprep.subr.mxu0 0.0
  %3560 = vmatpush1.msra.mxu0 0.0
  %3561 = vmatprep.subr.mxu0 0.0
  %3562 = vmatpush1.msra.mxu0 0.0
  %3563 = vmatprep.subr.mxu0 0.0
  %3564 = vmatpush1.msra.mxu0 0.0
  %3565 = vmatprep.subr.mxu0 0.0
  %3566 = vmatpush1.msra.mxu0 0.0
  %3567 = vmatprep.subr.mxu0 0.0
  %3568 = vmatpush1.msra.mxu0 0.0
  %3569 = vmatprep.subr.mxu0 0.0
  %3570 = vmatpush1.msra.mxu0 0.0
  %3571 = vmatprep.subr.mxu0 0.0
  %3572 = vmatpush1.msra.mxu0 0.0
  %3573 = vmatprep.subr.mxu0 0.0
  %3574 = vmatpush1.msra.mxu0 0.0
  %3575 = vmatprep.subr.mxu0 0.0
  %3576 = vmatpush1.msra.mxu0 0.0
  %3577 = vmatprep.subr.mxu0 0.0
  %3578 = vmatpush1.msra.mxu0 0.0
  %3579 = vmatprep.subr.mxu0 0.0
  %3580 = vmatpush1.msra.mxu0 0.0
  %3581 = vmatprep.mubr.f32.mxu0 0.0
  %3582 = vmatmul.mubr.f32.gmra.mrb[0].mxu0 %v3515
  %v3583 = vpop.f32.mrb[0].mxu0
  %v3584 = vadd.f32 %v3508, %v3583
  %v3585 = vpop.f32.mrb[0].mxu0
  %v3586 = vadd.f32 %v3510, %v3585
  %3587 = vdwg.mxu0
  %v3588 = vadd.f32 %v3584, %v3234
  %v3589 = vadd.f32 %v3586, %v3238
  %v3590 = vxor.u32 %v3588, 2147483648
  %v3591 = vmul.f32 %v3590, 1.442695
  %v3592 = vpow.pop %v3591
  %v3593 = vadd.f32 %v3592, 1.0
  %v3594 = vrcp.pop %v3593
  %v3595 = vmul.f32 1.0, %v3594
  %v3596 = vtanh.pop %v3589
  %v3597 = vxor.u32 %v3589, 2147483648
  %v3598 = vmul.f32 %v3597, 1.442695
  %v3599 = vpow.pop %v3598
  %v3600 = vadd.f32 %v3599, 1.0
  %v3601 = vrcp.pop %v3600
  %v3602 = vmul.f32 1.0, %v3601
  %v3603 = vmul.f32 %v3595, %v3262
  %v3604 = vmul.f32 %v3595, %v3596
  %3606 = vrot.lane.b32.xlu0 %v3604, 64
  %v3607 = vpop.permute.xlu0 %3606
  %v3609 = vadd.f32 %v3603, %v3607
  %v3610 = vtanh.pop %v3609
  %v3611 = vmul.f32 %v3602, %v3610
  %s3612 = scalar_lea.vmem %s1, 16
  %v3613 = vld [vmem:[%s3612] sm:$0xff]
  %3614 = vmatprep.subr.mxu0 %v2851
  %3615 = vmatpush1.msra.mxu0 %v2850
  %3616 = vmatprep.subr.mxu0 %v2853
  %3617 = vmatpush1.msra.mxu0 %v2852
  %3618 = vmatprep.subr.mxu0 %v2855
  %3619 = vmatpush1.msra.mxu0 %v2854
  %3620 = vmatprep.subr.mxu0 %v2857
  %3621 = vmatpush1.msra.mxu0 %v2856
  %3622 = vmatprep.subr.mxu0 %v2859
  %3623 = vmatpush1.msra.mxu0 %v2858
  %3624 = vmatprep.subr.mxu0 %v2861
  %3625 = vmatpush1.msra.mxu0 %v2860
  %3626 = vmatprep.subr.mxu0 %v2863
  %3627 = vmatpush1.msra.mxu0 %v2862
  %3628 = vmatprep.subr.mxu0 %v2865
  %3629 = vmatpush1.msra.mxu0 %v2864
  %3630 = vmatprep.subr.mxu0 0.0
  %3631 = vmatpush1.msra.mxu0 0.0
  %3632 = vmatprep.subr.mxu0 0.0
  %3633 = vmatpush1.msra.mxu0 0.0
  %3634 = vmatprep.subr.mxu0 0.0
  %3635 = vmatpush1.msra.mxu0 0.0
  %3636 = vmatprep.subr.mxu0 0.0
  %3637 = vmatpush1.msra.mxu0 0.0
  %3638 = vmatprep.subr.mxu0 0.0
  %3639 = vmatpush1.msra.mxu0 0.0
  %3640 = vmatprep.subr.mxu0 0.0
  %3641 = vmatpush1.msra.mxu0 0.0
  %3642 = vmatprep.subr.mxu0 0.0
  %3643 = vmatpush1.msra.mxu0 0.0
  %3644 = vmatprep.subr.mxu0 0.0
  %3645 = vmatpush1.msra.mxu0 0.0
  %3646 = vmatprep.subr.mxu0 0.0
  %3647 = vmatpush1.msra.mxu0 0.0
  %3648 = vmatprep.subr.mxu0 0.0
  %3649 = vmatpush1.msra.mxu0 0.0
  %3650 = vmatprep.subr.mxu0 0.0
  %3651 = vmatpush1.msra.mxu0 0.0
  %3652 = vmatprep.subr.mxu0 0.0
  %3653 = vmatpush1.msra.mxu0 0.0
  %3654 = vmatprep.subr.mxu0 0.0
  %3655 = vmatpush1.msra.mxu0 0.0
  %3656 = vmatprep.subr.mxu0 0.0
  %3657 = vmatpush1.msra.mxu0 0.0
  %3658 = vmatprep.subr.mxu0 0.0
  %3659 = vmatpush1.msra.mxu0 0.0
  %3660 = vmatprep.subr.mxu0 0.0
  %3661 = vmatpush1.msra.mxu0 0.0
  %3662 = vmatprep.subr.mxu0 0.0
  %3663 = vmatpush1.msra.mxu0 0.0
  %3664 = vmatprep.subr.mxu0 0.0
  %3665 = vmatpush1.msra.mxu0 0.0
  %3666 = vmatprep.subr.mxu0 0.0
  %3667 = vmatpush1.msra.mxu0 0.0
  %3668 = vmatprep.subr.mxu0 0.0
  %3669 = vmatpush1.msra.mxu0 0.0
  %3670 = vmatprep.subr.mxu0 0.0
  %3671 = vmatpush1.msra.mxu0 0.0
  %3672 = vmatprep.subr.mxu0 0.0
  %3673 = vmatpush1.msra.mxu0 0.0
  %3674 = vmatprep.subr.mxu0 0.0
  %3675 = vmatpush1.msra.mxu0 0.0
  %3676 = vmatprep.subr.mxu0 0.0
  %3677 = vmatpush1.msra.mxu0 0.0
  %3678 = vmatprep.mubr.f32.mxu0 0.0
  %3679 = vmatmul.mubr.f32.gmra.mrb[0].mxu0 %v3515
  %v3680 = vpop.f32.mrb[0].mxu0
  %v3681 = vadd.f32 0.0, %v3680
  %v3682 = vpop.f32.mrb[0].mxu0
  %v3683 = vadd.f32 0.0, %v3682
  %3684 = vdwg.mxu0
  %v3686 = vsel %vm62, %v3613, 0
  %3688 = vmatprep.subr.mxu0 %v2843
  %3689 = vmatpush1.msra.mxu0 %v2842
  %3690 = vmatprep.subr.mxu0 %v2845
  %3691 = vmatpush1.msra.mxu0 %v2844
  %3692 = vmatprep.subr.mxu0 %v2847
  %3693 = vmatpush1.msra.mxu0 %v2846
  %3694 = vmatprep.subr.mxu0 %v2849
  %3695 = vmatpush1.msra.mxu0 %v2848
  %3696 = vmatprep.subr.mxu0 0.0
  %3697 = vmatpush1.msra.mxu0 0.0
  %3698 = vmatprep.subr.mxu0 0.0
  %3699 = vmatpush1.msra.mxu0 0.0
  %3700 = vmatprep.subr.mxu0 0.0
  %3701 = vmatpush1.msra.mxu0 0.0
  %3702 = vmatprep.subr.mxu0 0.0
  %3703 = vmatpush1.msra.mxu0 0.0
  %3704 = vmatprep.subr.mxu0 0.0
  %3705 = vmatpush1.msra.mxu0 0.0
  %3706 = vmatprep.subr.mxu0 0.0
  %3707 = vmatpush1.msra.mxu0 0.0
  %3708 = vmatprep.subr.mxu0 0.0
  %3709 = vmatpush1.msra.mxu0 0.0
  %3710 = vmatprep.subr.mxu0 0.0
  %3711 = vmatpush1.msra.mxu0 0.0
  %3712 = vmatprep.subr.mxu0 0.0
  %3713 = vmatpush1.msra.mxu0 0.0
  %3714 = vmatprep.subr.mxu0 0.0
  %3715 = vmatpush1.msra.mxu0 0.0
  %3716 = vmatprep.subr.mxu0 0.0
  %3717 = vmatpush1.msra.mxu0 0.0
  %3718 = vmatprep.subr.mxu0 0.0
  %3719 = vmatpush1.msra.mxu0 0.0
  %3720 = vmatprep.subr.mxu0 0.0
  %3721 = vmatpush1.msra.mxu0 0.0
  %3722 = vmatprep.subr.mxu0 0.0
  %3723 = vmatpush1.msra.mxu0 0.0
  %3724 = vmatprep.subr.mxu0 0.0
  %3725 = vmatpush1.msra.mxu0 0.0
  %3726 = vmatprep.subr.mxu0 0.0
  %3727 = vmatpush1.msra.mxu0 0.0
  %3728 = vmatprep.subr.mxu0 0.0
  %3729 = vmatpush1.msra.mxu0 0.0
  %3730 = vmatprep.subr.mxu0 0.0
  %3731 = vmatpush1.msra.mxu0 0.0
  %3732 = vmatprep.subr.mxu0 0.0
  %3733 = vmatpush1.msra.mxu0 0.0
  %3734 = vmatprep.subr.mxu0 0.0
  %3735 = vmatpush1.msra.mxu0 0.0
  %3736 = vmatprep.subr.mxu0 0.0
  %3737 = vmatpush1.msra.mxu0 0.0
  %3738 = vmatprep.subr.mxu0 0.0
  %3739 = vmatpush1.msra.mxu0 0.0
  %3740 = vmatprep.subr.mxu0 0.0
  %3741 = vmatpush1.msra.mxu0 0.0
  %3742 = vmatprep.subr.mxu0 0.0
  %3743 = vmatpush1.msra.mxu0 0.0
  %3744 = vmatprep.subr.mxu0 0.0
  %3745 = vmatpush1.msra.mxu0 0.0
  %3746 = vmatprep.subr.mxu0 0.0
  %3747 = vmatpush1.msra.mxu0 0.0
  %3748 = vmatprep.subr.mxu0 0.0
  %3749 = vmatpush1.msra.mxu0 0.0
  %3750 = vmatprep.subr.mxu0 0.0
  %3751 = vmatpush1.msra.mxu0 0.0
  %3752 = vmatprep.mubr.f32.mxu0 0.0
  %3753 = vmatmul.mubr.f32.gmra.mrb[0].mxu0 %v3686
  %v3754 = vpop.f32.mrb[0].mxu0
  %v3755 = vadd.f32 %v3681, %v3754
  %v3756 = vpop.f32.mrb[0].mxu0
  %v3757 = vadd.f32 %v3683, %v3756
  %3758 = vdwg.mxu0
  %v3759 = vadd.f32 %v3755, %v3019
  %v3760 = vadd.f32 %v3757, %v3023
  %v3761 = vxor.u32 %v3759, 2147483648
  %v3762 = vmul.f32 %v3761, 1.442695
  %v3763 = vpow.pop %v3762
  %v3764 = vadd.f32 %v3763, 1.0
  %v3765 = vrcp.pop %v3764
  %v3766 = vmul.f32 1.0, %v3765
  %v3767 = vtanh.pop %v3760
  %v3768 = vxor.u32 %v3760, 2147483648
  %v3769 = vmul.f32 %v3768, 1.442695
  %v3770 = vpow.pop %v3769
  %v3771 = vadd.f32 %v3770, 1.0
  %v3772 = vrcp.pop %v3771
  %v3773 = vmul.f32 1.0, %v3772
  %v3774 = vmul.f32 %v3766, %v3433
  %v3775 = vmul.f32 %v3766, %v3767
  %3777 = vrot.lane.b32.xlu0 %v3775, 64
  %v3778 = vpop.permute.xlu0 %3777
  %v3780 = vadd.f32 %v3774, %v3778
  %v3781 = vtanh.pop %v3780
  %v3782 = vmul.f32 %v3773, %v3781
  %3784 = vrot.lane.b32.xlu0 %v3611, 64
  %v3785 = vpop.permute.xlu0 %3784
  %v3786 = vsel %vm2866, %v3785, 0
  %3788 = vmatprep.subr.mxu0 %v3067
  %3789 = vmatpush1.msra.mxu0 %v3066
  %3790 = vmatprep.subr.mxu0 %v3069
  %3791 = vmatpush1.msra.mxu0 %v3068
  %3792 = vmatprep.subr.mxu0 %v3071
  %3793 = vmatpush1.msra.mxu0 %v3070
  %3794 = vmatprep.subr.mxu0 %v3073
  %3795 = vmatpush1.msra.mxu0 %v3072
  %3796 = vmatprep.subr.mxu0 %v3075
  %3797 = vmatpush1.msra.mxu0 %v3074
  %3798 = vmatprep.subr.mxu0 %v3077
  %3799 = vmatpush1.msra.mxu0 %v3076
  %3800 = vmatprep.subr.mxu0 %v3079
  %3801 = vmatpush1.msra.mxu0 %v3078
  %3802 = vmatprep.subr.mxu0 %v3081
  %3803 = vmatpush1.msra.mxu0 %v3080
  %3804 = vmatprep.subr.mxu0 0.0
  %3805 = vmatpush1.msra.mxu0 0.0
  %3806 = vmatprep.subr.mxu0 0.0
  %3807 = vmatpush1.msra.mxu0 0.0
  %3808 = vmatprep.subr.mxu0 0.0
  %3809 = vmatpush1.msra.mxu0 0.0
  %3810 = vmatprep.subr.mxu0 0.0
  %3811 = vmatpush1.msra.mxu0 0.0
  %3812 = vmatprep.subr.mxu0 0.0
  %3813 = vmatpush1.msra.mxu0 0.0
  %3814 = vmatprep.subr.mxu0 0.0
  %3815 = vmatpush1.msra.mxu0 0.0
  %3816 = vmatprep.subr.mxu0 0.0
  %3817 = vmatpush1.msra.mxu0 0.0
  %3818 = vmatprep.subr.mxu0 0.0
  %3819 = vmatpush1.msra.mxu0 0.0
  %3820 = vmatprep.subr.mxu0 0.0
  %3821 = vmatpush1.msra.mxu0 0.0
  %3822 = vmatprep.subr.mxu0 0.0
  %3823 = vmatpush1.msra.mxu0 0.0
  %3824 = vmatprep.subr.mxu0 0.0
  %3825 = vmatpush1.msra.mxu0 0.0
  %3826 = vmatprep.subr.mxu0 0.0
  %3827 = vmatpush1.msra.mxu0 0.0
  %3828 = vmatprep.subr.mxu0 0.0
  %3829 = vmatpush1.msra.mxu0 0.0
  %3830 = vmatprep.subr.mxu0 0.0
  %3831 = vmatpush1.msra.mxu0 0.0
  %3832 = vmatprep.subr.mxu0 0.0
  %3833 = vmatpush1.msra.mxu0 0.0
  %3834 = vmatprep.subr.mxu0 0.0
  %3835 = vmatpush1.msra.mxu0 0.0
  %3836 = vmatprep.subr.mxu0 0.0
  %3837 = vmatpush1.msra.mxu0 0.0
  %3838 = vmatprep.subr.mxu0 0.0
  %3839 = vmatpush1.msra.mxu0 0.0
  %3840 = vmatprep.subr.mxu0 0.0
  %3841 = vmatpush1.msra.mxu0 0.0
  %3842 = vmatprep.subr.mxu0 0.0
  %3843 = vmatpush1.msra.mxu0 0.0
  %3844 = vmatprep.subr.mxu0 0.0
  %3845 = vmatpush1.msra.mxu0 0.0
  %3846 = vmatprep.subr.mxu0 0.0
  %3847 = vmatpush1.msra.mxu0 0.0
  %3848 = vmatprep.subr.mxu0 0.0
  %3849 = vmatpush1.msra.mxu0 0.0
  %3850 = vmatprep.subr.mxu0 0.0
  %3851 = vmatpush1.msra.mxu0 0.0
  %3852 = vmatprep.mubr.f32.mxu0 0.0
  %3853 = vmatmul.mubr.f32.gmra.mrb[0].mxu0 %v3786
  %v3854 = vpop.f32.mrb[0].mxu0
  %v3855 = vadd.f32 0.0, %v3854
  %v3856 = vpop.f32.mrb[0].mxu0
  %v3857 = vadd.f32 0.0, %v3856
  %3858 = vdwg.mxu0
  %3860 = vrot.lane.b32.xlu0 %v3782, 64
  %v3861 = vpop.permute.xlu0 %3860
  %v3862 = vsel %vm2866, %v3861, 0
  %3864 = vmatprep.subr.mxu0 %v3051
  %3865 = vmatpush1.msra.mxu0 %v3050
  %3866 = vmatprep.subr.mxu0 %v3053
  %3867 = vmatpush1.msra.mxu0 %v3052
  %3868 = vmatprep.subr.mxu0 %v3055
  %3869 = vmatpush1.msra.mxu0 %v3054
  %3870 = vmatprep.subr.mxu0 %v3057
  %3871 = vmatpush1.msra.mxu0 %v3056
  %3872 = vmatprep.subr.mxu0 %v3059
  %3873 = vmatpush1.msra.mxu0 %v3058
  %3874 = vmatprep.subr.mxu0 %v3061
  %3875 = vmatpush1.msra.mxu0 %v3060
  %3876 = vmatprep.subr.mxu0 %v3063
  %3877 = vmatpush1.msra.mxu0 %v3062
  %3878 = vmatprep.subr.mxu0 %v3065
  %3879 = vmatpush1.msra.mxu0 %v3064
  %3880 = vmatprep.subr.mxu0 0.0
  %3881 = vmatpush1.msra.mxu0 0.0
  %3882 = vmatprep.subr.mxu0 0.0
  %3883 = vmatpush1.msra.mxu0 0.0
  %3884 = vmatprep.subr.mxu0 0.0
  %3885 = vmatpush1.msra.mxu0 0.0
  %3886 = vmatprep.subr.mxu0 0.0
  %3887 = vmatpush1.msra.mxu0 0.0
  %3888 = vmatprep.subr.mxu0 0.0
  %3889 = vmatpush1.msra.mxu0 0.0
  %3890 = vmatprep.subr.mxu0 0.0
  %3891 = vmatpush1.msra.mxu0 0.0
  %3892 = vmatprep.subr.mxu0 0.0
  %3893 = vmatpush1.msra.mxu0 0.0
  %3894 = vmatprep.subr.mxu0 0.0
  %3895 = vmatpush1.msra.mxu0 0.0
  %3896 = vmatprep.subr.mxu0 0.0
  %3897 = vmatpush1.msra.mxu0 0.0
  %3898 = vmatprep.subr.mxu0 0.0
  %3899 = vmatpush1.msra.mxu0 0.0
  %3900 = vmatprep.subr.mxu0 0.0
  %3901 = vmatpush1.msra.mxu0 0.0
  %3902 = vmatprep.subr.mxu0 0.0
  %3903 = vmatpush1.msra.mxu0 0.0
  %3904 = vmatprep.subr.mxu0 0.0
  %3905 = vmatpush1.msra.mxu0 0.0
  %3906 = vmatprep.subr.mxu0 0.0
  %3907 = vmatpush1.msra.mxu0 0.0
  %3908 = vmatprep.subr.mxu0 0.0
  %3909 = vmatpush1.msra.mxu0 0.0
  %3910 = vmatprep.subr.mxu0 0.0
  %3911 = vmatpush1.msra.mxu0 0.0
  %3912 = vmatprep.subr.mxu0 0.0
  %3913 = vmatpush1.msra.mxu0 0.0
  %3914 = vmatprep.subr.mxu0 0.0
  %3915 = vmatpush1.msra.mxu0 0.0
  %3916 = vmatprep.subr.mxu0 0.0
  %3917 = vmatpush1.msra.mxu0 0.0
  %3918 = vmatprep.subr.mxu0 0.0
  %3919 = vmatpush1.msra.mxu0 0.0
  %3920 = vmatprep.subr.mxu0 0.0
  %3921 = vmatpush1.msra.mxu0 0.0
  %3922 = vmatprep.subr.mxu0 0.0
  %3923 = vmatpush1.msra.mxu0 0.0
  %3924 = vmatprep.subr.mxu0 0.0
  %3925 = vmatpush1.msra.mxu0 0.0
  %3926 = vmatprep.subr.mxu0 0.0
  %3927 = vmatpush1.msra.mxu0 0.0
  %3928 = vmatprep.mubr.f32.mxu0 0.0
  %3929 = vmatmul.mubr.f32.gmra.mrb[0].mxu0 %v3862
  %v3930 = vpop.f32.mrb[0].mxu0
  %v3931 = vadd.f32 %v3855, %v3930
  %v3932 = vpop.f32.mrb[0].mxu0
  %v3933 = vadd.f32 %v3857, %v3932
  %3934 = vdwg.mxu0
  %v3935 = vadd.f32 %v3931, %v3234
  %v3936 = vadd.f32 %v3933, %v3238
  %v3937 = vxor.u32 %v3935, 2147483648
  %v3938 = vmul.f32 %v3937, 1.442695
  %v3939 = vpow.pop %v3938
  %v3940 = vadd.f32 %v3939, 1.0
  %v3941 = vrcp.pop %v3940
  %v3942 = vmul.f32 1.0, %v3941
  %v3943 = vtanh.pop %v3936
  %v3944 = vxor.u32 %v3936, 2147483648
  %v3945 = vmul.f32 %v3944, 1.442695
  %v3946 = vpow.pop %v3945
  %v3947 = vadd.f32 %v3946, 1.0
  %v3948 = vrcp.pop %v3947
  %v3949 = vmul.f32 1.0, %v3948
  %v3950 = vmul.f32 %v3942, %v3609
  %v3951 = vmul.f32 %v3942, %v3943
  %3953 = vrot.lane.b32.xlu0 %v3951, 64
  %v3954 = vpop.permute.xlu0 %3953
  %v3956 = vadd.f32 %v3950, %v3954
  %v3957 = vtanh.pop %v3956
  %v3958 = vmul.f32 %v3949, %v3957
  %s3959 = scalar_lea.vmem %s1, 24
  %v3960 = vld [vmem:[%s3959] sm:$0xff]
  %3961 = vmatprep.subr.mxu0 %v2851
  %3962 = vmatpush1.msra.mxu0 %v2850
  %3963 = vmatprep.subr.mxu0 %v2853
  %3964 = vmatpush1.msra.mxu0 %v2852
  %3965 = vmatprep.subr.mxu0 %v2855
  %3966 = vmatpush1.msra.mxu0 %v2854
  %3967 = vmatprep.subr.mxu0 %v2857
  %3968 = vmatpush1.msra.mxu0 %v2856
  %3969 = vmatprep.subr.mxu0 %v2859
  %3970 = vmatpush1.msra.mxu0 %v2858
  %3971 = vmatprep.subr.mxu0 %v2861
  %3972 = vmatpush1.msra.mxu0 %v2860
  %3973 = vmatprep.subr.mxu0 %v2863
  %3974 = vmatpush1.msra.mxu0 %v2862
  %3975 = vmatprep.subr.mxu0 %v2865
  %3976 = vmatpush1.msra.mxu0 %v2864
  %3977 = vmatprep.subr.mxu0 0.0
  %3978 = vmatpush1.msra.mxu0 0.0
  %3979 = vmatprep.subr.mxu0 0.0
  %3980 = vmatpush1.msra.mxu0 0.0
  %3981 = vmatprep.subr.mxu0 0.0
  %3982 = vmatpush1.msra.mxu0 0.0
  %3983 = vmatprep.subr.mxu0 0.0
  %3984 = vmatpush1.msra.mxu0 0.0
  %3985 = vmatprep.subr.mxu0 0.0
  %3986 = vmatpush1.msra.mxu0 0.0
  %3987 = vmatprep.subr.mxu0 0.0
  %3988 = vmatpush1.msra.mxu0 0.0
  %3989 = vmatprep.subr.mxu0 0.0
  %3990 = vmatpush1.msra.mxu0 0.0
  %3991 = vmatprep.subr.mxu0 0.0
  %3992 = vmatpush1.msra.mxu0 0.0
  %3993 = vmatprep.subr.mxu0 0.0
  %3994 = vmatpush1.msra.mxu0 0.0
  %3995 = vmatprep.subr.mxu0 0.0
  %3996 = vmatpush1.msra.mxu0 0.0
  %3997 = vmatprep.subr.mxu0 0.0
  %3998 = vmatpush1.msra.mxu0 0.0
  %3999 = vmatprep.subr.mxu0 0.0
  %4000 = vmatpush1.msra.mxu0 0.0
  %4001 = vmatprep.subr.mxu0 0.0
  %4002 = vmatpush1.msra.mxu0 0.0
  %4003 = vmatprep.subr.mxu0 0.0
  %4004 = vmatpush1.msra.mxu0 0.0
  %4005 = vmatprep.subr.mxu0 0.0
  %4006 = vmatpush1.msra.mxu0 0.0
  %4007 = vmatprep.subr.mxu0 0.0
  %4008 = vmatpush1.msra.mxu0 0.0
  %4009 = vmatprep.subr.mxu0 0.0
  %4010 = vmatpush1.msra.mxu0 0.0
  %4011 = vmatprep.subr.mxu0 0.0
  %4012 = vmatpush1.msra.mxu0 0.0
  %4013 = vmatprep.subr.mxu0 0.0
  %4014 = vmatpush1.msra.mxu0 0.0
  %4015 = vmatprep.subr.mxu0 0.0
  %4016 = vmatpush1.msra.mxu0 0.0
  %4017 = vmatprep.subr.mxu0 0.0
  %4018 = vmatpush1.msra.mxu0 0.0
  %4019 = vmatprep.subr.mxu0 0.0
  %4020 = vmatpush1.msra.mxu0 0.0
  %4021 = vmatprep.subr.mxu0 0.0
  %4022 = vmatpush1.msra.mxu0 0.0
  %4023 = vmatprep.subr.mxu0 0.0
  %4024 = vmatpush1.msra.mxu0 0.0
  %4025 = vmatprep.mubr.f32.mxu0 0.0
  %4026 = vmatmul.mubr.f32.gmra.mrb[0].mxu0 %v3862
  %v4027 = vpop.f32.mrb[0].mxu0
  %v4028 = vadd.f32 0.0, %v4027
  %v4029 = vpop.f32.mrb[0].mxu0
  %v4030 = vadd.f32 0.0, %v4029
  %4031 = vdwg.mxu0
  %v4033 = vsel %vm62, %v3960, 0
  %4035 = vmatprep.subr.mxu0 %v2843
  %4036 = vmatpush1.msra.mxu0 %v2842
  %4037 = vmatprep.subr.mxu0 %v2845
  %4038 = vmatpush1.msra.mxu0 %v2844
  %4039 = vmatprep.subr.mxu0 %v2847
  %4040 = vmatpush1.msra.mxu0 %v2846
  %4041 = vmatprep.subr.mxu0 %v2849
  %4042 = vmatpush1.msra.mxu0 %v2848
  %4043 = vmatprep.subr.mxu0 0.0
  %4044 = vmatpush1.msra.mxu0 0.0
  %4045 = vmatprep.subr.mxu0 0.0
  %4046 = vmatpush1.msra.mxu0 0.0
  %4047 = vmatprep.subr.mxu0 0.0
  %4048 = vmatpush1.msra.mxu0 0.0
  %4049 = vmatprep.subr.mxu0 0.0
  %4050 = vmatpush1.msra.mxu0 0.0
  %4051 = vmatprep.subr.mxu0 0.0
  %4052 = vmatpush1.msra.mxu0 0.0
  %4053 = vmatprep.subr.mxu0 0.0
  %4054 = vmatpush1.msra.mxu0 0.0
  %4055 = vmatprep.subr.mxu0 0.0
  %4056 = vmatpush1.msra.mxu0 0.0
  %4057 = vmatprep.subr.mxu0 0.0
  %4058 = vmatpush1.msra.mxu0 0.0
  %4059 = vmatprep.subr.mxu0 0.0
  %4060 = vmatpush1.msra.mxu0 0.0
  %4061 = vmatprep.subr.mxu0 0.0
  %4062 = vmatpush1.msra.mxu0 0.0
  %4063 = vmatprep.subr.mxu0 0.0
  %4064 = vmatpush1.msra.mxu0 0.0
  %4065 = vmatprep.subr.mxu0 0.0
  %4066 = vmatpush1.msra.mxu0 0.0
  %4067 = vmatprep.subr.mxu0 0.0
  %4068 = vmatpush1.msra.mxu0 0.0
  %4069 = vmatprep.subr.mxu0 0.0
  %4070 = vmatpush1.msra.mxu0 0.0
  %4071 = vmatprep.subr.mxu0 0.0
  %4072 = vmatpush1.msra.mxu0 0.0
  %4073 = vmatprep.subr.mxu0 0.0
  %4074 = vmatpush1.msra.mxu0 0.0
  %4075 = vmatprep.subr.mxu0 0.0
  %4076 = vmatpush1.msra.mxu0 0.0
  %4077 = vmatprep.subr.mxu0 0.0
  %4078 = vmatpush1.msra.mxu0 0.0
  %4079 = vmatprep.subr.mxu0 0.0
  %4080 = vmatpush1.msra.mxu0 0.0
  %4081 = vmatprep.subr.mxu0 0.0
  %4082 = vmatpush1.msra.mxu0 0.0
  %4083 = vmatprep.subr.mxu0 0.0
  %4084 = vmatpush1.msra.mxu0 0.0
  %4085 = vmatprep.subr.mxu0 0.0
  %4086 = vmatpush1.msra.mxu0 0.0
  %4087 = vmatprep.subr.mxu0 0.0
  %4088 = vmatpush1.msra.mxu0 0.0
  %4089 = vmatprep.subr.mxu0 0.0
  %4090 = vmatpush1.msra.mxu0 0.0
  %4091 = vmatprep.subr.mxu0 0.0
  %4092 = vmatpush1.msra.mxu0 0.0
  %4093 = vmatprep.subr.mxu0 0.0
  %4094 = vmatpush1.msra.mxu0 0.0
  %4095 = vmatprep.subr.mxu0 0.0
  %4096 = vmatpush1.msra.mxu0 0.0
  %4097 = vmatprep.subr.mxu0 0.0
  %4098 = vmatpush1.msra.mxu0 0.0
  %4099 = vmatprep.mubr.f32.mxu0 0.0
  %4100 = vmatmul.mubr.f32.gmra.mrb[0].mxu0 %v4033
  %v4101 = vpop.f32.mrb[0].mxu0
  %v4102 = vadd.f32 %v4028, %v4101
  %v4103 = vpop.f32.mrb[0].mxu0
  %v4104 = vadd.f32 %v4030, %v4103
  %4105 = vdwg.mxu0
  %v4106 = vadd.f32 %v4102, %v3019
  %v4107 = vadd.f32 %v4104, %v3023
  %v4108 = vxor.u32 %v4106, 2147483648
  %v4109 = vmul.f32 %v4108, 1.442695
  %v4110 = vpow.pop %v4109
  %v4111 = vadd.f32 %v4110, 1.0
  %v4112 = vrcp.pop %v4111
  %v4113 = vmul.f32 1.0, %v4112
  %v4114 = vtanh.pop %v4107
  %v4115 = vxor.u32 %v4107, 2147483648
  %v4116 = vmul.f32 %v4115, 1.442695
  %v4117 = vpow.pop %v4116
  %v4118 = vadd.f32 %v4117, 1.0
  %v4119 = vrcp.pop %v4118
  %v4120 = vmul.f32 1.0, %v4119
  %v4121 = vmul.f32 %v4113, %v3780
  %v4122 = vmul.f32 %v4113, %v4114
  %4124 = vrot.lane.b32.xlu0 %v4122, 64
  %v4125 = vpop.permute.xlu0 %4124
  %v4127 = vadd.f32 %v4121, %v4125
  %v4128 = vtanh.pop %v4127
  %v4129 = vmul.f32 %v4120, %v4128
  %4131 = vrot.lane.b32.xlu0 %v3958, 64
  %v4132 = vpop.permute.xlu0 %4131
  %v4133 = vsel %vm2866, %v4132, 0
  %4135 = vmatprep.subr.mxu0 %v3067
  %4136 = vmatpush1.msra.mxu0 %v3066
  %4137 = vmatprep.subr.mxu0 %v3069
  %4138 = vmatpush1.msra.mxu0 %v3068
  %4139 = vmatprep.subr.mxu0 %v3071
  %4140 = vmatpush1.msra.mxu0 %v3070
  %4141 = vmatprep.subr.mxu0 %v3073
  %4142 = vmatpush1.msra.mxu0 %v3072
  %4143 = vmatprep.subr.mxu0 %v3075
  %4144 = vmatpush1.msra.mxu0 %v3074
  %4145 = vmatprep.subr.mxu0 %v3077
  %4146 = vmatpush1.msra.mxu0 %v3076
  %4147 = vmatprep.subr.mxu0 %v3079
  %4148 = vmatpush1.msra.mxu0 %v3078
  %4149 = vmatprep.subr.mxu0 %v3081
  %4150 = vmatpush1.msra.mxu0 %v3080
  %4151 = vmatprep.subr.mxu0 0.0
  %4152 = vmatpush1.msra.mxu0 0.0
  %4153 = vmatprep.subr.mxu0 0.0
  %4154 = vmatpush1.msra.mxu0 0.0
  %4155 = vmatprep.subr.mxu0 0.0
  %4156 = vmatpush1.msra.mxu0 0.0
  %4157 = vmatprep.subr.mxu0 0.0
  %4158 = vmatpush1.msra.mxu0 0.0
  %4159 = vmatprep.subr.mxu0 0.0
  %4160 = vmatpush1.msra.mxu0 0.0
  %4161 = vmatprep.subr.mxu0 0.0
  %4162 = vmatpush1.msra.mxu0 0.0
  %4163 = vmatprep.subr.mxu0 0.0
  %4164 = vmatpush1.msra.mxu0 0.0
  %4165 = vmatprep.subr.mxu0 0.0
  %4166 = vmatpush1.msra.mxu0 0.0
  %4167 = vmatprep.subr.mxu0 0.0
  %4168 = vmatpush1.msra.mxu0 0.0
  %4169 = vmatprep.subr.mxu0 0.0
  %4170 = vmatpush1.msra.mxu0 0.0
  %4171 = vmatprep.subr.mxu0 0.0
  %4172 = vmatpush1.msra.mxu0 0.0
  %4173 = vmatprep.subr.mxu0 0.0
  %4174 = vmatpush1.msra.mxu0 0.0
  %4175 = vmatprep.subr.mxu0 0.0
  %4176 = vmatpush1.msra.mxu0 0.0
  %4177 = vmatprep.subr.mxu0 0.0
  %4178 = vmatpush1.msra.mxu0 0.0
  %4179 = vmatprep.subr.mxu0 0.0
  %4180 = vmatpush1.msra.mxu0 0.0
  %4181 = vmatprep.subr.mxu0 0.0
  %4182 = vmatpush1.msra.mxu0 0.0
  %4183 = vmatprep.subr.mxu0 0.0
  %4184 = vmatpush1.msra.mxu0 0.0
  %4185 = vmatprep.subr.mxu0 0.0
  %4186 = vmatpush1.msra.mxu0 0.0
  %4187 = vmatprep.subr.mxu0 0.0
  %4188 = vmatpush1.msra.mxu0 0.0
  %4189 = vmatprep.subr.mxu0 0.0
  %4190 = vmatpush1.msra.mxu0 0.0
  %4191 = vmatprep.subr.mxu0 0.0
  %4192 = vmatpush1.msra.mxu0 0.0
  %4193 = vmatprep.subr.mxu0 0.0
  %4194 = vmatpush1.msra.mxu0 0.0
  %4195 = vmatprep.subr.mxu0 0.0
  %4196 = vmatpush1.msra.mxu0 0.0
  %4197 = vmatprep.subr.mxu0 0.0
  %4198 = vmatpush1.msra.mxu0 0.0
  %4199 = vmatprep.mubr.f32.mxu0 0.0
  %4200 = vmatmul.mubr.f32.gmra.mrb[0].mxu0 %v4133
  %v4201 = vpop.f32.mrb[0].mxu0
  %v4202 = vadd.f32 0.0, %v4201
  %v4203 = vpop.f32.mrb[0].mxu0
  %v4204 = vadd.f32 0.0, %v4203
  %4205 = vdwg.mxu0
  %4207 = vrot.lane.b32.xlu0 %v4129, 64
  %v4208 = vpop.permute.xlu0 %4207
  %v4209 = vsel %vm2866, %v4208, 0
  %4211 = vmatprep.subr.mxu0 %v3051
  %4212 = vmatpush1.msra.mxu0 %v3050
  %4213 = vmatprep.subr.mxu0 %v3053
  %4214 = vmatpush1.msra.mxu0 %v3052
  %4215 = vmatprep.subr.mxu0 %v3055
  %4216 = vmatpush1.msra.mxu0 %v3054
  %4217 = vmatprep.subr.mxu0 %v3057
  %4218 = vmatpush1.msra.mxu0 %v3056
  %4219 = vmatprep.subr.mxu0 %v3059
  %4220 = vmatpush1.msra.mxu0 %v3058
  %4221 = vmatprep.subr.mxu0 %v3061
  %4222 = vmatpush1.msra.mxu0 %v3060
  %4223 = vmatprep.subr.mxu0 %v3063
  %4224 = vmatpush1.msra.mxu0 %v3062
  %4225 = vmatprep.subr.mxu0 %v3065
  %4226 = vmatpush1.msra.mxu0 %v3064
  %4227 = vmatprep.subr.mxu0 0.0
  %4228 = vmatpush1.msra.mxu0 0.0
  %4229 = vmatprep.subr.mxu0 0.0
  %4230 = vmatpush1.msra.mxu0 0.0
  %4231 = vmatprep.subr.mxu0 0.0
  %4232 = vmatpush1.msra.mxu0 0.0
  %4233 = vmatprep.subr.mxu0 0.0
  %4234 = vmatpush1.msra.mxu0 0.0
  %4235 = vmatprep.subr.mxu0 0.0
  %4236 = vmatpush1.msra.mxu0 0.0
  %4237 = vmatprep.subr.mxu0 0.0
  %4238 = vmatpush1.msra.mxu0 0.0
  %4239 = vmatprep.subr.mxu0 0.0
  %4240 = vmatpush1.msra.mxu0 0.0
  %4241 = vmatprep.subr.mxu0 0.0
  %4242 = vmatpush1.msra.mxu0 0.0
  %4243 = vmatprep.subr.mxu0 0.0
  %4244 = vmatpush1.msra.mxu0 0.0
  %4245 = vmatprep.subr.mxu0 0.0
  %4246 = vmatpush1.msra.mxu0 0.0
  %4247 = vmatprep.subr.mxu0 0.0
  %4248 = vmatpush1.msra.mxu0 0.0
  %4249 = vmatprep.subr.mxu0 0.0
  %4250 = vmatpush1.msra.mxu0 0.0
  %4251 = vmatprep.subr.mxu0 0.0
  %4252 = vmatpush1.msra.mxu0 0.0
  %4253 = vmatprep.subr.mxu0 0.0
  %4254 = vmatpush1.msra.mxu0 0.0
  %4255 = vmatprep.subr.mxu0 0.0
  %4256 = vmatpush1.msra.mxu0 0.0
  %4257 = vmatprep.subr.mxu0 0.0
  %4258 = vmatpush1.msra.mxu0 0.0
  %4259 = vmatprep.subr.mxu0 0.0
  %4260 = vmatpush1.msra.mxu0 0.0
  %4261 = vmatprep.subr.mxu0 0.0
  %4262 = vmatpush1.msra.mxu0 0.0
  %4263 = vmatprep.subr.mxu0 0.0
  %4264 = vmatpush1.msra.mxu0 0.0
  %4265 = vmatprep.subr.mxu0 0.0
  %4266 = vmatpush1.msra.mxu0 0.0
  %4267 = vmatprep.subr.mxu0 0.0
  %4268 = vmatpush1.msra.mxu0 0.0
  %4269 = vmatprep.subr.mxu0 0.0
  %4270 = vmatpush1.msra.mxu0 0.0
  %4271 = vmatprep.subr.mxu0 0.0
  %4272 = vmatpush1.msra.mxu0 0.0
  %4273 = vmatprep.subr.mxu0 0.0
  %4274 = vmatpush1.msra.mxu0 0.0
  %4275 = vmatprep.mubr.f32.mxu0 0.0
  %4276 = vmatmul.mubr.f32.gmra.mrb[0].mxu0 %v4209
  %v4277 = vpop.f32.mrb[0].mxu0
  %v4278 = vadd.f32 %v4202, %v4277
  %v4279 = vpop.f32.mrb[0].mxu0
  %v4280 = vadd.f32 %v4204, %v4279
  %4281 = vdwg.mxu0
  %v4282 = vadd.f32 %v4278, %v3234
  %v4283 = vadd.f32 %v4280, %v3238
  %v4284 = vxor.u32 %v4282, 2147483648
  %v4285 = vmul.f32 %v4284, 1.442695
  %v4286 = vpow.pop %v4285
  %v4287 = vadd.f32 %v4286, 1.0
  %v4288 = vrcp.pop %v4287
  %v4289 = vmul.f32 1.0, %v4288
  %v4290 = vtanh.pop %v4283
  %v4291 = vxor.u32 %v4283, 2147483648
  %v4292 = vmul.f32 %v4291, 1.442695
  %v4293 = vpow.pop %v4292
  %v4294 = vadd.f32 %v4293, 1.0
  %v4295 = vrcp.pop %v4294
  %v4296 = vmul.f32 1.0, %v4295
  %v4297 = vmul.f32 %v4289, %v3956
  %v4298 = vmul.f32 %v4289, %v4290
  %4300 = vrot.lane.b32.xlu0 %v4298, 64
  %v4301 = vpop.permute.xlu0 %4300
  %v4303 = vadd.f32 %v4297, %v4301
  %v4304 = vtanh.pop %v4303
  %v4305 = vmul.f32 %v4296, %v4304
  %s4306 = scalar_lea.vmem %s1, 32
  %v4307 = vld [vmem:[%s4306] sm:$0xff]
  %4308 = vmatprep.subr.mxu0 %v2851
  %4309 = vmatpush1.msra.mxu0 %v2850
  %4310 = vmatprep.subr.mxu0 %v2853
  %4311 = vmatpush1.msra.mxu0 %v2852
  %4312 = vmatprep.subr.mxu0 %v2855
  %4313 = vmatpush1.msra.mxu0 %v2854
  %4314 = vmatprep.subr.mxu0 %v2857
  %4315 = vmatpush1.msra.mxu0 %v2856
  %4316 = vmatprep.subr.mxu0 %v2859
  %4317 = vmatpush1.msra.mxu0 %v2858
  %4318 = vmatprep.subr.mxu0 %v2861
  %4319 = vmatpush1.msra.mxu0 %v2860
  %4320 = vmatprep.subr.mxu0 %v2863
  %4321 = vmatpush1.msra.mxu0 %v2862
  %4322 = vmatprep.subr.mxu0 %v2865
  %4323 = vmatpush1.msra.mxu0 %v2864
  %4324 = vmatprep.subr.mxu0 0.0
  %4325 = vmatpush1.msra.mxu0 0.0
  %4326 = vmatprep.subr.mxu0 0.0
  %4327 = vmatpush1.msra.mxu0 0.0
  %4328 = vmatprep.subr.mxu0 0.0
  %4329 = vmatpush1.msra.mxu0 0.0
  %4330 = vmatprep.subr.mxu0 0.0
  %4331 = vmatpush1.msra.mxu0 0.0
  %4332 = vmatprep.subr.mxu0 0.0
  %4333 = vmatpush1.msra.mxu0 0.0
  %4334 = vmatprep.subr.mxu0 0.0
  %4335 = vmatpush1.msra.mxu0 0.0
  %4336 = vmatprep.subr.mxu0 0.0
  %4337 = vmatpush1.msra.mxu0 0.0
  %4338 = vmatprep.subr.mxu0 0.0
  %4339 = vmatpush1.msra.mxu0 0.0
  %4340 = vmatprep.subr.mxu0 0.0
  %4341 = vmatpush1.msra.mxu0 0.0
  %4342 = vmatprep.subr.mxu0 0.0
  %4343 = vmatpush1.msra.mxu0 0.0
  %4344 = vmatprep.subr.mxu0 0.0
  %4345 = vmatpush1.msra.mxu0 0.0
  %4346 = vmatprep.subr.mxu0 0.0
  %4347 = vmatpush1.msra.mxu0 0.0
  %4348 = vmatprep.subr.mxu0 0.0
  %4349 = vmatpush1.msra.mxu0 0.0
  %4350 = vmatprep.subr.mxu0 0.0
  %4351 = vmatpush1.msra.mxu0 0.0
  %4352 = vmatprep.subr.mxu0 0.0
  %4353 = vmatpush1.msra.mxu0 0.0
  %4354 = vmatprep.subr.mxu0 0.0
  %4355 = vmatpush1.msra.mxu0 0.0
  %4356 = vmatprep.subr.mxu0 0.0
  %4357 = vmatpush1.msra.mxu0 0.0
  %4358 = vmatprep.subr.mxu0 0.0
  %4359 = vmatpush1.msra.mxu0 0.0
  %4360 = vmatprep.subr.mxu0 0.0
  %4361 = vmatpush1.msra.mxu0 0.0
  %4362 = vmatprep.subr.mxu0 0.0
  %4363 = vmatpush1.msra.mxu0 0.0
  %4364 = vmatprep.subr.mxu0 0.0
  %4365 = vmatpush1.msra.mxu0 0.0
  %4366 = vmatprep.subr.mxu0 0.0
  %4367 = vmatpush1.msra.mxu0 0.0
  %4368 = vmatprep.subr.mxu0 0.0
  %4369 = vmatpush1.msra.mxu0 0.0
  %4370 = vmatprep.subr.mxu0 0.0
  %4371 = vmatpush1.msra.mxu0 0.0
  %4372 = vmatprep.mubr.f32.mxu0 0.0
  %4373 = vmatmul.mubr.f32.gmra.mrb[0].mxu0 %v4209
  %v4374 = vpop.f32.mrb[0].mxu0
  %v4375 = vadd.f32 0.0, %v4374
  %v4376 = vpop.f32.mrb[0].mxu0
  %v4377 = vadd.f32 0.0, %v4376
  %4378 = vdwg.mxu0
  %v4380 = vsel %vm62, %v4307, 0
  %4382 = vmatprep.subr.mxu0 %v2843
  %4383 = vmatpush1.msra.mxu0 %v2842
  %4384 = vmatprep.subr.mxu0 %v2845
  %4385 = vmatpush1.msra.mxu0 %v2844
  %4386 = vmatprep.subr.mxu0 %v2847
  %4387 = vmatpush1.msra.mxu0 %v2846
  %4388 = vmatprep.subr.mxu0 %v2849
  %4389 = vmatpush1.msra.mxu0 %v2848
  %4390 = vmatprep.subr.mxu0 0.0
  %4391 = vmatpush1.msra.mxu0 0.0
  %4392 = vmatprep.subr.mxu0 0.0
  %4393 = vmatpush1.msra.mxu0 0.0
  %4394 = vmatprep.subr.mxu0 0.0
  %4395 = vmatpush1.msra.mxu0 0.0
  %4396 = vmatprep.subr.mxu0 0.0
  %4397 = vmatpush1.msra.mxu0 0.0
  %4398 = vmatprep.subr.mxu0 0.0
  %4399 = vmatpush1.msra.mxu0 0.0
  %4400 = vmatprep.subr.mxu0 0.0
  %4401 = vmatpush1.msra.mxu0 0.0
  %4402 = vmatprep.subr.mxu0 0.0
  %4403 = vmatpush1.msra.mxu0 0.0
  %4404 = vmatprep.subr.mxu0 0.0
  %4405 = vmatpush1.msra.mxu0 0.0
  %4406 = vmatprep.subr.mxu0 0.0
  %4407 = vmatpush1.msra.mxu0 0.0
  %4408 = vmatprep.subr.mxu0 0.0
  %4409 = vmatpush1.msra.mxu0 0.0
  %4410 = vmatprep.subr.mxu0 0.0
  %4411 = vmatpush1.msra.mxu0 0.0
  %4412 = vmatprep.subr.mxu0 0.0
  %4413 = vmatpush1.msra.mxu0 0.0
  %4414 = vmatprep.subr.mxu0 0.0
  %4415 = vmatpush1.msra.mxu0 0.0
  %4416 = vmatprep.subr.mxu0 0.0
  %4417 = vmatpush1.msra.mxu0 0.0
  %4418 = vmatprep.subr.mxu0 0.0
  %4419 = vmatpush1.msra.mxu0 0.0
  %4420 = vmatprep.subr.mxu0 0.0
  %4421 = vmatpush1.msra.mxu0 0.0
  %4422 = vmatprep.subr.mxu0 0.0
  %4423 = vmatpush1.msra.mxu0 0.0
  %4424 = vmatprep.subr.mxu0 0.0
  %4425 = vmatpush1.msra.mxu0 0.0
  %4426 = vmatprep.subr.mxu0 0.0
  %4427 = vmatpush1.msra.mxu0 0.0
  %4428 = vmatprep.subr.mxu0 0.0
  %4429 = vmatpush1.msra.mxu0 0.0
  %4430 = vmatprep.subr.mxu0 0.0
  %4431 = vmatpush1.msra.mxu0 0.0
  %4432 = vmatprep.subr.mxu0 0.0
  %4433 = vmatpush1.msra.mxu0 0.0
  %4434 = vmatprep.subr.mxu0 0.0
  %4435 = vmatpush1.msra.mxu0 0.0
  %4436 = vmatprep.subr.mxu0 0.0
  %4437 = vmatpush1.msra.mxu0 0.0
  %4438 = vmatprep.subr.mxu0 0.0
  %4439 = vmatpush1.msra.mxu0 0.0
  %4440 = vmatprep.subr.mxu0 0.0
  %4441 = vmatpush1.msra.mxu0 0.0
  %4442 = vmatprep.subr.mxu0 0.0
  %4443 = vmatpush1.msra.mxu0 0.0
  %4444 = vmatprep.subr.mxu0 0.0
  %4445 = vmatpush1.msra.mxu0 0.0
  %4446 = vmatprep.mubr.f32.mxu0 0.0
  %4447 = vmatmul.mubr.f32.gmra.mrb[0].mxu0 %v4380
  %v4448 = vpop.f32.mrb[0].mxu0
  %v4449 = vadd.f32 %v4375, %v4448
  %v4450 = vpop.f32.mrb[0].mxu0
  %v4451 = vadd.f32 %v4377, %v4450
  %4452 = vdwg.mxu0
  %v4453 = vadd.f32 %v4449, %v3019
  %v4454 = vadd.f32 %v4451, %v3023
  %v4455 = vxor.u32 %v4453, 2147483648
  %v4456 = vmul.f32 %v4455, 1.442695
  %v4457 = vpow.pop %v4456
  %v4458 = vadd.f32 %v4457, 1.0
  %v4459 = vrcp.pop %v4458
  %v4460 = vmul.f32 1.0, %v4459
  %v4461 = vtanh.pop %v4454
  %v4462 = vxor.u32 %v4454, 2147483648
  %v4463 = vmul.f32 %v4462, 1.442695
  %v4464 = vpow.pop %v4463
  %v4465 = vadd.f32 %v4464, 1.0
  %v4466 = vrcp.pop %v4465
  %v4467 = vmul.f32 1.0, %v4466
  %v4468 = vmul.f32 %v4460, %v4127
  %v4469 = vmul.f32 %v4460, %v4461
  %4471 = vrot.lane.b32.xlu0 %v4469, 64
  %v4472 = vpop.permute.xlu0 %4471
  %v4474 = vadd.f32 %v4468, %v4472
  %v4475 = vtanh.pop %v4474
  %v4476 = vmul.f32 %v4467, %v4475
  %4478 = vrot.lane.b32.xlu0 %v4305, 64
  %v4479 = vpop.permute.xlu0 %4478
  %v4480 = vsel %vm2866, %v4479, 0
  %4482 = vmatprep.subr.mxu0 %v3067
  %4483 = vmatpush1.msra.mxu0 %v3066
  %4484 = vmatprep.subr.mxu0 %v3069
  %4485 = vmatpush1.msra.mxu0 %v3068
  %4486 = vmatprep.subr.mxu0 %v3071
  %4487 = vmatpush1.msra.mxu0 %v3070
  %4488 = vmatprep.subr.mxu0 %v3073
  %4489 = vmatpush1.msra.mxu0 %v3072
  %4490 = vmatprep.subr.mxu0 %v3075
  %4491 = vmatpush1.msra.mxu0 %v3074
  %4492 = vmatprep.subr.mxu0 %v3077
  %4493 = vmatpush1.msra.mxu0 %v3076
  %4494 = vmatprep.subr.mxu0 %v3079
  %4495 = vmatpush1.msra.mxu0 %v3078
  %4496 = vmatprep.subr.mxu0 %v3081
  %4497 = vmatpush1.msra.mxu0 %v3080
  %4498 = vmatprep.subr.mxu0 0.0
  %4499 = vmatpush1.msra.mxu0 0.0
  %4500 = vmatprep.subr.mxu0 0.0
  %4501 = vmatpush1.msra.mxu0 0.0
  %4502 = vmatprep.subr.mxu0 0.0
  %4503 = vmatpush1.msra.mxu0 0.0
  %4504 = vmatprep.subr.mxu0 0.0
  %4505 = vmatpush1.msra.mxu0 0.0
  %4506 = vmatprep.subr.mxu0 0.0
  %4507 = vmatpush1.msra.mxu0 0.0
  %4508 = vmatprep.subr.mxu0 0.0
  %4509 = vmatpush1.msra.mxu0 0.0
  %4510 = vmatprep.subr.mxu0 0.0
  %4511 = vmatpush1.msra.mxu0 0.0
  %4512 = vmatprep.subr.mxu0 0.0
  %4513 = vmatpush1.msra.mxu0 0.0
  %4514 = vmatprep.subr.mxu0 0.0
  %4515 = vmatpush1.msra.mxu0 0.0
  %4516 = vmatprep.subr.mxu0 0.0
  %4517 = vmatpush1.msra.mxu0 0.0
  %4518 = vmatprep.subr.mxu0 0.0
  %4519 = vmatpush1.msra.mxu0 0.0
  %4520 = vmatprep.subr.mxu0 0.0
  %4521 = vmatpush1.msra.mxu0 0.0
  %4522 = vmatprep.subr.mxu0 0.0
  %4523 = vmatpush1.msra.mxu0 0.0
  %4524 = vmatprep.subr.mxu0 0.0
  %4525 = vmatpush1.msra.mxu0 0.0
  %4526 = vmatprep.subr.mxu0 0.0
  %4527 = vmatpush1.msra.mxu0 0.0
  %4528 = vmatprep.subr.mxu0 0.0
  %4529 = vmatpush1.msra.mxu0 0.0
  %4530 = vmatprep.subr.mxu0 0.0
  %4531 = vmatpush1.msra.mxu0 0.0
  %4532 = vmatprep.subr.mxu0 0.0
  %4533 = vmatpush1.msra.mxu0 0.0
  %4534 = vmatprep.subr.mxu0 0.0
  %4535 = vmatpush1.msra.mxu0 0.0
  %4536 = vmatprep.subr.mxu0 0.0
  %4537 = vmatpush1.msra.mxu0 0.0
  %4538 = vmatprep.subr.mxu0 0.0
  %4539 = vmatpush1.msra.mxu0 0.0
  %4540 = vmatprep.subr.mxu0 0.0
  %4541 = vmatpush1.msra.mxu0 0.0
  %4542 = vmatprep.subr.mxu0 0.0
  %4543 = vmatpush1.msra.mxu0 0.0
  %4544 = vmatprep.subr.mxu0 0.0
  %4545 = vmatpush1.msra.mxu0 0.0
  %4546 = vmatprep.mubr.f32.mxu0 0.0
  %4547 = vmatmul.mubr.f32.gmra.mrb[0].mxu0 %v4480
  %v4548 = vpop.f32.mrb[0].mxu0
  %v4549 = vadd.f32 0.0, %v4548
  %v4550 = vpop.f32.mrb[0].mxu0
  %v4551 = vadd.f32 0.0, %v4550
  %4552 = vdwg.mxu0
  %4554 = vrot.lane.b32.xlu0 %v4476, 64
  %v4555 = vpop.permute.xlu0 %4554
  %v4556 = vsel %vm2866, %v4555, 0
  %4558 = vmatprep.subr.mxu0 %v3051
  %4559 = vmatpush1.msra.mxu0 %v3050
  %4560 = vmatprep.subr.mxu0 %v3053
  %4561 = vmatpush1.msra.mxu0 %v3052
  %4562 = vmatprep.subr.mxu0 %v3055
  %4563 = vmatpush1.msra.mxu0 %v3054
  %4564 = vmatprep.subr.mxu0 %v3057
  %4565 = vmatpush1.msra.mxu0 %v3056
  %4566 = vmatprep.subr.mxu0 %v3059
  %4567 = vmatpush1.msra.mxu0 %v3058
  %4568 = vmatprep.subr.mxu0 %v3061
  %4569 = vmatpush1.msra.mxu0 %v3060
  %4570 = vmatprep.subr.mxu0 %v3063
  %4571 = vmatpush1.msra.mxu0 %v3062
  %4572 = vmatprep.subr.mxu0 %v3065
  %4573 = vmatpush1.msra.mxu0 %v3064
  %4574 = vmatprep.subr.mxu0 0.0
  %4575 = vmatpush1.msra.mxu0 0.0
  %4576 = vmatprep.subr.mxu0 0.0
  %4577 = vmatpush1.msra.mxu0 0.0
  %4578 = vmatprep.subr.mxu0 0.0
  %4579 = vmatpush1.msra.mxu0 0.0
  %4580 = vmatprep.subr.mxu0 0.0
  %4581 = vmatpush1.msra.mxu0 0.0
  %4582 = vmatprep.subr.mxu0 0.0
  %4583 = vmatpush1.msra.mxu0 0.0
  %4584 = vmatprep.subr.mxu0 0.0
  %4585 = vmatpush1.msra.mxu0 0.0
  %4586 = vmatprep.subr.mxu0 0.0
  %4587 = vmatpush1.msra.mxu0 0.0
  %4588 = vmatprep.subr.mxu0 0.0
  %4589 = vmatpush1.msra.mxu0 0.0
  %4590 = vmatprep.subr.mxu0 0.0
  %4591 = vmatpush1.msra.mxu0 0.0
  %4592 = vmatprep.subr.mxu0 0.0
  %4593 = vmatpush1.msra.mxu0 0.0
  %4594 = vmatprep.subr.mxu0 0.0
  %4595 = vmatpush1.msra.mxu0 0.0
  %4596 = vmatprep.subr.mxu0 0.0
  %4597 = vmatpush1.msra.mxu0 0.0
  %4598 = vmatprep.subr.mxu0 0.0
  %4599 = vmatpush1.msra.mxu0 0.0
  %4600 = vmatprep.subr.mxu0 0.0
  %4601 = vmatpush1.msra.mxu0 0.0
  %4602 = vmatprep.subr.mxu0 0.0
  %4603 = vmatpush1.msra.mxu0 0.0
  %4604 = vmatprep.subr.mxu0 0.0
  %4605 = vmatpush1.msra.mxu0 0.0
  %4606 = vmatprep.subr.mxu0 0.0
  %4607 = vmatpush1.msra.mxu0 0.0
  %4608 = vmatprep.subr.mxu0 0.0
  %4609 = vmatpush1.msra.mxu0 0.0
  %4610 = vmatprep.subr.mxu0 0.0
  %4611 = vmatpush1.msra.mxu0 0.0
  %4612 = vmatprep.subr.mxu0 0.0
  %4613 = vmatpush1.msra.mxu0 0.0
  %4614 = vmatprep.subr.mxu0 0.0
  %4615 = vmatpush1.msra.mxu0 0.0
  %4616 = vmatprep.subr.mxu0 0.0
  %4617 = vmatpush1.msra.mxu0 0.0
  %4618 = vmatprep.subr.mxu0 0.0
  %4619 = vmatpush1.msra.mxu0 0.0
  %4620 = vmatprep.subr.mxu0 0.0
  %4621 = vmatpush1.msra.mxu0 0.0
  %4622 = vmatprep.mubr.f32.mxu0 0.0
  %4623 = vmatmul.mubr.f32.gmra.mrb[0].mxu0 %v4556
  %v4624 = vpop.f32.mrb[0].mxu0
  %v4625 = vadd.f32 %v4549, %v4624
  %v4626 = vpop.f32.mrb[0].mxu0
  %v4627 = vadd.f32 %v4551, %v4626
  %4628 = vdwg.mxu0
  %v4629 = vadd.f32 %v4625, %v3234
  %v4630 = vadd.f32 %v4627, %v3238
  %v4631 = vxor.u32 %v4629, 2147483648
  %v4632 = vmul.f32 %v4631, 1.442695
  %v4633 = vpow.pop %v4632
  %v4634 = vadd.f32 %v4633, 1.0
  %v4635 = vrcp.pop %v4634
  %v4636 = vmul.f32 1.0, %v4635
  %v4637 = vtanh.pop %v4630
  %v4638 = vxor.u32 %v4630, 2147483648
  %v4639 = vmul.f32 %v4638, 1.442695
  %v4640 = vpow.pop %v4639
  %v4641 = vadd.f32 %v4640, 1.0
  %v4642 = vrcp.pop %v4641
  %v4643 = vmul.f32 1.0, %v4642
  %v4644 = vmul.f32 %v4636, %v4303
  %v4645 = vmul.f32 %v4636, %v4637
  %4647 = vrot.lane.b32.xlu0 %v4645, 64
  %v4648 = vpop.permute.xlu0 %4647
  %v4650 = vadd.f32 %v4644, %v4648
  %v4651 = vtanh.pop %v4650
  %v4652 = vmul.f32 %v4643, %v4651
  %s4653 = scalar_lea.vmem %s1, 40
  %v4654 = vld [vmem:[%s4653] sm:$0xff]
  %4655 = vmatprep.subr.mxu0 %v2851
  %4656 = vmatpush1.msra.mxu0 %v2850
  %4657 = vmatprep.subr.mxu0 %v2853
  %4658 = vmatpush1.msra.mxu0 %v2852
  %4659 = vmatprep.subr.mxu0 %v2855
  %4660 = vmatpush1.msra.mxu0 %v2854
  %4661 = vmatprep.subr.mxu0 %v2857
  %4662 = vmatpush1.msra.mxu0 %v2856
  %4663 = vmatprep.subr.mxu0 %v2859
  %4664 = vmatpush1.msra.mxu0 %v2858
  %4665 = vmatprep.subr.mxu0 %v2861
  %4666 = vmatpush1.msra.mxu0 %v2860
  %4667 = vmatprep.subr.mxu0 %v2863
  %4668 = vmatpush1.msra.mxu0 %v2862
  %4669 = vmatprep.subr.mxu0 %v2865
  %4670 = vmatpush1.msra.mxu0 %v2864
  %4671 = vmatprep.subr.mxu0 0.0
  %4672 = vmatpush1.msra.mxu0 0.0
  %4673 = vmatprep.subr.mxu0 0.0
  %4674 = vmatpush1.msra.mxu0 0.0
  %4675 = vmatprep.subr.mxu0 0.0
  %4676 = vmatpush1.msra.mxu0 0.0
  %4677 = vmatprep.subr.mxu0 0.0
  %4678 = vmatpush1.msra.mxu0 0.0
  %4679 = vmatprep.subr.mxu0 0.0
  %4680 = vmatpush1.msra.mxu0 0.0
  %4681 = vmatprep.subr.mxu0 0.0
  %4682 = vmatpush1.msra.mxu0 0.0
  %4683 = vmatprep.subr.mxu0 0.0
  %4684 = vmatpush1.msra.mxu0 0.0
  %4685 = vmatprep.subr.mxu0 0.0
  %4686 = vmatpush1.msra.mxu0 0.0
  %4687 = vmatprep.subr.mxu0 0.0
  %4688 = vmatpush1.msra.mxu0 0.0
  %4689 = vmatprep.subr.mxu0 0.0
  %4690 = vmatpush1.msra.mxu0 0.0
  %4691 = vmatprep.subr.mxu0 0.0
  %4692 = vmatpush1.msra.mxu0 0.0
  %4693 = vmatprep.subr.mxu0 0.0
  %4694 = vmatpush1.msra.mxu0 0.0
  %4695 = vmatprep.subr.mxu0 0.0
  %4696 = vmatpush1.msra.mxu0 0.0
  %4697 = vmatprep.subr.mxu0 0.0
  %4698 = vmatpush1.msra.mxu0 0.0
  %4699 = vmatprep.subr.mxu0 0.0
  %4700 = vmatpush1.msra.mxu0 0.0
  %4701 = vmatprep.subr.mxu0 0.0
  %4702 = vmatpush1.msra.mxu0 0.0
  %4703 = vmatprep.subr.mxu0 0.0
  %4704 = vmatpush1.msra.mxu0 0.0
  %4705 = vmatprep.subr.mxu0 0.0
  %4706 = vmatpush1.msra.mxu0 0.0
  %4707 = vmatprep.subr.mxu0 0.0
  %4708 = vmatpush1.msra.mxu0 0.0
  %4709 = vmatprep.subr.mxu0 0.0
  %4710 = vmatpush1.msra.mxu0 0.0
  %4711 = vmatprep.subr.mxu0 0.0
  %4712 = vmatpush1.msra.mxu0 0.0
  %4713 = vmatprep.subr.mxu0 0.0
  %4714 = vmatpush1.msra.mxu0 0.0
  %4715 = vmatprep.subr.mxu0 0.0
  %4716 = vmatpush1.msra.mxu0 0.0
  %4717 = vmatprep.subr.mxu0 0.0
  %4718 = vmatpush1.msra.mxu0 0.0
  %4719 = vmatprep.mubr.f32.mxu0 0.0
  %4720 = vmatmul.mubr.f32.gmra.mrb[0].mxu0 %v4556
  %v4721 = vpop.f32.mrb[0].mxu0
  %v4722 = vadd.f32 0.0, %v4721
  %v4723 = vpop.f32.mrb[0].mxu0
  %v4724 = vadd.f32 0.0, %v4723
  %4725 = vdwg.mxu0
  %v4727 = vsel %vm62, %v4654, 0
  %4729 = vmatprep.subr.mxu0 %v2843
  %4730 = vmatpush1.msra.mxu0 %v2842
  %4731 = vmatprep.subr.mxu0 %v2845
  %4732 = vmatpush1.msra.mxu0 %v2844
  %4733 = vmatprep.subr.mxu0 %v2847
  %4734 = vmatpush1.msra.mxu0 %v2846
  %4735 = vmatprep.subr.mxu0 %v2849
  %4736 = vmatpush1.msra.mxu0 %v2848
  %4737 = vmatprep.subr.mxu0 0.0
  %4738 = vmatpush1.msra.mxu0 0.0
  %4739 = vmatprep.subr.mxu0 0.0
  %4740 = vmatpush1.msra.mxu0 0.0
  %4741 = vmatprep.subr.mxu0 0.0
  %4742 = vmatpush1.msra.mxu0 0.0
  %4743 = vmatprep.subr.mxu0 0.0
  %4744 = vmatpush1.msra.mxu0 0.0
  %4745 = vmatprep.subr.mxu0 0.0
  %4746 = vmatpush1.msra.mxu0 0.0
  %4747 = vmatprep.subr.mxu0 0.0
  %4748 = vmatpush1.msra.mxu0 0.0
  %4749 = vmatprep.subr.mxu0 0.0
  %4750 = vmatpush1.msra.mxu0 0.0
  %4751 = vmatprep.subr.mxu0 0.0
  %4752 = vmatpush1.msra.mxu0 0.0
  %4753 = vmatprep.subr.mxu0 0.0
  %4754 = vmatpush1.msra.mxu0 0.0
  %4755 = vmatprep.subr.mxu0 0.0
  %4756 = vmatpush1.msra.mxu0 0.0
  %4757 = vmatprep.subr.mxu0 0.0
  %4758 = vmatpush1.msra.mxu0 0.0
  %4759 = vmatprep.subr.mxu0 0.0
  %4760 = vmatpush1.msra.mxu0 0.0
  %4761 = vmatprep.subr.mxu0 0.0
  %4762 = vmatpush1.msra.mxu0 0.0
  %4763 = vmatprep.subr.mxu0 0.0
  %4764 = vmatpush1.msra.mxu0 0.0
  %4765 = vmatprep.subr.mxu0 0.0
  %4766 = vmatpush1.msra.mxu0 0.0
  %4767 = vmatprep.subr.mxu0 0.0
  %4768 = vmatpush1.msra.mxu0 0.0
  %4769 = vmatprep.subr.mxu0 0.0
  %4770 = vmatpush1.msra.mxu0 0.0
  %4771 = vmatprep.subr.mxu0 0.0
  %4772 = vmatpush1.msra.mxu0 0.0
  %4773 = vmatprep.subr.mxu0 0.0
  %4774 = vmatpush1.msra.mxu0 0.0
  %4775 = vmatprep.subr.mxu0 0.0
  %4776 = vmatpush1.msra.mxu0 0.0
  %4777 = vmatprep.subr.mxu0 0.0
  %4778 = vmatpush1.msra.mxu0 0.0
  %4779 = vmatprep.subr.mxu0 0.0
  %4780 = vmatpush1.msra.mxu0 0.0
  %4781 = vmatprep.subr.mxu0 0.0
  %4782 = vmatpush1.msra.mxu0 0.0
  %4783 = vmatprep.subr.mxu0 0.0
  %4784 = vmatpush1.msra.mxu0 0.0
  %4785 = vmatprep.subr.mxu0 0.0
  %4786 = vmatpush1.msra.mxu0 0.0
  %4787 = vmatprep.subr.mxu0 0.0
  %4788 = vmatpush1.msra.mxu0 0.0
  %4789 = vmatprep.subr.mxu0 0.0
  %4790 = vmatpush1.msra.mxu0 0.0
  %4791 = vmatprep.subr.mxu0 0.0
  %4792 = vmatpush1.msra.mxu0 0.0
  %4793 = vmatprep.mubr.f32.mxu0 0.0
  %4794 = vmatmul.mubr.f32.gmra.mrb[0].mxu0 %v4727
  %v4795 = vpop.f32.mrb[0].mxu0
  %v4796 = vadd.f32 %v4722, %v4795
  %v4797 = vpop.f32.mrb[0].mxu0
  %v4798 = vadd.f32 %v4724, %v4797
  %4799 = vdwg.mxu0
  %v4800 = vadd.f32 %v4796, %v3019
  %v4801 = vadd.f32 %v4798, %v3023
  %v4802 = vxor.u32 %v4800, 2147483648
  %v4803 = vmul.f32 %v4802, 1.442695
  %v4804 = vpow.pop %v4803
  %v4805 = vadd.f32 %v4804, 1.0
  %v4806 = vrcp.pop %v4805
  %v4807 = vmul.f32 1.0, %v4806
  %v4808 = vtanh.pop %v4801
  %v4809 = vxor.u32 %v4801, 2147483648
  %v4810 = vmul.f32 %v4809, 1.442695
  %v4811 = vpow.pop %v4810
  %v4812 = vadd.f32 %v4811, 1.0
  %v4813 = vrcp.pop %v4812
  %v4814 = vmul.f32 1.0, %v4813
  %v4815 = vmul.f32 %v4807, %v4474
  %v4816 = vmul.f32 %v4807, %v4808
  %4818 = vrot.lane.b32.xlu0 %v4816, 64
  %v4819 = vpop.permute.xlu0 %4818
  %v4821 = vadd.f32 %v4815, %v4819
  %v4822 = vtanh.pop %v4821
  %v4823 = vmul.f32 %v4814, %v4822
  %4825 = vrot.lane.b32.xlu0 %v4652, 64
  %v4826 = vpop.permute.xlu0 %4825
  %v4827 = vsel %vm2866, %v4826, 0
  %4829 = vmatprep.subr.mxu0 %v3067
  %4830 = vmatpush1.msra.mxu0 %v3066
  %4831 = vmatprep.subr.mxu0 %v3069
  %4832 = vmatpush1.msra.mxu0 %v3068
  %4833 = vmatprep.subr.mxu0 %v3071
  %4834 = vmatpush1.msra.mxu0 %v3070
  %4835 = vmatprep.subr.mxu0 %v3073
  %4836 = vmatpush1.msra.mxu0 %v3072
  %4837 = vmatprep.subr.mxu0 %v3075
  %4838 = vmatpush1.msra.mxu0 %v3074
  %4839 = vmatprep.subr.mxu0 %v3077
  %4840 = vmatpush1.msra.mxu0 %v3076
  %4841 = vmatprep.subr.mxu0 %v3079
  %4842 = vmatpush1.msra.mxu0 %v3078
  %4843 = vmatprep.subr.mxu0 %v3081
  %4844 = vmatpush1.msra.mxu0 %v3080
  %4845 = vmatprep.subr.mxu0 0.0
  %4846 = vmatpush1.msra.mxu0 0.0
  %4847 = vmatprep.subr.mxu0 0.0
  %4848 = vmatpush1.msra.mxu0 0.0
  %4849 = vmatprep.subr.mxu0 0.0
  %4850 = vmatpush1.msra.mxu0 0.0
  %4851 = vmatprep.subr.mxu0 0.0
  %4852 = vmatpush1.msra.mxu0 0.0
  %4853 = vmatprep.subr.mxu0 0.0
  %4854 = vmatpush1.msra.mxu0 0.0
  %4855 = vmatprep.subr.mxu0 0.0
  %4856 = vmatpush1.msra.mxu0 0.0
  %4857 = vmatprep.subr.mxu0 0.0
  %4858 = vmatpush1.msra.mxu0 0.0
  %4859 = vmatprep.subr.mxu0 0.0
  %4860 = vmatpush1.msra.mxu0 0.0
  %4861 = vmatprep.subr.mxu0 0.0
  %4862 = vmatpush1.msra.mxu0 0.0
  %4863 = vmatprep.subr.mxu0 0.0
  %4864 = vmatpush1.msra.mxu0 0.0
  %4865 = vmatprep.subr.mxu0 0.0
  %4866 = vmatpush1.msra.mxu0 0.0
  %4867 = vmatprep.subr.mxu0 0.0
  %4868 = vmatpush1.msra.mxu0 0.0
  %4869 = vmatprep.subr.mxu0 0.0
  %4870 = vmatpush1.msra.mxu0 0.0
  %4871 = vmatprep.subr.mxu0 0.0
  %4872 = vmatpush1.msra.mxu0 0.0
  %4873 = vmatprep.subr.mxu0 0.0
  %4874 = vmatpush1.msra.mxu0 0.0
  %4875 = vmatprep.subr.mxu0 0.0
  %4876 = vmatpush1.msra.mxu0 0.0
  %4877 = vmatprep.subr.mxu0 0.0
  %4878 = vmatpush1.msra.mxu0 0.0
  %4879 = vmatprep.subr.mxu0 0.0
  %4880 = vmatpush1.msra.mxu0 0.0
  %4881 = vmatprep.subr.mxu0 0.0
  %4882 = vmatpush1.msra.mxu0 0.0
  %4883 = vmatprep.subr.mxu0 0.0
  %4884 = vmatpush1.msra.mxu0 0.0
  %4885 = vmatprep.subr.mxu0 0.0
  %4886 = vmatpush1.msra.mxu0 0.0
  %4887 = vmatprep.subr.mxu0 0.0
  %4888 = vmatpush1.msra.mxu0 0.0
  %4889 = vmatprep.subr.mxu0 0.0
  %4890 = vmatpush1.msra.mxu0 0.0
  %4891 = vmatprep.subr.mxu0 0.0
  %4892 = vmatpush1.msra.mxu0 0.0
  %4893 = vmatprep.mubr.f32.mxu0 0.0
  %4894 = vmatmul.mubr.f32.gmra.mrb[0].mxu0 %v4827
  %v4895 = vpop.f32.mrb[0].mxu0
  %v4896 = vadd.f32 0.0, %v4895
  %v4897 = vpop.f32.mrb[0].mxu0
  %v4898 = vadd.f32 0.0, %v4897
  %4899 = vdwg.mxu0
  %4901 = vrot.lane.b32.xlu0 %v4823, 64
  %v4902 = vpop.permute.xlu0 %4901
  %v4903 = vsel %vm2866, %v4902, 0
  %4905 = vmatprep.subr.mxu0 %v3051
  %4906 = vmatpush1.msra.mxu0 %v3050
  %4907 = vmatprep.subr.mxu0 %v3053
  %4908 = vmatpush1.msra.mxu0 %v3052
  %4909 = vmatprep.subr.mxu0 %v3055
  %4910 = vmatpush1.msra.mxu0 %v3054
  %4911 = vmatprep.subr.mxu0 %v3057
  %4912 = vmatpush1.msra.mxu0 %v3056
  %4913 = vmatprep.subr.mxu0 %v3059
  %4914 = vmatpush1.msra.mxu0 %v3058
  %4915 = vmatprep.subr.mxu0 %v3061
  %4916 = vmatpush1.msra.mxu0 %v3060
  %4917 = vmatprep.subr.mxu0 %v3063
  %4918 = vmatpush1.msra.mxu0 %v3062
  %4919 = vmatprep.subr.mxu0 %v3065
  %4920 = vmatpush1.msra.mxu0 %v3064
  %4921 = vmatprep.subr.mxu0 0.0
  %4922 = vmatpush1.msra.mxu0 0.0
  %4923 = vmatprep.subr.mxu0 0.0
  %4924 = vmatpush1.msra.mxu0 0.0
  %4925 = vmatprep.subr.mxu0 0.0
  %4926 = vmatpush1.msra.mxu0 0.0
  %4927 = vmatprep.subr.mxu0 0.0
  %4928 = vmatpush1.msra.mxu0 0.0
  %4929 = vmatprep.subr.mxu0 0.0
  %4930 = vmatpush1.msra.mxu0 0.0
  %4931 = vmatprep.subr.mxu0 0.0
  %4932 = vmatpush1.msra.mxu0 0.0
  %4933 = vmatprep.subr.mxu0 0.0
  %4934 = vmatpush1.msra.mxu0 0.0
  %4935 = vmatprep.subr.mxu0 0.0
  %4936 = vmatpush1.msra.mxu0 0.0
  %4937 = vmatprep.subr.mxu0 0.0
  %4938 = vmatpush1.msra.mxu0 0.0
  %4939 = vmatprep.subr.mxu0 0.0
  %4940 = vmatpush1.msra.mxu0 0.0
  %4941 = vmatprep.subr.mxu0 0.0
  %4942 = vmatpush1.msra.mxu0 0.0
  %4943 = vmatprep.subr.mxu0 0.0
  %4944 = vmatpush1.msra.mxu0 0.0
  %4945 = vmatprep.subr.mxu0 0.0
  %4946 = vmatpush1.msra.mxu0 0.0
  %4947 = vmatprep.subr.mxu0 0.0
  %4948 = vmatpush1.msra.mxu0 0.0
  %4949 = vmatprep.subr.mxu0 0.0
  %4950 = vmatpush1.msra.mxu0 0.0
  %4951 = vmatprep.subr.mxu0 0.0
  %4952 = vmatpush1.msra.mxu0 0.0
  %4953 = vmatprep.subr.mxu0 0.0
  %4954 = vmatpush1.msra.mxu0 0.0
  %4955 = vmatprep.subr.mxu0 0.0
  %4956 = vmatpush1.msra.mxu0 0.0
  %4957 = vmatprep.subr.mxu0 0.0
  %4958 = vmatpush1.msra.mxu0 0.0
  %4959 = vmatprep.subr.mxu0 0.0
  %4960 = vmatpush1.msra.mxu0 0.0
  %4961 = vmatprep.subr.mxu0 0.0
  %4962 = vmatpush1.msra.mxu0 0.0
  %4963 = vmatprep.subr.mxu0 0.0
  %4964 = vmatpush1.msra.mxu0 0.0
  %4965 = vmatprep.subr.mxu0 0.0
  %4966 = vmatpush1.msra.mxu0 0.0
  %4967 = vmatprep.subr.mxu0 0.0
  %4968 = vmatpush1.msra.mxu0 0.0
  %4969 = vmatprep.mubr.f32.mxu0 0.0
  %4970 = vmatmul.mubr.f32.gmra.mrb[0].mxu0 %v4903
  %v4971 = vpop.f32.mrb[0].mxu0
  %v4972 = vadd.f32 %v4896, %v4971
  %v4973 = vpop.f32.mrb[0].mxu0
  %v4974 = vadd.f32 %v4898, %v4973
  %4975 = vdwg.mxu0
  %v4976 = vadd.f32 %v4972, %v3234
  %v4977 = vadd.f32 %v4974, %v3238
  %v4978 = vxor.u32 %v4976, 2147483648
  %v4979 = vmul.f32 %v4978, 1.442695
  %v4980 = vpow.pop %v4979
  %v4981 = vadd.f32 %v4980, 1.0
  %v4982 = vrcp.pop %v4981
  %v4983 = vmul.f32 1.0, %v4982
  %v4984 = vtanh.pop %v4977
  %v4985 = vxor.u32 %v4977, 2147483648
  %v4986 = vmul.f32 %v4985, 1.442695
  %v4987 = vpow.pop %v4986
  %v4988 = vadd.f32 %v4987, 1.0
  %v4989 = vrcp.pop %v4988
  %v4990 = vmul.f32 1.0, %v4989
  %v4991 = vmul.f32 %v4983, %v4650
  %v4992 = vmul.f32 %v4983, %v4984
  %4994 = vrot.lane.b32.xlu0 %v4992, 64
  %v4995 = vpop.permute.xlu0 %4994
  %v4997 = vadd.f32 %v4991, %v4995
  %v4998 = vtanh.pop %v4997
  %v4999 = vmul.f32 %v4990, %v4998
  %s5000 = scalar_lea.vmem %s1, 48
  %v5001 = vld [vmem:[%s5000] sm:$0xff]
  %5002 = vmatprep.subr.mxu0 %v2851
  %5003 = vmatpush1.msra.mxu0 %v2850
  %5004 = vmatprep.subr.mxu0 %v2853
  %5005 = vmatpush1.msra.mxu0 %v2852
  %5006 = vmatprep.subr.mxu0 %v2855
  %5007 = vmatpush1.msra.mxu0 %v2854
  %5008 = vmatprep.subr.mxu0 %v2857
  %5009 = vmatpush1.msra.mxu0 %v2856
  %5010 = vmatprep.subr.mxu0 %v2859
  %5011 = vmatpush1.msra.mxu0 %v2858
  %5012 = vmatprep.subr.mxu0 %v2861
  %5013 = vmatpush1.msra.mxu0 %v2860
  %5014 = vmatprep.subr.mxu0 %v2863
  %5015 = vmatpush1.msra.mxu0 %v2862
  %5016 = vmatprep.subr.mxu0 %v2865
  %5017 = vmatpush1.msra.mxu0 %v2864
  %5018 = vmatprep.subr.mxu0 0.0
  %5019 = vmatpush1.msra.mxu0 0.0
  %5020 = vmatprep.subr.mxu0 0.0
  %5021 = vmatpush1.msra.mxu0 0.0
  %5022 = vmatprep.subr.mxu0 0.0
  %5023 = vmatpush1.msra.mxu0 0.0
  %5024 = vmatprep.subr.mxu0 0.0
  %5025 = vmatpush1.msra.mxu0 0.0
  %5026 = vmatprep.subr.mxu0 0.0
  %5027 = vmatpush1.msra.mxu0 0.0
  %5028 = vmatprep.subr.mxu0 0.0
  %5029 = vmatpush1.msra.mxu0 0.0
  %5030 = vmatprep.subr.mxu0 0.0
  %5031 = vmatpush1.msra.mxu0 0.0
  %5032 = vmatprep.subr.mxu0 0.0
  %5033 = vmatpush1.msra.mxu0 0.0
  %5034 = vmatprep.subr.mxu0 0.0
  %5035 = vmatpush1.msra.mxu0 0.0
  %5036 = vmatprep.subr.mxu0 0.0
  %5037 = vmatpush1.msra.mxu0 0.0
  %5038 = vmatprep.subr.mxu0 0.0
  %5039 = vmatpush1.msra.mxu0 0.0
  %5040 = vmatprep.subr.mxu0 0.0
  %5041 = vmatpush1.msra.mxu0 0.0
  %5042 = vmatprep.subr.mxu0 0.0
  %5043 = vmatpush1.msra.mxu0 0.0
  %5044 = vmatprep.subr.mxu0 0.0
  %5045 = vmatpush1.msra.mxu0 0.0
  %5046 = vmatprep.subr.mxu0 0.0
  %5047 = vmatpush1.msra.mxu0 0.0
  %5048 = vmatprep.subr.mxu0 0.0
  %5049 = vmatpush1.msra.mxu0 0.0
  %5050 = vmatprep.subr.mxu0 0.0
  %5051 = vmatpush1.msra.mxu0 0.0
  %5052 = vmatprep.subr.mxu0 0.0
  %5053 = vmatpush1.msra.mxu0 0.0
  %5054 = vmatprep.subr.mxu0 0.0
  %5055 = vmatpush1.msra.mxu0 0.0
  %5056 = vmatprep.subr.mxu0 0.0
  %5057 = vmatpush1.msra.mxu0 0.0
  %5058 = vmatprep.subr.mxu0 0.0
  %5059 = vmatpush1.msra.mxu0 0.0
  %5060 = vmatprep.subr.mxu0 0.0
  %5061 = vmatpush1.msra.mxu0 0.0
  %5062 = vmatprep.subr.mxu0 0.0
  %5063 = vmatpush1.msra.mxu0 0.0
  %5064 = vmatprep.subr.mxu0 0.0
  %5065 = vmatpush1.msra.mxu0 0.0
  %5066 = vmatprep.mubr.f32.mxu0 0.0
  %5067 = vmatmul.mubr.f32.gmra.mrb[0].mxu0 %v4903
  %v5068 = vpop.f32.mrb[0].mxu0
  %v5069 = vadd.f32 0.0, %v5068
  %v5070 = vpop.f32.mrb[0].mxu0
  %v5071 = vadd.f32 0.0, %v5070
  %5072 = vdwg.mxu0
  %v5074 = vsel %vm62, %v5001, 0
  %5076 = vmatprep.subr.mxu0 %v2843
  %5077 = vmatpush1.msra.mxu0 %v2842
  %5078 = vmatprep.subr.mxu0 %v2845
  %5079 = vmatpush1.msra.mxu0 %v2844
  %5080 = vmatprep.subr.mxu0 %v2847
  %5081 = vmatpush1.msra.mxu0 %v2846
  %5082 = vmatprep.subr.mxu0 %v2849
  %5083 = vmatpush1.msra.mxu0 %v2848
  %5084 = vmatprep.subr.mxu0 0.0
  %5085 = vmatpush1.msra.mxu0 0.0
  %5086 = vmatprep.subr.mxu0 0.0
  %5087 = vmatpush1.msra.mxu0 0.0
  %5088 = vmatprep.subr.mxu0 0.0
  %5089 = vmatpush1.msra.mxu0 0.0
  %5090 = vmatprep.subr.mxu0 0.0
  %5091 = vmatpush1.msra.mxu0 0.0
  %5092 = vmatprep.subr.mxu0 0.0
  %5093 = vmatpush1.msra.mxu0 0.0
  %5094 = vmatprep.subr.mxu0 0.0
  %5095 = vmatpush1.msra.mxu0 0.0
  %5096 = vmatprep.subr.mxu0 0.0
  %5097 = vmatpush1.msra.mxu0 0.0
  %5098 = vmatprep.subr.mxu0 0.0
  %5099 = vmatpush1.msra.mxu0 0.0
  %5100 = vmatprep.subr.mxu0 0.0
  %5101 = vmatpush1.msra.mxu0 0.0
  %5102 = vmatprep.subr.mxu0 0.0
  %5103 = vmatpush1.msra.mxu0 0.0
  %5104 = vmatprep.subr.mxu0 0.0
  %5105 = vmatpush1.msra.mxu0 0.0
  %5106 = vmatprep.subr.mxu0 0.0
  %5107 = vmatpush1.msra.mxu0 0.0
  %5108 = vmatprep.subr.mxu0 0.0
  %5109 = vmatpush1.msra.mxu0 0.0
  %5110 = vmatprep.subr.mxu0 0.0
  %5111 = vmatpush1.msra.mxu0 0.0
  %5112 = vmatprep.subr.mxu0 0.0
  %5113 = vmatpush1.msra.mxu0 0.0
  %5114 = vmatprep.subr.mxu0 0.0
  %5115 = vmatpush1.msra.mxu0 0.0
  %5116 = vmatprep.subr.mxu0 0.0
  %5117 = vmatpush1.msra.mxu0 0.0
  %5118 = vmatprep.subr.mxu0 0.0
  %5119 = vmatpush1.msra.mxu0 0.0
  %5120 = vmatprep.subr.mxu0 0.0
  %5121 = vmatpush1.msra.mxu0 0.0
  %5122 = vmatprep.subr.mxu0 0.0
  %5123 = vmatpush1.msra.mxu0 0.0
  %5124 = vmatprep.subr.mxu0 0.0
  %5125 = vmatpush1.msra.mxu0 0.0
  %5126 = vmatprep.subr.mxu0 0.0
  %5127 = vmatpush1.msra.mxu0 0.0
  %5128 = vmatprep.subr.mxu0 0.0
  %5129 = vmatpush1.msra.mxu0 0.0
  %5130 = vmatprep.subr.mxu0 0.0
  %5131 = vmatpush1.msra.mxu0 0.0
  %5132 = vmatprep.subr.mxu0 0.0
  %5133 = vmatpush1.msra.mxu0 0.0
  %5134 = vmatprep.subr.mxu0 0.0
  %5135 = vmatpush1.msra.mxu0 0.0
  %5136 = vmatprep.subr.mxu0 0.0
  %5137 = vmatpush1.msra.mxu0 0.0
  %5138 = vmatprep.subr.mxu0 0.0
  %5139 = vmatpush1.msra.mxu0 0.0
  %5140 = vmatprep.mubr.f32.mxu0 0.0
  %5141 = vmatmul.mubr.f32.gmra.mrb[0].mxu0 %v5074
  %v5142 = vpop.f32.mrb[0].mxu0
  %v5143 = vadd.f32 %v5069, %v5142
  %v5144 = vpop.f32.mrb[0].mxu0
  %v5145 = vadd.f32 %v5071, %v5144
  %5146 = vdwg.mxu0
  %v5147 = vadd.f32 %v5143, %v3019
  %v5148 = vadd.f32 %v5145, %v3023
  %v5149 = vxor.u32 %v5147, 2147483648
  %v5150 = vmul.f32 %v5149, 1.442695
  %v5151 = vpow.pop %v5150
  %v5152 = vadd.f32 %v5151, 1.0
  %v5153 = vrcp.pop %v5152
  %v5154 = vmul.f32 1.0, %v5153
  %v5155 = vtanh.pop %v5148
  %v5156 = vxor.u32 %v5148, 2147483648
  %v5157 = vmul.f32 %v5156, 1.442695
  %v5158 = vpow.pop %v5157
  %v5159 = vadd.f32 %v5158, 1.0
  %v5160 = vrcp.pop %v5159
  %v5161 = vmul.f32 1.0, %v5160
  %v5162 = vmul.f32 %v5154, %v4821
  %v5163 = vmul.f32 %v5154, %v5155
  %5165 = vrot.lane.b32.xlu0 %v5163, 64
  %v5166 = vpop.permute.xlu0 %5165
  %v5168 = vadd.f32 %v5162, %v5166
  %v5169 = vtanh.pop %v5168
  %v5170 = vmul.f32 %v5161, %v5169
  %5172 = vrot.lane.b32.xlu0 %v4999, 64
  %v5173 = vpop.permute.xlu0 %5172
  %v5174 = vsel %vm2866, %v5173, 0
  %5176 = vmatprep.subr.mxu0 %v3067
  %5177 = vmatpush1.msra.mxu0 %v3066
  %5178 = vmatprep.subr.mxu0 %v3069
  %5179 = vmatpush1.msra.mxu0 %v3068
  %5180 = vmatprep.subr.mxu0 %v3071
  %5181 = vmatpush1.msra.mxu0 %v3070
  %5182 = vmatprep.subr.mxu0 %v3073
  %5183 = vmatpush1.msra.mxu0 %v3072
  %5184 = vmatprep.subr.mxu0 %v3075
  %5185 = vmatpush1.msra.mxu0 %v3074
  %5186 = vmatprep.subr.mxu0 %v3077
  %5187 = vmatpush1.msra.mxu0 %v3076
  %5188 = vmatprep.subr.mxu0 %v3079
  %5189 = vmatpush1.msra.mxu0 %v3078
  %5190 = vmatprep.subr.mxu0 %v3081
  %5191 = vmatpush1.msra.mxu0 %v3080
  %5192 = vmatprep.subr.mxu0 0.0
  %5193 = vmatpush1.msra.mxu0 0.0
  %5194 = vmatprep.subr.mxu0 0.0
  %5195 = vmatpush1.msra.mxu0 0.0
  %5196 = vmatprep.subr.mxu0 0.0
  %5197 = vmatpush1.msra.mxu0 0.0
  %5198 = vmatprep.subr.mxu0 0.0
  %5199 = vmatpush1.msra.mxu0 0.0
  %5200 = vmatprep.subr.mxu0 0.0
  %5201 = vmatpush1.msra.mxu0 0.0
  %5202 = vmatprep.subr.mxu0 0.0
  %5203 = vmatpush1.msra.mxu0 0.0
  %5204 = vmatprep.subr.mxu0 0.0
  %5205 = vmatpush1.msra.mxu0 0.0
  %5206 = vmatprep.subr.mxu0 0.0
  %5207 = vmatpush1.msra.mxu0 0.0
  %5208 = vmatprep.subr.mxu0 0.0
  %5209 = vmatpush1.msra.mxu0 0.0
  %5210 = vmatprep.subr.mxu0 0.0
  %5211 = vmatpush1.msra.mxu0 0.0
  %5212 = vmatprep.subr.mxu0 0.0
  %5213 = vmatpush1.msra.mxu0 0.0
  %5214 = vmatprep.subr.mxu0 0.0
  %5215 = vmatpush1.msra.mxu0 0.0
  %5216 = vmatprep.subr.mxu0 0.0
  %5217 = vmatpush1.msra.mxu0 0.0
  %5218 = vmatprep.subr.mxu0 0.0
  %5219 = vmatpush1.msra.mxu0 0.0
  %5220 = vmatprep.subr.mxu0 0.0
  %5221 = vmatpush1.msra.mxu0 0.0
  %5222 = vmatprep.subr.mxu0 0.0
  %5223 = vmatpush1.msra.mxu0 0.0
  %5224 = vmatprep.subr.mxu0 0.0
  %5225 = vmatpush1.msra.mxu0 0.0
  %5226 = vmatprep.subr.mxu0 0.0
  %5227 = vmatpush1.msra.mxu0 0.0
  %5228 = vmatprep.subr.mxu0 0.0
  %5229 = vmatpush1.msra.mxu0 0.0
  %5230 = vmatprep.subr.mxu0 0.0
  %5231 = vmatpush1.msra.mxu0 0.0
  %5232 = vmatprep.subr.mxu0 0.0
  %5233 = vmatpush1.msra.mxu0 0.0
  %5234 = vmatprep.subr.mxu0 0.0
  %5235 = vmatpush1.msra.mxu0 0.0
  %5236 = vmatprep.subr.mxu0 0.0
  %5237 = vmatpush1.msra.mxu0 0.0
  %5238 = vmatprep.subr.mxu0 0.0
  %5239 = vmatpush1.msra.mxu0 0.0
  %5240 = vmatprep.mubr.f32.mxu0 0.0
  %5241 = vmatmul.mubr.f32.gmra.mrb[0].mxu0 %v5174
  %v5242 = vpop.f32.mrb[0].mxu0
  %v5243 = vadd.f32 0.0, %v5242
  %v5244 = vpop.f32.mrb[0].mxu0
  %v5245 = vadd.f32 0.0, %v5244
  %5246 = vdwg.mxu0
  %5248 = vrot.lane.b32.xlu0 %v5170, 64
  %v5249 = vpop.permute.xlu0 %5248
  %v5250 = vsel %vm2866, %v5249, 0
  %5252 = vmatprep.subr.mxu0 %v3051
  %5253 = vmatpush1.msra.mxu0 %v3050
  %5254 = vmatprep.subr.mxu0 %v3053
  %5255 = vmatpush1.msra.mxu0 %v3052
  %5256 = vmatprep.subr.mxu0 %v3055
  %5257 = vmatpush1.msra.mxu0 %v3054
  %5258 = vmatprep.subr.mxu0 %v3057
  %5259 = vmatpush1.msra.mxu0 %v3056
  %5260 = vmatprep.subr.mxu0 %v3059
  %5261 = vmatpush1.msra.mxu0 %v3058
  %5262 = vmatprep.subr.mxu0 %v3061
  %5263 = vmatpush1.msra.mxu0 %v3060
  %5264 = vmatprep.subr.mxu0 %v3063
  %5265 = vmatpush1.msra.mxu0 %v3062
  %5266 = vmatprep.subr.mxu0 %v3065
  %5267 = vmatpush1.msra.mxu0 %v3064
  %5268 = vmatprep.subr.mxu0 0.0
  %5269 = vmatpush1.msra.mxu0 0.0
  %5270 = vmatprep.subr.mxu0 0.0
  %5271 = vmatpush1.msra.mxu0 0.0
  %5272 = vmatprep.subr.mxu0 0.0
  %5273 = vmatpush1.msra.mxu0 0.0
  %5274 = vmatprep.subr.mxu0 0.0
  %5275 = vmatpush1.msra.mxu0 0.0
  %5276 = vmatprep.subr.mxu0 0.0
  %5277 = vmatpush1.msra.mxu0 0.0
  %5278 = vmatprep.subr.mxu0 0.0
  %5279 = vmatpush1.msra.mxu0 0.0
  %5280 = vmatprep.subr.mxu0 0.0
  %5281 = vmatpush1.msra.mxu0 0.0
  %5282 = vmatprep.subr.mxu0 0.0
  %5283 = vmatpush1.msra.mxu0 0.0
  %5284 = vmatprep.subr.mxu0 0.0
  %5285 = vmatpush1.msra.mxu0 0.0
  %5286 = vmatprep.subr.mxu0 0.0
  %5287 = vmatpush1.msra.mxu0 0.0
  %5288 = vmatprep.subr.mxu0 0.0
  %5289 = vmatpush1.msra.mxu0 0.0
  %5290 = vmatprep.subr.mxu0 0.0
  %5291 = vmatpush1.msra.mxu0 0.0
  %5292 = vmatprep.subr.mxu0 0.0
  %5293 = vmatpush1.msra.mxu0 0.0
  %5294 = vmatprep.subr.mxu0 0.0
  %5295 = vmatpush1.msra.mxu0 0.0
  %5296 = vmatprep.subr.mxu0 0.0
  %5297 = vmatpush1.msra.mxu0 0.0
  %5298 = vmatprep.subr.mxu0 0.0
  %5299 = vmatpush1.msra.mxu0 0.0
  %5300 = vmatprep.subr.mxu0 0.0
  %5301 = vmatpush1.msra.mxu0 0.0
  %5302 = vmatprep.subr.mxu0 0.0
  %5303 = vmatpush1.msra.mxu0 0.0
  %5304 = vmatprep.subr.mxu0 0.0
  %5305 = vmatpush1.msra.mxu0 0.0
  %5306 = vmatprep.subr.mxu0 0.0
  %5307 = vmatpush1.msra.mxu0 0.0
  %5308 = vmatprep.subr.mxu0 0.0
  %5309 = vmatpush1.msra.mxu0 0.0
  %5310 = vmatprep.subr.mxu0 0.0
  %5311 = vmatpush1.msra.mxu0 0.0
  %5312 = vmatprep.subr.mxu0 0.0
  %5313 = vmatpush1.msra.mxu0 0.0
  %5314 = vmatprep.subr.mxu0 0.0
  %5315 = vmatpush1.msra.mxu0 0.0
  %5316 = vmatprep.mubr.f32.mxu0 0.0
  %5317 = vmatmul.mubr.f32.gmra.mrb[0].mxu0 %v5250
  %v5318 = vpop.f32.mrb[0].mxu0
  %v5319 = vadd.f32 %v5243, %v5318
  %v5320 = vpop.f32.mrb[0].mxu0
  %v5321 = vadd.f32 %v5245, %v5320
  %5322 = vdwg.mxu0
  %v5323 = vadd.f32 %v5319, %v3234
  %v5324 = vadd.f32 %v5321, %v3238
  %v5325 = vxor.u32 %v5323, 2147483648
  %v5326 = vmul.f32 %v5325, 1.442695
  %v5327 = vpow.pop %v5326
  %v5328 = vadd.f32 %v5327, 1.0
  %v5329 = vrcp.pop %v5328
  %v5330 = vmul.f32 1.0, %v5329
  %v5331 = vtanh.pop %v5324
  %v5332 = vxor.u32 %v5324, 2147483648
  %v5333 = vmul.f32 %v5332, 1.442695
  %v5334 = vpow.pop %v5333
  %v5335 = vadd.f32 %v5334, 1.0
  %v5336 = vrcp.pop %v5335
  %v5337 = vmul.f32 1.0, %v5336
  %v5338 = vmul.f32 %v5330, %v4997
  %v5339 = vmul.f32 %v5330, %v5331
  %5341 = vrot.lane.b32.xlu0 %v5339, 64
  %v5342 = vpop.permute.xlu0 %5341
  %v5344 = vadd.f32 %v5338, %v5342
  %v5345 = vtanh.pop %v5344
  %v5346 = vmul.f32 %v5337, %v5345
  %s5347 = scalar_lea.vmem %s1, 56
  %v5348 = vld [vmem:[%s5347] sm:$0xff]
  %5349 = vmatprep.subr.mxu0 %v2851
  %5350 = vmatpush1.msra.mxu0 %v2850
  %5351 = vmatprep.subr.mxu0 %v2853
  %5352 = vmatpush1.msra.mxu0 %v2852
  %5353 = vmatprep.subr.mxu0 %v2855
  %5354 = vmatpush1.msra.mxu0 %v2854
  %5355 = vmatprep.subr.mxu0 %v2857
  %5356 = vmatpush1.msra.mxu0 %v2856
  %5357 = vmatprep.subr.mxu0 %v2859
  %5358 = vmatpush1.msra.mxu0 %v2858
  %5359 = vmatprep.subr.mxu0 %v2861
  %5360 = vmatpush1.msra.mxu0 %v2860
  %5361 = vmatprep.subr.mxu0 %v2863
  %5362 = vmatpush1.msra.mxu0 %v2862
  %5363 = vmatprep.subr.mxu0 %v2865
  %5364 = vmatpush1.msra.mxu0 %v2864
  %5365 = vmatprep.subr.mxu0 0.0
  %5366 = vmatpush1.msra.mxu0 0.0
  %5367 = vmatprep.subr.mxu0 0.0
  %5368 = vmatpush1.msra.mxu0 0.0
  %5369 = vmatprep.subr.mxu0 0.0
  %5370 = vmatpush1.msra.mxu0 0.0
  %5371 = vmatprep.subr.mxu0 0.0
  %5372 = vmatpush1.msra.mxu0 0.0
  %5373 = vmatprep.subr.mxu0 0.0
  %5374 = vmatpush1.msra.mxu0 0.0
  %5375 = vmatprep.subr.mxu0 0.0
  %5376 = vmatpush1.msra.mxu0 0.0
  %5377 = vmatprep.subr.mxu0 0.0
  %5378 = vmatpush1.msra.mxu0 0.0
  %5379 = vmatprep.subr.mxu0 0.0
  %5380 = vmatpush1.msra.mxu0 0.0
  %5381 = vmatprep.subr.mxu0 0.0
  %5382 = vmatpush1.msra.mxu0 0.0
  %5383 = vmatprep.subr.mxu0 0.0
  %5384 = vmatpush1.msra.mxu0 0.0
  %5385 = vmatprep.subr.mxu0 0.0
  %5386 = vmatpush1.msra.mxu0 0.0
  %5387 = vmatprep.subr.mxu0 0.0
  %5388 = vmatpush1.msra.mxu0 0.0
  %5389 = vmatprep.subr.mxu0 0.0
  %5390 = vmatpush1.msra.mxu0 0.0
  %5391 = vmatprep.subr.mxu0 0.0
  %5392 = vmatpush1.msra.mxu0 0.0
  %5393 = vmatprep.subr.mxu0 0.0
  %5394 = vmatpush1.msra.mxu0 0.0
  %5395 = vmatprep.subr.mxu0 0.0
  %5396 = vmatpush1.msra.mxu0 0.0
  %5397 = vmatprep.subr.mxu0 0.0
  %5398 = vmatpush1.msra.mxu0 0.0
  %5399 = vmatprep.subr.mxu0 0.0
  %5400 = vmatpush1.msra.mxu0 0.0
  %5401 = vmatprep.subr.mxu0 0.0
  %5402 = vmatpush1.msra.mxu0 0.0
  %5403 = vmatprep.subr.mxu0 0.0
  %5404 = vmatpush1.msra.mxu0 0.0
  %5405 = vmatprep.subr.mxu0 0.0
  %5406 = vmatpush1.msra.mxu0 0.0
  %5407 = vmatprep.subr.mxu0 0.0
  %5408 = vmatpush1.msra.mxu0 0.0
  %5409 = vmatprep.subr.mxu0 0.0
  %5410 = vmatpush1.msra.mxu0 0.0
  %5411 = vmatprep.subr.mxu0 0.0
  %5412 = vmatpush1.msra.mxu0 0.0
  %5413 = vmatprep.mubr.f32.mxu0 0.0
  %5414 = vmatmul.mubr.f32.gmra.mrb[0].mxu0 %v5250
  %v5415 = vpop.f32.mrb[0].mxu0
  %v5416 = vadd.f32 0.0, %v5415
  %v5417 = vpop.f32.mrb[0].mxu0
  %v5418 = vadd.f32 0.0, %v5417
  %5419 = vdwg.mxu0
  %v5421 = vsel %vm62, %v5348, 0
  %5423 = vmatprep.subr.mxu0 %v2843
  %5424 = vmatpush1.msra.mxu0 %v2842
  %5425 = vmatprep.subr.mxu0 %v2845
  %5426 = vmatpush1.msra.mxu0 %v2844
  %5427 = vmatprep.subr.mxu0 %v2847
  %5428 = vmatpush1.msra.mxu0 %v2846
  %5429 = vmatprep.subr.mxu0 %v2849
  %5430 = vmatpush1.msra.mxu0 %v2848
  %5431 = vmatprep.subr.mxu0 0.0
  %5432 = vmatpush1.msra.mxu0 0.0
  %5433 = vmatprep.subr.mxu0 0.0
  %5434 = vmatpush1.msra.mxu0 0.0
  %5435 = vmatprep.subr.mxu0 0.0
  %5436 = vmatpush1.msra.mxu0 0.0
  %5437 = vmatprep.subr.mxu0 0.0
  %5438 = vmatpush1.msra.mxu0 0.0
  %5439 = vmatprep.subr.mxu0 0.0
  %5440 = vmatpush1.msra.mxu0 0.0
  %5441 = vmatprep.subr.mxu0 0.0
  %5442 = vmatpush1.msra.mxu0 0.0
  %5443 = vmatprep.subr.mxu0 0.0
  %5444 = vmatpush1.msra.mxu0 0.0
  %5445 = vmatprep.subr.mxu0 0.0
  %5446 = vmatpush1.msra.mxu0 0.0
  %5447 = vmatprep.subr.mxu0 0.0
  %5448 = vmatpush1.msra.mxu0 0.0
  %5449 = vmatprep.subr.mxu0 0.0
  %5450 = vmatpush1.msra.mxu0 0.0
  %5451 = vmatprep.subr.mxu0 0.0
  %5452 = vmatpush1.msra.mxu0 0.0
  %5453 = vmatprep.subr.mxu0 0.0
  %5454 = vmatpush1.msra.mxu0 0.0
  %5455 = vmatprep.subr.mxu0 0.0
  %5456 = vmatpush1.msra.mxu0 0.0
  %5457 = vmatprep.subr.mxu0 0.0
  %5458 = vmatpush1.msra.mxu0 0.0
  %5459 = vmatprep.subr.mxu0 0.0
  %5460 = vmatpush1.msra.mxu0 0.0
  %5461 = vmatprep.subr.mxu0 0.0
  %5462 = vmatpush1.msra.mxu0 0.0
  %5463 = vmatprep.subr.mxu0 0.0
  %5464 = vmatpush1.msra.mxu0 0.0
  %5465 = vmatprep.subr.mxu0 0.0
  %5466 = vmatpush1.msra.mxu0 0.0
  %5467 = vmatprep.subr.mxu0 0.0
  %5468 = vmatpush1.msra.mxu0 0.0
  %5469 = vmatprep.subr.mxu0 0.0
  %5470 = vmatpush1.msra.mxu0 0.0
  %5471 = vmatprep.subr.mxu0 0.0
  %5472 = vmatpush1.msra.mxu0 0.0
  %5473 = vmatprep.subr.mxu0 0.0
  %5474 = vmatpush1.msra.mxu0 0.0
  %5475 = vmatprep.subr.mxu0 0.0
  %5476 = vmatpush1.msra.mxu0 0.0
  %5477 = vmatprep.subr.mxu0 0.0
  %5478 = vmatpush1.msra.mxu0 0.0
  %5479 = vmatprep.subr.mxu0 0.0
  %5480 = vmatpush1.msra.mxu0 0.0
  %5481 = vmatprep.subr.mxu0 0.0
  %5482 = vmatpush1.msra.mxu0 0.0
  %5483 = vmatprep.subr.mxu0 0.0
  %5484 = vmatpush1.msra.mxu0 0.0
  %5485 = vmatprep.subr.mxu0 0.0
  %5486 = vmatpush1.msra.mxu0 0.0
  %5487 = vmatprep.mubr.f32.mxu0 0.0
  %5488 = vmatmul.mubr.f32.gmra.mrb[0].mxu0 %v5421
  %v5489 = vpop.f32.mrb[0].mxu0
  %v5490 = vadd.f32 %v5416, %v5489
  %v5491 = vpop.f32.mrb[0].mxu0
  %v5492 = vadd.f32 %v5418, %v5491
  %5493 = vdwg.mxu0
  %v5494 = vadd.f32 %v5490, %v3019
  %v5495 = vadd.f32 %v5492, %v3023
  %v5496 = vxor.u32 %v5494, 2147483648
  %v5497 = vmul.f32 %v5496, 1.442695
  %v5498 = vpow.pop %v5497
  %v5499 = vadd.f32 %v5498, 1.0
  %v5500 = vrcp.pop %v5499
  %v5501 = vmul.f32 1.0, %v5500
  %v5502 = vtanh.pop %v5495
  %v5503 = vxor.u32 %v5495, 2147483648
  %v5504 = vmul.f32 %v5503, 1.442695
  %v5505 = vpow.pop %v5504
  %v5506 = vadd.f32 %v5505, 1.0
  %v5507 = vrcp.pop %v5506
  %v5508 = vmul.f32 1.0, %v5507
  %v5509 = vmul.f32 %v5501, %v5168
  %v5510 = vmul.f32 %v5501, %v5502
  %5512 = vrot.lane.b32.xlu0 %v5510, 64
  %v5513 = vpop.permute.xlu0 %5512
  %v5515 = vadd.f32 %v5509, %v5513
  %v5516 = vtanh.pop %v5515
  %v5517 = vmul.f32 %v5508, %v5516
  %5519 = vrot.lane.b32.xlu0 %v5346, 64
  %v5520 = vpop.permute.xlu0 %5519
  %v5521 = vsel %vm2866, %v5520, 0
  %5523 = vmatprep.subr.mxu0 %v3067
  %5524 = vmatpush1.msra.mxu0 %v3066
  %5525 = vmatprep.subr.mxu0 %v3069
  %5526 = vmatpush1.msra.mxu0 %v3068
  %5527 = vmatprep.subr.mxu0 %v3071
  %5528 = vmatpush1.msra.mxu0 %v3070
  %5529 = vmatprep.subr.mxu0 %v3073
  %5530 = vmatpush1.msra.mxu0 %v3072
  %5531 = vmatprep.subr.mxu0 %v3075
  %5532 = vmatpush1.msra.mxu0 %v3074
  %5533 = vmatprep.subr.mxu0 %v3077
  %5534 = vmatpush1.msra.mxu0 %v3076
  %5535 = vmatprep.subr.mxu0 %v3079
  %5536 = vmatpush1.msra.mxu0 %v3078
  %5537 = vmatprep.subr.mxu0 %v3081
  %5538 = vmatpush1.msra.mxu0 %v3080
  %5539 = vmatprep.subr.mxu0 0.0
  %5540 = vmatpush1.msra.mxu0 0.0
  %5541 = vmatprep.subr.mxu0 0.0
  %5542 = vmatpush1.msra.mxu0 0.0
  %5543 = vmatprep.subr.mxu0 0.0
  %5544 = vmatpush1.msra.mxu0 0.0
  %5545 = vmatprep.subr.mxu0 0.0
  %5546 = vmatpush1.msra.mxu0 0.0
  %5547 = vmatprep.subr.mxu0 0.0
  %5548 = vmatpush1.msra.mxu0 0.0
  %5549 = vmatprep.subr.mxu0 0.0
  %5550 = vmatpush1.msra.mxu0 0.0
  %5551 = vmatprep.subr.mxu0 0.0
  %5552 = vmatpush1.msra.mxu0 0.0
  %5553 = vmatprep.subr.mxu0 0.0
  %5554 = vmatpush1.msra.mxu0 0.0
  %5555 = vmatprep.subr.mxu0 0.0
  %5556 = vmatpush1.msra.mxu0 0.0
  %5557 = vmatprep.subr.mxu0 0.0
  %5558 = vmatpush1.msra.mxu0 0.0
  %5559 = vmatprep.subr.mxu0 0.0
  %5560 = vmatpush1.msra.mxu0 0.0
  %5561 = vmatprep.subr.mxu0 0.0
  %5562 = vmatpush1.msra.mxu0 0.0
  %5563 = vmatprep.subr.mxu0 0.0
  %5564 = vmatpush1.msra.mxu0 0.0
  %5565 = vmatprep.subr.mxu0 0.0
  %5566 = vmatpush1.msra.mxu0 0.0
  %5567 = vmatprep.subr.mxu0 0.0
  %5568 = vmatpush1.msra.mxu0 0.0
  %5569 = vmatprep.subr.mxu0 0.0
  %5570 = vmatpush1.msra.mxu0 0.0
  %5571 = vmatprep.subr.mxu0 0.0
  %5572 = vmatpush1.msra.mxu0 0.0
  %5573 = vmatprep.subr.mxu0 0.0
  %5574 = vmatpush1.msra.mxu0 0.0
  %5575 = vmatprep.subr.mxu0 0.0
  %5576 = vmatpush1.msra.mxu0 0.0
  %5577 = vmatprep.subr.mxu0 0.0
  %5578 = vmatpush1.msra.mxu0 0.0
  %5579 = vmatprep.subr.mxu0 0.0
  %5580 = vmatpush1.msra.mxu0 0.0
  %5581 = vmatprep.subr.mxu0 0.0
  %5582 = vmatpush1.msra.mxu0 0.0
  %5583 = vmatprep.subr.mxu0 0.0
  %5584 = vmatpush1.msra.mxu0 0.0
  %5585 = vmatprep.subr.mxu0 0.0
  %5586 = vmatpush1.msra.mxu0 0.0
  %5587 = vmatprep.mubr.f32.mxu0 0.0
  %5588 = vmatmul.mubr.f32.gmra.mrb[0].mxu0 %v5521
  %v5589 = vpop.f32.mrb[0].mxu0
  %v5590 = vadd.f32 0.0, %v5589
  %v5591 = vpop.f32.mrb[0].mxu0
  %v5592 = vadd.f32 0.0, %v5591
  %5593 = vdwg.mxu0
  %5595 = vrot.lane.b32.xlu0 %v5517, 64
  %v5596 = vpop.permute.xlu0 %5595
  %v5597 = vsel %vm2866, %v5596, 0
  %5599 = vmatprep.subr.mxu0 %v3051
  %5600 = vmatpush1.msra.mxu0 %v3050
  %5601 = vmatprep.subr.mxu0 %v3053
  %5602 = vmatpush1.msra.mxu0 %v3052
  %5603 = vmatprep.subr.mxu0 %v3055
  %5604 = vmatpush1.msra.mxu0 %v3054
  %5605 = vmatprep.subr.mxu0 %v3057
  %5606 = vmatpush1.msra.mxu0 %v3056
  %5607 = vmatprep.subr.mxu0 %v3059
  %5608 = vmatpush1.msra.mxu0 %v3058
  %5609 = vmatprep.subr.mxu0 %v3061
  %5610 = vmatpush1.msra.mxu0 %v3060
  %5611 = vmatprep.subr.mxu0 %v3063
  %5612 = vmatpush1.msra.mxu0 %v3062
  %5613 = vmatprep.subr.mxu0 %v3065
  %5614 = vmatpush1.msra.mxu0 %v3064
  %5615 = vmatprep.subr.mxu0 0.0
  %5616 = vmatpush1.msra.mxu0 0.0
  %5617 = vmatprep.subr.mxu0 0.0
  %5618 = vmatpush1.msra.mxu0 0.0
  %5619 = vmatprep.subr.mxu0 0.0
  %5620 = vmatpush1.msra.mxu0 0.0
  %5621 = vmatprep.subr.mxu0 0.0
  %5622 = vmatpush1.msra.mxu0 0.0
  %5623 = vmatprep.subr.mxu0 0.0
  %5624 = vmatpush1.msra.mxu0 0.0
  %5625 = vmatprep.subr.mxu0 0.0
  %5626 = vmatpush1.msra.mxu0 0.0
  %5627 = vmatprep.subr.mxu0 0.0
  %5628 = vmatpush1.msra.mxu0 0.0
  %5629 = vmatprep.subr.mxu0 0.0
  %5630 = vmatpush1.msra.mxu0 0.0
  %5631 = vmatprep.subr.mxu0 0.0
  %5632 = vmatpush1.msra.mxu0 0.0
  %5633 = vmatprep.subr.mxu0 0.0
  %5634 = vmatpush1.msra.mxu0 0.0
  %5635 = vmatprep.subr.mxu0 0.0
  %5636 = vmatpush1.msra.mxu0 0.0
  %5637 = vmatprep.subr.mxu0 0.0
  %5638 = vmatpush1.msra.mxu0 0.0
  %5639 = vmatprep.subr.mxu0 0.0
  %5640 = vmatpush1.msra.mxu0 0.0
  %5641 = vmatprep.subr.mxu0 0.0
  %5642 = vmatpush1.msra.mxu0 0.0
  %5643 = vmatprep.subr.mxu0 0.0
  %5644 = vmatpush1.msra.mxu0 0.0
  %5645 = vmatprep.subr.mxu0 0.0
  %5646 = vmatpush1.msra.mxu0 0.0
  %5647 = vmatprep.subr.mxu0 0.0
  %5648 = vmatpush1.msra.mxu0 0.0
  %5649 = vmatprep.subr.mxu0 0.0
  %5650 = vmatpush1.msra.mxu0 0.0
  %5651 = vmatprep.subr.mxu0 0.0
  %5652 = vmatpush1.msra.mxu0 0.0
  %5653 = vmatprep.subr.mxu0 0.0
  %5654 = vmatpush1.msra.mxu0 0.0
  %5655 = vmatprep.subr.mxu0 0.0
  %5656 = vmatpush1.msra.mxu0 0.0
  %5657 = vmatprep.subr.mxu0 0.0
  %5658 = vmatpush1.msra.mxu0 0.0
  %5659 = vmatprep.subr.mxu0 0.0
  %5660 = vmatpush1.msra.mxu0 0.0
  %5661 = vmatprep.subr.mxu0 0.0
  %5662 = vmatpush1.msra.mxu0 0.0
  %5663 = vmatprep.mubr.f32.mxu0 0.0
  %5664 = vmatmul.mubr.f32.gmra.mrb[0].mxu0 %v5597
  %v5665 = vpop.f32.mrb[0].mxu0
  %v5666 = vadd.f32 %v5590, %v5665
  %v5667 = vpop.f32.mrb[0].mxu0
  %v5668 = vadd.f32 %v5592, %v5667
  %5669 = vdwg.mxu0
  %v5670 = vadd.f32 %v5666, %v3234
  %v5671 = vadd.f32 %v5668, %v3238
  %v5672 = vxor.u32 %v5670, 2147483648
  %v5673 = vmul.f32 %v5672, 1.442695
  %v5674 = vpow.pop %v5673
  %v5675 = vadd.f32 %v5674, 1.0
  %v5676 = vrcp.pop %v5675
  %v5677 = vmul.f32 1.0, %v5676
  %v5678 = vtanh.pop %v5671
  %v5679 = vxor.u32 %v5671, 2147483648
  %v5680 = vmul.f32 %v5679, 1.442695
  %v5681 = vpow.pop %v5680
  %v5682 = vadd.f32 %v5681, 1.0
  %v5683 = vrcp.pop %v5682
  %v5684 = vmul.f32 1.0, %v5683
  %v5685 = vmul.f32 %v5677, %v5344
  %v5686 = vmul.f32 %v5677, %v5678
  %5688 = vrot.lane.b32.xlu0 %v5686, 64
  %v5689 = vpop.permute.xlu0 %5688
  %v5691 = vadd.f32 %v5685, %v5689
  %v5692 = vtanh.pop %v5691
  %v5693 = vmul.f32 %v5684, %v5692
  %s5694 = scalar_lea.vmem %s1, 64
  %v5695 = vld [vmem:[%s5694] sm:$0xff]
  %5696 = vmatprep.subr.mxu0 %v2851
  %5697 = vmatpush1.msra.mxu0 %v2850
  %5698 = vmatprep.subr.mxu0 %v2853
  %5699 = vmatpush1.msra.mxu0 %v2852
  %5700 = vmatprep.subr.mxu0 %v2855
  %5701 = vmatpush1.msra.mxu0 %v2854
  %5702 = vmatprep.subr.mxu0 %v2857
  %5703 = vmatpush1.msra.mxu0 %v2856
  %5704 = vmatprep.subr.mxu0 %v2859
  %5705 = vmatpush1.msra.mxu0 %v2858
  %5706 = vmatprep.subr.mxu0 %v2861
  %5707 = vmatpush1.msra.mxu0 %v2860
  %5708 = vmatprep.subr.mxu0 %v2863
  %5709 = vmatpush1.msra.mxu0 %v2862
  %5710 = vmatprep.subr.mxu0 %v2865
  %5711 = vmatpush1.msra.mxu0 %v2864
  %5712 = vmatprep.subr.mxu0 0.0
  %5713 = vmatpush1.msra.mxu0 0.0
  %5714 = vmatprep.subr.mxu0 0.0
  %5715 = vmatpush1.msra.mxu0 0.0
  %5716 = vmatprep.subr.mxu0 0.0
  %5717 = vmatpush1.msra.mxu0 0.0
  %5718 = vmatprep.subr.mxu0 0.0
  %5719 = vmatpush1.msra.mxu0 0.0
  %5720 = vmatprep.subr.mxu0 0.0
  %5721 = vmatpush1.msra.mxu0 0.0
  %5722 = vmatprep.subr.mxu0 0.0
  %5723 = vmatpush1.msra.mxu0 0.0
  %5724 = vmatprep.subr.mxu0 0.0
  %5725 = vmatpush1.msra.mxu0 0.0
  %5726 = vmatprep.subr.mxu0 0.0
  %5727 = vmatpush1.msra.mxu0 0.0
  %5728 = vmatprep.subr.mxu0 0.0
  %5729 = vmatpush1.msra.mxu0 0.0
  %5730 = vmatprep.subr.mxu0 0.0
  %5731 = vmatpush1.msra.mxu0 0.0
  %5732 = vmatprep.subr.mxu0 0.0
  %5733 = vmatpush1.msra.mxu0 0.0
  %5734 = vmatprep.subr.mxu0 0.0
  %5735 = vmatpush1.msra.mxu0 0.0
  %5736 = vmatprep.subr.mxu0 0.0
  %5737 = vmatpush1.msra.mxu0 0.0
  %5738 = vmatprep.subr.mxu0 0.0
  %5739 = vmatpush1.msra.mxu0 0.0
  %5740 = vmatprep.subr.mxu0 0.0
  %5741 = vmatpush1.msra.mxu0 0.0
  %5742 = vmatprep.subr.mxu0 0.0
  %5743 = vmatpush1.msra.mxu0 0.0
  %5744 = vmatprep.subr.mxu0 0.0
  %5745 = vmatpush1.msra.mxu0 0.0
  %5746 = vmatprep.subr.mxu0 0.0
  %5747 = vmatpush1.msra.mxu0 0.0
  %5748 = vmatprep.subr.mxu0 0.0
  %5749 = vmatpush1.msra.mxu0 0.0
  %5750 = vmatprep.subr.mxu0 0.0
  %5751 = vmatpush1.msra.mxu0 0.0
  %5752 = vmatprep.subr.mxu0 0.0
  %5753 = vmatpush1.msra.mxu0 0.0
  %5754 = vmatprep.subr.mxu0 0.0
  %5755 = vmatpush1.msra.mxu0 0.0
  %5756 = vmatprep.subr.mxu0 0.0
  %5757 = vmatpush1.msra.mxu0 0.0
  %5758 = vmatprep.subr.mxu0 0.0
  %5759 = vmatpush1.msra.mxu0 0.0
  %5760 = vmatprep.mubr.f32.mxu0 0.0
  %5761 = vmatmul.mubr.f32.gmra.mrb[0].mxu0 %v5597
  %v5762 = vpop.f32.mrb[0].mxu0
  %v5763 = vadd.f32 0.0, %v5762
  %v5764 = vpop.f32.mrb[0].mxu0
  %v5765 = vadd.f32 0.0, %v5764
  %5766 = vdwg.mxu0
  %v5768 = vsel %vm62, %v5695, 0
  %5770 = vmatprep.subr.mxu0 %v2843
  %5771 = vmatpush1.msra.mxu0 %v2842
  %5772 = vmatprep.subr.mxu0 %v2845
  %5773 = vmatpush1.msra.mxu0 %v2844
  %5774 = vmatprep.subr.mxu0 %v2847
  %5775 = vmatpush1.msra.mxu0 %v2846
  %5776 = vmatprep.subr.mxu0 %v2849
  %5777 = vmatpush1.msra.mxu0 %v2848
  %5778 = vmatprep.subr.mxu0 0.0
  %5779 = vmatpush1.msra.mxu0 0.0
  %5780 = vmatprep.subr.mxu0 0.0
  %5781 = vmatpush1.msra.mxu0 0.0
  %5782 = vmatprep.subr.mxu0 0.0
  %5783 = vmatpush1.msra.mxu0 0.0
  %5784 = vmatprep.subr.mxu0 0.0
  %5785 = vmatpush1.msra.mxu0 0.0
  %5786 = vmatprep.subr.mxu0 0.0
  %5787 = vmatpush1.msra.mxu0 0.0
  %5788 = vmatprep.subr.mxu0 0.0
  %5789 = vmatpush1.msra.mxu0 0.0
  %5790 = vmatprep.subr.mxu0 0.0
  %5791 = vmatpush1.msra.mxu0 0.0
  %5792 = vmatprep.subr.mxu0 0.0
  %5793 = vmatpush1.msra.mxu0 0.0
  %5794 = vmatprep.subr.mxu0 0.0
  %5795 = vmatpush1.msra.mxu0 0.0
  %5796 = vmatprep.subr.mxu0 0.0
  %5797 = vmatpush1.msra.mxu0 0.0
  %5798 = vmatprep.subr.mxu0 0.0
  %5799 = vmatpush1.msra.mxu0 0.0
  %5800 = vmatprep.subr.mxu0 0.0
  %5801 = vmatpush1.msra.mxu0 0.0
  %5802 = vmatprep.subr.mxu0 0.0
  %5803 = vmatpush1.msra.mxu0 0.0
  %5804 = vmatprep.subr.mxu0 0.0
  %5805 = vmatpush1.msra.mxu0 0.0
  %5806 = vmatprep.subr.mxu0 0.0
  %5807 = vmatpush1.msra.mxu0 0.0
  %5808 = vmatprep.subr.mxu0 0.0
  %5809 = vmatpush1.msra.mxu0 0.0
  %5810 = vmatprep.subr.mxu0 0.0
  %5811 = vmatpush1.msra.mxu0 0.0
  %5812 = vmatprep.subr.mxu0 0.0
  %5813 = vmatpush1.msra.mxu0 0.0
  %5814 = vmatprep.subr.mxu0 0.0
  %5815 = vmatpush1.msra.mxu0 0.0
  %5816 = vmatprep.subr.mxu0 0.0
  %5817 = vmatpush1.msra.mxu0 0.0
  %5818 = vmatprep.subr.mxu0 0.0
  %5819 = vmatpush1.msra.mxu0 0.0
  %5820 = vmatprep.subr.mxu0 0.0
  %5821 = vmatpush1.msra.mxu0 0.0
  %5822 = vmatprep.subr.mxu0 0.0
  %5823 = vmatpush1.msra.mxu0 0.0
  %5824 = vmatprep.subr.mxu0 0.0
  %5825 = vmatpush1.msra.mxu0 0.0
  %5826 = vmatprep.subr.mxu0 0.0
  %5827 = vmatpush1.msra.mxu0 0.0
  %5828 = vmatprep.subr.mxu0 0.0
  %5829 = vmatpush1.msra.mxu0 0.0
  %5830 = vmatprep.subr.mxu0 0.0
  %5831 = vmatpush1.msra.mxu0 0.0
  %5832 = vmatprep.subr.mxu0 0.0
  %5833 = vmatpush1.msra.mxu0 0.0
  %5834 = vmatprep.mubr.f32.mxu0 0.0
  %5835 = vmatmul.mubr.f32.gmra.mrb[0].mxu0 %v5768
  %v5836 = vpop.f32.mrb[0].mxu0
  %v5837 = vadd.f32 %v5763, %v5836
  %v5838 = vpop.f32.mrb[0].mxu0
  %v5839 = vadd.f32 %v5765, %v5838
  %5840 = vdwg.mxu0
  %v5841 = vadd.f32 %v5837, %v3019
  %v5842 = vadd.f32 %v5839, %v3023
  %v5843 = vxor.u32 %v5841, 2147483648
  %v5844 = vmul.f32 %v5843, 1.442695
  %v5845 = vpow.pop %v5844
  %v5846 = vadd.f32 %v5845, 1.0
  %v5847 = vrcp.pop %v5846
  %v5848 = vmul.f32 1.0, %v5847
  %v5849 = vtanh.pop %v5842
  %v5850 = vxor.u32 %v5842, 2147483648
  %v5851 = vmul.f32 %v5850, 1.442695
  %v5852 = vpow.pop %v5851
  %v5853 = vadd.f32 %v5852, 1.0
  %v5854 = vrcp.pop %v5853
  %v5855 = vmul.f32 1.0, %v5854
  %v5856 = vmul.f32 %v5848, %v5515
  %v5857 = vmul.f32 %v5848, %v5849
  %5859 = vrot.lane.b32.xlu0 %v5857, 64
  %v5860 = vpop.permute.xlu0 %5859
  %v5862 = vadd.f32 %v5856, %v5860
  %v5863 = vtanh.pop %v5862
  %v5864 = vmul.f32 %v5855, %v5863
  %5866 = vrot.lane.b32.xlu0 %v5693, 64
  %v5867 = vpop.permute.xlu0 %5866
  %v5868 = vsel %vm2866, %v5867, 0
  %5870 = vmatprep.subr.mxu0 %v3067
  %5871 = vmatpush1.msra.mxu0 %v3066
  %5872 = vmatprep.subr.mxu0 %v3069
  %5873 = vmatpush1.msra.mxu0 %v3068
  %5874 = vmatprep.subr.mxu0 %v3071
  %5875 = vmatpush1.msra.mxu0 %v3070
  %5876 = vmatprep.subr.mxu0 %v3073
  %5877 = vmatpush1.msra.mxu0 %v3072
  %5878 = vmatprep.subr.mxu0 %v3075
  %5879 = vmatpush1.msra.mxu0 %v3074
  %5880 = vmatprep.subr.mxu0 %v3077
  %5881 = vmatpush1.msra.mxu0 %v3076
  %5882 = vmatprep.subr.mxu0 %v3079
  %5883 = vmatpush1.msra.mxu0 %v3078
  %5884 = vmatprep.subr.mxu0 %v3081
  %5885 = vmatpush1.msra.mxu0 %v3080
  %5886 = vmatprep.subr.mxu0 0.0
  %5887 = vmatpush1.msra.mxu0 0.0
  %5888 = vmatprep.subr.mxu0 0.0
  %5889 = vmatpush1.msra.mxu0 0.0
  %5890 = vmatprep.subr.mxu0 0.0
  %5891 = vmatpush1.msra.mxu0 0.0
  %5892 = vmatprep.subr.mxu0 0.0
  %5893 = vmatpush1.msra.mxu0 0.0
  %5894 = vmatprep.subr.mxu0 0.0
  %5895 = vmatpush1.msra.mxu0 0.0
  %5896 = vmatprep.subr.mxu0 0.0
  %5897 = vmatpush1.msra.mxu0 0.0
  %5898 = vmatprep.subr.mxu0 0.0
  %5899 = vmatpush1.msra.mxu0 0.0
  %5900 = vmatprep.subr.mxu0 0.0
  %5901 = vmatpush1.msra.mxu0 0.0
  %5902 = vmatprep.subr.mxu0 0.0
  %5903 = vmatpush1.msra.mxu0 0.0
  %5904 = vmatprep.subr.mxu0 0.0
  %5905 = vmatpush1.msra.mxu0 0.0
  %5906 = vmatprep.subr.mxu0 0.0
  %5907 = vmatpush1.msra.mxu0 0.0
  %5908 = vmatprep.subr.mxu0 0.0
  %5909 = vmatpush1.msra.mxu0 0.0
  %5910 = vmatprep.subr.mxu0 0.0
  %5911 = vmatpush1.msra.mxu0 0.0
  %5912 = vmatprep.subr.mxu0 0.0
  %5913 = vmatpush1.msra.mxu0 0.0
  %5914 = vmatprep.subr.mxu0 0.0
  %5915 = vmatpush1.msra.mxu0 0.0
  %5916 = vmatprep.subr.mxu0 0.0
  %5917 = vmatpush1.msra.mxu0 0.0
  %5918 = vmatprep.subr.mxu0 0.0
  %5919 = vmatpush1.msra.mxu0 0.0
  %5920 = vmatprep.subr.mxu0 0.0
  %5921 = vmatpush1.msra.mxu0 0.0
  %5922 = vmatprep.subr.mxu0 0.0
  %5923 = vmatpush1.msra.mxu0 0.0
  %5924 = vmatprep.subr.mxu0 0.0
  %5925 = vmatpush1.msra.mxu0 0.0
  %5926 = vmatprep.subr.mxu0 0.0
  %5927 = vmatpush1.msra.mxu0 0.0
  %5928 = vmatprep.subr.mxu0 0.0
  %5929 = vmatpush1.msra.mxu0 0.0
  %5930 = vmatprep.subr.mxu0 0.0
  %5931 = vmatpush1.msra.mxu0 0.0
  %5932 = vmatprep.subr.mxu0 0.0
  %5933 = vmatpush1.msra.mxu0 0.0
  %5934 = vmatprep.mubr.f32.mxu0 0.0
  %5935 = vmatmul.mubr.f32.gmra.mrb[0].mxu0 %v5868
  %v5936 = vpop.f32.mrb[0].mxu0
  %v5937 = vadd.f32 0.0, %v5936
  %v5938 = vpop.f32.mrb[0].mxu0
  %v5939 = vadd.f32 0.0, %v5938
  %5940 = vdwg.mxu0
  %5942 = vrot.lane.b32.xlu0 %v5864, 64
  %v5943 = vpop.permute.xlu0 %5942
  %v5944 = vsel %vm2866, %v5943, 0
  %5946 = vmatprep.subr.mxu0 %v3051
  %5947 = vmatpush1.msra.mxu0 %v3050
  %5948 = vmatprep.subr.mxu0 %v3053
  %5949 = vmatpush1.msra.mxu0 %v3052
  %5950 = vmatprep.subr.mxu0 %v3055
  %5951 = vmatpush1.msra.mxu0 %v3054
  %5952 = vmatprep.subr.mxu0 %v3057
  %5953 = vmatpush1.msra.mxu0 %v3056
  %5954 = vmatprep.subr.mxu0 %v3059
  %5955 = vmatpush1.msra.mxu0 %v3058
  %5956 = vmatprep.subr.mxu0 %v3061
  %5957 = vmatpush1.msra.mxu0 %v3060
  %5958 = vmatprep.subr.mxu0 %v3063
  %5959 = vmatpush1.msra.mxu0 %v3062
  %5960 = vmatprep.subr.mxu0 %v3065
  %5961 = vmatpush1.msra.mxu0 %v3064
  %5962 = vmatprep.subr.mxu0 0.0
  %5963 = vmatpush1.msra.mxu0 0.0
  %5964 = vmatprep.subr.mxu0 0.0
  %5965 = vmatpush1.msra.mxu0 0.0
  %5966 = vmatprep.subr.mxu0 0.0
  %5967 = vmatpush1.msra.mxu0 0.0
  %5968 = vmatprep.subr.mxu0 0.0
  %5969 = vmatpush1.msra.mxu0 0.0
  %5970 = vmatprep.subr.mxu0 0.0
  %5971 = vmatpush1.msra.mxu0 0.0
  %5972 = vmatprep.subr.mxu0 0.0
  %5973 = vmatpush1.msra.mxu0 0.0
  %5974 = vmatprep.subr.mxu0 0.0
  %5975 = vmatpush1.msra.mxu0 0.0
  %5976 = vmatprep.subr.mxu0 0.0
  %5977 = vmatpush1.msra.mxu0 0.0
  %5978 = vmatprep.subr.mxu0 0.0
  %5979 = vmatpush1.msra.mxu0 0.0
  %5980 = vmatprep.subr.mxu0 0.0
  %5981 = vmatpush1.msra.mxu0 0.0
  %5982 = vmatprep.subr.mxu0 0.0
  %5983 = vmatpush1.msra.mxu0 0.0
  %5984 = vmatprep.subr.mxu0 0.0
  %5985 = vmatpush1.msra.mxu0 0.0
  %5986 = vmatprep.subr.mxu0 0.0
  %5987 = vmatpush1.msra.mxu0 0.0
  %5988 = vmatprep.subr.mxu0 0.0
  %5989 = vmatpush1.msra.mxu0 0.0
  %5990 = vmatprep.subr.mxu0 0.0
  %5991 = vmatpush1.msra.mxu0 0.0
  %5992 = vmatprep.subr.mxu0 0.0
  %5993 = vmatpush1.msra.mxu0 0.0
  %5994 = vmatprep.subr.mxu0 0.0
  %5995 = vmatpush1.msra.mxu0 0.0
  %5996 = vmatprep.subr.mxu0 0.0
  %5997 = vmatpush1.msra.mxu0 0.0
  %5998 = vmatprep.subr.mxu0 0.0
  %5999 = vmatpush1.msra.mxu0 0.0
  %6000 = vmatprep.subr.mxu0 0.0
  %6001 = vmatpush1.msra.mxu0 0.0
  %6002 = vmatprep.subr.mxu0 0.0
  %6003 = vmatpush1.msra.mxu0 0.0
  %6004 = vmatprep.subr.mxu0 0.0
  %6005 = vmatpush1.msra.mxu0 0.0
  %6006 = vmatprep.subr.mxu0 0.0
  %6007 = vmatpush1.msra.mxu0 0.0
  %6008 = vmatprep.subr.mxu0 0.0
  %6009 = vmatpush1.msra.mxu0 0.0
  %6010 = vmatprep.mubr.f32.mxu0 0.0
  %6011 = vmatmul.mubr.f32.gmra.mrb[0].mxu0 %v5944
  %v6012 = vpop.f32.mrb[0].mxu0
  %v6013 = vadd.f32 %v5937, %v6012
  %v6014 = vpop.f32.mrb[0].mxu0
  %v6015 = vadd.f32 %v5939, %v6014
  %6016 = vdwg.mxu0
  %v6017 = vadd.f32 %v6013, %v3234
  %v6018 = vadd.f32 %v6015, %v3238
  %v6019 = vxor.u32 %v6017, 2147483648
  %v6020 = vmul.f32 %v6019, 1.442695
  %v6021 = vpow.pop %v6020
  %v6022 = vadd.f32 %v6021, 1.0
  %v6023 = vrcp.pop %v6022
  %v6024 = vmul.f32 1.0, %v6023
  %v6025 = vtanh.pop %v6018
  %v6026 = vxor.u32 %v6018, 2147483648
  %v6027 = vmul.f32 %v6026, 1.442695
  %v6028 = vpow.pop %v6027
  %v6029 = vadd.f32 %v6028, 1.0
  %v6030 = vrcp.pop %v6029
  %v6031 = vmul.f32 1.0, %v6030
  %v6032 = vmul.f32 %v6024, %v5691
  %v6033 = vmul.f32 %v6024, %v6025
  %6035 = vrot.lane.b32.xlu0 %v6033, 64
  %v6036 = vpop.permute.xlu0 %6035
  %v6038 = vadd.f32 %v6032, %v6036
  %v6039 = vtanh.pop %v6038
  %v6040 = vmul.f32 %v6031, %v6039
  %s6041 = scalar_lea.vmem %s1, 72
  %v6042 = vld [vmem:[%s6041] sm:$0xff]
  %6043 = vmatprep.subr.mxu0 %v2851
  %6044 = vmatpush1.msra.mxu0 %v2850
  %6045 = vmatprep.subr.mxu0 %v2853
  %6046 = vmatpush1.msra.mxu0 %v2852
  %6047 = vmatprep.subr.mxu0 %v2855
  %6048 = vmatpush1.msra.mxu0 %v2854
  %6049 = vmatprep.subr.mxu0 %v2857
  %6050 = vmatpush1.msra.mxu0 %v2856
  %6051 = vmatprep.subr.mxu0 %v2859
  %6052 = vmatpush1.msra.mxu0 %v2858
  %6053 = vmatprep.subr.mxu0 %v2861
  %6054 = vmatpush1.msra.mxu0 %v2860
  %6055 = vmatprep.subr.mxu0 %v2863
  %6056 = vmatpush1.msra.mxu0 %v2862
  %6057 = vmatprep.subr.mxu0 %v2865
  %6058 = vmatpush1.msra.mxu0 %v2864
  %6059 = vmatprep.subr.mxu0 0.0
  %6060 = vmatpush1.msra.mxu0 0.0
  %6061 = vmatprep.subr.mxu0 0.0
  %6062 = vmatpush1.msra.mxu0 0.0
  %6063 = vmatprep.subr.mxu0 0.0
  %6064 = vmatpush1.msra.mxu0 0.0
  %6065 = vmatprep.subr.mxu0 0.0
  %6066 = vmatpush1.msra.mxu0 0.0
  %6067 = vmatprep.subr.mxu0 0.0
  %6068 = vmatpush1.msra.mxu0 0.0
  %6069 = vmatprep.subr.mxu0 0.0
  %6070 = vmatpush1.msra.mxu0 0.0
  %6071 = vmatprep.subr.mxu0 0.0
  %6072 = vmatpush1.msra.mxu0 0.0
  %6073 = vmatprep.subr.mxu0 0.0
  %6074 = vmatpush1.msra.mxu0 0.0
  %6075 = vmatprep.subr.mxu0 0.0
  %6076 = vmatpush1.msra.mxu0 0.0
  %6077 = vmatprep.subr.mxu0 0.0
  %6078 = vmatpush1.msra.mxu0 0.0
  %6079 = vmatprep.subr.mxu0 0.0
  %6080 = vmatpush1.msra.mxu0 0.0
  %6081 = vmatprep.subr.mxu0 0.0
  %6082 = vmatpush1.msra.mxu0 0.0
  %6083 = vmatprep.subr.mxu0 0.0
  %6084 = vmatpush1.msra.mxu0 0.0
  %6085 = vmatprep.subr.mxu0 0.0
  %6086 = vmatpush1.msra.mxu0 0.0
  %6087 = vmatprep.subr.mxu0 0.0
  %6088 = vmatpush1.msra.mxu0 0.0
  %6089 = vmatprep.subr.mxu0 0.0
  %6090 = vmatpush1.msra.mxu0 0.0
  %6091 = vmatprep.subr.mxu0 0.0
  %6092 = vmatpush1.msra.mxu0 0.0
  %6093 = vmatprep.subr.mxu0 0.0
  %6094 = vmatpush1.msra.mxu0 0.0
  %6095 = vmatprep.subr.mxu0 0.0
  %6096 = vmatpush1.msra.mxu0 0.0
  %6097 = vmatprep.subr.mxu0 0.0
  %6098 = vmatpush1.msra.mxu0 0.0
  %6099 = vmatprep.subr.mxu0 0.0
  %6100 = vmatpush1.msra.mxu0 0.0
  %6101 = vmatprep.subr.mxu0 0.0
  %6102 = vmatpush1.msra.mxu0 0.0
  %6103 = vmatprep.subr.mxu0 0.0
  %6104 = vmatpush1.msra.mxu0 0.0
  %6105 = vmatprep.subr.mxu0 0.0
  %6106 = vmatpush1.msra.mxu0 0.0
  %6107 = vmatprep.mubr.f32.mxu0 0.0
  %6108 = vmatmul.mubr.f32.gmra.mrb[0].mxu0 %v5944
  %v6109 = vpop.f32.mrb[0].mxu0
  %v6110 = vadd.f32 0.0, %v6109
  %v6111 = vpop.f32.mrb[0].mxu0
  %v6112 = vadd.f32 0.0, %v6111
  %6113 = vdwg.mxu0
  %v6115 = vsel %vm62, %v6042, 0
  %6117 = vmatprep.subr.mxu0 %v2843
  %6118 = vmatpush1.msra.mxu0 %v2842
  %6119 = vmatprep.subr.mxu0 %v2845
  %6120 = vmatpush1.msra.mxu0 %v2844
  %6121 = vmatprep.subr.mxu0 %v2847
  %6122 = vmatpush1.msra.mxu0 %v2846
  %6123 = vmatprep.subr.mxu0 %v2849
  %6124 = vmatpush1.msra.mxu0 %v2848
  %6125 = vmatprep.subr.mxu0 0.0
  %6126 = vmatpush1.msra.mxu0 0.0
  %6127 = vmatprep.subr.mxu0 0.0
  %6128 = vmatpush1.msra.mxu0 0.0
  %6129 = vmatprep.subr.mxu0 0.0
  %6130 = vmatpush1.msra.mxu0 0.0
  %6131 = vmatprep.subr.mxu0 0.0
  %6132 = vmatpush1.msra.mxu0 0.0
  %6133 = vmatprep.subr.mxu0 0.0
  %6134 = vmatpush1.msra.mxu0 0.0
  %6135 = vmatprep.subr.mxu0 0.0
  %6136 = vmatpush1.msra.mxu0 0.0
  %6137 = vmatprep.subr.mxu0 0.0
  %6138 = vmatpush1.msra.mxu0 0.0
  %6139 = vmatprep.subr.mxu0 0.0
  %6140 = vmatpush1.msra.mxu0 0.0
  %6141 = vmatprep.subr.mxu0 0.0
  %6142 = vmatpush1.msra.mxu0 0.0
  %6143 = vmatprep.subr.mxu0 0.0
  %6144 = vmatpush1.msra.mxu0 0.0
  %6145 = vmatprep.subr.mxu0 0.0
  %6146 = vmatpush1.msra.mxu0 0.0
  %6147 = vmatprep.subr.mxu0 0.0
  %6148 = vmatpush1.msra.mxu0 0.0
  %6149 = vmatprep.subr.mxu0 0.0
  %6150 = vmatpush1.msra.mxu0 0.0
  %6151 = vmatprep.subr.mxu0 0.0
  %6152 = vmatpush1.msra.mxu0 0.0
  %6153 = vmatprep.subr.mxu0 0.0
  %6154 = vmatpush1.msra.mxu0 0.0
  %6155 = vmatprep.subr.mxu0 0.0
  %6156 = vmatpush1.msra.mxu0 0.0
  %6157 = vmatprep.subr.mxu0 0.0
  %6158 = vmatpush1.msra.mxu0 0.0
  %6159 = vmatprep.subr.mxu0 0.0
  %6160 = vmatpush1.msra.mxu0 0.0
  %6161 = vmatprep.subr.mxu0 0.0
  %6162 = vmatpush1.msra.mxu0 0.0
  %6163 = vmatprep.subr.mxu0 0.0
  %6164 = vmatpush1.msra.mxu0 0.0
  %6165 = vmatprep.subr.mxu0 0.0
  %6166 = vmatpush1.msra.mxu0 0.0
  %6167 = vmatprep.subr.mxu0 0.0
  %6168 = vmatpush1.msra.mxu0 0.0
  %6169 = vmatprep.subr.mxu0 0.0
  %6170 = vmatpush1.msra.mxu0 0.0
  %6171 = vmatprep.subr.mxu0 0.0
  %6172 = vmatpush1.msra.mxu0 0.0
  %6173 = vmatprep.subr.mxu0 0.0
  %6174 = vmatpush1.msra.mxu0 0.0
  %6175 = vmatprep.subr.mxu0 0.0
  %6176 = vmatpush1.msra.mxu0 0.0
  %6177 = vmatprep.subr.mxu0 0.0
  %6178 = vmatpush1.msra.mxu0 0.0
  %6179 = vmatprep.subr.mxu0 0.0
  %6180 = vmatpush1.msra.mxu0 0.0
  %6181 = vmatprep.mubr.f32.mxu0 0.0
  %6182 = vmatmul.mubr.f32.gmra.mrb[0].mxu0 %v6115
  %v6183 = vpop.f32.mrb[0].mxu0
  %v6184 = vadd.f32 %v6110, %v6183
  %v6185 = vpop.f32.mrb[0].mxu0
  %v6186 = vadd.f32 %v6112, %v6185
  %6187 = vdwg.mxu0
  %v6188 = vadd.f32 %v6184, %v3019
  %v6189 = vadd.f32 %v6186, %v3023
  %v6190 = vxor.u32 %v6188, 2147483648
  %v6191 = vmul.f32 %v6190, 1.442695
  %v6192 = vpow.pop %v6191
  %v6193 = vadd.f32 %v6192, 1.0
  %v6194 = vrcp.pop %v6193
  %v6195 = vmul.f32 1.0, %v6194
  %v6196 = vtanh.pop %v6189
  %v6197 = vxor.u32 %v6189, 2147483648
  %v6198 = vmul.f32 %v6197, 1.442695
  %v6199 = vpow.pop %v6198
  %v6200 = vadd.f32 %v6199, 1.0
  %v6201 = vrcp.pop %v6200
  %v6202 = vmul.f32 1.0, %v6201
  %v6203 = vmul.f32 %v6195, %v5862
  %v6204 = vmul.f32 %v6195, %v6196
  %6206 = vrot.lane.b32.xlu0 %v6204, 64
  %v6207 = vpop.permute.xlu0 %6206
  %v6209 = vadd.f32 %v6203, %v6207
  %v6210 = vtanh.pop %v6209
  %v6211 = vmul.f32 %v6202, %v6210
  %6213 = vrot.lane.b32.xlu0 %v6040, 64
  %v6214 = vpop.permute.xlu0 %6213
  %v6215 = vsel %vm2866, %v6214, 0
  %6217 = vmatprep.subr.mxu0 %v3067
  %6218 = vmatpush1.msra.mxu0 %v3066
  %6219 = vmatprep.subr.mxu0 %v3069
  %6220 = vmatpush1.msra.mxu0 %v3068
  %6221 = vmatprep.subr.mxu0 %v3071
  %6222 = vmatpush1.msra.mxu0 %v3070
  %6223 = vmatprep.subr.mxu0 %v3073
  %6224 = vmatpush1.msra.mxu0 %v3072
  %6225 = vmatprep.subr.mxu0 %v3075
  %6226 = vmatpush1.msra.mxu0 %v3074
  %6227 = vmatprep.subr.mxu0 %v3077
  %6228 = vmatpush1.msra.mxu0 %v3076
  %6229 = vmatprep.subr.mxu0 %v3079
  %6230 = vmatpush1.msra.mxu0 %v3078
  %6231 = vmatprep.subr.mxu0 %v3081
  %6232 = vmatpush1.msra.mxu0 %v3080
  %6233 = vmatprep.subr.mxu0 0.0
  %6234 = vmatpush1.msra.mxu0 0.0
  %6235 = vmatprep.subr.mxu0 0.0
  %6236 = vmatpush1.msra.mxu0 0.0
  %6237 = vmatprep.subr.mxu0 0.0
  %6238 = vmatpush1.msra.mxu0 0.0
  %6239 = vmatprep.subr.mxu0 0.0
  %6240 = vmatpush1.msra.mxu0 0.0
  %6241 = vmatprep.subr.mxu0 0.0
  %6242 = vmatpush1.msra.mxu0 0.0
  %6243 = vmatprep.subr.mxu0 0.0
  %6244 = vmatpush1.msra.mxu0 0.0
  %6245 = vmatprep.subr.mxu0 0.0
  %6246 = vmatpush1.msra.mxu0 0.0
  %6247 = vmatprep.subr.mxu0 0.0
  %6248 = vmatpush1.msra.mxu0 0.0
  %6249 = vmatprep.subr.mxu0 0.0
  %6250 = vmatpush1.msra.mxu0 0.0
  %6251 = vmatprep.subr.mxu0 0.0
  %6252 = vmatpush1.msra.mxu0 0.0
  %6253 = vmatprep.subr.mxu0 0.0
  %6254 = vmatpush1.msra.mxu0 0.0
  %6255 = vmatprep.subr.mxu0 0.0
  %6256 = vmatpush1.msra.mxu0 0.0
  %6257 = vmatprep.subr.mxu0 0.0
  %6258 = vmatpush1.msra.mxu0 0.0
  %6259 = vmatprep.subr.mxu0 0.0
  %6260 = vmatpush1.msra.mxu0 0.0
  %6261 = vmatprep.subr.mxu0 0.0
  %6262 = vmatpush1.msra.mxu0 0.0
  %6263 = vmatprep.subr.mxu0 0.0
  %6264 = vmatpush1.msra.mxu0 0.0
  %6265 = vmatprep.subr.mxu0 0.0
  %6266 = vmatpush1.msra.mxu0 0.0
  %6267 = vmatprep.subr.mxu0 0.0
  %6268 = vmatpush1.msra.mxu0 0.0
  %6269 = vmatprep.subr.mxu0 0.0
  %6270 = vmatpush1.msra.mxu0 0.0
  %6271 = vmatprep.subr.mxu0 0.0
  %6272 = vmatpush1.msra.mxu0 0.0
  %6273 = vmatprep.subr.mxu0 0.0
  %6274 = vmatpush1.msra.mxu0 0.0
  %6275 = vmatprep.subr.mxu0 0.0
  %6276 = vmatpush1.msra.mxu0 0.0
  %6277 = vmatprep.subr.mxu0 0.0
  %6278 = vmatpush1.msra.mxu0 0.0
  %6279 = vmatprep.subr.mxu0 0.0
  %6280 = vmatpush1.msra.mxu0 0.0
  %6281 = vmatprep.mubr.f32.mxu0 0.0
  %6282 = vmatmul.mubr.f32.gmra.mrb[0].mxu0 %v6215
  %v6283 = vpop.f32.mrb[0].mxu0
  %v6284 = vadd.f32 0.0, %v6283
  %v6285 = vpop.f32.mrb[0].mxu0
  %v6286 = vadd.f32 0.0, %v6285
  %6287 = vdwg.mxu0
  %6289 = vrot.lane.b32.xlu0 %v6211, 64
  %v6290 = vpop.permute.xlu0 %6289
  %v6291 = vsel %vm2866, %v6290, 0
  %6293 = vmatprep.subr.mxu0 %v3051
  %6294 = vmatpush1.msra.mxu0 %v3050
  %6295 = vmatprep.subr.mxu0 %v3053
  %6296 = vmatpush1.msra.mxu0 %v3052
  %6297 = vmatprep.subr.mxu0 %v3055
  %6298 = vmatpush1.msra.mxu0 %v3054
  %6299 = vmatprep.subr.mxu0 %v3057
  %6300 = vmatpush1.msra.mxu0 %v3056
  %6301 = vmatprep.subr.mxu0 %v3059
  %6302 = vmatpush1.msra.mxu0 %v3058
  %6303 = vmatprep.subr.mxu0 %v3061
  %6304 = vmatpush1.msra.mxu0 %v3060
  %6305 = vmatprep.subr.mxu0 %v3063
  %6306 = vmatpush1.msra.mxu0 %v3062
  %6307 = vmatprep.subr.mxu0 %v3065
  %6308 = vmatpush1.msra.mxu0 %v3064
  %6309 = vmatprep.subr.mxu0 0.0
  %6310 = vmatpush1.msra.mxu0 0.0
  %6311 = vmatprep.subr.mxu0 0.0
  %6312 = vmatpush1.msra.mxu0 0.0
  %6313 = vmatprep.subr.mxu0 0.0
  %6314 = vmatpush1.msra.mxu0 0.0
  %6315 = vmatprep.subr.mxu0 0.0
  %6316 = vmatpush1.msra.mxu0 0.0
  %6317 = vmatprep.subr.mxu0 0.0
  %6318 = vmatpush1.msra.mxu0 0.0
  %6319 = vmatprep.subr.mxu0 0.0
  %6320 = vmatpush1.msra.mxu0 0.0
  %6321 = vmatprep.subr.mxu0 0.0
  %6322 = vmatpush1.msra.mxu0 0.0
  %6323 = vmatprep.subr.mxu0 0.0
  %6324 = vmatpush1.msra.mxu0 0.0
  %6325 = vmatprep.subr.mxu0 0.0
  %6326 = vmatpush1.msra.mxu0 0.0
  %6327 = vmatprep.subr.mxu0 0.0
  %6328 = vmatpush1.msra.mxu0 0.0
  %6329 = vmatprep.subr.mxu0 0.0
  %6330 = vmatpush1.msra.mxu0 0.0
  %6331 = vmatprep.subr.mxu0 0.0
  %6332 = vmatpush1.msra.mxu0 0.0
  %6333 = vmatprep.subr.mxu0 0.0
  %6334 = vmatpush1.msra.mxu0 0.0
  %6335 = vmatprep.subr.mxu0 0.0
  %6336 = vmatpush1.msra.mxu0 0.0
  %6337 = vmatprep.subr.mxu0 0.0
  %6338 = vmatpush1.msra.mxu0 0.0
  %6339 = vmatprep.subr.mxu0 0.0
  %6340 = vmatpush1.msra.mxu0 0.0
  %6341 = vmatprep.subr.mxu0 0.0
  %6342 = vmatpush1.msra.mxu0 0.0
  %6343 = vmatprep.subr.mxu0 0.0
  %6344 = vmatpush1.msra.mxu0 0.0
  %6345 = vmatprep.subr.mxu0 0.0
  %6346 = vmatpush1.msra.mxu0 0.0
  %6347 = vmatprep.subr.mxu0 0.0
  %6348 = vmatpush1.msra.mxu0 0.0
  %6349 = vmatprep.subr.mxu0 0.0
  %6350 = vmatpush1.msra.mxu0 0.0
  %6351 = vmatprep.subr.mxu0 0.0
  %6352 = vmatpush1.msra.mxu0 0.0
  %6353 = vmatprep.subr.mxu0 0.0
  %6354 = vmatpush1.msra.mxu0 0.0
  %6355 = vmatprep.subr.mxu0 0.0
  %6356 = vmatpush1.msra.mxu0 0.0
  %6357 = vmatprep.mubr.f32.mxu0 0.0
  %6358 = vmatmul.mubr.f32.gmra.mrb[0].mxu0 %v6291
  %v6359 = vpop.f32.mrb[0].mxu0
  %v6360 = vadd.f32 %v6284, %v6359
  %v6361 = vpop.f32.mrb[0].mxu0
  %v6362 = vadd.f32 %v6286, %v6361
  %6363 = vdwg.mxu0
  %v6364 = vadd.f32 %v6360, %v3234
  %v6365 = vadd.f32 %v6362, %v3238
  %v6366 = vxor.u32 %v6364, 2147483648
  %v6367 = vmul.f32 %v6366, 1.442695
  %v6368 = vpow.pop %v6367
  %v6369 = vadd.f32 %v6368, 1.0
  %v6370 = vrcp.pop %v6369
  %v6371 = vmul.f32 1.0, %v6370
  %v6372 = vtanh.pop %v6365
  %v6373 = vxor.u32 %v6365, 2147483648
  %v6374 = vmul.f32 %v6373, 1.442695
  %v6375 = vpow.pop %v6374
  %v6376 = vadd.f32 %v6375, 1.0
  %v6377 = vrcp.pop %v6376
  %v6378 = vmul.f32 1.0, %v6377
  %v6379 = vmul.f32 %v6371, %v6038
  %v6380 = vmul.f32 %v6371, %v6372
  %6382 = vrot.lane.b32.xlu0 %v6380, 64
  %v6383 = vpop.permute.xlu0 %6382
  %v6385 = vadd.f32 %v6379, %v6383
  %v6386 = vtanh.pop %v6385
  %v6387 = vmul.f32 %v6378, %v6386
  %s6388 = scalar_lea.vmem %s1, 80
  %v6389 = vld [vmem:[%s6388] sm:$0xff]
  %6390 = vmatprep.subr.mxu0 %v2851
  %6391 = vmatpush1.msra.mxu0 %v2850
  %6392 = vmatprep.subr.mxu0 %v2853
  %6393 = vmatpush1.msra.mxu0 %v2852
  %6394 = vmatprep.subr.mxu0 %v2855
  %6395 = vmatpush1.msra.mxu0 %v2854
  %6396 = vmatprep.subr.mxu0 %v2857
  %6397 = vmatpush1.msra.mxu0 %v2856
  %6398 = vmatprep.subr.mxu0 %v2859
  %6399 = vmatpush1.msra.mxu0 %v2858
  %6400 = vmatprep.subr.mxu0 %v2861
  %6401 = vmatpush1.msra.mxu0 %v2860
  %6402 = vmatprep.subr.mxu0 %v2863
  %6403 = vmatpush1.msra.mxu0 %v2862
  %6404 = vmatprep.subr.mxu0 %v2865
  %6405 = vmatpush1.msra.mxu0 %v2864
  %6406 = vmatprep.subr.mxu0 0.0
  %6407 = vmatpush1.msra.mxu0 0.0
  %6408 = vmatprep.subr.mxu0 0.0
  %6409 = vmatpush1.msra.mxu0 0.0
  %6410 = vmatprep.subr.mxu0 0.0
  %6411 = vmatpush1.msra.mxu0 0.0
  %6412 = vmatprep.subr.mxu0 0.0
  %6413 = vmatpush1.msra.mxu0 0.0
  %6414 = vmatprep.subr.mxu0 0.0
  %6415 = vmatpush1.msra.mxu0 0.0
  %6416 = vmatprep.subr.mxu0 0.0
  %6417 = vmatpush1.msra.mxu0 0.0
  %6418 = vmatprep.subr.mxu0 0.0
  %6419 = vmatpush1.msra.mxu0 0.0
  %6420 = vmatprep.subr.mxu0 0.0
  %6421 = vmatpush1.msra.mxu0 0.0
  %6422 = vmatprep.subr.mxu0 0.0
  %6423 = vmatpush1.msra.mxu0 0.0
  %6424 = vmatprep.subr.mxu0 0.0
  %6425 = vmatpush1.msra.mxu0 0.0
  %6426 = vmatprep.subr.mxu0 0.0
  %6427 = vmatpush1.msra.mxu0 0.0
  %6428 = vmatprep.subr.mxu0 0.0
  %6429 = vmatpush1.msra.mxu0 0.0
  %6430 = vmatprep.subr.mxu0 0.0
  %6431 = vmatpush1.msra.mxu0 0.0
  %6432 = vmatprep.subr.mxu0 0.0
  %6433 = vmatpush1.msra.mxu0 0.0
  %6434 = vmatprep.subr.mxu0 0.0
  %6435 = vmatpush1.msra.mxu0 0.0
  %6436 = vmatprep.subr.mxu0 0.0
  %6437 = vmatpush1.msra.mxu0 0.0
  %6438 = vmatprep.subr.mxu0 0.0
  %6439 = vmatpush1.msra.mxu0 0.0
  %6440 = vmatprep.subr.mxu0 0.0
  %6441 = vmatpush1.msra.mxu0 0.0
  %6442 = vmatprep.subr.mxu0 0.0
  %6443 = vmatpush1.msra.mxu0 0.0
  %6444 = vmatprep.subr.mxu0 0.0
  %6445 = vmatpush1.msra.mxu0 0.0
  %6446 = vmatprep.subr.mxu0 0.0
  %6447 = vmatpush1.msra.mxu0 0.0
  %6448 = vmatprep.subr.mxu0 0.0
  %6449 = vmatpush1.msra.mxu0 0.0
  %6450 = vmatprep.subr.mxu0 0.0
  %6451 = vmatpush1.msra.mxu0 0.0
  %6452 = vmatprep.subr.mxu0 0.0
  %6453 = vmatpush1.msra.mxu0 0.0
  %6454 = vmatprep.mubr.f32.mxu0 0.0
  %6455 = vmatmul.mubr.f32.gmra.mrb[0].mxu0 %v6291
  %v6456 = vpop.f32.mrb[0].mxu0
  %v6457 = vadd.f32 0.0, %v6456
  %v6458 = vpop.f32.mrb[0].mxu0
  %v6459 = vadd.f32 0.0, %v6458
  %6460 = vdwg.mxu0
  %v6462 = vsel %vm62, %v6389, 0
  %6464 = vmatprep.subr.mxu0 %v2843
  %6465 = vmatpush1.msra.mxu0 %v2842
  %6466 = vmatprep.subr.mxu0 %v2845
  %6467 = vmatpush1.msra.mxu0 %v2844
  %6468 = vmatprep.subr.mxu0 %v2847
  %6469 = vmatpush1.msra.mxu0 %v2846
  %6470 = vmatprep.subr.mxu0 %v2849
  %6471 = vmatpush1.msra.mxu0 %v2848
  %6472 = vmatprep.subr.mxu0 0.0
  %6473 = vmatpush1.msra.mxu0 0.0
  %6474 = vmatprep.subr.mxu0 0.0
  %6475 = vmatpush1.msra.mxu0 0.0
  %6476 = vmatprep.subr.mxu0 0.0
  %6477 = vmatpush1.msra.mxu0 0.0
  %6478 = vmatprep.subr.mxu0 0.0
  %6479 = vmatpush1.msra.mxu0 0.0
  %6480 = vmatprep.subr.mxu0 0.0
  %6481 = vmatpush1.msra.mxu0 0.0
  %6482 = vmatprep.subr.mxu0 0.0
  %6483 = vmatpush1.msra.mxu0 0.0
  %6484 = vmatprep.subr.mxu0 0.0
  %6485 = vmatpush1.msra.mxu0 0.0
  %6486 = vmatprep.subr.mxu0 0.0
  %6487 = vmatpush1.msra.mxu0 0.0
  %6488 = vmatprep.subr.mxu0 0.0
  %6489 = vmatpush1.msra.mxu0 0.0
  %6490 = vmatprep.subr.mxu0 0.0
  %6491 = vmatpush1.msra.mxu0 0.0
  %6492 = vmatprep.subr.mxu0 0.0
  %6493 = vmatpush1.msra.mxu0 0.0
  %6494 = vmatprep.subr.mxu0 0.0
  %6495 = vmatpush1.msra.mxu0 0.0
  %6496 = vmatprep.subr.mxu0 0.0
  %6497 = vmatpush1.msra.mxu0 0.0
  %6498 = vmatprep.subr.mxu0 0.0
  %6499 = vmatpush1.msra.mxu0 0.0
  %6500 = vmatprep.subr.mxu0 0.0
  %6501 = vmatpush1.msra.mxu0 0.0
  %6502 = vmatprep.subr.mxu0 0.0
  %6503 = vmatpush1.msra.mxu0 0.0
  %6504 = vmatprep.subr.mxu0 0.0
  %6505 = vmatpush1.msra.mxu0 0.0
  %6506 = vmatprep.subr.mxu0 0.0
  %6507 = vmatpush1.msra.mxu0 0.0
  %6508 = vmatprep.subr.mxu0 0.0
  %6509 = vmatpush1.msra.mxu0 0.0
  %6510 = vmatprep.subr.mxu0 0.0
  %6511 = vmatpush1.msra.mxu0 0.0
  %6512 = vmatprep.subr.mxu0 0.0
  %6513 = vmatpush1.msra.mxu0 0.0
  %6514 = vmatprep.subr.mxu0 0.0
  %6515 = vmatpush1.msra.mxu0 0.0
  %6516 = vmatprep.subr.mxu0 0.0
  %6517 = vmatpush1.msra.mxu0 0.0
  %6518 = vmatprep.subr.mxu0 0.0
  %6519 = vmatpush1.msra.mxu0 0.0
  %6520 = vmatprep.subr.mxu0 0.0
  %6521 = vmatpush1.msra.mxu0 0.0
  %6522 = vmatprep.subr.mxu0 0.0
  %6523 = vmatpush1.msra.mxu0 0.0
  %6524 = vmatprep.subr.mxu0 0.0
  %6525 = vmatpush1.msra.mxu0 0.0
  %6526 = vmatprep.subr.mxu0 0.0
  %6527 = vmatpush1.msra.mxu0 0.0
  %6528 = vmatprep.mubr.f32.mxu0 0.0
  %6529 = vmatmul.mubr.f32.gmra.mrb[0].mxu0 %v6462
  %v6530 = vpop.f32.mrb[0].mxu0
  %v6531 = vadd.f32 %v6457, %v6530
  %v6532 = vpop.f32.mrb[0].mxu0
  %v6533 = vadd.f32 %v6459, %v6532
  %6534 = vdwg.mxu0
  %v6535 = vadd.f32 %v6531, %v3019
  %v6536 = vadd.f32 %v6533, %v3023
  %v6537 = vxor.u32 %v6535, 2147483648
  %v6538 = vmul.f32 %v6537, 1.442695
  %v6539 = vpow.pop %v6538
  %v6540 = vadd.f32 %v6539, 1.0
  %v6541 = vrcp.pop %v6540
  %v6542 = vmul.f32 1.0, %v6541
  %v6543 = vtanh.pop %v6536
  %v6544 = vxor.u32 %v6536, 2147483648
  %v6545 = vmul.f32 %v6544, 1.442695
  %v6546 = vpow.pop %v6545
  %v6547 = vadd.f32 %v6546, 1.0
  %v6548 = vrcp.pop %v6547
  %v6549 = vmul.f32 1.0, %v6548
  %v6550 = vmul.f32 %v6542, %v6209
  %v6551 = vmul.f32 %v6542, %v6543
  %6553 = vrot.lane.b32.xlu0 %v6551, 64
  %v6554 = vpop.permute.xlu0 %6553
  %v6556 = vadd.f32 %v6550, %v6554
  %v6557 = vtanh.pop %v6556
  %v6558 = vmul.f32 %v6549, %v6557
  %6560 = vrot.lane.b32.xlu0 %v6387, 64
  %v6561 = vpop.permute.xlu0 %6560
  %v6562 = vsel %vm2866, %v6561, 0
  %6564 = vmatprep.subr.mxu0 %v3067
  %6565 = vmatpush1.msra.mxu0 %v3066
  %6566 = vmatprep.subr.mxu0 %v3069
  %6567 = vmatpush1.msra.mxu0 %v3068
  %6568 = vmatprep.subr.mxu0 %v3071
  %6569 = vmatpush1.msra.mxu0 %v3070
  %6570 = vmatprep.subr.mxu0 %v3073
  %6571 = vmatpush1.msra.mxu0 %v3072
  %6572 = vmatprep.subr.mxu0 %v3075
  %6573 = vmatpush1.msra.mxu0 %v3074
  %6574 = vmatprep.subr.mxu0 %v3077
  %6575 = vmatpush1.msra.mxu0 %v3076
  %6576 = vmatprep.subr.mxu0 %v3079
  %6577 = vmatpush1.msra.mxu0 %v3078
  %6578 = vmatprep.subr.mxu0 %v3081
  %6579 = vmatpush1.msra.mxu0 %v3080
  %6580 = vmatprep.subr.mxu0 0.0
  %6581 = vmatpush1.msra.mxu0 0.0
  %6582 = vmatprep.subr.mxu0 0.0
  %6583 = vmatpush1.msra.mxu0 0.0
  %6584 = vmatprep.subr.mxu0 0.0
  %6585 = vmatpush1.msra.mxu0 0.0
  %6586 = vmatprep.subr.mxu0 0.0
  %6587 = vmatpush1.msra.mxu0 0.0
  %6588 = vmatprep.subr.mxu0 0.0
  %6589 = vmatpush1.msra.mxu0 0.0
  %6590 = vmatprep.subr.mxu0 0.0
  %6591 = vmatpush1.msra.mxu0 0.0
  %6592 = vmatprep.subr.mxu0 0.0
  %6593 = vmatpush1.msra.mxu0 0.0
  %6594 = vmatprep.subr.mxu0 0.0
  %6595 = vmatpush1.msra.mxu0 0.0
  %6596 = vmatprep.subr.mxu0 0.0
  %6597 = vmatpush1.msra.mxu0 0.0
  %6598 = vmatprep.subr.mxu0 0.0
  %6599 = vmatpush1.msra.mxu0 0.0
  %6600 = vmatprep.subr.mxu0 0.0
  %6601 = vmatpush1.msra.mxu0 0.0
  %6602 = vmatprep.subr.mxu0 0.0
  %6603 = vmatpush1.msra.mxu0 0.0
  %6604 = vmatprep.subr.mxu0 0.0
  %6605 = vmatpush1.msra.mxu0 0.0
  %6606 = vmatprep.subr.mxu0 0.0
  %6607 = vmatpush1.msra.mxu0 0.0
  %6608 = vmatprep.subr.mxu0 0.0
  %6609 = vmatpush1.msra.mxu0 0.0
  %6610 = vmatprep.subr.mxu0 0.0
  %6611 = vmatpush1.msra.mxu0 0.0
  %6612 = vmatprep.subr.mxu0 0.0
  %6613 = vmatpush1.msra.mxu0 0.0
  %6614 = vmatprep.subr.mxu0 0.0
  %6615 = vmatpush1.msra.mxu0 0.0
  %6616 = vmatprep.subr.mxu0 0.0
  %6617 = vmatpush1.msra.mxu0 0.0
  %6618 = vmatprep.subr.mxu0 0.0
  %6619 = vmatpush1.msra.mxu0 0.0
  %6620 = vmatprep.subr.mxu0 0.0
  %6621 = vmatpush1.msra.mxu0 0.0
  %6622 = vmatprep.subr.mxu0 0.0
  %6623 = vmatpush1.msra.mxu0 0.0
  %6624 = vmatprep.subr.mxu0 0.0
  %6625 = vmatpush1.msra.mxu0 0.0
  %6626 = vmatprep.subr.mxu0 0.0
  %6627 = vmatpush1.msra.mxu0 0.0
  %6628 = vmatprep.mubr.f32.mxu0 0.0
  %6629 = vmatmul.mubr.f32.gmra.mrb[0].mxu0 %v6562
  %v6630 = vpop.f32.mrb[0].mxu0
  %v6631 = vadd.f32 0.0, %v6630
  %v6632 = vpop.f32.mrb[0].mxu0
  %v6633 = vadd.f32 0.0, %v6632
  %6634 = vdwg.mxu0
  %6636 = vrot.lane.b32.xlu0 %v6558, 64
  %v6637 = vpop.permute.xlu0 %6636
  %v6638 = vsel %vm2866, %v6637, 0
  %6640 = vmatprep.subr.mxu0 %v3051
  %6641 = vmatpush1.msra.mxu0 %v3050
  %6642 = vmatprep.subr.mxu0 %v3053
  %6643 = vmatpush1.msra.mxu0 %v3052
  %6644 = vmatprep.subr.mxu0 %v3055
  %6645 = vmatpush1.msra.mxu0 %v3054
  %6646 = vmatprep.subr.mxu0 %v3057
  %6647 = vmatpush1.msra.mxu0 %v3056
  %6648 = vmatprep.subr.mxu0 %v3059
  %6649 = vmatpush1.msra.mxu0 %v3058
  %6650 = vmatprep.subr.mxu0 %v3061
  %6651 = vmatpush1.msra.mxu0 %v3060
  %6652 = vmatprep.subr.mxu0 %v3063
  %6653 = vmatpush1.msra.mxu0 %v3062
  %6654 = vmatprep.subr.mxu0 %v3065
  %6655 = vmatpush1.msra.mxu0 %v3064
  %6656 = vmatprep.subr.mxu0 0.0
  %6657 = vmatpush1.msra.mxu0 0.0
  %6658 = vmatprep.subr.mxu0 0.0
  %6659 = vmatpush1.msra.mxu0 0.0
  %6660 = vmatprep.subr.mxu0 0.0
  %6661 = vmatpush1.msra.mxu0 0.0
  %6662 = vmatprep.subr.mxu0 0.0
  %6663 = vmatpush1.msra.mxu0 0.0
  %6664 = vmatprep.subr.mxu0 0.0
  %6665 = vmatpush1.msra.mxu0 0.0
  %6666 = vmatprep.subr.mxu0 0.0
  %6667 = vmatpush1.msra.mxu0 0.0
  %6668 = vmatprep.subr.mxu0 0.0
  %6669 = vmatpush1.msra.mxu0 0.0
  %6670 = vmatprep.subr.mxu0 0.0
  %6671 = vmatpush1.msra.mxu0 0.0
  %6672 = vmatprep.subr.mxu0 0.0
  %6673 = vmatpush1.msra.mxu0 0.0
  %6674 = vmatprep.subr.mxu0 0.0
  %6675 = vmatpush1.msra.mxu0 0.0
  %6676 = vmatprep.subr.mxu0 0.0
  %6677 = vmatpush1.msra.mxu0 0.0
  %6678 = vmatprep.subr.mxu0 0.0
  %6679 = vmatpush1.msra.mxu0 0.0
  %6680 = vmatprep.subr.mxu0 0.0
  %6681 = vmatpush1.msra.mxu0 0.0
  %6682 = vmatprep.subr.mxu0 0.0
  %6683 = vmatpush1.msra.mxu0 0.0
  %6684 = vmatprep.subr.mxu0 0.0
  %6685 = vmatpush1.msra.mxu0 0.0
  %6686 = vmatprep.subr.mxu0 0.0
  %6687 = vmatpush1.msra.mxu0 0.0
  %6688 = vmatprep.subr.mxu0 0.0
  %6689 = vmatpush1.msra.mxu0 0.0
  %6690 = vmatprep.subr.mxu0 0.0
  %6691 = vmatpush1.msra.mxu0 0.0
  %6692 = vmatprep.subr.mxu0 0.0
  %6693 = vmatpush1.msra.mxu0 0.0
  %6694 = vmatprep.subr.mxu0 0.0
  %6695 = vmatpush1.msra.mxu0 0.0
  %6696 = vmatprep.subr.mxu0 0.0
  %6697 = vmatpush1.msra.mxu0 0.0
  %6698 = vmatprep.subr.mxu0 0.0
  %6699 = vmatpush1.msra.mxu0 0.0
  %6700 = vmatprep.subr.mxu0 0.0
  %6701 = vmatpush1.msra.mxu0 0.0
  %6702 = vmatprep.subr.mxu0 0.0
  %6703 = vmatpush1.msra.mxu0 0.0
  %6704 = vmatprep.mubr.f32.mxu0 0.0
  %6705 = vmatmul.mubr.f32.gmra.mrb[0].mxu0 %v6638
  %v6706 = vpop.f32.mrb[0].mxu0
  %v6707 = vadd.f32 %v6631, %v6706
  %v6708 = vpop.f32.mrb[0].mxu0
  %v6709 = vadd.f32 %v6633, %v6708
  %6710 = vdwg.mxu0
  %v6711 = vadd.f32 %v6707, %v3234
  %v6712 = vadd.f32 %v6709, %v3238
  %v6713 = vxor.u32 %v6711, 2147483648
  %v6714 = vmul.f32 %v6713, 1.442695
  %v6715 = vpow.pop %v6714
  %v6716 = vadd.f32 %v6715, 1.0
  %v6717 = vrcp.pop %v6716
  %v6718 = vmul.f32 1.0, %v6717
  %v6719 = vtanh.pop %v6712
  %v6720 = vxor.u32 %v6712, 2147483648
  %v6721 = vmul.f32 %v6720, 1.442695
  %v6722 = vpow.pop %v6721
  %v6723 = vadd.f32 %v6722, 1.0
  %v6724 = vrcp.pop %v6723
  %v6725 = vmul.f32 1.0, %v6724
  %v6726 = vmul.f32 %v6718, %v6385
  %v6727 = vmul.f32 %v6718, %v6719
  %6729 = vrot.lane.b32.xlu0 %v6727, 64
  %v6730 = vpop.permute.xlu0 %6729
  %v6732 = vadd.f32 %v6726, %v6730
  %v6733 = vtanh.pop %v6732
  %v6734 = vmul.f32 %v6725, %v6733
  %s6735 = scalar_lea.vmem %s1, 88
  %v6736 = vld [vmem:[%s6735] sm:$0xff]
  %6737 = vmatprep.subr.mxu0 %v2851
  %6738 = vmatpush1.msra.mxu0 %v2850
  %6739 = vmatprep.subr.mxu0 %v2853
  %6740 = vmatpush1.msra.mxu0 %v2852
  %6741 = vmatprep.subr.mxu0 %v2855
  %6742 = vmatpush1.msra.mxu0 %v2854
  %6743 = vmatprep.subr.mxu0 %v2857
  %6744 = vmatpush1.msra.mxu0 %v2856
  %6745 = vmatprep.subr.mxu0 %v2859
  %6746 = vmatpush1.msra.mxu0 %v2858
  %6747 = vmatprep.subr.mxu0 %v2861
  %6748 = vmatpush1.msra.mxu0 %v2860
  %6749 = vmatprep.subr.mxu0 %v2863
  %6750 = vmatpush1.msra.mxu0 %v2862
  %6751 = vmatprep.subr.mxu0 %v2865
  %6752 = vmatpush1.msra.mxu0 %v2864
  %6753 = vmatprep.subr.mxu0 0.0
  %6754 = vmatpush1.msra.mxu0 0.0
  %6755 = vmatprep.subr.mxu0 0.0
  %6756 = vmatpush1.msra.mxu0 0.0
  %6757 = vmatprep.subr.mxu0 0.0
  %6758 = vmatpush1.msra.mxu0 0.0
  %6759 = vmatprep.subr.mxu0 0.0
  %6760 = vmatpush1.msra.mxu0 0.0
  %6761 = vmatprep.subr.mxu0 0.0
  %6762 = vmatpush1.msra.mxu0 0.0
  %6763 = vmatprep.subr.mxu0 0.0
  %6764 = vmatpush1.msra.mxu0 0.0
  %6765 = vmatprep.subr.mxu0 0.0
  %6766 = vmatpush1.msra.mxu0 0.0
  %6767 = vmatprep.subr.mxu0 0.0
  %6768 = vmatpush1.msra.mxu0 0.0
  %6769 = vmatprep.subr.mxu0 0.0
  %6770 = vmatpush1.msra.mxu0 0.0
  %6771 = vmatprep.subr.mxu0 0.0
  %6772 = vmatpush1.msra.mxu0 0.0
  %6773 = vmatprep.subr.mxu0 0.0
  %6774 = vmatpush1.msra.mxu0 0.0
  %6775 = vmatprep.subr.mxu0 0.0
  %6776 = vmatpush1.msra.mxu0 0.0
  %6777 = vmatprep.subr.mxu0 0.0
  %6778 = vmatpush1.msra.mxu0 0.0
  %6779 = vmatprep.subr.mxu0 0.0
  %6780 = vmatpush1.msra.mxu0 0.0
  %6781 = vmatprep.subr.mxu0 0.0
  %6782 = vmatpush1.msra.mxu0 0.0
  %6783 = vmatprep.subr.mxu0 0.0
  %6784 = vmatpush1.msra.mxu0 0.0
  %6785 = vmatprep.subr.mxu0 0.0
  %6786 = vmatpush1.msra.mxu0 0.0
  %6787 = vmatprep.subr.mxu0 0.0
  %6788 = vmatpush1.msra.mxu0 0.0
  %6789 = vmatprep.subr.mxu0 0.0
  %6790 = vmatpush1.msra.mxu0 0.0
  %6791 = vmatprep.subr.mxu0 0.0
  %6792 = vmatpush1.msra.mxu0 0.0
  %6793 = vmatprep.subr.mxu0 0.0
  %6794 = vmatpush1.msra.mxu0 0.0
  %6795 = vmatprep.subr.mxu0 0.0
  %6796 = vmatpush1.msra.mxu0 0.0
  %6797 = vmatprep.subr.mxu0 0.0
  %6798 = vmatpush1.msra.mxu0 0.0
  %6799 = vmatprep.subr.mxu0 0.0
  %6800 = vmatpush1.msra.mxu0 0.0
  %6801 = vmatprep.mubr.f32.mxu0 0.0
  %6802 = vmatmul.mubr.f32.gmra.mrb[0].mxu0 %v6638
  %v6803 = vpop.f32.mrb[0].mxu0
  %v6804 = vadd.f32 0.0, %v6803
  %v6805 = vpop.f32.mrb[0].mxu0
  %v6806 = vadd.f32 0.0, %v6805
  %6807 = vdwg.mxu0
  %v6809 = vsel %vm62, %v6736, 0
  %6811 = vmatprep.subr.mxu0 %v2843
  %6812 = vmatpush1.msra.mxu0 %v2842
  %6813 = vmatprep.subr.mxu0 %v2845
  %6814 = vmatpush1.msra.mxu0 %v2844
  %6815 = vmatprep.subr.mxu0 %v2847
  %6816 = vmatpush1.msra.mxu0 %v2846
  %6817 = vmatprep.subr.mxu0 %v2849
  %6818 = vmatpush1.msra.mxu0 %v2848
  %6819 = vmatprep.subr.mxu0 0.0
  %6820 = vmatpush1.msra.mxu0 0.0
  %6821 = vmatprep.subr.mxu0 0.0
  %6822 = vmatpush1.msra.mxu0 0.0
  %6823 = vmatprep.subr.mxu0 0.0
  %6824 = vmatpush1.msra.mxu0 0.0
  %6825 = vmatprep.subr.mxu0 0.0
  %6826 = vmatpush1.msra.mxu0 0.0
  %6827 = vmatprep.subr.mxu0 0.0
  %6828 = vmatpush1.msra.mxu0 0.0
  %6829 = vmatprep.subr.mxu0 0.0
  %6830 = vmatpush1.msra.mxu0 0.0
  %6831 = vmatprep.subr.mxu0 0.0
  %6832 = vmatpush1.msra.mxu0 0.0
  %6833 = vmatprep.subr.mxu0 0.0
  %6834 = vmatpush1.msra.mxu0 0.0
  %6835 = vmatprep.subr.mxu0 0.0
  %6836 = vmatpush1.msra.mxu0 0.0
  %6837 = vmatprep.subr.mxu0 0.0
  %6838 = vmatpush1.msra.mxu0 0.0
  %6839 = vmatprep.subr.mxu0 0.0
  %6840 = vmatpush1.msra.mxu0 0.0
  %6841 = vmatprep.subr.mxu0 0.0
  %6842 = vmatpush1.msra.mxu0 0.0
  %6843 = vmatprep.subr.mxu0 0.0
  %6844 = vmatpush1.msra.mxu0 0.0
  %6845 = vmatprep.subr.mxu0 0.0
  %6846 = vmatpush1.msra.mxu0 0.0
  %6847 = vmatprep.subr.mxu0 0.0
  %6848 = vmatpush1.msra.mxu0 0.0
  %6849 = vmatprep.subr.mxu0 0.0
  %6850 = vmatpush1.msra.mxu0 0.0
  %6851 = vmatprep.subr.mxu0 0.0
  %6852 = vmatpush1.msra.mxu0 0.0
  %6853 = vmatprep.subr.mxu0 0.0
  %6854 = vmatpush1.msra.mxu0 0.0
  %6855 = vmatprep.subr.mxu0 0.0
  %6856 = vmatpush1.msra.mxu0 0.0
  %6857 = vmatprep.subr.mxu0 0.0
  %6858 = vmatpush1.msra.mxu0 0.0
  %6859 = vmatprep.subr.mxu0 0.0
  %6860 = vmatpush1.msra.mxu0 0.0
  %6861 = vmatprep.subr.mxu0 0.0
  %6862 = vmatpush1.msra.mxu0 0.0
  %6863 = vmatprep.subr.mxu0 0.0
  %6864 = vmatpush1.msra.mxu0 0.0
  %6865 = vmatprep.subr.mxu0 0.0
  %6866 = vmatpush1.msra.mxu0 0.0
  %6867 = vmatprep.subr.mxu0 0.0
  %6868 = vmatpush1.msra.mxu0 0.0
  %6869 = vmatprep.subr.mxu0 0.0
  %6870 = vmatpush1.msra.mxu0 0.0
  %6871 = vmatprep.subr.mxu0 0.0
  %6872 = vmatpush1.msra.mxu0 0.0
  %6873 = vmatprep.subr.mxu0 0.0
  %6874 = vmatpush1.msra.mxu0 0.0
  %6875 = vmatprep.mubr.f32.mxu0 0.0
  %6876 = vmatmul.mubr.f32.gmra.mrb[0].mxu0 %v6809
  %v6877 = vpop.f32.mrb[0].mxu0
  %v6878 = vadd.f32 %v6804, %v6877
  %v6879 = vpop.f32.mrb[0].mxu0
  %v6880 = vadd.f32 %v6806, %v6879
  %6881 = vdwg.mxu0
  %v6882 = vadd.f32 %v6878, %v3019
  %v6883 = vadd.f32 %v6880, %v3023
  %v6884 = vxor.u32 %v6882, 2147483648
  %v6885 = vmul.f32 %v6884, 1.442695
  %v6886 = vpow.pop %v6885
  %v6887 = vadd.f32 %v6886, 1.0
  %v6888 = vrcp.pop %v6887
  %v6889 = vmul.f32 1.0, %v6888
  %v6890 = vtanh.pop %v6883
  %v6891 = vxor.u32 %v6883, 2147483648
  %v6892 = vmul.f32 %v6891, 1.442695
  %v6893 = vpow.pop %v6892
  %v6894 = vadd.f32 %v6893, 1.0
  %v6895 = vrcp.pop %v6894
  %v6896 = vmul.f32 1.0, %v6895
  %v6897 = vmul.f32 %v6889, %v6556
  %v6898 = vmul.f32 %v6889, %v6890
  %6900 = vrot.lane.b32.xlu0 %v6898, 64
  %v6901 = vpop.permute.xlu0 %6900
  %v6903 = vadd.f32 %v6897, %v6901
  %v6904 = vtanh.pop %v6903
  %v6905 = vmul.f32 %v6896, %v6904
  %6907 = vrot.lane.b32.xlu0 %v6734, 64
  %v6908 = vpop.permute.xlu0 %6907
  %v6909 = vsel %vm2866, %v6908, 0
  %6911 = vmatprep.subr.mxu0 %v3067
  %6912 = vmatpush1.msra.mxu0 %v3066
  %6913 = vmatprep.subr.mxu0 %v3069
  %6914 = vmatpush1.msra.mxu0 %v3068
  %6915 = vmatprep.subr.mxu0 %v3071
  %6916 = vmatpush1.msra.mxu0 %v3070
  %6917 = vmatprep.subr.mxu0 %v3073
  %6918 = vmatpush1.msra.mxu0 %v3072
  %6919 = vmatprep.subr.mxu0 %v3075
  %6920 = vmatpush1.msra.mxu0 %v3074
  %6921 = vmatprep.subr.mxu0 %v3077
  %6922 = vmatpush1.msra.mxu0 %v3076
  %6923 = vmatprep.subr.mxu0 %v3079
  %6924 = vmatpush1.msra.mxu0 %v3078
  %6925 = vmatprep.subr.mxu0 %v3081
  %6926 = vmatpush1.msra.mxu0 %v3080
  %6927 = vmatprep.subr.mxu0 0.0
  %6928 = vmatpush1.msra.mxu0 0.0
  %6929 = vmatprep.subr.mxu0 0.0
  %6930 = vmatpush1.msra.mxu0 0.0
  %6931 = vmatprep.subr.mxu0 0.0
  %6932 = vmatpush1.msra.mxu0 0.0
  %6933 = vmatprep.subr.mxu0 0.0
  %6934 = vmatpush1.msra.mxu0 0.0
  %6935 = vmatprep.subr.mxu0 0.0
  %6936 = vmatpush1.msra.mxu0 0.0
  %6937 = vmatprep.subr.mxu0 0.0
  %6938 = vmatpush1.msra.mxu0 0.0
  %6939 = vmatprep.subr.mxu0 0.0
  %6940 = vmatpush1.msra.mxu0 0.0
  %6941 = vmatprep.subr.mxu0 0.0
  %6942 = vmatpush1.msra.mxu0 0.0
  %6943 = vmatprep.subr.mxu0 0.0
  %6944 = vmatpush1.msra.mxu0 0.0
  %6945 = vmatprep.subr.mxu0 0.0
  %6946 = vmatpush1.msra.mxu0 0.0
  %6947 = vmatprep.subr.mxu0 0.0
  %6948 = vmatpush1.msra.mxu0 0.0
  %6949 = vmatprep.subr.mxu0 0.0
  %6950 = vmatpush1.msra.mxu0 0.0
  %6951 = vmatprep.subr.mxu0 0.0
  %6952 = vmatpush1.msra.mxu0 0.0
  %6953 = vmatprep.subr.mxu0 0.0
  %6954 = vmatpush1.msra.mxu0 0.0
  %6955 = vmatprep.subr.mxu0 0.0
  %6956 = vmatpush1.msra.mxu0 0.0
  %6957 = vmatprep.subr.mxu0 0.0
  %6958 = vmatpush1.msra.mxu0 0.0
  %6959 = vmatprep.subr.mxu0 0.0
  %6960 = vmatpush1.msra.mxu0 0.0
  %6961 = vmatprep.subr.mxu0 0.0
  %6962 = vmatpush1.msra.mxu0 0.0
  %6963 = vmatprep.subr.mxu0 0.0
  %6964 = vmatpush1.msra.mxu0 0.0
  %6965 = vmatprep.subr.mxu0 0.0
  %6966 = vmatpush1.msra.mxu0 0.0
  %6967 = vmatprep.subr.mxu0 0.0
  %6968 = vmatpush1.msra.mxu0 0.0
  %6969 = vmatprep.subr.mxu0 0.0
  %6970 = vmatpush1.msra.mxu0 0.0
  %6971 = vmatprep.subr.mxu0 0.0
  %6972 = vmatpush1.msra.mxu0 0.0
  %6973 = vmatprep.subr.mxu0 0.0
  %6974 = vmatpush1.msra.mxu0 0.0
  %6975 = vmatprep.mubr.f32.mxu0 0.0
  %6976 = vmatmul.mubr.f32.gmra.mrb[0].mxu0 %v6909
  %v6977 = vpop.f32.mrb[0].mxu0
  %v6978 = vadd.f32 0.0, %v6977
  %v6979 = vpop.f32.mrb[0].mxu0
  %v6980 = vadd.f32 0.0, %v6979
  %6981 = vdwg.mxu0
  %6983 = vrot.lane.b32.xlu0 %v6905, 64
  %v6984 = vpop.permute.xlu0 %6983
  %v6985 = vsel %vm2866, %v6984, 0
  %6987 = vmatprep.subr.mxu0 %v3051
  %6988 = vmatpush1.msra.mxu0 %v3050
  %6989 = vmatprep.subr.mxu0 %v3053
  %6990 = vmatpush1.msra.mxu0 %v3052
  %6991 = vmatprep.subr.mxu0 %v3055
  %6992 = vmatpush1.msra.mxu0 %v3054
  %6993 = vmatprep.subr.mxu0 %v3057
  %6994 = vmatpush1.msra.mxu0 %v3056
  %6995 = vmatprep.subr.mxu0 %v3059
  %6996 = vmatpush1.msra.mxu0 %v3058
  %6997 = vmatprep.subr.mxu0 %v3061
  %6998 = vmatpush1.msra.mxu0 %v3060
  %6999 = vmatprep.subr.mxu0 %v3063
  %7000 = vmatpush1.msra.mxu0 %v3062
  %7001 = vmatprep.subr.mxu0 %v3065
  %7002 = vmatpush1.msra.mxu0 %v3064
  %7003 = vmatprep.subr.mxu0 0.0
  %7004 = vmatpush1.msra.mxu0 0.0
  %7005 = vmatprep.subr.mxu0 0.0
  %7006 = vmatpush1.msra.mxu0 0.0
  %7007 = vmatprep.subr.mxu0 0.0
  %7008 = vmatpush1.msra.mxu0 0.0
  %7009 = vmatprep.subr.mxu0 0.0
  %7010 = vmatpush1.msra.mxu0 0.0
  %7011 = vmatprep.subr.mxu0 0.0
  %7012 = vmatpush1.msra.mxu0 0.0
  %7013 = vmatprep.subr.mxu0 0.0
  %7014 = vmatpush1.msra.mxu0 0.0
  %7015 = vmatprep.subr.mxu0 0.0
  %7016 = vmatpush1.msra.mxu0 0.0
  %7017 = vmatprep.subr.mxu0 0.0
  %7018 = vmatpush1.msra.mxu0 0.0
  %7019 = vmatprep.subr.mxu0 0.0
  %7020 = vmatpush1.msra.mxu0 0.0
  %7021 = vmatprep.subr.mxu0 0.0
  %7022 = vmatpush1.msra.mxu0 0.0
  %7023 = vmatprep.subr.mxu0 0.0
  %7024 = vmatpush1.msra.mxu0 0.0
  %7025 = vmatprep.subr.mxu0 0.0
  %7026 = vmatpush1.msra.mxu0 0.0
  %7027 = vmatprep.subr.mxu0 0.0
  %7028 = vmatpush1.msra.mxu0 0.0
  %7029 = vmatprep.subr.mxu0 0.0
  %7030 = vmatpush1.msra.mxu0 0.0
  %7031 = vmatprep.subr.mxu0 0.0
  %7032 = vmatpush1.msra.mxu0 0.0
  %7033 = vmatprep.subr.mxu0 0.0
  %7034 = vmatpush1.msra.mxu0 0.0
  %7035 = vmatprep.subr.mxu0 0.0
  %7036 = vmatpush1.msra.mxu0 0.0
  %7037 = vmatprep.subr.mxu0 0.0
  %7038 = vmatpush1.msra.mxu0 0.0
  %7039 = vmatprep.subr.mxu0 0.0
  %7040 = vmatpush1.msra.mxu0 0.0
  %7041 = vmatprep.subr.mxu0 0.0
  %7042 = vmatpush1.msra.mxu0 0.0
  %7043 = vmatprep.subr.mxu0 0.0
  %7044 = vmatpush1.msra.mxu0 0.0
  %7045 = vmatprep.subr.mxu0 0.0
  %7046 = vmatpush1.msra.mxu0 0.0
  %7047 = vmatprep.subr.mxu0 0.0
  %7048 = vmatpush1.msra.mxu0 0.0
  %7049 = vmatprep.subr.mxu0 0.0
  %7050 = vmatpush1.msra.mxu0 0.0
  %7051 = vmatprep.mubr.f32.mxu0 0.0
  %7052 = vmatmul.mubr.f32.gmra.mrb[0].mxu0 %v6985
  %v7053 = vpop.f32.mrb[0].mxu0
  %v7054 = vadd.f32 %v6978, %v7053
  %v7055 = vpop.f32.mrb[0].mxu0
  %v7056 = vadd.f32 %v6980, %v7055
  %7057 = vdwg.mxu0
  %v7058 = vadd.f32 %v7054, %v3234
  %v7059 = vadd.f32 %v7056, %v3238
  %v7060 = vxor.u32 %v7058, 2147483648
  %v7061 = vmul.f32 %v7060, 1.442695
  %v7062 = vpow.pop %v7061
  %v7063 = vadd.f32 %v7062, 1.0
  %v7064 = vrcp.pop %v7063
  %v7065 = vmul.f32 1.0, %v7064
  %v7066 = vtanh.pop %v7059
  %v7067 = vxor.u32 %v7059, 2147483648
  %v7068 = vmul.f32 %v7067, 1.442695
  %v7069 = vpow.pop %v7068
  %v7070 = vadd.f32 %v7069, 1.0
  %v7071 = vrcp.pop %v7070
  %v7072 = vmul.f32 1.0, %v7071
  %v7073 = vmul.f32 %v7065, %v6732
  %v7074 = vmul.f32 %v7065, %v7066
  %7076 = vrot.lane.b32.xlu0 %v7074, 64
  %v7077 = vpop.permute.xlu0 %7076
  %v7079 = vadd.f32 %v7073, %v7077
  %v7080 = vtanh.pop %v7079
  %v7081 = vmul.f32 %v7072, %v7080
  %s7082 = scalar_lea.vmem %s1, 96
  %v7083 = vld [vmem:[%s7082] sm:$0xff]
  %7084 = vmatprep.subr.mxu0 %v2851
  %7085 = vmatpush1.msra.mxu0 %v2850
  %7086 = vmatprep.subr.mxu0 %v2853
  %7087 = vmatpush1.msra.mxu0 %v2852
  %7088 = vmatprep.subr.mxu0 %v2855
  %7089 = vmatpush1.msra.mxu0 %v2854
  %7090 = vmatprep.subr.mxu0 %v2857
  %7091 = vmatpush1.msra.mxu0 %v2856
  %7092 = vmatprep.subr.mxu0 %v2859
  %7093 = vmatpush1.msra.mxu0 %v2858
  %7094 = vmatprep.subr.mxu0 %v2861
  %7095 = vmatpush1.msra.mxu0 %v2860
  %7096 = vmatprep.subr.mxu0 %v2863
  %7097 = vmatpush1.msra.mxu0 %v2862
  %7098 = vmatprep.subr.mxu0 %v2865
  %7099 = vmatpush1.msra.mxu0 %v2864
  %7100 = vmatprep.subr.mxu0 0.0
  %7101 = vmatpush1.msra.mxu0 0.0
  %7102 = vmatprep.subr.mxu0 0.0
  %7103 = vmatpush1.msra.mxu0 0.0
  %7104 = vmatprep.subr.mxu0 0.0
  %7105 = vmatpush1.msra.mxu0 0.0
  %7106 = vmatprep.subr.mxu0 0.0
  %7107 = vmatpush1.msra.mxu0 0.0
  %7108 = vmatprep.subr.mxu0 0.0
  %7109 = vmatpush1.msra.mxu0 0.0
  %7110 = vmatprep.subr.mxu0 0.0
  %7111 = vmatpush1.msra.mxu0 0.0
  %7112 = vmatprep.subr.mxu0 0.0
  %7113 = vmatpush1.msra.mxu0 0.0
  %7114 = vmatprep.subr.mxu0 0.0
  %7115 = vmatpush1.msra.mxu0 0.0
  %7116 = vmatprep.subr.mxu0 0.0
  %7117 = vmatpush1.msra.mxu0 0.0
  %7118 = vmatprep.subr.mxu0 0.0
  %7119 = vmatpush1.msra.mxu0 0.0
  %7120 = vmatprep.subr.mxu0 0.0
  %7121 = vmatpush1.msra.mxu0 0.0
  %7122 = vmatprep.subr.mxu0 0.0
  %7123 = vmatpush1.msra.mxu0 0.0
  %7124 = vmatprep.subr.mxu0 0.0
  %7125 = vmatpush1.msra.mxu0 0.0
  %7126 = vmatprep.subr.mxu0 0.0
  %7127 = vmatpush1.msra.mxu0 0.0
  %7128 = vmatprep.subr.mxu0 0.0
  %7129 = vmatpush1.msra.mxu0 0.0
  %7130 = vmatprep.subr.mxu0 0.0
  %7131 = vmatpush1.msra.mxu0 0.0
  %7132 = vmatprep.subr.mxu0 0.0
  %7133 = vmatpush1.msra.mxu0 0.0
  %7134 = vmatprep.subr.mxu0 0.0
  %7135 = vmatpush1.msra.mxu0 0.0
  %7136 = vmatprep.subr.mxu0 0.0
  %7137 = vmatpush1.msra.mxu0 0.0
  %7138 = vmatprep.subr.mxu0 0.0
  %7139 = vmatpush1.msra.mxu0 0.0
  %7140 = vmatprep.subr.mxu0 0.0
  %7141 = vmatpush1.msra.mxu0 0.0
  %7142 = vmatprep.subr.mxu0 0.0
  %7143 = vmatpush1.msra.mxu0 0.0
  %7144 = vmatprep.subr.mxu0 0.0
  %7145 = vmatpush1.msra.mxu0 0.0
  %7146 = vmatprep.subr.mxu0 0.0
  %7147 = vmatpush1.msra.mxu0 0.0
  %7148 = vmatprep.mubr.f32.mxu0 0.0
  %7149 = vmatmul.mubr.f32.gmra.mrb[0].mxu0 %v6985
  %v7150 = vpop.f32.mrb[0].mxu0
  %v7151 = vadd.f32 0.0, %v7150
  %v7152 = vpop.f32.mrb[0].mxu0
  %v7153 = vadd.f32 0.0, %v7152
  %7154 = vdwg.mxu0
  %v7156 = vsel %vm62, %v7083, 0
  %7158 = vmatprep.subr.mxu0 %v2843
  %7159 = vmatpush1.msra.mxu0 %v2842
  %7160 = vmatprep.subr.mxu0 %v2845
  %7161 = vmatpush1.msra.mxu0 %v2844
  %7162 = vmatprep.subr.mxu0 %v2847
  %7163 = vmatpush1.msra.mxu0 %v2846
  %7164 = vmatprep.subr.mxu0 %v2849
  %7165 = vmatpush1.msra.mxu0 %v2848
  %7166 = vmatprep.subr.mxu0 0.0
  %7167 = vmatpush1.msra.mxu0 0.0
  %7168 = vmatprep.subr.mxu0 0.0
  %7169 = vmatpush1.msra.mxu0 0.0
  %7170 = vmatprep.subr.mxu0 0.0
  %7171 = vmatpush1.msra.mxu0 0.0
  %7172 = vmatprep.subr.mxu0 0.0
  %7173 = vmatpush1.msra.mxu0 0.0
  %7174 = vmatprep.subr.mxu0 0.0
  %7175 = vmatpush1.msra.mxu0 0.0
  %7176 = vmatprep.subr.mxu0 0.0
  %7177 = vmatpush1.msra.mxu0 0.0
  %7178 = vmatprep.subr.mxu0 0.0
  %7179 = vmatpush1.msra.mxu0 0.0
  %7180 = vmatprep.subr.mxu0 0.0
  %7181 = vmatpush1.msra.mxu0 0.0
  %7182 = vmatprep.subr.mxu0 0.0
  %7183 = vmatpush1.msra.mxu0 0.0
  %7184 = vmatprep.subr.mxu0 0.0
  %7185 = vmatpush1.msra.mxu0 0.0
  %7186 = vmatprep.subr.mxu0 0.0
  %7187 = vmatpush1.msra.mxu0 0.0
  %7188 = vmatprep.subr.mxu0 0.0
  %7189 = vmatpush1.msra.mxu0 0.0
  %7190 = vmatprep.subr.mxu0 0.0
  %7191 = vmatpush1.msra.mxu0 0.0
  %7192 = vmatprep.subr.mxu0 0.0
  %7193 = vmatpush1.msra.mxu0 0.0
  %7194 = vmatprep.subr.mxu0 0.0
  %7195 = vmatpush1.msra.mxu0 0.0
  %7196 = vmatprep.subr.mxu0 0.0
  %7197 = vmatpush1.msra.mxu0 0.0
  %7198 = vmatprep.subr.mxu0 0.0
  %7199 = vmatpush1.msra.mxu0 0.0
  %7200 = vmatprep.subr.mxu0 0.0
  %7201 = vmatpush1.msra.mxu0 0.0
  %7202 = vmatprep.subr.mxu0 0.0
  %7203 = vmatpush1.msra.mxu0 0.0
  %7204 = vmatprep.subr.mxu0 0.0
  %7205 = vmatpush1.msra.mxu0 0.0
  %7206 = vmatprep.subr.mxu0 0.0
  %7207 = vmatpush1.msra.mxu0 0.0
  %7208 = vmatprep.subr.mxu0 0.0
  %7209 = vmatpush1.msra.mxu0 0.0
  %7210 = vmatprep.subr.mxu0 0.0
  %7211 = vmatpush1.msra.mxu0 0.0
  %7212 = vmatprep.subr.mxu0 0.0
  %7213 = vmatpush1.msra.mxu0 0.0
  %7214 = vmatprep.subr.mxu0 0.0
  %7215 = vmatpush1.msra.mxu0 0.0
  %7216 = vmatprep.subr.mxu0 0.0
  %7217 = vmatpush1.msra.mxu0 0.0
  %7218 = vmatprep.subr.mxu0 0.0
  %7219 = vmatpush1.msra.mxu0 0.0
  %7220 = vmatprep.subr.mxu0 0.0
  %7221 = vmatpush1.msra.mxu0 0.0
  %7222 = vmatprep.mubr.f32.mxu0 0.0
  %7223 = vmatmul.mubr.f32.gmra.mrb[0].mxu0 %v7156
  %v7224 = vpop.f32.mrb[0].mxu0
  %v7225 = vadd.f32 %v7151, %v7224
  %v7226 = vpop.f32.mrb[0].mxu0
  %v7227 = vadd.f32 %v7153, %v7226
  %7228 = vdwg.mxu0
  %v7229 = vadd.f32 %v7225, %v3019
  %v7230 = vadd.f32 %v7227, %v3023
  %v7231 = vxor.u32 %v7229, 2147483648
  %v7232 = vmul.f32 %v7231, 1.442695
  %v7233 = vpow.pop %v7232
  %v7234 = vadd.f32 %v7233, 1.0
  %v7235 = vrcp.pop %v7234
  %v7236 = vmul.f32 1.0, %v7235
  %v7237 = vtanh.pop %v7230
  %v7238 = vxor.u32 %v7230, 2147483648
  %v7239 = vmul.f32 %v7238, 1.442695
  %v7240 = vpow.pop %v7239
  %v7241 = vadd.f32 %v7240, 1.0
  %v7242 = vrcp.pop %v7241
  %v7243 = vmul.f32 1.0, %v7242
  %v7244 = vmul.f32 %v7236, %v6903
  %v7245 = vmul.f32 %v7236, %v7237
  %7247 = vrot.lane.b32.xlu0 %v7245, 64
  %v7248 = vpop.permute.xlu0 %7247
  %v7250 = vadd.f32 %v7244, %v7248
  %v7251 = vtanh.pop %v7250
  %v7252 = vmul.f32 %v7243, %v7251
  %7254 = vrot.lane.b32.xlu0 %v7081, 64
  %v7255 = vpop.permute.xlu0 %7254
  %v7256 = vsel %vm2866, %v7255, 0
  %7258 = vmatprep.subr.mxu0 %v3067
  %7259 = vmatpush1.msra.mxu0 %v3066
  %7260 = vmatprep.subr.mxu0 %v3069
  %7261 = vmatpush1.msra.mxu0 %v3068
  %7262 = vmatprep.subr.mxu0 %v3071
  %7263 = vmatpush1.msra.mxu0 %v3070
  %7264 = vmatprep.subr.mxu0 %v3073
  %7265 = vmatpush1.msra.mxu0 %v3072
  %7266 = vmatprep.subr.mxu0 %v3075
  %7267 = vmatpush1.msra.mxu0 %v3074
  %7268 = vmatprep.subr.mxu0 %v3077
  %7269 = vmatpush1.msra.mxu0 %v3076
  %7270 = vmatprep.subr.mxu0 %v3079
  %7271 = vmatpush1.msra.mxu0 %v3078
  %7272 = vmatprep.subr.mxu0 %v3081
  %7273 = vmatpush1.msra.mxu0 %v3080
  %7274 = vmatprep.subr.mxu0 0.0
  %7275 = vmatpush1.msra.mxu0 0.0
  %7276 = vmatprep.subr.mxu0 0.0
  %7277 = vmatpush1.msra.mxu0 0.0
  %7278 = vmatprep.subr.mxu0 0.0
  %7279 = vmatpush1.msra.mxu0 0.0
  %7280 = vmatprep.subr.mxu0 0.0
  %7281 = vmatpush1.msra.mxu0 0.0
  %7282 = vmatprep.subr.mxu0 0.0
  %7283 = vmatpush1.msra.mxu0 0.0
  %7284 = vmatprep.subr.mxu0 0.0
  %7285 = vmatpush1.msra.mxu0 0.0
  %7286 = vmatprep.subr.mxu0 0.0
  %7287 = vmatpush1.msra.mxu0 0.0
  %7288 = vmatprep.subr.mxu0 0.0
  %7289 = vmatpush1.msra.mxu0 0.0
  %7290 = vmatprep.subr.mxu0 0.0
  %7291 = vmatpush1.msra.mxu0 0.0
  %7292 = vmatprep.subr.mxu0 0.0
  %7293 = vmatpush1.msra.mxu0 0.0
  %7294 = vmatprep.subr.mxu0 0.0
  %7295 = vmatpush1.msra.mxu0 0.0
  %7296 = vmatprep.subr.mxu0 0.0
  %7297 = vmatpush1.msra.mxu0 0.0
  %7298 = vmatprep.subr.mxu0 0.0
  %7299 = vmatpush1.msra.mxu0 0.0
  %7300 = vmatprep.subr.mxu0 0.0
  %7301 = vmatpush1.msra.mxu0 0.0
  %7302 = vmatprep.subr.mxu0 0.0
  %7303 = vmatpush1.msra.mxu0 0.0
  %7304 = vmatprep.subr.mxu0 0.0
  %7305 = vmatpush1.msra.mxu0 0.0
  %7306 = vmatprep.subr.mxu0 0.0
  %7307 = vmatpush1.msra.mxu0 0.0
  %7308 = vmatprep.subr.mxu0 0.0
  %7309 = vmatpush1.msra.mxu0 0.0
  %7310 = vmatprep.subr.mxu0 0.0
  %7311 = vmatpush1.msra.mxu0 0.0
  %7312 = vmatprep.subr.mxu0 0.0
  %7313 = vmatpush1.msra.mxu0 0.0
  %7314 = vmatprep.subr.mxu0 0.0
  %7315 = vmatpush1.msra.mxu0 0.0
  %7316 = vmatprep.subr.mxu0 0.0
  %7317 = vmatpush1.msra.mxu0 0.0
  %7318 = vmatprep.subr.mxu0 0.0
  %7319 = vmatpush1.msra.mxu0 0.0
  %7320 = vmatprep.subr.mxu0 0.0
  %7321 = vmatpush1.msra.mxu0 0.0
  %7322 = vmatprep.mubr.f32.mxu0 0.0
  %7323 = vmatmul.mubr.f32.gmra.mrb[0].mxu0 %v7256
  %v7324 = vpop.f32.mrb[0].mxu0
  %v7325 = vadd.f32 0.0, %v7324
  %v7326 = vpop.f32.mrb[0].mxu0
  %v7327 = vadd.f32 0.0, %v7326
  %7328 = vdwg.mxu0
  %7330 = vrot.lane.b32.xlu0 %v7252, 64
  %v7331 = vpop.permute.xlu0 %7330
  %v7332 = vsel %vm2866, %v7331, 0
  %7334 = vmatprep.subr.mxu0 %v3051
  %7335 = vmatpush1.msra.mxu0 %v3050
  %7336 = vmatprep.subr.mxu0 %v3053
  %7337 = vmatpush1.msra.mxu0 %v3052
  %7338 = vmatprep.subr.mxu0 %v3055
  %7339 = vmatpush1.msra.mxu0 %v3054
  %7340 = vmatprep.subr.mxu0 %v3057
  %7341 = vmatpush1.msra.mxu0 %v3056
  %7342 = vmatprep.subr.mxu0 %v3059
  %7343 = vmatpush1.msra.mxu0 %v3058
  %7344 = vmatprep.subr.mxu0 %v3061
  %7345 = vmatpush1.msra.mxu0 %v3060
  %7346 = vmatprep.subr.mxu0 %v3063
  %7347 = vmatpush1.msra.mxu0 %v3062
  %7348 = vmatprep.subr.mxu0 %v3065
  %7349 = vmatpush1.msra.mxu0 %v3064
  %7350 = vmatprep.subr.mxu0 0.0
  %7351 = vmatpush1.msra.mxu0 0.0
  %7352 = vmatprep.subr.mxu0 0.0
  %7353 = vmatpush1.msra.mxu0 0.0
  %7354 = vmatprep.subr.mxu0 0.0
  %7355 = vmatpush1.msra.mxu0 0.0
  %7356 = vmatprep.subr.mxu0 0.0
  %7357 = vmatpush1.msra.mxu0 0.0
  %7358 = vmatprep.subr.mxu0 0.0
  %7359 = vmatpush1.msra.mxu0 0.0
  %7360 = vmatprep.subr.mxu0 0.0
  %7361 = vmatpush1.msra.mxu0 0.0
  %7362 = vmatprep.subr.mxu0 0.0
  %7363 = vmatpush1.msra.mxu0 0.0
  %7364 = vmatprep.subr.mxu0 0.0
  %7365 = vmatpush1.msra.mxu0 0.0
  %7366 = vmatprep.subr.mxu0 0.0
  %7367 = vmatpush1.msra.mxu0 0.0
  %7368 = vmatprep.subr.mxu0 0.0
  %7369 = vmatpush1.msra.mxu0 0.0
  %7370 = vmatprep.subr.mxu0 0.0
  %7371 = vmatpush1.msra.mxu0 0.0
  %7372 = vmatprep.subr.mxu0 0.0
  %7373 = vmatpush1.msra.mxu0 0.0
  %7374 = vmatprep.subr.mxu0 0.0
  %7375 = vmatpush1.msra.mxu0 0.0
  %7376 = vmatprep.subr.mxu0 0.0
  %7377 = vmatpush1.msra.mxu0 0.0
  %7378 = vmatprep.subr.mxu0 0.0
  %7379 = vmatpush1.msra.mxu0 0.0
  %7380 = vmatprep.subr.mxu0 0.0
  %7381 = vmatpush1.msra.mxu0 0.0
  %7382 = vmatprep.subr.mxu0 0.0
  %7383 = vmatpush1.msra.mxu0 0.0
  %7384 = vmatprep.subr.mxu0 0.0
  %7385 = vmatpush1.msra.mxu0 0.0
  %7386 = vmatprep.subr.mxu0 0.0
  %7387 = vmatpush1.msra.mxu0 0.0
  %7388 = vmatprep.subr.mxu0 0.0
  %7389 = vmatpush1.msra.mxu0 0.0
  %7390 = vmatprep.subr.mxu0 0.0
  %7391 = vmatpush1.msra.mxu0 0.0
  %7392 = vmatprep.subr.mxu0 0.0
  %7393 = vmatpush1.msra.mxu0 0.0
  %7394 = vmatprep.subr.mxu0 0.0
  %7395 = vmatpush1.msra.mxu0 0.0
  %7396 = vmatprep.subr.mxu0 0.0
  %7397 = vmatpush1.msra.mxu0 0.0
  %7398 = vmatprep.mubr.f32.mxu0 0.0
  %7399 = vmatmul.mubr.f32.gmra.mrb[0].mxu0 %v7332
  %v7400 = vpop.f32.mrb[0].mxu0
  %v7401 = vadd.f32 %v7325, %v7400
  %v7402 = vpop.f32.mrb[0].mxu0
  %v7403 = vadd.f32 %v7327, %v7402
  %7404 = vdwg.mxu0
  %v7405 = vadd.f32 %v7401, %v3234
  %v7406 = vadd.f32 %v7403, %v3238
  %v7407 = vxor.u32 %v7405, 2147483648
  %v7408 = vmul.f32 %v7407, 1.442695
  %v7409 = vpow.pop %v7408
  %v7410 = vadd.f32 %v7409, 1.0
  %v7411 = vrcp.pop %v7410
  %v7412 = vmul.f32 1.0, %v7411
  %v7413 = vtanh.pop %v7406
  %v7414 = vxor.u32 %v7406, 2147483648
  %v7415 = vmul.f32 %v7414, 1.442695
  %v7416 = vpow.pop %v7415
  %v7417 = vadd.f32 %v7416, 1.0
  %v7418 = vrcp.pop %v7417
  %v7419 = vmul.f32 1.0, %v7418
  %v7420 = vmul.f32 %v7412, %v7079
  %v7421 = vmul.f32 %v7412, %v7413
  %7423 = vrot.lane.b32.xlu0 %v7421, 64
  %v7424 = vpop.permute.xlu0 %7423
  %v7426 = vadd.f32 %v7420, %v7424
  %v7427 = vtanh.pop %v7426
  %v7428 = vmul.f32 %v7419, %v7427
  %s7429 = scalar_lea.vmem %s1, 104
  %v7430 = vld [vmem:[%s7429] sm:$0xff]
  %7431 = vmatprep.subr.mxu0 %v2851
  %7432 = vmatpush1.msra.mxu0 %v2850
  %7433 = vmatprep.subr.mxu0 %v2853
  %7434 = vmatpush1.msra.mxu0 %v2852
  %7435 = vmatprep.subr.mxu0 %v2855
  %7436 = vmatpush1.msra.mxu0 %v2854
  %7437 = vmatprep.subr.mxu0 %v2857
  %7438 = vmatpush1.msra.mxu0 %v2856
  %7439 = vmatprep.subr.mxu0 %v2859
  %7440 = vmatpush1.msra.mxu0 %v2858
  %7441 = vmatprep.subr.mxu0 %v2861
  %7442 = vmatpush1.msra.mxu0 %v2860
  %7443 = vmatprep.subr.mxu0 %v2863
  %7444 = vmatpush1.msra.mxu0 %v2862
  %7445 = vmatprep.subr.mxu0 %v2865
  %7446 = vmatpush1.msra.mxu0 %v2864
  %7447 = vmatprep.subr.mxu0 0.0
  %7448 = vmatpush1.msra.mxu0 0.0
  %7449 = vmatprep.subr.mxu0 0.0
  %7450 = vmatpush1.msra.mxu0 0.0
  %7451 = vmatprep.subr.mxu0 0.0
  %7452 = vmatpush1.msra.mxu0 0.0
  %7453 = vmatprep.subr.mxu0 0.0
  %7454 = vmatpush1.msra.mxu0 0.0
  %7455 = vmatprep.subr.mxu0 0.0
  %7456 = vmatpush1.msra.mxu0 0.0
  %7457 = vmatprep.subr.mxu0 0.0
  %7458 = vmatpush1.msra.mxu0 0.0
  %7459 = vmatprep.subr.mxu0 0.0
  %7460 = vmatpush1.msra.mxu0 0.0
  %7461 = vmatprep.subr.mxu0 0.0
  %7462 = vmatpush1.msra.mxu0 0.0
  %7463 = vmatprep.subr.mxu0 0.0
  %7464 = vmatpush1.msra.mxu0 0.0
  %7465 = vmatprep.subr.mxu0 0.0
  %7466 = vmatpush1.msra.mxu0 0.0
  %7467 = vmatprep.subr.mxu0 0.0
  %7468 = vmatpush1.msra.mxu0 0.0
  %7469 = vmatprep.subr.mxu0 0.0
  %7470 = vmatpush1.msra.mxu0 0.0
  %7471 = vmatprep.subr.mxu0 0.0
  %7472 = vmatpush1.msra.mxu0 0.0
  %7473 = vmatprep.subr.mxu0 0.0
  %7474 = vmatpush1.msra.mxu0 0.0
  %7475 = vmatprep.subr.mxu0 0.0
  %7476 = vmatpush1.msra.mxu0 0.0
  %7477 = vmatprep.subr.mxu0 0.0
  %7478 = vmatpush1.msra.mxu0 0.0
  %7479 = vmatprep.subr.mxu0 0.0
  %7480 = vmatpush1.msra.mxu0 0.0
  %7481 = vmatprep.subr.mxu0 0.0
  %7482 = vmatpush1.msra.mxu0 0.0
  %7483 = vmatprep.subr.mxu0 0.0
  %7484 = vmatpush1.msra.mxu0 0.0
  %7485 = vmatprep.subr.mxu0 0.0
  %7486 = vmatpush1.msra.mxu0 0.0
  %7487 = vmatprep.subr.mxu0 0.0
  %7488 = vmatpush1.msra.mxu0 0.0
  %7489 = vmatprep.subr.mxu0 0.0
  %7490 = vmatpush1.msra.mxu0 0.0
  %7491 = vmatprep.subr.mxu0 0.0
  %7492 = vmatpush1.msra.mxu0 0.0
  %7493 = vmatprep.subr.mxu0 0.0
  %7494 = vmatpush1.msra.mxu0 0.0
  %7495 = vmatprep.mubr.f32.mxu0 0.0
  %7496 = vmatmul.mubr.f32.gmra.mrb[0].mxu0 %v7332
  %v7497 = vpop.f32.mrb[0].mxu0
  %v7498 = vadd.f32 0.0, %v7497
  %v7499 = vpop.f32.mrb[0].mxu0
  %v7500 = vadd.f32 0.0, %v7499
  %7501 = vdwg.mxu0
  %v7503 = vsel %vm62, %v7430, 0
  %7505 = vmatprep.subr.mxu0 %v2843
  %7506 = vmatpush1.msra.mxu0 %v2842
  %7507 = vmatprep.subr.mxu0 %v2845
  %7508 = vmatpush1.msra.mxu0 %v2844
  %7509 = vmatprep.subr.mxu0 %v2847
  %7510 = vmatpush1.msra.mxu0 %v2846
  %7511 = vmatprep.subr.mxu0 %v2849
  %7512 = vmatpush1.msra.mxu0 %v2848
  %7513 = vmatprep.subr.mxu0 0.0
  %7514 = vmatpush1.msra.mxu0 0.0
  %7515 = vmatprep.subr.mxu0 0.0
  %7516 = vmatpush1.msra.mxu0 0.0
  %7517 = vmatprep.subr.mxu0 0.0
  %7518 = vmatpush1.msra.mxu0 0.0
  %7519 = vmatprep.subr.mxu0 0.0
  %7520 = vmatpush1.msra.mxu0 0.0
  %7521 = vmatprep.subr.mxu0 0.0
  %7522 = vmatpush1.msra.mxu0 0.0
  %7523 = vmatprep.subr.mxu0 0.0
  %7524 = vmatpush1.msra.mxu0 0.0
  %7525 = vmatprep.subr.mxu0 0.0
  %7526 = vmatpush1.msra.mxu0 0.0
  %7527 = vmatprep.subr.mxu0 0.0
  %7528 = vmatpush1.msra.mxu0 0.0
  %7529 = vmatprep.subr.mxu0 0.0
  %7530 = vmatpush1.msra.mxu0 0.0
  %7531 = vmatprep.subr.mxu0 0.0
  %7532 = vmatpush1.msra.mxu0 0.0
  %7533 = vmatprep.subr.mxu0 0.0
  %7534 = vmatpush1.msra.mxu0 0.0
  %7535 = vmatprep.subr.mxu0 0.0
  %7536 = vmatpush1.msra.mxu0 0.0
  %7537 = vmatprep.subr.mxu0 0.0
  %7538 = vmatpush1.msra.mxu0 0.0
  %7539 = vmatprep.subr.mxu0 0.0
  %7540 = vmatpush1.msra.mxu0 0.0
  %7541 = vmatprep.subr.mxu0 0.0
  %7542 = vmatpush1.msra.mxu0 0.0
  %7543 = vmatprep.subr.mxu0 0.0
  %7544 = vmatpush1.msra.mxu0 0.0
  %7545 = vmatprep.subr.mxu0 0.0
  %7546 = vmatpush1.msra.mxu0 0.0
  %7547 = vmatprep.subr.mxu0 0.0
  %7548 = vmatpush1.msra.mxu0 0.0
  %7549 = vmatprep.subr.mxu0 0.0
  %7550 = vmatpush1.msra.mxu0 0.0
  %7551 = vmatprep.subr.mxu0 0.0
  %7552 = vmatpush1.msra.mxu0 0.0
  %7553 = vmatprep.subr.mxu0 0.0
  %7554 = vmatpush1.msra.mxu0 0.0
  %7555 = vmatprep.subr.mxu0 0.0
  %7556 = vmatpush1.msra.mxu0 0.0
  %7557 = vmatprep.subr.mxu0 0.0
  %7558 = vmatpush1.msra.mxu0 0.0
  %7559 = vmatprep.subr.mxu0 0.0
  %7560 = vmatpush1.msra.mxu0 0.0
  %7561 = vmatprep.subr.mxu0 0.0
  %7562 = vmatpush1.msra.mxu0 0.0
  %7563 = vmatprep.subr.mxu0 0.0
  %7564 = vmatpush1.msra.mxu0 0.0
  %7565 = vmatprep.subr.mxu0 0.0
  %7566 = vmatpush1.msra.mxu0 0.0
  %7567 = vmatprep.subr.mxu0 0.0
  %7568 = vmatpush1.msra.mxu0 0.0
  %7569 = vmatprep.mubr.f32.mxu0 0.0
  %7570 = vmatmul.mubr.f32.gmra.mrb[0].mxu0 %v7503
  %v7571 = vpop.f32.mrb[0].mxu0
  %v7572 = vadd.f32 %v7498, %v7571
  %v7573 = vpop.f32.mrb[0].mxu0
  %v7574 = vadd.f32 %v7500, %v7573
  %7575 = vdwg.mxu0
  %v7576 = vadd.f32 %v7572, %v3019
  %v7577 = vadd.f32 %v7574, %v3023
  %v7578 = vxor.u32 %v7576, 2147483648
  %v7579 = vmul.f32 %v7578, 1.442695
  %v7580 = vpow.pop %v7579
  %v7581 = vadd.f32 %v7580, 1.0
  %v7582 = vrcp.pop %v7581
  %v7583 = vmul.f32 1.0, %v7582
  %v7584 = vtanh.pop %v7577
  %v7585 = vxor.u32 %v7577, 2147483648
  %v7586 = vmul.f32 %v7585, 1.442695
  %v7587 = vpow.pop %v7586
  %v7588 = vadd.f32 %v7587, 1.0
  %v7589 = vrcp.pop %v7588
  %v7590 = vmul.f32 1.0, %v7589
  %v7591 = vmul.f32 %v7583, %v7250
  %v7592 = vmul.f32 %v7583, %v7584
  %7594 = vrot.lane.b32.xlu0 %v7592, 64
  %v7595 = vpop.permute.xlu0 %7594
  %v7597 = vadd.f32 %v7591, %v7595
  %v7598 = vtanh.pop %v7597
  %v7599 = vmul.f32 %v7590, %v7598
  %7601 = vrot.lane.b32.xlu0 %v7428, 64
  %v7602 = vpop.permute.xlu0 %7601
  %v7603 = vsel %vm2866, %v7602, 0
  %7605 = vmatprep.subr.mxu0 %v3067
  %7606 = vmatpush1.msra.mxu0 %v3066
  %7607 = vmatprep.subr.mxu0 %v3069
  %7608 = vmatpush1.msra.mxu0 %v3068
  %7609 = vmatprep.subr.mxu0 %v3071
  %7610 = vmatpush1.msra.mxu0 %v3070
  %7611 = vmatprep.subr.mxu0 %v3073
  %7612 = vmatpush1.msra.mxu0 %v3072
  %7613 = vmatprep.subr.mxu0 %v3075
  %7614 = vmatpush1.msra.mxu0 %v3074
  %7615 = vmatprep.subr.mxu0 %v3077
  %7616 = vmatpush1.msra.mxu0 %v3076
  %7617 = vmatprep.subr.mxu0 %v3079
  %7618 = vmatpush1.msra.mxu0 %v3078
  %7619 = vmatprep.subr.mxu0 %v3081
  %7620 = vmatpush1.msra.mxu0 %v3080
  %7621 = vmatprep.subr.mxu0 0.0
  %7622 = vmatpush1.msra.mxu0 0.0
  %7623 = vmatprep.subr.mxu0 0.0
  %7624 = vmatpush1.msra.mxu0 0.0
  %7625 = vmatprep.subr.mxu0 0.0
  %7626 = vmatpush1.msra.mxu0 0.0
  %7627 = vmatprep.subr.mxu0 0.0
  %7628 = vmatpush1.msra.mxu0 0.0
  %7629 = vmatprep.subr.mxu0 0.0
  %7630 = vmatpush1.msra.mxu0 0.0
  %7631 = vmatprep.subr.mxu0 0.0
  %7632 = vmatpush1.msra.mxu0 0.0
  %7633 = vmatprep.subr.mxu0 0.0
  %7634 = vmatpush1.msra.mxu0 0.0
  %7635 = vmatprep.subr.mxu0 0.0
  %7636 = vmatpush1.msra.mxu0 0.0
  %7637 = vmatprep.subr.mxu0 0.0
  %7638 = vmatpush1.msra.mxu0 0.0
  %7639 = vmatprep.subr.mxu0 0.0
  %7640 = vmatpush1.msra.mxu0 0.0
  %7641 = vmatprep.subr.mxu0 0.0
  %7642 = vmatpush1.msra.mxu0 0.0
  %7643 = vmatprep.subr.mxu0 0.0
  %7644 = vmatpush1.msra.mxu0 0.0
  %7645 = vmatprep.subr.mxu0 0.0
  %7646 = vmatpush1.msra.mxu0 0.0
  %7647 = vmatprep.subr.mxu0 0.0
  %7648 = vmatpush1.msra.mxu0 0.0
  %7649 = vmatprep.subr.mxu0 0.0
  %7650 = vmatpush1.msra.mxu0 0.0
  %7651 = vmatprep.subr.mxu0 0.0
  %7652 = vmatpush1.msra.mxu0 0.0
  %7653 = vmatprep.subr.mxu0 0.0
  %7654 = vmatpush1.msra.mxu0 0.0
  %7655 = vmatprep.subr.mxu0 0.0
  %7656 = vmatpush1.msra.mxu0 0.0
  %7657 = vmatprep.subr.mxu0 0.0
  %7658 = vmatpush1.msra.mxu0 0.0
  %7659 = vmatprep.subr.mxu0 0.0
  %7660 = vmatpush1.msra.mxu0 0.0
  %7661 = vmatprep.subr.mxu0 0.0
  %7662 = vmatpush1.msra.mxu0 0.0
  %7663 = vmatprep.subr.mxu0 0.0
  %7664 = vmatpush1.msra.mxu0 0.0
  %7665 = vmatprep.subr.mxu0 0.0
  %7666 = vmatpush1.msra.mxu0 0.0
  %7667 = vmatprep.subr.mxu0 0.0
  %7668 = vmatpush1.msra.mxu0 0.0
  %7669 = vmatprep.mubr.f32.mxu0 0.0
  %7670 = vmatmul.mubr.f32.gmra.mrb[0].mxu0 %v7603
  %v7671 = vpop.f32.mrb[0].mxu0
  %v7672 = vadd.f32 0.0, %v7671
  %v7673 = vpop.f32.mrb[0].mxu0
  %v7674 = vadd.f32 0.0, %v7673
  %7675 = vdwg.mxu0
  %7677 = vrot.lane.b32.xlu0 %v7599, 64
  %v7678 = vpop.permute.xlu0 %7677
  %v7679 = vsel %vm2866, %v7678, 0
  %7681 = vmatprep.subr.mxu0 %v3051
  %7682 = vmatpush1.msra.mxu0 %v3050
  %7683 = vmatprep.subr.mxu0 %v3053
  %7684 = vmatpush1.msra.mxu0 %v3052
  %7685 = vmatprep.subr.mxu0 %v3055
  %7686 = vmatpush1.msra.mxu0 %v3054
  %7687 = vmatprep.subr.mxu0 %v3057
  %7688 = vmatpush1.msra.mxu0 %v3056
  %7689 = vmatprep.subr.mxu0 %v3059
  %7690 = vmatpush1.msra.mxu0 %v3058
  %7691 = vmatprep.subr.mxu0 %v3061
  %7692 = vmatpush1.msra.mxu0 %v3060
  %7693 = vmatprep.subr.mxu0 %v3063
  %7694 = vmatpush1.msra.mxu0 %v3062
  %7695 = vmatprep.subr.mxu0 %v3065
  %7696 = vmatpush1.msra.mxu0 %v3064
  %7697 = vmatprep.subr.mxu0 0.0
  %7698 = vmatpush1.msra.mxu0 0.0
  %7699 = vmatprep.subr.mxu0 0.0
  %7700 = vmatpush1.msra.mxu0 0.0
  %7701 = vmatprep.subr.mxu0 0.0
  %7702 = vmatpush1.msra.mxu0 0.0
  %7703 = vmatprep.subr.mxu0 0.0
  %7704 = vmatpush1.msra.mxu0 0.0
  %7705 = vmatprep.subr.mxu0 0.0
  %7706 = vmatpush1.msra.mxu0 0.0
  %7707 = vmatprep.subr.mxu0 0.0
  %7708 = vmatpush1.msra.mxu0 0.0
  %7709 = vmatprep.subr.mxu0 0.0
  %7710 = vmatpush1.msra.mxu0 0.0
  %7711 = vmatprep.subr.mxu0 0.0
  %7712 = vmatpush1.msra.mxu0 0.0
  %7713 = vmatprep.subr.mxu0 0.0
  %7714 = vmatpush1.msra.mxu0 0.0
  %7715 = vmatprep.subr.mxu0 0.0
  %7716 = vmatpush1.msra.mxu0 0.0
  %7717 = vmatprep.subr.mxu0 0.0
  %7718 = vmatpush1.msra.mxu0 0.0
  %7719 = vmatprep.subr.mxu0 0.0
  %7720 = vmatpush1.msra.mxu0 0.0
  %7721 = vmatprep.subr.mxu0 0.0
  %7722 = vmatpush1.msra.mxu0 0.0
  %7723 = vmatprep.subr.mxu0 0.0
  %7724 = vmatpush1.msra.mxu0 0.0
  %7725 = vmatprep.subr.mxu0 0.0
  %7726 = vmatpush1.msra.mxu0 0.0
  %7727 = vmatprep.subr.mxu0 0.0
  %7728 = vmatpush1.msra.mxu0 0.0
  %7729 = vmatprep.subr.mxu0 0.0
  %7730 = vmatpush1.msra.mxu0 0.0
  %7731 = vmatprep.subr.mxu0 0.0
  %7732 = vmatpush1.msra.mxu0 0.0
  %7733 = vmatprep.subr.mxu0 0.0
  %7734 = vmatpush1.msra.mxu0 0.0
  %7735 = vmatprep.subr.mxu0 0.0
  %7736 = vmatpush1.msra.mxu0 0.0
  %7737 = vmatprep.subr.mxu0 0.0
  %7738 = vmatpush1.msra.mxu0 0.0
  %7739 = vmatprep.subr.mxu0 0.0
  %7740 = vmatpush1.msra.mxu0 0.0
  %7741 = vmatprep.subr.mxu0 0.0
  %7742 = vmatpush1.msra.mxu0 0.0
  %7743 = vmatprep.subr.mxu0 0.0
  %7744 = vmatpush1.msra.mxu0 0.0
  %7745 = vmatprep.mubr.f32.mxu0 0.0
  %7746 = vmatmul.mubr.f32.gmra.mrb[0].mxu0 %v7679
  %v7747 = vpop.f32.mrb[0].mxu0
  %v7748 = vadd.f32 %v7672, %v7747
  %v7749 = vpop.f32.mrb[0].mxu0
  %v7750 = vadd.f32 %v7674, %v7749
  %7751 = vdwg.mxu0
  %v7752 = vadd.f32 %v7748, %v3234
  %v7753 = vadd.f32 %v7750, %v3238
  %v7754 = vxor.u32 %v7752, 2147483648
  %v7755 = vmul.f32 %v7754, 1.442695
  %v7756 = vpow.pop %v7755
  %v7757 = vadd.f32 %v7756, 1.0
  %v7758 = vrcp.pop %v7757
  %v7759 = vmul.f32 1.0, %v7758
  %v7760 = vtanh.pop %v7753
  %v7761 = vxor.u32 %v7753, 2147483648
  %v7762 = vmul.f32 %v7761, 1.442695
  %v7763 = vpow.pop %v7762
  %v7764 = vadd.f32 %v7763, 1.0
  %v7765 = vrcp.pop %v7764
  %v7766 = vmul.f32 1.0, %v7765
  %v7767 = vmul.f32 %v7759, %v7426
  %v7768 = vmul.f32 %v7759, %v7760
  %7770 = vrot.lane.b32.xlu0 %v7768, 64
  %v7771 = vpop.permute.xlu0 %7770
  %v7773 = vadd.f32 %v7767, %v7771
  %v7774 = vtanh.pop %v7773
  %v7775 = vmul.f32 %v7766, %v7774
  %s7776 = scalar_lea.vmem %s1, 112
  %v7777 = vld [vmem:[%s7776] sm:$0xff]
  %7778 = vmatprep.subr.mxu0 %v2851
  %7779 = vmatpush1.msra.mxu0 %v2850
  %7780 = vmatprep.subr.mxu0 %v2853
  %7781 = vmatpush1.msra.mxu0 %v2852
  %7782 = vmatprep.subr.mxu0 %v2855
  %7783 = vmatpush1.msra.mxu0 %v2854
  %7784 = vmatprep.subr.mxu0 %v2857
  %7785 = vmatpush1.msra.mxu0 %v2856
  %7786 = vmatprep.subr.mxu0 %v2859
  %7787 = vmatpush1.msra.mxu0 %v2858
  %7788 = vmatprep.subr.mxu0 %v2861
  %7789 = vmatpush1.msra.mxu0 %v2860
  %7790 = vmatprep.subr.mxu0 %v2863
  %7791 = vmatpush1.msra.mxu0 %v2862
  %7792 = vmatprep.subr.mxu0 %v2865
  %7793 = vmatpush1.msra.mxu0 %v2864
  %7794 = vmatprep.subr.mxu0 0.0
  %7795 = vmatpush1.msra.mxu0 0.0
  %7796 = vmatprep.subr.mxu0 0.0
  %7797 = vmatpush1.msra.mxu0 0.0
  %7798 = vmatprep.subr.mxu0 0.0
  %7799 = vmatpush1.msra.mxu0 0.0
  %7800 = vmatprep.subr.mxu0 0.0
  %7801 = vmatpush1.msra.mxu0 0.0
  %7802 = vmatprep.subr.mxu0 0.0
  %7803 = vmatpush1.msra.mxu0 0.0
  %7804 = vmatprep.subr.mxu0 0.0
  %7805 = vmatpush1.msra.mxu0 0.0
  %7806 = vmatprep.subr.mxu0 0.0
  %7807 = vmatpush1.msra.mxu0 0.0
  %7808 = vmatprep.subr.mxu0 0.0
  %7809 = vmatpush1.msra.mxu0 0.0
  %7810 = vmatprep.subr.mxu0 0.0
  %7811 = vmatpush1.msra.mxu0 0.0
  %7812 = vmatprep.subr.mxu0 0.0
  %7813 = vmatpush1.msra.mxu0 0.0
  %7814 = vmatprep.subr.mxu0 0.0
  %7815 = vmatpush1.msra.mxu0 0.0
  %7816 = vmatprep.subr.mxu0 0.0
  %7817 = vmatpush1.msra.mxu0 0.0
  %7818 = vmatprep.subr.mxu0 0.0
  %7819 = vmatpush1.msra.mxu0 0.0
  %7820 = vmatprep.subr.mxu0 0.0
  %7821 = vmatpush1.msra.mxu0 0.0
  %7822 = vmatprep.subr.mxu0 0.0
  %7823 = vmatpush1.msra.mxu0 0.0
  %7824 = vmatprep.subr.mxu0 0.0
  %7825 = vmatpush1.msra.mxu0 0.0
  %7826 = vmatprep.subr.mxu0 0.0
  %7827 = vmatpush1.msra.mxu0 0.0
  %7828 = vmatprep.subr.mxu0 0.0
  %7829 = vmatpush1.msra.mxu0 0.0
  %7830 = vmatprep.subr.mxu0 0.0
  %7831 = vmatpush1.msra.mxu0 0.0
  %7832 = vmatprep.subr.mxu0 0.0
  %7833 = vmatpush1.msra.mxu0 0.0
  %7834 = vmatprep.subr.mxu0 0.0
  %7835 = vmatpush1.msra.mxu0 0.0
  %7836 = vmatprep.subr.mxu0 0.0
  %7837 = vmatpush1.msra.mxu0 0.0
  %7838 = vmatprep.subr.mxu0 0.0
  %7839 = vmatpush1.msra.mxu0 0.0
  %7840 = vmatprep.subr.mxu0 0.0
  %7841 = vmatpush1.msra.mxu0 0.0
  %7842 = vmatprep.mubr.f32.mxu0 0.0
  %7843 = vmatmul.mubr.f32.gmra.mrb[0].mxu0 %v7679
  %v7844 = vpop.f32.mrb[0].mxu0
  %v7845 = vadd.f32 0.0, %v7844
  %v7846 = vpop.f32.mrb[0].mxu0
  %v7847 = vadd.f32 0.0, %v7846
  %7848 = vdwg.mxu0
  %v7850 = vsel %vm62, %v7777, 0
  %7852 = vmatprep.subr.mxu0 %v2843
  %7853 = vmatpush1.msra.mxu0 %v2842
  %7854 = vmatprep.subr.mxu0 %v2845
  %7855 = vmatpush1.msra.mxu0 %v2844
  %7856 = vmatprep.subr.mxu0 %v2847
  %7857 = vmatpush1.msra.mxu0 %v2846
  %7858 = vmatprep.subr.mxu0 %v2849
  %7859 = vmatpush1.msra.mxu0 %v2848
  %7860 = vmatprep.subr.mxu0 0.0
  %7861 = vmatpush1.msra.mxu0 0.0
  %7862 = vmatprep.subr.mxu0 0.0
  %7863 = vmatpush1.msra.mxu0 0.0
  %7864 = vmatprep.subr.mxu0 0.0
  %7865 = vmatpush1.msra.mxu0 0.0
  %7866 = vmatprep.subr.mxu0 0.0
  %7867 = vmatpush1.msra.mxu0 0.0
  %7868 = vmatprep.subr.mxu0 0.0
  %7869 = vmatpush1.msra.mxu0 0.0
  %7870 = vmatprep.subr.mxu0 0.0
  %7871 = vmatpush1.msra.mxu0 0.0
  %7872 = vmatprep.subr.mxu0 0.0
  %7873 = vmatpush1.msra.mxu0 0.0
  %7874 = vmatprep.subr.mxu0 0.0
  %7875 = vmatpush1.msra.mxu0 0.0
  %7876 = vmatprep.subr.mxu0 0.0
  %7877 = vmatpush1.msra.mxu0 0.0
  %7878 = vmatprep.subr.mxu0 0.0
  %7879 = vmatpush1.msra.mxu0 0.0
  %7880 = vmatprep.subr.mxu0 0.0
  %7881 = vmatpush1.msra.mxu0 0.0
  %7882 = vmatprep.subr.mxu0 0.0
  %7883 = vmatpush1.msra.mxu0 0.0
  %7884 = vmatprep.subr.mxu0 0.0
  %7885 = vmatpush1.msra.mxu0 0.0
  %7886 = vmatprep.subr.mxu0 0.0
  %7887 = vmatpush1.msra.mxu0 0.0
  %7888 = vmatprep.subr.mxu0 0.0
  %7889 = vmatpush1.msra.mxu0 0.0
  %7890 = vmatprep.subr.mxu0 0.0
  %7891 = vmatpush1.msra.mxu0 0.0
  %7892 = vmatprep.subr.mxu0 0.0
  %7893 = vmatpush1.msra.mxu0 0.0
  %7894 = vmatprep.subr.mxu0 0.0
  %7895 = vmatpush1.msra.mxu0 0.0
  %7896 = vmatprep.subr.mxu0 0.0
  %7897 = vmatpush1.msra.mxu0 0.0
  %7898 = vmatprep.subr.mxu0 0.0
  %7899 = vmatpush1.msra.mxu0 0.0
  %7900 = vmatprep.subr.mxu0 0.0
  %7901 = vmatpush1.msra.mxu0 0.0
  %7902 = vmatprep.subr.mxu0 0.0
  %7903 = vmatpush1.msra.mxu0 0.0
  %7904 = vmatprep.subr.mxu0 0.0
  %7905 = vmatpush1.msra.mxu0 0.0
  %7906 = vmatprep.subr.mxu0 0.0
  %7907 = vmatpush1.msra.mxu0 0.0
  %7908 = vmatprep.subr.mxu0 0.0
  %7909 = vmatpush1.msra.mxu0 0.0
  %7910 = vmatprep.subr.mxu0 0.0
  %7911 = vmatpush1.msra.mxu0 0.0
  %7912 = vmatprep.subr.mxu0 0.0
  %7913 = vmatpush1.msra.mxu0 0.0
  %7914 = vmatprep.subr.mxu0 0.0
  %7915 = vmatpush1.msra.mxu0 0.0
  %7916 = vmatprep.mubr.f32.mxu0 0.0
  %7917 = vmatmul.mubr.f32.gmra.mrb[0].mxu0 %v7850
  %v7918 = vpop.f32.mrb[0].mxu0
  %v7919 = vadd.f32 %v7845, %v7918
  %v7920 = vpop.f32.mrb[0].mxu0
  %v7921 = vadd.f32 %v7847, %v7920
  %7922 = vdwg.mxu0
  %v7923 = vadd.f32 %v7919, %v3019
  %v7924 = vadd.f32 %v7921, %v3023
  %v7925 = vxor.u32 %v7923, 2147483648
  %v7926 = vmul.f32 %v7925, 1.442695
  %v7927 = vpow.pop %v7926
  %v7928 = vadd.f32 %v7927, 1.0
  %v7929 = vrcp.pop %v7928
  %v7930 = vmul.f32 1.0, %v7929
  %v7931 = vtanh.pop %v7924
  %v7932 = vxor.u32 %v7924, 2147483648
  %v7933 = vmul.f32 %v7932, 1.442695
  %v7934 = vpow.pop %v7933
  %v7935 = vadd.f32 %v7934, 1.0
  %v7936 = vrcp.pop %v7935
  %v7937 = vmul.f32 1.0, %v7936
  %v7938 = vmul.f32 %v7930, %v7597
  %v7939 = vmul.f32 %v7930, %v7931
  %7941 = vrot.lane.b32.xlu0 %v7939, 64
  %v7942 = vpop.permute.xlu0 %7941
  %v7944 = vadd.f32 %v7938, %v7942
  %v7945 = vtanh.pop %v7944
  %v7946 = vmul.f32 %v7937, %v7945
  %7948 = vrot.lane.b32.xlu0 %v7775, 64
  %v7949 = vpop.permute.xlu0 %7948
  %v7950 = vsel %vm2866, %v7949, 0
  %7952 = vmatprep.subr.mxu0 %v3067
  %7953 = vmatpush1.msra.mxu0 %v3066
  %7954 = vmatprep.subr.mxu0 %v3069
  %7955 = vmatpush1.msra.mxu0 %v3068
  %7956 = vmatprep.subr.mxu0 %v3071
  %7957 = vmatpush1.msra.mxu0 %v3070
  %7958 = vmatprep.subr.mxu0 %v3073
  %7959 = vmatpush1.msra.mxu0 %v3072
  %7960 = vmatprep.subr.mxu0 %v3075
  %7961 = vmatpush1.msra.mxu0 %v3074
  %7962 = vmatprep.subr.mxu0 %v3077
  %7963 = vmatpush1.msra.mxu0 %v3076
  %7964 = vmatprep.subr.mxu0 %v3079
  %7965 = vmatpush1.msra.mxu0 %v3078
  %7966 = vmatprep.subr.mxu0 %v3081
  %7967 = vmatpush1.msra.mxu0 %v3080
  %7968 = vmatprep.subr.mxu0 0.0
  %7969 = vmatpush1.msra.mxu0 0.0
  %7970 = vmatprep.subr.mxu0 0.0
  %7971 = vmatpush1.msra.mxu0 0.0
  %7972 = vmatprep.subr.mxu0 0.0
  %7973 = vmatpush1.msra.mxu0 0.0
  %7974 = vmatprep.subr.mxu0 0.0
  %7975 = vmatpush1.msra.mxu0 0.0
  %7976 = vmatprep.subr.mxu0 0.0
  %7977 = vmatpush1.msra.mxu0 0.0
  %7978 = vmatprep.subr.mxu0 0.0
  %7979 = vmatpush1.msra.mxu0 0.0
  %7980 = vmatprep.subr.mxu0 0.0
  %7981 = vmatpush1.msra.mxu0 0.0
  %7982 = vmatprep.subr.mxu0 0.0
  %7983 = vmatpush1.msra.mxu0 0.0
  %7984 = vmatprep.subr.mxu0 0.0
  %7985 = vmatpush1.msra.mxu0 0.0
  %7986 = vmatprep.subr.mxu0 0.0
  %7987 = vmatpush1.msra.mxu0 0.0
  %7988 = vmatprep.subr.mxu0 0.0
  %7989 = vmatpush1.msra.mxu0 0.0
  %7990 = vmatprep.subr.mxu0 0.0
  %7991 = vmatpush1.msra.mxu0 0.0
  %7992 = vmatprep.subr.mxu0 0.0
  %7993 = vmatpush1.msra.mxu0 0.0
  %7994 = vmatprep.subr.mxu0 0.0
  %7995 = vmatpush1.msra.mxu0 0.0
  %7996 = vmatprep.subr.mxu0 0.0
  %7997 = vmatpush1.msra.mxu0 0.0
  %7998 = vmatprep.subr.mxu0 0.0
  %7999 = vmatpush1.msra.mxu0 0.0
  %8000 = vmatprep.subr.mxu0 0.0
  %8001 = vmatpush1.msra.mxu0 0.0
  %8002 = vmatprep.subr.mxu0 0.0
  %8003 = vmatpush1.msra.mxu0 0.0
  %8004 = vmatprep.subr.mxu0 0.0
  %8005 = vmatpush1.msra.mxu0 0.0
  %8006 = vmatprep.subr.mxu0 0.0
  %8007 = vmatpush1.msra.mxu0 0.0
  %8008 = vmatprep.subr.mxu0 0.0
  %8009 = vmatpush1.msra.mxu0 0.0
  %8010 = vmatprep.subr.mxu0 0.0
  %8011 = vmatpush1.msra.mxu0 0.0
  %8012 = vmatprep.subr.mxu0 0.0
  %8013 = vmatpush1.msra.mxu0 0.0
  %8014 = vmatprep.subr.mxu0 0.0
  %8015 = vmatpush1.msra.mxu0 0.0
  %8016 = vmatprep.mubr.f32.mxu0 0.0
  %8017 = vmatmul.mubr.f32.gmra.mrb[0].mxu0 %v7950
  %v8018 = vpop.f32.mrb[0].mxu0
  %v8019 = vadd.f32 0.0, %v8018
  %v8020 = vpop.f32.mrb[0].mxu0
  %v8021 = vadd.f32 0.0, %v8020
  %8022 = vdwg.mxu0
  %8024 = vrot.lane.b32.xlu0 %v7946, 64
  %v8025 = vpop.permute.xlu0 %8024
  %v8026 = vsel %vm2866, %v8025, 0
  %8028 = vmatprep.subr.mxu0 %v3051
  %8029 = vmatpush1.msra.mxu0 %v3050
  %8030 = vmatprep.subr.mxu0 %v3053
  %8031 = vmatpush1.msra.mxu0 %v3052
  %8032 = vmatprep.subr.mxu0 %v3055
  %8033 = vmatpush1.msra.mxu0 %v3054
  %8034 = vmatprep.subr.mxu0 %v3057
  %8035 = vmatpush1.msra.mxu0 %v3056
  %8036 = vmatprep.subr.mxu0 %v3059
  %8037 = vmatpush1.msra.mxu0 %v3058
  %8038 = vmatprep.subr.mxu0 %v3061
  %8039 = vmatpush1.msra.mxu0 %v3060
  %8040 = vmatprep.subr.mxu0 %v3063
  %8041 = vmatpush1.msra.mxu0 %v3062
  %8042 = vmatprep.subr.mxu0 %v3065
  %8043 = vmatpush1.msra.mxu0 %v3064
  %8044 = vmatprep.subr.mxu0 0.0
  %8045 = vmatpush1.msra.mxu0 0.0
  %8046 = vmatprep.subr.mxu0 0.0
  %8047 = vmatpush1.msra.mxu0 0.0
  %8048 = vmatprep.subr.mxu0 0.0
  %8049 = vmatpush1.msra.mxu0 0.0
  %8050 = vmatprep.subr.mxu0 0.0
  %8051 = vmatpush1.msra.mxu0 0.0
  %8052 = vmatprep.subr.mxu0 0.0
  %8053 = vmatpush1.msra.mxu0 0.0
  %8054 = vmatprep.subr.mxu0 0.0
  %8055 = vmatpush1.msra.mxu0 0.0
  %8056 = vmatprep.subr.mxu0 0.0
  %8057 = vmatpush1.msra.mxu0 0.0
  %8058 = vmatprep.subr.mxu0 0.0
  %8059 = vmatpush1.msra.mxu0 0.0
  %8060 = vmatprep.subr.mxu0 0.0
  %8061 = vmatpush1.msra.mxu0 0.0
  %8062 = vmatprep.subr.mxu0 0.0
  %8063 = vmatpush1.msra.mxu0 0.0
  %8064 = vmatprep.subr.mxu0 0.0
  %8065 = vmatpush1.msra.mxu0 0.0
  %8066 = vmatprep.subr.mxu0 0.0
  %8067 = vmatpush1.msra.mxu0 0.0
  %8068 = vmatprep.subr.mxu0 0.0
  %8069 = vmatpush1.msra.mxu0 0.0
  %8070 = vmatprep.subr.mxu0 0.0
  %8071 = vmatpush1.msra.mxu0 0.0
  %8072 = vmatprep.subr.mxu0 0.0
  %8073 = vmatpush1.msra.mxu0 0.0
  %8074 = vmatprep.subr.mxu0 0.0
  %8075 = vmatpush1.msra.mxu0 0.0
  %8076 = vmatprep.subr.mxu0 0.0
  %8077 = vmatpush1.msra.mxu0 0.0
  %8078 = vmatprep.subr.mxu0 0.0
  %8079 = vmatpush1.msra.mxu0 0.0
  %8080 = vmatprep.subr.mxu0 0.0
  %8081 = vmatpush1.msra.mxu0 0.0
  %8082 = vmatprep.subr.mxu0 0.0
  %8083 = vmatpush1.msra.mxu0 0.0
  %8084 = vmatprep.subr.mxu0 0.0
  %8085 = vmatpush1.msra.mxu0 0.0
  %8086 = vmatprep.subr.mxu0 0.0
  %8087 = vmatpush1.msra.mxu0 0.0
  %8088 = vmatprep.subr.mxu0 0.0
  %8089 = vmatpush1.msra.mxu0 0.0
  %8090 = vmatprep.subr.mxu0 0.0
  %8091 = vmatpush1.msra.mxu0 0.0
  %8092 = vmatprep.mubr.f32.mxu0 0.0
  %8093 = vmatmul.mubr.f32.gmra.mrb[0].mxu0 %v8026
  %v8094 = vpop.f32.mrb[0].mxu0
  %v8095 = vadd.f32 %v8019, %v8094
  %v8096 = vpop.f32.mrb[0].mxu0
  %v8097 = vadd.f32 %v8021, %v8096
  %8098 = vdwg.mxu0
  %v8099 = vadd.f32 %v8095, %v3234
  %v8100 = vadd.f32 %v8097, %v3238
  %v8101 = vxor.u32 %v8099, 2147483648
  %v8102 = vmul.f32 %v8101, 1.442695
  %v8103 = vpow.pop %v8102
  %v8104 = vadd.f32 %v8103, 1.0
  %v8105 = vrcp.pop %v8104
  %v8106 = vmul.f32 1.0, %v8105
  %v8107 = vtanh.pop %v8100
  %v8108 = vxor.u32 %v8100, 2147483648
  %v8109 = vmul.f32 %v8108, 1.442695
  %v8110 = vpow.pop %v8109
  %v8111 = vadd.f32 %v8110, 1.0
  %v8112 = vrcp.pop %v8111
  %v8113 = vmul.f32 1.0, %v8112
  %v8114 = vmul.f32 %v8106, %v7773
  %v8115 = vmul.f32 %v8106, %v8107
  %8117 = vrot.lane.b32.xlu0 %v8115, 64
  %v8118 = vpop.permute.xlu0 %8117
  %v8120 = vadd.f32 %v8114, %v8118
  %v8121 = vtanh.pop %v8120
  %v8122 = vmul.f32 %v8113, %v8121
  %s8123 = scalar_lea.vmem %s1, 120
  %v8124 = vld [vmem:[%s8123] sm:$0xff]
  %8125 = vmatprep.subr.mxu0 %v2851
  %8126 = vmatpush1.msra.mxu0 %v2850
  %8127 = vmatprep.subr.mxu0 %v2853
  %8128 = vmatpush1.msra.mxu0 %v2852
  %8129 = vmatprep.subr.mxu0 %v2855
  %8130 = vmatpush1.msra.mxu0 %v2854
  %8131 = vmatprep.subr.mxu0 %v2857
  %8132 = vmatpush1.msra.mxu0 %v2856
  %8133 = vmatprep.subr.mxu0 %v2859
  %8134 = vmatpush1.msra.mxu0 %v2858
  %8135 = vmatprep.subr.mxu0 %v2861
  %8136 = vmatpush1.msra.mxu0 %v2860
  %8137 = vmatprep.subr.mxu0 %v2863
  %8138 = vmatpush1.msra.mxu0 %v2862
  %8139 = vmatprep.subr.mxu0 %v2865
  %8140 = vmatpush1.msra.mxu0 %v2864
  %8141 = vmatprep.subr.mxu0 0.0
  %8142 = vmatpush1.msra.mxu0 0.0
  %8143 = vmatprep.subr.mxu0 0.0
  %8144 = vmatpush1.msra.mxu0 0.0
  %8145 = vmatprep.subr.mxu0 0.0
  %8146 = vmatpush1.msra.mxu0 0.0
  %8147 = vmatprep.subr.mxu0 0.0
  %8148 = vmatpush1.msra.mxu0 0.0
  %8149 = vmatprep.subr.mxu0 0.0
  %8150 = vmatpush1.msra.mxu0 0.0
  %8151 = vmatprep.subr.mxu0 0.0
  %8152 = vmatpush1.msra.mxu0 0.0
  %8153 = vmatprep.subr.mxu0 0.0
  %8154 = vmatpush1.msra.mxu0 0.0
  %8155 = vmatprep.subr.mxu0 0.0
  %8156 = vmatpush1.msra.mxu0 0.0
  %8157 = vmatprep.subr.mxu0 0.0
  %8158 = vmatpush1.msra.mxu0 0.0
  %8159 = vmatprep.subr.mxu0 0.0
  %8160 = vmatpush1.msra.mxu0 0.0
  %8161 = vmatprep.subr.mxu0 0.0
  %8162 = vmatpush1.msra.mxu0 0.0
  %8163 = vmatprep.subr.mxu0 0.0
  %8164 = vmatpush1.msra.mxu0 0.0
  %8165 = vmatprep.subr.mxu0 0.0
  %8166 = vmatpush1.msra.mxu0 0.0
  %8167 = vmatprep.subr.mxu0 0.0
  %8168 = vmatpush1.msra.mxu0 0.0
  %8169 = vmatprep.subr.mxu0 0.0
  %8170 = vmatpush1.msra.mxu0 0.0
  %8171 = vmatprep.subr.mxu0 0.0
  %8172 = vmatpush1.msra.mxu0 0.0
  %8173 = vmatprep.subr.mxu0 0.0
  %8174 = vmatpush1.msra.mxu0 0.0
  %8175 = vmatprep.subr.mxu0 0.0
  %8176 = vmatpush1.msra.mxu0 0.0
  %8177 = vmatprep.subr.mxu0 0.0
  %8178 = vmatpush1.msra.mxu0 0.0
  %8179 = vmatprep.subr.mxu0 0.0
  %8180 = vmatpush1.msra.mxu0 0.0
  %8181 = vmatprep.subr.mxu0 0.0
  %8182 = vmatpush1.msra.mxu0 0.0
  %8183 = vmatprep.subr.mxu0 0.0
  %8184 = vmatpush1.msra.mxu0 0.0
  %8185 = vmatprep.subr.mxu0 0.0
  %8186 = vmatpush1.msra.mxu0 0.0
  %8187 = vmatprep.subr.mxu0 0.0
  %8188 = vmatpush1.msra.mxu0 0.0
  %8189 = vmatprep.mubr.f32.mxu0 0.0
  %8190 = vmatmul.mubr.f32.gmra.mrb[0].mxu0 %v8026
  %v8191 = vpop.f32.mrb[0].mxu0
  %v8192 = vadd.f32 0.0, %v8191
  %v8193 = vpop.f32.mrb[0].mxu0
  %v8194 = vadd.f32 0.0, %v8193
  %8195 = vdwg.mxu0
  %v8197 = vsel %vm62, %v8124, 0
  %8199 = vmatprep.subr.mxu0 %v2843
  %8200 = vmatpush1.msra.mxu0 %v2842
  %8201 = vmatprep.subr.mxu0 %v2845
  %8202 = vmatpush1.msra.mxu0 %v2844
  %8203 = vmatprep.subr.mxu0 %v2847
  %8204 = vmatpush1.msra.mxu0 %v2846
  %8205 = vmatprep.subr.mxu0 %v2849
  %8206 = vmatpush1.msra.mxu0 %v2848
  %8207 = vmatprep.subr.mxu0 0.0
  %8208 = vmatpush1.msra.mxu0 0.0
  %8209 = vmatprep.subr.mxu0 0.0
  %8210 = vmatpush1.msra.mxu0 0.0
  %8211 = vmatprep.subr.mxu0 0.0
  %8212 = vmatpush1.msra.mxu0 0.0
  %8213 = vmatprep.subr.mxu0 0.0
  %8214 = vmatpush1.msra.mxu0 0.0
  %8215 = vmatprep.subr.mxu0 0.0
  %8216 = vmatpush1.msra.mxu0 0.0
  %8217 = vmatprep.subr.mxu0 0.0
  %8218 = vmatpush1.msra.mxu0 0.0
  %8219 = vmatprep.subr.mxu0 0.0
  %8220 = vmatpush1.msra.mxu0 0.0
  %8221 = vmatprep.subr.mxu0 0.0
  %8222 = vmatpush1.msra.mxu0 0.0
  %8223 = vmatprep.subr.mxu0 0.0
  %8224 = vmatpush1.msra.mxu0 0.0
  %8225 = vmatprep.subr.mxu0 0.0
  %8226 = vmatpush1.msra.mxu0 0.0
  %8227 = vmatprep.subr.mxu0 0.0
  %8228 = vmatpush1.msra.mxu0 0.0
  %8229 = vmatprep.subr.mxu0 0.0
  %8230 = vmatpush1.msra.mxu0 0.0
  %8231 = vmatprep.subr.mxu0 0.0
  %8232 = vmatpush1.msra.mxu0 0.0
  %8233 = vmatprep.subr.mxu0 0.0
  %8234 = vmatpush1.msra.mxu0 0.0
  %8235 = vmatprep.subr.mxu0 0.0
  %8236 = vmatpush1.msra.mxu0 0.0
  %8237 = vmatprep.subr.mxu0 0.0
  %8238 = vmatpush1.msra.mxu0 0.0
  %8239 = vmatprep.subr.mxu0 0.0
  %8240 = vmatpush1.msra.mxu0 0.0
  %8241 = vmatprep.subr.mxu0 0.0
  %8242 = vmatpush1.msra.mxu0 0.0
  %8243 = vmatprep.subr.mxu0 0.0
  %8244 = vmatpush1.msra.mxu0 0.0
  %8245 = vmatprep.subr.mxu0 0.0
  %8246 = vmatpush1.msra.mxu0 0.0
  %8247 = vmatprep.subr.mxu0 0.0
  %8248 = vmatpush1.msra.mxu0 0.0
  %8249 = vmatprep.subr.mxu0 0.0
  %8250 = vmatpush1.msra.mxu0 0.0
  %8251 = vmatprep.subr.mxu0 0.0
  %8252 = vmatpush1.msra.mxu0 0.0
  %8253 = vmatprep.subr.mxu0 0.0
  %8254 = vmatpush1.msra.mxu0 0.0
  %8255 = vmatprep.subr.mxu0 0.0
  %8256 = vmatpush1.msra.mxu0 0.0
  %8257 = vmatprep.subr.mxu0 0.0
  %8258 = vmatpush1.msra.mxu0 0.0
  %8259 = vmatprep.subr.mxu0 0.0
  %8260 = vmatpush1.msra.mxu0 0.0
  %8261 = vmatprep.subr.mxu0 0.0
  %8262 = vmatpush1.msra.mxu0 0.0
  %8263 = vmatprep.mubr.f32.mxu0 0.0
  %8264 = vmatmul.mubr.f32.gmra.mrb[0].mxu0 %v8197
  %v8265 = vpop.f32.mrb[0].mxu0
  %v8266 = vadd.f32 %v8192, %v8265
  %v8267 = vpop.f32.mrb[0].mxu0
  %v8268 = vadd.f32 %v8194, %v8267
  %8269 = vdwg.mxu0
  %v8270 = vadd.f32 %v8266, %v3019
  %v8271 = vadd.f32 %v8268, %v3023
  %v8272 = vxor.u32 %v8270, 2147483648
  %v8273 = vmul.f32 %v8272, 1.442695
  %v8274 = vpow.pop %v8273
  %v8275 = vadd.f32 %v8274, 1.0
  %v8276 = vrcp.pop %v8275
  %v8277 = vmul.f32 1.0, %v8276
  %v8278 = vtanh.pop %v8271
  %v8279 = vxor.u32 %v8271, 2147483648
  %v8280 = vmul.f32 %v8279, 1.442695
  %v8281 = vpow.pop %v8280
  %v8282 = vadd.f32 %v8281, 1.0
  %v8283 = vrcp.pop %v8282
  %v8284 = vmul.f32 1.0, %v8283
  %v8285 = vmul.f32 %v8277, %v7944
  %v8286 = vmul.f32 %v8277, %v8278
  %8288 = vrot.lane.b32.xlu0 %v8286, 64
  %v8289 = vpop.permute.xlu0 %8288
  %v8291 = vadd.f32 %v8285, %v8289
  %v8292 = vtanh.pop %v8291
  %v8293 = vmul.f32 %v8284, %v8292
  %8295 = vrot.lane.b32.xlu0 %v8122, 64
  %v8296 = vpop.permute.xlu0 %8295
  %v8297 = vsel %vm2866, %v8296, 0
  %8299 = vmatprep.subr.mxu0 %v3067
  %8300 = vmatpush1.msra.mxu0 %v3066
  %8301 = vmatprep.subr.mxu0 %v3069
  %8302 = vmatpush1.msra.mxu0 %v3068
  %8303 = vmatprep.subr.mxu0 %v3071
  %8304 = vmatpush1.msra.mxu0 %v3070
  %8305 = vmatprep.subr.mxu0 %v3073
  %8306 = vmatpush1.msra.mxu0 %v3072
  %8307 = vmatprep.subr.mxu0 %v3075
  %8308 = vmatpush1.msra.mxu0 %v3074
  %8309 = vmatprep.subr.mxu0 %v3077
  %8310 = vmatpush1.msra.mxu0 %v3076
  %8311 = vmatprep.subr.mxu0 %v3079
  %8312 = vmatpush1.msra.mxu0 %v3078
  %8313 = vmatprep.subr.mxu0 %v3081
  %8314 = vmatpush1.msra.mxu0 %v3080
  %8315 = vmatprep.subr.mxu0 0.0
  %8316 = vmatpush1.msra.mxu0 0.0
  %8317 = vmatprep.subr.mxu0 0.0
  %8318 = vmatpush1.msra.mxu0 0.0
  %8319 = vmatprep.subr.mxu0 0.0
  %8320 = vmatpush1.msra.mxu0 0.0
  %8321 = vmatprep.subr.mxu0 0.0
  %8322 = vmatpush1.msra.mxu0 0.0
  %8323 = vmatprep.subr.mxu0 0.0
  %8324 = vmatpush1.msra.mxu0 0.0
  %8325 = vmatprep.subr.mxu0 0.0
  %8326 = vmatpush1.msra.mxu0 0.0
  %8327 = vmatprep.subr.mxu0 0.0
  %8328 = vmatpush1.msra.mxu0 0.0
  %8329 = vmatprep.subr.mxu0 0.0
  %8330 = vmatpush1.msra.mxu0 0.0
  %8331 = vmatprep.subr.mxu0 0.0
  %8332 = vmatpush1.msra.mxu0 0.0
  %8333 = vmatprep.subr.mxu0 0.0
  %8334 = vmatpush1.msra.mxu0 0.0
  %8335 = vmatprep.subr.mxu0 0.0
  %8336 = vmatpush1.msra.mxu0 0.0
  %8337 = vmatprep.subr.mxu0 0.0
  %8338 = vmatpush1.msra.mxu0 0.0
  %8339 = vmatprep.subr.mxu0 0.0
  %8340 = vmatpush1.msra.mxu0 0.0
  %8341 = vmatprep.subr.mxu0 0.0
  %8342 = vmatpush1.msra.mxu0 0.0
  %8343 = vmatprep.subr.mxu0 0.0
  %8344 = vmatpush1.msra.mxu0 0.0
  %8345 = vmatprep.subr.mxu0 0.0
  %8346 = vmatpush1.msra.mxu0 0.0
  %8347 = vmatprep.subr.mxu0 0.0
  %8348 = vmatpush1.msra.mxu0 0.0
  %8349 = vmatprep.subr.mxu0 0.0
  %8350 = vmatpush1.msra.mxu0 0.0
  %8351 = vmatprep.subr.mxu0 0.0
  %8352 = vmatpush1.msra.mxu0 0.0
  %8353 = vmatprep.subr.mxu0 0.0
  %8354 = vmatpush1.msra.mxu0 0.0
  %8355 = vmatprep.subr.mxu0 0.0
  %8356 = vmatpush1.msra.mxu0 0.0
  %8357 = vmatprep.subr.mxu0 0.0
  %8358 = vmatpush1.msra.mxu0 0.0
  %8359 = vmatprep.subr.mxu0 0.0
  %8360 = vmatpush1.msra.mxu0 0.0
  %8361 = vmatprep.subr.mxu0 0.0
  %8362 = vmatpush1.msra.mxu0 0.0
  %8363 = vmatprep.mubr.f32.mxu0 0.0
  %8364 = vmatmul.mubr.f32.gmra.mrb[0].mxu0 %v8297
  %v8365 = vpop.f32.mrb[0].mxu0
  %v8366 = vadd.f32 0.0, %v8365
  %v8367 = vpop.f32.mrb[0].mxu0
  %v8368 = vadd.f32 0.0, %v8367
  %8369 = vdwg.mxu0
  %8371 = vrot.lane.b32.xlu0 %v8293, 64
  %v8372 = vpop.permute.xlu0 %8371
  %v8373 = vsel %vm2866, %v8372, 0
  %8375 = vmatprep.subr.mxu0 %v3051
  %8376 = vmatpush1.msra.mxu0 %v3050
  %8377 = vmatprep.subr.mxu0 %v3053
  %8378 = vmatpush1.msra.mxu0 %v3052
  %8379 = vmatprep.subr.mxu0 %v3055
  %8380 = vmatpush1.msra.mxu0 %v3054
  %8381 = vmatprep.subr.mxu0 %v3057
  %8382 = vmatpush1.msra.mxu0 %v3056
  %8383 = vmatprep.subr.mxu0 %v3059
  %8384 = vmatpush1.msra.mxu0 %v3058
  %8385 = vmatprep.subr.mxu0 %v3061
  %8386 = vmatpush1.msra.mxu0 %v3060
  %8387 = vmatprep.subr.mxu0 %v3063
  %8388 = vmatpush1.msra.mxu0 %v3062
  %8389 = vmatprep.subr.mxu0 %v3065
  %8390 = vmatpush1.msra.mxu0 %v3064
  %8391 = vmatprep.subr.mxu0 0.0
  %8392 = vmatpush1.msra.mxu0 0.0
  %8393 = vmatprep.subr.mxu0 0.0
  %8394 = vmatpush1.msra.mxu0 0.0
  %8395 = vmatprep.subr.mxu0 0.0
  %8396 = vmatpush1.msra.mxu0 0.0
  %8397 = vmatprep.subr.mxu0 0.0
  %8398 = vmatpush1.msra.mxu0 0.0
  %8399 = vmatprep.subr.mxu0 0.0
  %8400 = vmatpush1.msra.mxu0 0.0
  %8401 = vmatprep.subr.mxu0 0.0
  %8402 = vmatpush1.msra.mxu0 0.0
  %8403 = vmatprep.subr.mxu0 0.0
  %8404 = vmatpush1.msra.mxu0 0.0
  %8405 = vmatprep.subr.mxu0 0.0
  %8406 = vmatpush1.msra.mxu0 0.0
  %8407 = vmatprep.subr.mxu0 0.0
  %8408 = vmatpush1.msra.mxu0 0.0
  %8409 = vmatprep.subr.mxu0 0.0
  %8410 = vmatpush1.msra.mxu0 0.0
  %8411 = vmatprep.subr.mxu0 0.0
  %8412 = vmatpush1.msra.mxu0 0.0
  %8413 = vmatprep.subr.mxu0 0.0
  %8414 = vmatpush1.msra.mxu0 0.0
  %8415 = vmatprep.subr.mxu0 0.0
  %8416 = vmatpush1.msra.mxu0 0.0
  %8417 = vmatprep.subr.mxu0 0.0
  %8418 = vmatpush1.msra.mxu0 0.0
  %8419 = vmatprep.subr.mxu0 0.0
  %8420 = vmatpush1.msra.mxu0 0.0
  %8421 = vmatprep.subr.mxu0 0.0
  %8422 = vmatpush1.msra.mxu0 0.0
  %8423 = vmatprep.subr.mxu0 0.0
  %8424 = vmatpush1.msra.mxu0 0.0
  %8425 = vmatprep.subr.mxu0 0.0
  %8426 = vmatpush1.msra.mxu0 0.0
  %8427 = vmatprep.subr.mxu0 0.0
  %8428 = vmatpush1.msra.mxu0 0.0
  %8429 = vmatprep.subr.mxu0 0.0
  %8430 = vmatpush1.msra.mxu0 0.0
  %8431 = vmatprep.subr.mxu0 0.0
  %8432 = vmatpush1.msra.mxu0 0.0
  %8433 = vmatprep.subr.mxu0 0.0
  %8434 = vmatpush1.msra.mxu0 0.0
  %8435 = vmatprep.subr.mxu0 0.0
  %8436 = vmatpush1.msra.mxu0 0.0
  %8437 = vmatprep.subr.mxu0 0.0
  %8438 = vmatpush1.msra.mxu0 0.0
  %8439 = vmatprep.mubr.f32.mxu0 0.0
  %8440 = vmatmul.mubr.f32.gmra.mrb[0].mxu0 %v8373
  %v8441 = vpop.f32.mrb[0].mxu0
  %v8442 = vadd.f32 %v8366, %v8441
  %v8443 = vpop.f32.mrb[0].mxu0
  %v8444 = vadd.f32 %v8368, %v8443
  %8445 = vdwg.mxu0
  %v8446 = vadd.f32 %v8442, %v3234
  %v8447 = vadd.f32 %v8444, %v3238
  %v8448 = vxor.u32 %v8446, 2147483648
  %v8449 = vmul.f32 %v8448, 1.442695
  %v8450 = vpow.pop %v8449
  %v8451 = vadd.f32 %v8450, 1.0
  %v8452 = vrcp.pop %v8451
  %v8453 = vmul.f32 1.0, %v8452
  %v8454 = vtanh.pop %v8447
  %v8455 = vxor.u32 %v8447, 2147483648
  %v8456 = vmul.f32 %v8455, 1.442695
  %v8457 = vpow.pop %v8456
  %v8458 = vadd.f32 %v8457, 1.0
  %v8459 = vrcp.pop %v8458
  %v8460 = vmul.f32 1.0, %v8459
  %v8461 = vmul.f32 %v8453, %v8120
  %v8462 = vmul.f32 %v8453, %v8454
  %8464 = vrot.lane.b32.xlu0 %v8462, 64
  %v8465 = vpop.permute.xlu0 %8464
  %v8467 = vadd.f32 %v8461, %v8465
  %v8468 = vtanh.pop %v8467
  %v8469 = vmul.f32 %v8460, %v8468
  %v8470 = vld [vmem:[%s14] sm:$0xff]
  %v8471 = vld [vmem:[%s14 + $0x8] sm:$0xff]
  %v8472 = vld [vmem:[%s14 + $0x10] sm:$0xff]
  %v8473 = vld [vmem:[%s14 + $0x18] sm:$0xff]
  %v8474 = vld [vmem:[%s14 + $0x20] sm:$0xff]
  %v8475 = vld [vmem:[%s14 + $0x28] sm:$0xff]
  %v8476 = vld [vmem:[%s14 + $0x30] sm:$0xff]
  %v8477 = vld [vmem:[%s14 + $0x38] sm:$0xff]
  %v8478 = vld [vmem:[%s14 + $0x40] sm:$0xff]
  %v8479 = vld [vmem:[%s14 + $0x48] sm:$0xff]
  %v8480 = vld [vmem:[%s14 + $0x50] sm:$0xff]
  %v8481 = vld [vmem:[%s14 + $0x58] sm:$0xff]
  %8483 = vrot.lane.b32.xlu0 %v8469, 64
  %v8484 = vpop.permute.xlu0 %8483
  %v8485 = vsel %vm2866, %v8484, 0
  %8487 = vmatprep.subr.mxu0 0.0
  %8488 = vmatpush1.msra.mxu0 %v8474
  %8489 = vmatprep.subr.mxu0 0.0
  %8490 = vmatpush1.msra.mxu0 %v8475
  %8491 = vmatprep.subr.mxu0 0.0
  %8492 = vmatpush1.msra.mxu0 %v8476
  %8493 = vmatprep.subr.mxu0 0.0
  %8494 = vmatpush1.msra.mxu0 %v8477
  %8495 = vmatprep.subr.mxu0 0.0
  %8496 = vmatpush1.msra.mxu0 %v8478
  %8497 = vmatprep.subr.mxu0 0.0
  %8498 = vmatpush1.msra.mxu0 %v8479
  %8499 = vmatprep.subr.mxu0 0.0
  %8500 = vmatpush1.msra.mxu0 %v8480
  %8501 = vmatprep.subr.mxu0 0.0
  %8502 = vmatpush1.msra.mxu0 %v8481
  %8503 = vmatprep.subr.mxu0 0.0
  %8504 = vmatpush1.msra.mxu0 0.0
  %8505 = vmatprep.subr.mxu0 0.0
  %8506 = vmatpush1.msra.mxu0 0.0
  %8507 = vmatprep.subr.mxu0 0.0
  %8508 = vmatpush1.msra.mxu0 0.0
  %8509 = vmatprep.subr.mxu0 0.0
  %8510 = vmatpush1.msra.mxu0 0.0
  %8511 = vmatprep.subr.mxu0 0.0
  %8512 = vmatpush1.msra.mxu0 0.0
  %8513 = vmatprep.subr.mxu0 0.0
  %8514 = vmatpush1.msra.mxu0 0.0
  %8515 = vmatprep.subr.mxu0 0.0
  %8516 = vmatpush1.msra.mxu0 0.0
  %8517 = vmatprep.subr.mxu0 0.0
  %8518 = vmatpush1.msra.mxu0 0.0
  %8519 = vmatprep.subr.mxu0 0.0
  %8520 = vmatpush1.msra.mxu0 0.0
  %8521 = vmatprep.subr.mxu0 0.0
  %8522 = vmatpush1.msra.mxu0 0.0
  %8523 = vmatprep.subr.mxu0 0.0
  %8524 = vmatpush1.msra.mxu0 0.0
  %8525 = vmatprep.subr.mxu0 0.0
  %8526 = vmatpush1.msra.mxu0 0.0
  %8527 = vmatprep.subr.mxu0 0.0
  %8528 = vmatpush1.msra.mxu0 0.0
  %8529 = vmatprep.subr.mxu0 0.0
  %8530 = vmatpush1.msra.mxu0 0.0
  %8531 = vmatprep.subr.mxu0 0.0
  %8532 = vmatpush1.msra.mxu0 0.0
  %8533 = vmatprep.subr.mxu0 0.0
  %8534 = vmatpush1.msra.mxu0 0.0
  %8535 = vmatprep.subr.mxu0 0.0
  %8536 = vmatpush1.msra.mxu0 0.0
  %8537 = vmatprep.subr.mxu0 0.0
  %8538 = vmatpush1.msra.mxu0 0.0
  %8539 = vmatprep.subr.mxu0 0.0
  %8540 = vmatpush1.msra.mxu0 0.0
  %8541 = vmatprep.subr.mxu0 0.0
  %8542 = vmatpush1.msra.mxu0 0.0
  %8543 = vmatprep.subr.mxu0 0.0
  %8544 = vmatpush1.msra.mxu0 0.0
  %8545 = vmatprep.subr.mxu0 0.0
  %8546 = vmatpush1.msra.mxu0 0.0
  %8547 = vmatprep.subr.mxu0 0.0
  %8548 = vmatpush1.msra.mxu0 0.0
  %8549 = vmatprep.subr.mxu0 0.0
  %8550 = vmatpush1.msra.mxu0 0.0
  %8551 = vmatprep.mubr.f32.mxu0 0.0
  %8552 = vmatmul.mubr.f32.gmra.mrb[0].mxu0 %v8485
  %v8553 = vpop.f32.mrb[0].mxu0
  %v8554 = vadd.f32 0.0, %v8553
  %v8555 = vpop.f32.mrb[0].mxu0
  %8556 = vdwg.mxu0
  %8558 = vrot.lane.b32.xlu0 %v2840, 32
  %v8559 = vpop.permute.xlu0 %8558
  %v8560 = vsel %vm62, %v8559, 0
  %8562 = vmatprep.subr.mxu0 0.0
  %8563 = vmatpush1.msra.mxu0 %v8470
  %8564 = vmatprep.subr.mxu0 0.0
  %8565 = vmatpush1.msra.mxu0 %v8471
  %8566 = vmatprep.subr.mxu0 0.0
  %8567 = vmatpush1.msra.mxu0 %v8472
  %8568 = vmatprep.subr.mxu0 0.0
  %8569 = vmatpush1.msra.mxu0 %v8473
  %8570 = vmatprep.subr.mxu0 0.0
  %8571 = vmatpush1.msra.mxu0 0.0
  %8572 = vmatprep.subr.mxu0 0.0
  %8573 = vmatpush1.msra.mxu0 0.0
  %8574 = vmatprep.subr.mxu0 0.0
  %8575 = vmatpush1.msra.mxu0 0.0
  %8576 = vmatprep.subr.mxu0 0.0
  %8577 = vmatpush1.msra.mxu0 0.0
  %8578 = vmatprep.subr.mxu0 0.0
  %8579 = vmatpush1.msra.mxu0 0.0
  %8580 = vmatprep.subr.mxu0 0.0
  %8581 = vmatpush1.msra.mxu0 0.0
  %8582 = vmatprep.subr.mxu0 0.0
  %8583 = vmatpush1.msra.mxu0 0.0
  %8584 = vmatprep.subr.mxu0 0.0
  %8585 = vmatpush1.msra.mxu0 0.0
  %8586 = vmatprep.subr.mxu0 0.0
  %8587 = vmatpush1.msra.mxu0 0.0
  %8588 = vmatprep.subr.mxu0 0.0
  %8589 = vmatpush1.msra.mxu0 0.0
  %8590 = vmatprep.subr.mxu0 0.0
  %8591 = vmatpush1.msra.mxu0 0.0
  %8592 = vmatprep.subr.mxu0 0.0
  %8593 = vmatpush1.msra.mxu0 0.0
  %8594 = vmatprep.subr.mxu0 0.0
  %8595 = vmatpush1.msra.mxu0 0.0
  %8596 = vmatprep.subr.mxu0 0.0
  %8597 = vmatpush1.msra.mxu0 0.0
  %8598 = vmatprep.subr.mxu0 0.0
  %8599 = vmatpush1.msra.mxu0 0.0
  %8600 = vmatprep.subr.mxu0 0.0
  %8601 = vmatpush1.msra.mxu0 0.0
  %8602 = vmatprep.subr.mxu0 0.0
  %8603 = vmatpush1.msra.mxu0 0.0
  %8604 = vmatprep.subr.mxu0 0.0
  %8605 = vmatpush1.msra.mxu0 0.0
  %8606 = vmatprep.subr.mxu0 0.0
  %8607 = vmatpush1.msra.mxu0 0.0
  %8608 = vmatprep.subr.mxu0 0.0
  %8609 = vmatpush1.msra.mxu0 0.0
  %8610 = vmatprep.subr.mxu0 0.0
  %8611 = vmatpush1.msra.mxu0 0.0
  %8612 = vmatprep.subr.mxu0 0.0
  %8613 = vmatpush1.msra.mxu0 0.0
  %8614 = vmatprep.subr.mxu0 0.0
  %8615 = vmatpush1.msra.mxu0 0.0
  %8616 = vmatprep.subr.mxu0 0.0
  %8617 = vmatpush1.msra.mxu0 0.0
  %8618 = vmatprep.subr.mxu0 0.0
  %8619 = vmatpush1.msra.mxu0 0.0
  %8620 = vmatprep.subr.mxu0 0.0
  %8621 = vmatpush1.msra.mxu0 0.0
  %8622 = vmatprep.subr.mxu0 0.0
  %8623 = vmatpush1.msra.mxu0 0.0
  %8624 = vmatprep.subr.mxu0 0.0
  %8625 = vmatpush1.msra.mxu0 0.0
  %8626 = vmatprep.mubr.f32.mxu0 0.0
  %8627 = vmatmul.mubr.f32.gmra.mrb[0].mxu0 %v8560
  %v8628 = vpop.f32.mrb[0].mxu0
  %v8629 = vadd.f32 %v8554, %v8628
  %v8630 = vpop.f32.mrb[0].mxu0
  %8631 = vdwg.mxu0
  %v8632 = vld [vmem:[%s15] sm:$0x1]
  %v8634 = vlaneseq
  %v8635 = vshrl.u32 %v8634, 7
  %v8636 = vsub.s32 0, %v8635
  %v8637 = vrot.slane %v8632, %v8636
  %v8639 = vadd.f32 %v8629, %v8637
  %8640 = vst [vmem:[%s16] sm:$0xff] %v8639
  // Predicated region
  $region66: #{forward.1} parent=0 // pred_check
    _
  $region67: #{forward.1} parent=0 // pred_check_branch
    %8642 = sbr.rel (0) target = $region69
  $region68: #{forward.1} parent=0 // pred_region
    _
  $region69: #{forward.1} parent=0 // pred_fallthru
    _
  // Predicated region
  $region70: #{forward.1} parent=0 // pred_check
    _
  $region71: #{forward.1} parent=0 // pred_check_branch
    %8644 = sbr.rel (0) target = $region73
  $region72: #{forward.1} parent=0 // pred_region
    _
  $region73: #{forward.1} parent=0 // pred_fallthru
    _

</llo_original>
